<compile_context>
chip_gen: v5e
topology: v5e:2x2
jax: 0.10.0
libtpu: 0.0.40
codegen_flags: <defaults>
</compile_context>

<pallas_src>
import functools

import jax
import jax.numpy as jnp
from jax.experimental import pallas as pl
from jax.experimental.pallas import tpu as pltpu

BN_EPS = 1e-5
_BN_SCALE = 1.0 / (1.0 + BN_EPS) ** 0.5

_CP = pltpu.CompilerParams(
    dimension_semantics=("parallel",),        # batch axis -> both TCs on v7x
    vmem_limit_bytes=48 * 1024 * 1024,        # stay under v7x 64 MiB physical
)


# --------------------------------------------------------------------------
# In-kernel helpers (all ops are static slices / lane concat / stores only).
# --------------------------------------------------------------------------
def _fill_padded(pad_ref, rows, H, W):
    """Scatter a (H*W, C) value into the interior of a (H+2, W+2, C) scratch."""
    pad_ref[...] = jnp.zeros_like(pad_ref)
    for y in range(H):
        pad_ref[y + 1, 1:W + 1, :] = rows[y * W:(y + 1) * W, :].astype(pad_ref.dtype)


def _im2col_3x3(pad_ref, t_ref, H, W):
    """Build the deep-K tap matrix (H*W, 9*C) in VMEM from the padded scratch.

    Row m=(y,x) holds [pad[y+dy, x+dx, :] for dy in 0..2 for dx in 0..2],
    matching a (3,3,Cin,Cout) weight reshaped to (9*Cin, Cout) tap-major.
    """
    for y in range(H):
        parts = []
        for dy in range(3):
            prow = pad_ref[y + dy]                        # (W+2, C)
            parts.extend([prow[0:W, :], prow[1:W + 1, :], prow[2:W + 2, :]])
        t_ref[y * W:(y + 1) * W, :] = jnp.concatenate(parts, axis=-1)


# --------------------------------------------------------------------------
# Pallas kernel bodies
# --------------------------------------------------------------------------
def _double_conv_kernel(x_ref, w1_ref, b1_ref, w2_ref, b2_ref, o_ref,
                        pad1, t1, pad2, t2, *, H, W):
    """(conv3x3 + foldedBN + ReLU) x2 for one image; intermediate stays in VMEM."""
    x = x_ref[0]                                           # (H*W, Cin) bf16
    _fill_padded(pad1, x, H, W)
    _im2col_3x3(pad1, t1, H, W)
    mid = jnp.dot(t1[...], w1_ref[...], preferred_element_type=jnp.float32)
    mid = jnp.maximum(mid + b1_ref[...], 0.0)              # f32 epilogue
    _fill_padded(pad2, mid, H, W)
    _im2col_3x3(pad2, t2, H, W)
    out = jnp.dot(t2[...], w2_ref[...], preferred_element_type=jnp.float32)
    out = jnp.maximum(out + b2_ref[...], 0.0)
    o_ref[0] = out.astype(o_ref.dtype)                     # bf16 store


def _up_conv_kernel(x_ref, w_ref, b_ref, o_ref, pad, t, *, H, W):
    """Nearest 2x upsample (y-duplication in VMEM) + conv3x3 + BN + ReLU.

    x_ref holds H//2 source rows already duplicated in x (width W); each row
    is written to two padded rows, so the 4x-sized upsampled image is never
    materialised in HBM.
    """
    x = x_ref[0]                                           # ((H//2)*W, Cin) bf16
    pad[...] = jnp.zeros_like(pad)
    for sy in range(H // 2):
        row = x[sy * W:(sy + 1) * W, :]
        pad[2 * sy + 1, 1:W + 1, :] = row
        pad[2 * sy + 2, 1:W + 1, :] = row
    _im2col_3x3(pad, t, H, W)
    out = jnp.dot(t[...], w_ref[...], preferred_element_type=jnp.float32)
    out = jnp.maximum(out + b_ref[...], 0.0)
    o_ref[0] = out.astype(o_ref.dtype)


def _att_decoder_kernel(d_ref, s_ref,
                        wg_ref, bg_ref, wx_ref, bx_ref, wp_ref, bp_ref,
                        wa_ref, wd_ref, b1_ref, w2_ref, b2_ref,
                        o_ref,
                        pad_a, t_a, pad_d, t_d, pad_m, t_m, *, H, W):
    """Fused: attention gate + skip-concat conv3x3 + conv3x3 (one decoder level).

    The concat([gated_skip, d]) conv is done as two K-blocks accumulated on
    the MXU, so neither the gated skip nor the doubled-width tensor ever hit
    HBM.
    """
    d = d_ref[0]                                           # (M, Cd) bf16
    s = s_ref[0]                                           # (M, Cs) bf16
    # ---- attention gate (f32 epilogue, exact sigmoid) ----
    g1 = jnp.dot(d, wg_ref[...], preferred_element_type=jnp.float32) + bg_ref[...]
    x1 = jnp.dot(s, wx_ref[...], preferred_element_type=jnp.float32) + bx_ref[...]
    a = jnp.maximum(g1 + x1, 0.0)
    # psi as VPU multiply + lane reduction (no 1-column MXU matmul)
    psi = jnp.sum(a * wp_ref[...], axis=-1, keepdims=True) + bp_ref[...]
    gate = 1.0 / (1.0 + jnp.exp(-psi))                     # exact sigmoid (EUP exp)
    gated = s.astype(jnp.float32) * gate                   # (M, Cs) f32
    # ---- first decoder conv over concat([gated, d]) as split-K matmuls ----
    _fill_padded(pad_a, gated, H, W)
    _fill_padded(pad_d, d, H, W)
    _im2col_3x3(pad_a, t_a, H, W)
    _im2col_3x3(pad_d, t_d, H, W)
    mid = jnp.dot(t_a[...], wa_ref[...], preferred_element_type=jnp.float32)
    mid = mid + jnp.dot(t_d[...], wd_ref[...], preferred_element_type=jnp.float32)
    mid = jnp.maximum(mid + b1_ref[...], 0.0)
    # ---- second decoder conv ----
    _fill_padded(pad_m, mid, H, W)
    _im2col_3x3(pad_m, t_m, H, W)
    out = jnp.dot(t_m[...], w2_ref[...], preferred_element_type=jnp.float32)
    out = jnp.maximum(out + b2_ref[...], 0.0)
    o_ref[0] = out.astype(o_ref.dtype)


# --------------------------------------------------------------------------
# pallas_call wrappers (activations flow between kernels as (N, H*W, C) bf16)
# --------------------------------------------------------------------------
def _act_spec(m, c):
    return pl.BlockSpec((1, m, c), lambda n: (n, 0, 0))


def _const_spec(shape):
    nd = len(shape)
    return pl.BlockSpec(shape, lambda n, _nd=nd: (0,) * _nd)
    # NOTE: constant-index weight blocks would ideally be single-buffered
    # (pipeline_mode=pl.Buffered(1)); left at the default for compatibility.


def double_conv(x, p, H, W):
    """x: (N, H*W, Cin) bf16 -> (N, H*W, Cout) bf16."""
    n, m, cin = x.shape
    cmid = p["w1"].shape[-1]
    cout = p["w2"].shape[-1]
    kern = functools.partial(_double_conv_kernel, H=H, W=W)
    return pl.pallas_call(
        kern,
        out_shape=jax.ShapeDtypeStruct((n, m, cout), jnp.bfloat16),
        grid=(n,),
        in_specs=[
            _act_spec(m, cin),
            _const_spec(p["w1"].shape), _const_spec(p["b1"].shape),
            _const_spec(p["w2"].shape), _const_spec(p["b2"].shape),
        ],
        out_specs=_act_spec(m, cout),
        scratch_shapes=[
            pltpu.VMEM((H + 2, W + 2, cin), jnp.bfloat16),
            pltpu.VMEM((m, 9 * cin), jnp.bfloat16),
            pltpu.VMEM((H + 2, W + 2, cmid), jnp.bfloat16),
            pltpu.VMEM((m, 9 * cmid), jnp.bfloat16),
        ],
        compiler_params=_CP,
    )(x, p["w1"], p["b1"], p["w2"], p["b2"])


def up_conv(x_img, p):
    """x_img: (N, h, w, Cin) bf16 NHWC -> (N, (2h)*(2w), Cout) bf16 rows."""
    n, h, w, cin = x_img.shape
    H, W = 2 * h, 2 * w
    cout = p["w"].shape[-1]
    # host does only the x-duplication; the kernel does the y-duplication.
    xr = jnp.repeat(x_img, 2, axis=2).reshape(n, h * W, cin)
    kern = functools.partial(_up_conv_kernel, H=H, W=W)
    return pl.pallas_call(
        kern,
        out_shape=jax.ShapeDtypeStruct((n, H * W, cout), jnp.bfloat16),
        grid=(n,),
        in_specs=[_act_spec(h * W, cin),
                  _const_spec(p["w"].shape), _const_spec(p["b"].shape)],
        out_specs=_act_spec(H * W, cout),
        scratch_shapes=[
            pltpu.VMEM((H + 2, W + 2, cin), jnp.bfloat16),
            pltpu.VMEM((H * W, 9 * cin), jnp.bfloat16),
        ],
        compiler_params=_CP,
    )(xr, p["w"], p["b"])


def att_decoder(d, s, p, H, W):
    """d: (N, H*W, Cd) bf16 (up_conv out), s: (N, H*W, Cs) bf16 (encoder skip)."""
    n, m, cd = d.shape
    cs = s.shape[-1]
    cmid = p["wa"].shape[-1]
    cout = p["w2"].shape[-1]
    kern = functools.partial(_att_decoder_kernel, H=H, W=W)
    return pl.pallas_call(
        kern,
        out_shape=jax.ShapeDtypeStruct((n, m, cout), jnp.bfloat16),
        grid=(n,),
        in_specs=[
            _act_spec(m, cd), _act_spec(m, cs),
            _const_spec(p["wg"].shape), _const_spec(p["bg"].shape),
            _const_spec(p["wx"].shape), _const_spec(p["bx"].shape),
            _const_spec(p["wp"].shape), _const_spec(p["bp"].shape),
            _const_spec(p["wa"].shape), _const_spec(p["wd"].shape),
            _const_spec(p["b1"].shape),
            _const_spec(p["w2"].shape), _const_spec(p["b2"].shape),
        ],
        out_specs=_act_spec(m, cout),
        scratch_shapes=[
            pltpu.VMEM((H + 2, W + 2, cs), jnp.bfloat16),
            pltpu.VMEM((m, 9 * cs), jnp.bfloat16),
            pltpu.VMEM((H + 2, W + 2, cd), jnp.bfloat16),
            pltpu.VMEM((m, 9 * cd), jnp.bfloat16),
            pltpu.VMEM((H + 2, W + 2, cmid), jnp.bfloat16),
            pltpu.VMEM((m, 9 * cmid), jnp.bfloat16),
        ],
        compiler_params=_CP,
    )(d, s, p["wg"], p["bg"], p["wx"], p["bx"], p["wp"], p["bp"],
      p["wa"], p["wd"], p["b1"], p["w2"], p["b2"])


# --------------------------------------------------------------------------
# Plain-XLA glue
# --------------------------------------------------------------------------
def maxpool2(x_img):  # nn.MaxPool2d(2, 2), NHWC
    n, h, w, c = x_img.shape
    return jnp.max(x_img.reshape(n, h // 2, 2, w // 2, 2, c), axis=(2, 4))


# --------------------------------------------------------------------------
# Parameter init (PyTorch-default-like uniform bounds), eval-mode BN folded
# into the weights: w *= 1/sqrt(1+eps), b *= 1/sqrt(1+eps).
# --------------------------------------------------------------------------
def _uniform(key, shape, bound):
    return jax.random.uniform(key, shape, jnp.float32, -bound, bound)


def _init_conv3x3(key, cin, cout):
    wkey, bkey = jax.random.split(key)
    bound = 1.0 / float((9 * cin) ** 0.5)
    w = _uniform(wkey, (3, 3, cin, cout), bound) * _BN_SCALE
    b = _uniform(bkey, (cout,), bound) * _BN_SCALE
    return w.reshape(9 * cin, cout).astype(jnp.bfloat16), b.reshape(1, cout)


def _init_conv1x1(key, cin, cout):
    wkey, bkey = jax.random.split(key)
    bound = 1.0 / float(cin ** 0.5)
    return _uniform(wkey, (cin, cout), bound), _uniform(bkey, (cout,), bound)


def init_conv_block(key, cin, cout):
    k1, k2 = jax.random.split(key)
    w1, b1 = _init_conv3x3(k1, cin, cout)
    w2, b2 = _init_conv3x3(k2, cout, cout)
    return {"w1": w1, "b1": b1, "w2": w2, "b2": b2}


def init_up_conv(key, cin, cout):
    w, b = _init_conv3x3(key, cin, cout)
    return {"w": w, "b": b}


def init_att_decoder(key, cs, cd, fint, cout):
    kg, kx, kp, kc1, kc2 = jax.random.split(key, 5)
    wg, bg = _init_conv1x1(kg, cd, fint)        # W_g acts on g = decoder feature
    wx, bx = _init_conv1x1(kx, cs, fint)        # W_x acts on the encoder skip
    wp, bp = _init_conv1x1(kp, fint, 1)
    # Up_conv first conv over cat([gated_skip, d]) -> split into two K-blocks.
    wkey, bkey = jax.random.split(kc1)
    cin = cs + cd
    bound = 1.0 / float((9 * cin) ** 0.5)
    w1 = _uniform(wkey, (3, 3, cin, cout), bound) * _BN_SCALE
    b1 = (_uniform(bkey, (cout,), bound) * _BN_SCALE).reshape(1, cout)
    wa = w1[:, :, :cs, :].reshape(9 * cs, cout).astype(jnp.bfloat16)
    wd = w1[:, :, cs:, :].reshape(9 * cd, cout).astype(jnp.bfloat16)
    w2, b2 = _init_conv3x3(kc2, cout, cout)
    return {
        "wg": (wg * _BN_SCALE).astype(jnp.bfloat16),
        "bg": (bg * _BN_SCALE).reshape(1, fint),
        "wx": (wx * _BN_SCALE).astype(jnp.bfloat16),
        "bx": (bx * _BN_SCALE).reshape(1, fint),
        "wp": (wp * _BN_SCALE).reshape(1, fint),   # row form for the VPU psi reduce
        "bp": (bp * _BN_SCALE).reshape(1, 1),
        "wa": wa, "wd": wd, "b1": b1, "w2": w2, "b2": b2,
    }


def init_attunet(key, img_ch, out_ch, base):
    c1, c2, c3, c4, c5 = base, base * 2, base * 4, base * 8, base * 16
    ks = iter(jax.random.split(key, 16))
    p = {}
    p["Conv1"] = init_conv_block(next(ks), img_ch, c1)
    p["Conv2"] = init_conv_block(next(ks), c1, c2)
    p["Conv3"] = init_conv_block(next(ks), c2, c3)
    p["Conv4"] = init_conv_block(next(ks), c3, c4)
    p["Conv5"] = init_conv_block(next(ks), c4, c5)
    p["Up5"] = init_up_conv(next(ks), c5, c4)
    p["Dec5"] = init_att_decoder(next(ks), cs=c4, cd=c4, fint=c3, cout=c4)
    p["Up4"] = init_up_conv(next(ks), c4, c3)
    p["Dec4"] = init_att_decoder(next(ks), cs=c3, cd=c3, fint=c2, cout=c3)
    p["Up3"] = init_up_conv(next(ks), c3, c2)
    p["Dec3"] = init_att_decoder(next(ks), cs=c2, cd=c2, fint=c1, cout=c2)
    p["Up2"] = init_up_conv(next(ks), c2, c1)
    p["Dec2"] = init_att_decoder(next(ks), cs=c1, cd=c1, fint=max(c1 // 2, 1), cout=c1)
    wf, bf = _init_conv1x1(next(ks), c1, out_ch)
    p["Conv_1x1"] = {"w": wf, "b": bf}
    return p


# --------------------------------------------------------------------------
# Forward pass
# --------------------------------------------------------------------------
def attunet_apply(p, x_img):
    """x_img: (N, H, W, Cin) f32 NHWC -> (N, H, W, out_ch) f32."""
    n, h, w, _ = x_img.shape
    x = x_img.astype(jnp.bfloat16)   # bf16 MXU path (first layer loses f32 precision)

    def rows(t):
        return t.reshape(t.shape[0], t.shape[1] * t.shape[2], t.shape[3])

    def img(t, hh, ww):
        return t.reshape(t.shape[0], hh, ww, t.shape[-1])

    # encoder (fused conv pairs)
    x1 = double_conv(rows(x), p["Conv1"], h, w)
    h2, w2 = h // 2, w // 2
    x2 = double_conv(rows(maxpool2(img(x1, h, w))), p["Conv2"], h2, w2)
    h3, w3 = h2 // 2, w2 // 2
    x3 = double_conv(rows(maxpool2(img(x2, h2, w2))), p["Conv3"], h3, w3)
    h4, w4 = h3 // 2, w3 // 2
    x4 = double_conv(rows(maxpool2(img(x3, h3, w3))), p["Conv4"], h4, w4)
    h5, w5 = h4 // 2, w4 // 2
    x5 = double_conv(rows(maxpool2(img(x4, h4, w4))), p["Conv5"], h5, w5)

    # decoder (up_conv kernel + fused attention/concat/double-conv kernel)
    d5 = up_conv(img(x5, h5, w5), p["Up5"])
    d5 = att_decoder(d5, x4, p["Dec5"], h4, w4)
    d4 = up_conv(img(d5, h4, w4), p["Up4"])
    d4 = att_decoder(d4, x3, p["Dec4"], h3, w3)
    d3 = up_conv(img(d4, h3, w3), p["Up3"])
    d3 = att_decoder(d3, x2, p["Dec3"], h2, w2)
    d2 = up_conv(img(d3, h2, w2), p["Up2"])
    d2 = att_decoder(d2, x1, p["Dec2"], h, w)

    # final 1x1 conv: tiny K and 2-lane output -> plain XLA (per perf review)
    y = jnp.dot(d2.astype(jnp.float32), p["Conv_1x1"]["w"]) + p["Conv_1x1"]["b"]
    return img(y, h, w)


def init_stack(key, input_channels, out_channels, base):
    k1, k2 = jax.random.split(key)
    return {"at_unet1": init_attunet(k1, input_channels, out_channels, base),
            "at_unet2": init_attunet(k2, out_channels, out_channels, base)}


def stack_attention_unet_apply(params, x_nchw):
    """Matches Stack_Attention_Unet.forward: returns (y1, y2) in NCHW, f32."""
    x = jnp.transpose(x_nchw, (0, 2, 3, 1))                # NCHW -> NHWC
    y1 = attunet_apply(params["at_unet1"], x)
    y2 = attunet_apply(params["at_unet2"], y1)
    return (jnp.transpose(y1, (0, 3, 1, 2)),
            jnp.transpose(y2, (0, 3, 1, 2)))


# --------------------------------------------------------------------------
# Pure-JAX reference pieces for a lightweight self-check of the fused kernels.
# --------------------------------------------------------------------------
def _conv3x3_ref(x_img_f32, w_folded_bf16, b_folded):
    cin = x_img_f32.shape[-1]
    cout = w_folded_bf16.shape[-1]
    w = w_folded_bf16.astype(jnp.float32).reshape(3, 3, cin, cout)
    y = jax.lax.conv_general_dilated(
        x_img_f32, w, window_strides=(1, 1), padding="SAME",
        dimension_numbers=("NHWC", "HWIO", "NHWC"))
    return jnp.maximum(y + b_folded.reshape(1, 1, 1, cout), 0.0)


# --------------------------------------------------------------------------
if __name__ == "__main__":
    key = jax.random.PRNGKey(0)
    pkey, xkey = jax.random.split(key)

    input_channels, out_channels = 3, 2
    base = 8          # scaled-down encoder widths (real AttU_Net uses 64) for demo
    batch, spatial = 2, 16

    # --- self-check: fused double_conv / up_conv kernels vs. XLA conv ---
    ck = jax.random.split(jax.random.PRNGKey(1), 3)
    cb = init_conv_block(ck[0], 3, 8)
    xc = jax.random.normal(ck[1], (2, 16, 16, 3), jnp.float32)
    got = double_conv(xc.astype(jnp.bfloat16).reshape(2, 256, 3), cb, 16, 16)
    got = got.astype(jnp.float32).reshape(2, 16, 16, 8)
    ref = _conv3x3_ref(_conv3x3_ref(xc, cb["w1"], cb["b1"]), cb["w2"], cb["b2"])
    assert bool(jnp.allclose(got, ref, rtol=0.1, atol=0.1)), "double_conv mismatch"

    uc = init_up_conv(ck[2], 8, 4)
    xu = jax.random.normal(ck[1], (2, 8, 8, 8), jnp.float32)
    got_u = up_conv(xu.astype(jnp.bfloat16), uc)
    got_u = got_u.astype(jnp.float32).reshape(2, 16, 16, 4)
    ref_u = _conv3x3_ref(jnp.repeat(jnp.repeat(xu, 2, axis=1), 2, axis=2),
                         uc["w"], uc["b"])
    assert bool(jnp.allclose(got_u, ref_u, rtol=0.1, atol=0.1)), "up_conv mismatch"

    # --- full stacked Attention U-Net forward ---
    params = init_stack(pkey, input_channels, out_channels, base)
    x = jax.random.normal(xkey, (batch, input_channels, spatial, spatial),
                          jnp.float32)                     # PyTorch-style NCHW

    fwd = jax.jit(stack_attention_unet_apply)
    y1, y2 = fwd(params, x)
    jax.block_until_ready((y1, y2))

    assert y1.shape == (batch, out_channels, spatial, spatial)
    assert y2.shape == (batch, out_channels, spatial, spatial)
    assert y1.dtype == jnp.float32 and y2.dtype == jnp.float32
    assert bool(jnp.all(jnp.isfinite(y1))) and bool(jnp.all(jnp.isfinite(y2)))
    print("KERNEL_OK")
</pallas_src>

<mosaic_0001>
module attributes {stable_mosaic.version = 11 : i64} {
  func.func @_double_conv_kernel(%arg0: i32, %arg1: memref<1x256x3xbf16, #tpu.memory_space<vmem>>, %arg2: memref<27x8xbf16, #tpu.memory_space<vmem>>, %arg3: memref<1x8xf32, #tpu.memory_space<vmem>>, %arg4: memref<72x8xbf16, #tpu.memory_space<vmem>>, %arg5: memref<1x8xf32, #tpu.memory_space<vmem>>, %arg6: memref<1x256x8xbf16, #tpu.memory_space<vmem>>, %arg7: memref<18x18x3xbf16, #tpu.memory_space<vmem>>, %arg8: memref<256x27xbf16, #tpu.memory_space<vmem>>, %arg9: memref<18x18x8xbf16, #tpu.memory_space<vmem>>, %arg10: memref<256x72xbf16, #tpu.memory_space<vmem>>) attributes {dimension_semantics = [#tpu.dimension_semantics<parallel>], iteration_bounds = array<i64: 2>, scalar_prefetch = 0 : i64, scratch_operands = 4 : i64, tpu.core_type = #tpu.core_type<tc>, window_params = [{transform_indices = @transform_0, window_bounds = array<i64: 1, 256, 3>}, {pipeline_mode = #tpu.pipeline_mode<synchronous>, transform_indices = @transform_1, window_bounds = array<i64: 27, 8>}, {pipeline_mode = #tpu.pipeline_mode<synchronous>, transform_indices = @transform_2, window_bounds = array<i64: 1, 8>}, {pipeline_mode = #tpu.pipeline_mode<synchronous>, transform_indices = @transform_3, window_bounds = array<i64: 72, 8>}, {pipeline_mode = #tpu.pipeline_mode<synchronous>, transform_indices = @transform_4, window_bounds = array<i64: 1, 8>}, {transform_indices = @transform_5, window_bounds = array<i64: 1, 256, 8>}]} {
    %c0 = arith.constant 0 : index
    %c0_0 = arith.constant 0 : index
    %c0_1 = arith.constant 0 : index
    %0 = vector.load %arg1[%c0, %c0_0, %c0_1] : memref<1x256x3xbf16, #tpu.memory_space<vmem>>, vector<1x256x3xbf16>
    %1 = vector.shape_cast %0 : vector<1x256x3xbf16> to vector<256x3xbf16>
    %cst = arith.constant 0.000000e+00 : bf16
    %2 = vector.broadcast %cst : bf16 to vector<18x18x3xbf16>
    %c0_2 = arith.constant 0 : index
    %c0_3 = arith.constant 0 : index
    %c0_4 = arith.constant 0 : index
    %3 = vector.load %arg7[%c0_2, %c0_3, %c0_4] : memref<18x18x3xbf16, #tpu.memory_space<vmem>>, vector<18x18x3xbf16>
    tpu.vector_store %arg7[%c0_2, %c0_3, %c0_4], %2 {strides = array<i32>} : memref<18x18x3xbf16, #tpu.memory_space<vmem>>, vector<18x18x3xbf16>,
    %4 = vector.extract_strided_slice %1 {offsets = [0, 0], sizes = [16, 3], strides = [1, 1]} : vector<256x3xbf16> to vector<16x3xbf16>
    %c1 = arith.constant 1 : index
    %c1_5 = arith.constant 1 : index
    %c0_6 = arith.constant 0 : index
    %5 = vector.load %arg7[%c1, %c1_5, %c0_6] : memref<18x18x3xbf16, #tpu.memory_space<vmem>>, vector<1x16x3xbf16>
    %6 = vector.shape_cast %5 : vector<1x16x3xbf16> to vector<16x3xbf16>
    %7 = vector.shape_cast %4 : vector<16x3xbf16> to vector<1x16x3xbf16>
    tpu.vector_store %arg7[%c1, %c1_5, %c0_6], %7 {strides = array<i32>} : memref<18x18x3xbf16, #tpu.memory_space<vmem>>, vector<1x16x3xbf16>,
    %8 = vector.extract_strided_slice %1 {offsets = [16, 0], sizes = [16, 3], strides = [1, 1]} : vector<256x3xbf16> to vector<16x3xbf16>
    %c2 = arith.constant 2 : index
    %c1_7 = arith.constant 1 : index
    %c0_8 = arith.constant 0 : index
    %9 = vector.load %arg7[%c2, %c1_7, %c0_8] : memref<18x18x3xbf16, #tpu.memory_space<vmem>>, vector<1x16x3xbf16>
    %10 = vector.shape_cast %9 : vector<1x16x3xbf16> to vector<16x3xbf16>
    %11 = vector.shape_cast %8 : vector<16x3xbf16> to vector<1x16x3xbf16>
    tpu.vector_store %arg7[%c2, %c1_7, %c0_8], %11 {strides = array<i32>} : memref<18x18x3xbf16, #tpu.memory_space<vmem>>, vector<1x16x3xbf16>,
    %12 = vector.extract_strided_slice %1 {offsets = [32, 0], sizes = [16, 3], strides = [1, 1]} : vector<256x3xbf16> to vector<16x3xbf16>
    %c3 = arith.constant 3 : index
    %c1_9 = arith.constant 1 : index
    %c0_10 = arith.constant 0 : index
    %13 = vector.load %arg7[%c3, %c1_9, %c0_10] : memref<18x18x3xbf16, #tpu.memory_space<vmem>>, vector<1x16x3xbf16>
    %14 = vector.shape_cast %13 : vector<1x16x3xbf16> to vector<16x3xbf16>
    %15 = vector.shape_cast %12 : vector<16x3xbf16> to vector<1x16x3xbf16>
    tpu.vector_store %arg7[%c3, %c1_9, %c0_10], %15 {strides = array<i32>} : memref<18x18x3xbf16, #tpu.memory_space<vmem>>, vector<1x16x3xbf16>,
    %16 = vector.extract_strided_slice %1 {offsets = [48, 0], sizes = [16, 3], strides = [1, 1]} : vector<256x3xbf16> to vector<16x3xbf16>
    %c4 = arith.constant 4 : index
    %c1_11 = arith.constant 1 : index
    %c0_12 = arith.constant 0 : index
    %17 = vector.load %arg7[%c4, %c1_11, %c0_12] : memref<18x18x3xbf16, #tpu.memory_space<vmem>>, vector<1x16x3xbf16>
    %18 = vector.shape_cast %17 : vector<1x16x3xbf16> to vector<16x3xbf16>
    %19 = vector.shape_cast %16 : vector<16x3xbf16> to vector<1x16x3xbf16>
    tpu.vector_store %arg7[%c4, %c1_11, %c0_12], %19 {strides = array<i32>} : memref<18x18x3xbf16, #tpu.memory_space<vmem>>, vector<1x16x3xbf16>,
    %20 = vector.extract_strided_slice %1 {offsets = [64, 0], sizes = [16, 3], strides = [1, 1]} : vector<256x3xbf16> to vector<16x3xbf16>
    %c5 = arith.constant 5 : index
    %c1_13 = arith.constant 1 : index
    %c0_14 = arith.constant 0 : index
    %21 = vector.load %arg7[%c5, %c1_13, %c0_14] : memref<18x18x3xbf16, #tpu.memory_space<vmem>>, vector<1x16x3xbf16>
    %22 = vector.shape_cast %21 : vector<1x16x3xbf16> to vector<16x3xbf16>
    %23 = vector.shape_cast %20 : vector<16x3xbf16> to vector<1x16x3xbf16>
    tpu.vector_store %arg7[%c5, %c1_13, %c0_14], %23 {strides = array<i32>} : memref<18x18x3xbf16, #tpu.memory_space<vmem>>, vector<1x16x3xbf16>,
    %24 = vector.extract_strided_slice %1 {offsets = [80, 0], sizes = [16, 3], strides = [1, 1]} : vector<256x3xbf16> to vector<16x3xbf16>
    %c6 = arith.constant 6 : index
    %c1_15 = arith.constant 1 : index
    %c0_16 = arith.constant 0 : index
    %25 = vector.load %arg7[%c6, %c1_15, %c0_16] : memref<18x18x3xbf16, #tpu.memory_space<vmem>>, vector<1x16x3xbf16>
    %26 = vector.shape_cast %25 : vector<1x16x3xbf16> to vector<16x3xbf16>
    %27 = vector.shape_cast %24 : vector<16x3xbf16> to vector<1x16x3xbf16>
    tpu.vector_store %arg7[%c6, %c1_15, %c0_16], %27 {strides = array<i32>} : memref<18x18x3xbf16, #tpu.memory_space<vmem>>, vector<1x16x3xbf16>,
    %28 = vector.extract_strided_slice %1 {offsets = [96, 0], sizes = [16, 3], strides = [1, 1]} : vector<256x3xbf16> to vector<16x3xbf16>
    %c7 = arith.constant 7 : index
    %c1_17 = arith.constant 1 : index
    %c0_18 = arith.constant 0 : index
    %29 = vector.load %arg7[%c7, %c1_17, %c0_18] : memref<18x18x3xbf16, #tpu.memory_space<vmem>>, vector<1x16x3xbf16>
    %30 = vector.shape_cast %29 : vector<1x16x3xbf16> to vector<16x3xbf16>
    %31 = vector.shape_cast %28 : vector<16x3xbf16> to vector<1x16x3xbf16>
    tpu.vector_store %arg7[%c7, %c1_17, %c0_18], %31 {strides = array<i32>} : memref<18x18x3xbf16, #tpu.memory_space<vmem>>, vector<1x16x3xbf16>,
    %32 = vector.extract_strided_slice %1 {offsets = [112, 0], sizes = [16, 3], strides = [1, 1]} : vector<256x3xbf16> to vector<16x3xbf16>
    %c8 = arith.constant 8 : index
    %c1_19 = arith.constant 1 : index
    %c0_20 = arith.constant 0 : index
    %33 = vector.load %arg7[%c8, %c1_19, %c0_20] : memref<18x18x3xbf16, #tpu.memory_space<vmem>>, vector<1x16x3xbf16>
    %34 = vector.shape_cast %33 : vector<1x16x3xbf16> to vector<16x3xbf16>
    %35 = vector.shape_cast %32 : vector<16x3xbf16> to vector<1x16x3xbf16>
    tpu.vector_store %arg7[%c8, %c1_19, %c0_20], %35 {strides = array<i32>} : memref<18x18x3xbf16, #tpu.memory_space<vmem>>, vector<1x16x3xbf16>,
    %36 = vector.extract_strided_slice %1 {offsets = [128, 0], sizes = [16, 3], strides = [1, 1]} : vector<256x3xbf16> to vector<16x3xbf16>
    %c9 = arith.constant 9 : index
    %c1_21 = arith.constant 1 : index
    %c0_22 = arith.constant 0 : index
    %37 = vector.load %arg7[%c9, %c1_21, %c0_22] : memref<18x18x3xbf16, #tpu.memory_space<vmem>>, vector<1x16x3xbf16>
    %38 = vector.shape_cast %37 : vector<1x16x3xbf16> to vector<16x3xbf16>
    %39 = vector.shape_cast %36 : vector<16x3xbf16> to vector<1x16x3xbf16>
    tpu.vector_store %arg7[%c9, %c1_21, %c0_22], %39 {strides = array<i32>} : memref<18x18x3xbf16, #tpu.memory_space<vmem>>, vector<1x16x3xbf16>,
    %40 = vector.extract_strided_slice %1 {offsets = [144, 0], sizes = [16, 3], strides = [1, 1]} : vector<256x3xbf16> to vector<16x3xbf16>
    %c10 = arith.constant 10 : index
    %c1_23 = arith.constant 1 : index
    %c0_24 = arith.constant 0 : index
    %41 = vector.load %arg7[%c10, %c1_23, %c0_24] : memref<18x18x3xbf16, #tpu.memory_space<vmem>>, vector<1x16x3xbf16>
    %42 = vector.shape_cast %41 : vector<1x16x3xbf16> to vector<16x3xbf16>
    %43 = vector.shape_cast %40 : vector<16x3xbf16> to vector<1x16x3xbf16>
    tpu.vector_store %arg7[%c10, %c1_23, %c0_24], %43 {strides = array<i32>} : memref<18x18x3xbf16, #tpu.memory_space<vmem>>, vector<1x16x3xbf16>,
    %44 = vector.extract_strided_slice %1 {offsets = [160, 0], sizes = [16, 3], strides = [1, 1]} : vector<256x3xbf16> to vector<16x3xbf16>
    %c11 = arith.constant 11 : index
    %c1_25 = arith.constant 1 : index
    %c0_26 = arith.constant 0 : index
    %45 = vector.load %arg7[%c11, %c1_25, %c0_26] : memref<18x18x3xbf16, #tpu.memory_space<vmem>>, vector<1x16x3xbf16>
    %46 = vector.shape_cast %45 : vector<1x16x3xbf16> to vector<16x3xbf16>
    %47 = vector.shape_cast %44 : vector<16x3xbf16> to vector<1x16x3xbf16>
    tpu.vector_store %arg7[%c11, %c1_25, %c0_26], %47 {strides = array<i32>} : memref<18x18x3xbf16, #tpu.memory_space<vmem>>, vector<1x16x3xbf16>,
    %48 = vector.extract_strided_slice %1 {offsets = [176, 0], sizes = [16, 3], strides = [1, 1]} : vector<256x3xbf16> to vector<16x3xbf16>
    %c12 = arith.constant 12 : index
    %c1_27 = arith.constant 1 : index
    %c0_28 = arith.constant 0 : index
    %49 = vector.load %arg7[%c12, %c1_27, %c0_28] : memref<18x18x3xbf16, #tpu.memory_space<vmem>>, vector<1x16x3xbf16>
    %50 = vector.shape_cast %49 : vector<1x16x3xbf16> to vector<16x3xbf16>
    %51 = vector.shape_cast %48 : vector<16x3xbf16> to vector<1x16x3xbf16>
    tpu.vector_store %arg7[%c12, %c1_27, %c0_28], %51 {strides = array<i32>} : memref<18x18x3xbf16, #tpu.memory_space<vmem>>, vector<1x16x3xbf16>,
    %52 = vector.extract_strided_slice %1 {offsets = [192, 0], sizes = [16, 3], strides = [1, 1]} : vector<256x3xbf16> to vector<16x3xbf16>
    %c13 = arith.constant 13 : index
    %c1_29 = arith.constant 1 : index
    %c0_30 = arith.constant 0 : index
    %53 = vector.load %arg7[%c13, %c1_29, %c0_30] : memref<18x18x3xbf16, #tpu.memory_space<vmem>>, vector<1x16x3xbf16>
    %54 = vector.shape_cast %53 : vector<1x16x3xbf16> to vector<16x3xbf16>
    %55 = vector.shape_cast %52 : vector<16x3xbf16> to vector<1x16x3xbf16>
    tpu.vector_store %arg7[%c13, %c1_29, %c0_30], %55 {strides = array<i32>} : memref<18x18x3xbf16, #tpu.memory_space<vmem>>, vector<1x16x3xbf16>,
    %56 = vector.extract_strided_slice %1 {offsets = [208, 0], sizes = [16, 3], strides = [1, 1]} : vector<256x3xbf16> to vector<16x3xbf16>
    %c14 = arith.constant 14 : index
    %c1_31 = arith.constant 1 : index
    %c0_32 = arith.constant 0 : index
    %57 = vector.load %arg7[%c14, %c1_31, %c0_32] : memref<18x18x3xbf16, #tpu.memory_space<vmem>>, vector<1x16x3xbf16>
    %58 = vector.shape_cast %57 : vector<1x16x3xbf16> to vector<16x3xbf16>
    %59 = vector.shape_cast %56 : vector<16x3xbf16> to vector<1x16x3xbf16>
    tpu.vector_store %arg7[%c14, %c1_31, %c0_32], %59 {strides = array<i32>} : memref<18x18x3xbf16, #tpu.memory_space<vmem>>, vector<1x16x3xbf16>,
    %60 = vector.extract_strided_slice %1 {offsets = [224, 0], sizes = [16, 3], strides = [1, 1]} : vector<256x3xbf16> to vector<16x3xbf16>
    %c15 = arith.constant 15 : index
    %c1_33 = arith.constant 1 : index
    %c0_34 = arith.constant 0 : index
    %61 = vector.load %arg7[%c15, %c1_33, %c0_34] : memref<18x18x3xbf16, #tpu.memory_space<vmem>>, vector<1x16x3xbf16>
    %62 = vector.shape_cast %61 : vector<1x16x3xbf16> to vector<16x3xbf16>
    %63 = vector.shape_cast %60 : vector<16x3xbf16> to vector<1x16x3xbf16>
    tpu.vector_store %arg7[%c15, %c1_33, %c0_34], %63 {strides = array<i32>} : memref<18x18x3xbf16, #tpu.memory_space<vmem>>, vector<1x16x3xbf16>,
    %64 = vector.extract_strided_slice %1 {offsets = [240, 0], sizes = [16, 3], strides = [1, 1]} : vector<256x3xbf16> to vector<16x3xbf16>
    %c16 = arith.constant 16 : index
    %c1_35 = arith.constant 1 : index
    %c0_36 = arith.constant 0 : index
    %65 = vector.load %arg7[%c16, %c1_35, %c0_36] : memref<18x18x3xbf16, #tpu.memory_space<vmem>>, vector<1x16x3xbf16>
    %66 = vector.shape_cast %65 : vector<1x16x3xbf16> to vector<16x3xbf16>
    %67 = vector.shape_cast %64 : vector<16x3xbf16> to vector<1x16x3xbf16>
    tpu.vector_store %arg7[%c16, %c1_35, %c0_36], %67 {strides = array<i32>} : memref<18x18x3xbf16, #tpu.memory_space<vmem>>, vector<1x16x3xbf16>,
    %c0_37 = arith.constant 0 : index
    %c0_38 = arith.constant 0 : index
    %c0_39 = arith.constant 0 : index
    %68 = vector.load %arg7[%c0_37, %c0_38, %c0_39] : memref<18x18x3xbf16, #tpu.memory_space<vmem>>, vector<1x18x3xbf16>
    %69 = vector.shape_cast %68 : vector<1x18x3xbf16> to vector<18x3xbf16>
    %70 = vector.extract_strided_slice %69 {offsets = [0, 0], sizes = [16, 3], strides = [1, 1]} : vector<18x3xbf16> to vector<16x3xbf16>
    %71 = vector.extract_strided_slice %69 {offsets = [1, 0], sizes = [16, 3], strides = [1, 1]} : vector<18x3xbf16> to vector<16x3xbf16>
    %72 = vector.extract_strided_slice %69 {offsets = [2, 0], sizes = [16, 3], strides = [1, 1]} : vector<18x3xbf16> to vector<16x3xbf16>
    %c1_40 = arith.constant 1 : index
    %c0_41 = arith.constant 0 : index
    %c0_42 = arith.constant 0 : index
    %73 = vector.load %arg7[%c1_40, %c0_41, %c0_42] : memref<18x18x3xbf16, #tpu.memory_space<vmem>>, vector<1x18x3xbf16>
    %74 = vector.shape_cast %73 : vector<1x18x3xbf16> to vector<18x3xbf16>
    %75 = vector.extract_strided_slice %74 {offsets = [0, 0], sizes = [16, 3], strides = [1, 1]} : vector<18x3xbf16> to vector<16x3xbf16>
    %76 = vector.extract_strided_slice %74 {offsets = [1, 0], sizes = [16, 3], strides = [1, 1]} : vector<18x3xbf16> to vector<16x3xbf16>
    %77 = vector.extract_strided_slice %74 {offsets = [2, 0], sizes = [16, 3], strides = [1, 1]} : vector<18x3xbf16> to vector<16x3xbf16>
    %c2_43 = arith.constant 2 : index
    %c0_44 = arith.constant 0 : index
    %c0_45 = arith.constant 0 : index
    %78 = vector.load %arg7[%c2_43, %c0_44, %c0_45] : memref<18x18x3xbf16, #tpu.memory_space<vmem>>, vector<1x18x3xbf16>
    %79 = vector.shape_cast %78 : vector<1x18x3xbf16> to vector<18x3xbf16>
    %80 = vector.extract_strided_slice %79 {offsets = [0, 0], sizes = [16, 3], strides = [1, 1]} : vector<18x3xbf16> to vector<16x3xbf16>
    %81 = vector.extract_strided_slice %79 {offsets = [1, 0], sizes = [16, 3], strides = [1, 1]} : vector<18x3xbf16> to vector<16x3xbf16>
    %82 = vector.extract_strided_slice %79 {offsets = [2, 0], sizes = [16, 3], strides = [1, 1]} : vector<18x3xbf16> to vector<16x3xbf16>
    %83 = tpu.concatenate %70, %71, %72, %75, %76, %77, %80, %81, %82 in 1 : vector<16x3xbf16>, vector<16x3xbf16>, vector<16x3xbf16>, vector<16x3xbf16>, vector<16x3xbf16>, vector<16x3xbf16>, vector<16x3xbf16>, vector<16x3xbf16>, vector<16x3xbf16> -> vector<16x27xbf16>
    %c0_46 = arith.constant 0 : index
    %c0_47 = arith.constant 0 : index
    %84 = vector.load %arg8[%c0_46, %c0_47] : memref<256x27xbf16, #tpu.memory_space<vmem>>, vector<16x27xbf16>
    tpu.vector_store %arg8[%c0_46, %c0_47], %83 {strides = array<i32>} : memref<256x27xbf16, #tpu.memory_space<vmem>>, vector<16x27xbf16>,
    %c1_48 = arith.constant 1 : index
    %c0_49 = arith.constant 0 : index
    %c0_50 = arith.constant 0 : index
    %85 = vector.load %arg7[%c1_48, %c0_49, %c0_50] : memref<18x18x3xbf16, #tpu.memory_space<vmem>>, vector<1x18x3xbf16>
    %86 = vector.shape_cast %85 : vector<1x18x3xbf16> to vector<18x3xbf16>
    %87 = vector.extract_strided_slice %86 {offsets = [0, 0], sizes = [16, 3], strides = [1, 1]} : vector<18x3xbf16> to vector<16x3xbf16>
    %88 = vector.extract_strided_slice %86 {offsets = [1, 0], sizes = [16, 3], strides = [1, 1]} : vector<18x3xbf16> to vector<16x3xbf16>
    %89 = vector.extract_strided_slice %86 {offsets = [2, 0], sizes = [16, 3], strides = [1, 1]} : vector<18x3xbf16> to vector<16x3xbf16>
    %c2_51 = arith.constant 2 : index
    %c0_52 = arith.constant 0 : index
    %c0_53 = arith.constant 0 : index
    %90 = vector.load %arg7[%c2_51, %c0_52, %c0_53] : memref<18x18x3xbf16, #tpu.memory_space<vmem>>, vector<1x18x3xbf16>
    %91 = vector.shape_cast %90 : vector<1x18x3xbf16> to vector<18x3xbf16>
    %92 = vector.extract_strided_slice %91 {offsets = [0, 0], sizes = [16, 3], strides = [1, 1]} : vector<18x3xbf16> to vector<16x3xbf16>
    %93 = vector.extract_strided_slice %91 {offsets = [1, 0], sizes = [16, 3], strides = [1, 1]} : vector<18x3xbf16> to vector<16x3xbf16>
    %94 = vector.extract_strided_slice %91 {offsets = [2, 0], sizes = [16, 3], strides = [1, 1]} : vector<18x3xbf16> to vector<16x3xbf16>
    %c3_54 = arith.constant 3 : index
    %c0_55 = arith.constant 0 : index
    %c0_56 = arith.constant 0 : index
    %95 = vector.load %arg7[%c3_54, %c0_55, %c0_56] : memref<18x18x3xbf16, #tpu.memory_space<vmem>>, vector<1x18x3xbf16>
    %96 = vector.shape_cast %95 : vector<1x18x3xbf16> to vector<18x3xbf16>
    %97 = vector.extract_strided_slice %96 {offsets = [0, 0], sizes = [16, 3], strides = [1, 1]} : vector<18x3xbf16> to vector<16x3xbf16>
    %98 = vector.extract_strided_slice %96 {offsets = [1, 0], sizes = [16, 3], strides = [1, 1]} : vector<18x3xbf16> to vector<16x3xbf16>
    %99 = vector.extract_strided_slice %96 {offsets = [2, 0], sizes = [16, 3], strides = [1, 1]} : vector<18x3xbf16> to vector<16x3xbf16>
    %100 = tpu.concatenate %87, %88, %89, %92, %93, %94, %97, %98, %99 in 1 : vector<16x3xbf16>, vector<16x3xbf16>, vector<16x3xbf16>, vector<16x3xbf16>, vector<16x3xbf16>, vector<16x3xbf16>, vector<16x3xbf16>, vector<16x3xbf16>, vector<16x3xbf16> -> vector<16x27xbf16>
    %c16_57 = arith.constant 16 : index
    %c0_58 = arith.constant 0 : index
    %101 = vector.load %arg8[%c16_57, %c0_58] : memref<256x27xbf16, #tpu.memory_space<vmem>>, vector<16x27xbf16>
    tpu.vector_store %arg8[%c16_57, %c0_58], %100 {strides = array<i32>} : memref<256x27xbf16, #tpu.memory_space<vmem>>, vector<16x27xbf16>,
    %c2_59 = arith.constant 2 : index
    %c0_60 = arith.constant 0 : index
    %c0_61 = arith.constant 0 : index
    %102 = vector.load %arg7[%c2_59, %c0_60, %c0_61] : memref<18x18x3xbf16, #tpu.memory_space<vmem>>, vector<1x18x3xbf16>
    %103 = vector.shape_cast %102 : vector<1x18x3xbf16> to vector<18x3xbf16>
    %104 = vector.extract_strided_slice %103 {offsets = [0, 0], sizes = [16, 3], strides = [1, 1]} : vector<18x3xbf16> to vector<16x3xbf16>
    %105 = vector.extract_strided_slice %103 {offsets = [1, 0], sizes = [16, 3], strides = [1, 1]} : vector<18x3xbf16> to vector<16x3xbf16>
    %106 = vector.extract_strided_slice %103 {offsets = [2, 0], sizes = [16, 3], strides = [1, 1]} : vector<18x3xbf16> to vector<16x3xbf16>
    %c3_62 = arith.constant 3 : index
    %c0_63 = arith.constant 0 : index
    %c0_64 = arith.constant 0 : index
    %107 = vector.load %arg7[%c3_62, %c0_63, %c0_64] : memref<18x18x3xbf16, #tpu.memory_space<vmem>>, vector<1x18x3xbf16>
    %108 = vector.shape_cast %107 : vector<1x18x3xbf16> to vector<18x3xbf16>
    %109 = vector.extract_strided_slice %108 {offsets = [0, 0], sizes = [16, 3], strides = [1, 1]} : vector<18x3xbf16> to vector<16x3xbf16>
    %110 = vector.extract_strided_slice %108 {offsets = [1, 0], sizes = [16, 3], strides = [1, 1]} : vector<18x3xbf16> to vector<16x3xbf16>
    %111 = vector.extract_strided_slice %108 {offsets = [2, 0], sizes = [16, 3], strides = [1, 1]} : vector<18x3xbf16> to vector<16x3xbf16>
    %c4_65 = arith.constant 4 : index
    %c0_66 = arith.constant 0 : index
    %c0_67 = arith.constant 0 : index
    %112 = vector.load %arg7[%c4_65, %c0_66, %c0_67] : memref<18x18x3xbf16, #tpu.memory_space<vmem>>, vector<1x18x3xbf16>
    %113 = vector.shape_cast %112 : vector<1x18x3xbf16> to vector<18x3xbf16>
    %114 = vector.extract_strided_slice %113 {offsets = [0, 0], sizes = [16, 3], strides = [1, 1]} : vector<18x3xbf16> to vector<16x3xbf16>
    %115 = vector.extract_strided_slice %113 {offsets = [1, 0], sizes = [16, 3], strides = [1, 1]} : vector<18x3xbf16> to vector<16x3xbf16>
    %116 = vector.extract_strided_slice %113 {offsets = [2, 0], sizes = [16, 3], strides = [1, 1]} : vector<18x3xbf16> to vector<16x3xbf16>
    %117 = tpu.concatenate %104, %105, %106, %109, %110, %111, %114, %115, %116 in 1 : vector<16x3xbf16>, vector<16x3xbf16>, vector<16x3xbf16>, vector<16x3xbf16>, vector<16x3xbf16>, vector<16x3xbf16>, vector<16x3xbf16>, vector<16x3xbf16>, vector<16x3xbf16> -> vector<16x27xbf16>
    %c32 = arith.constant 32 : index
    %c0_68 = arith.constant 0 : index
    %118 = vector.load %arg8[%c32, %c0_68] : memref<256x27xbf16, #tpu.memory_space<vmem>>, vector<16x27xbf16>
    tpu.vector_store %arg8[%c32, %c0_68], %117 {strides = array<i32>} : memref<256x27xbf16, #tpu.memory_space<vmem>>, vector<16x27xbf16>,
    %c3_69 = arith.constant 3 : index
    %c0_70 = arith.constant 0 : index
    %c0_71 = arith.constant 0 : index
    %119 = vector.load %arg7[%c3_69, %c0_70, %c0_71] : memref<18x18x3xbf16, #tpu.memory_space<vmem>>, vector<1x18x3xbf16>
    %120 = vector.shape_cast %119 : vector<1x18x3xbf16> to vector<18x3xbf16>
    %121 = vector.extract_strided_slice %120 {offsets = [0, 0], sizes = [16, 3], strides = [1, 1]} : vector<18x3xbf16> to vector<16x3xbf16>
    %122 = vector.extract_strided_slice %120 {offsets = [1, 0], sizes = [16, 3], strides = [1, 1]} : vector<18x3xbf16> to vector<16x3xbf16>
    %123 = vector.extract_strided_slice %120 {offsets = [2, 0], sizes = [16, 3], strides = [1, 1]} : vector<18x3xbf16> to vector<16x3xbf16>
    %c4_72 = arith.constant 4 : index
    %c0_73 = arith.constant 0 : index
    %c0_74 = arith.constant 0 : index
    %124 = vector.load %arg7[%c4_72, %c0_73, %c0_74] : memref<18x18x3xbf16, #tpu.memory_space<vmem>>, vector<1x18x3xbf16>
    %125 = vector.shape_cast %124 : vector<1x18x3xbf16> to vector<18x3xbf16>
    %126 = vector.extract_strided_slice %125 {offsets = [0, 0], sizes = [16, 3], strides = [1, 1]} : vector<18x3xbf16> to vector<16x3xbf16>
    %127 = vector.extract_strided_slice %125 {offsets = [1, 0], sizes = [16, 3], strides = [1, 1]} : vector<18x3xbf16> to vector<16x3xbf16>
    %128 = vector.extract_strided_slice %125 {offsets = [2, 0], sizes = [16, 3], strides = [1, 1]} : vector<18x3xbf16> to vector<16x3xbf16>
    %c5_75 = arith.constant 5 : index
    %c0_76 = arith.constant 0 : index
    %c0_77 = arith.constant 0 : index
    %129 = vector.load %arg7[%c5_75, %c0_76, %c0_77] : memref<18x18x3xbf16, #tpu.memory_space<vmem>>, vector<1x18x3xbf16>
    %130 = vector.shape_cast %129 : vector<1x18x3xbf16> to vector<18x3xbf16>
    %131 = vector.extract_strided_slice %130 {offsets = [0, 0], sizes = [16, 3], strides = [1, 1]} : vector<18x3xbf16> to vector<16x3xbf16>
    %132 = vector.extract_strided_slice %130 {offsets = [1, 0], sizes = [16, 3], strides = [1, 1]} : vector<18x3xbf16> to vector<16x3xbf16>
    %133 = vector.extract_strided_slice %130 {offsets = [2, 0], sizes = [16, 3], strides = [1, 1]} : vector<18x3xbf16> to vector<16x3xbf16>
    %134 = tpu.concatenate %121, %122, %123, %126, %127, %128, %131, %132, %133 in 1 : vector<16x3xbf16>, vector<16x3xbf16>, vector<16x3xbf16>, vector<16x3xbf16>, vector<16x3xbf16>, vector<16x3xbf16>, vector<16x3xbf16>, vector<16x3xbf16>, vector<16x3xbf16> -> vector<16x27xbf16>
    %c48 = arith.constant 48 : index
    %c0_78 = arith.constant 0 : index
    %135 = vector.load %arg8[%c48, %c0_78] : memref<256x27xbf16, #tpu.memory_space<vmem>>, vector<16x27xbf16>
    tpu.vector_store %arg8[%c48, %c0_78], %134 {strides = array<i32>} : memref<256x27xbf16, #tpu.memory_space<vmem>>, vector<16x27xbf16>,
    %c4_79 = arith.constant 4 : index
    %c0_80 = arith.constant 0 : index
    %c0_81 = arith.constant 0 : index
    %136 = vector.load %arg7[%c4_79, %c0_80, %c0_81] : memref<18x18x3xbf16, #tpu.memory_space<vmem>>, vector<1x18x3xbf16>
    %137 = vector.shape_cast %136 : vector<1x18x3xbf16> to vector<18x3xbf16>
    %138 = vector.extract_strided_slice %137 {offsets = [0, 0], sizes = [16, 3], strides = [1, 1]} : vector<18x3xbf16> to vector<16x3xbf16>
    %139 = vector.extract_strided_slice %137 {offsets = [1, 0], sizes = [16, 3], strides = [1, 1]} : vector<18x3xbf16> to vector<16x3xbf16>
    %140 = vector.extract_strided_slice %137 {offsets = [2, 0], sizes = [16, 3], strides = [1, 1]} : vector<18x3xbf16> to vector<16x3xbf16>
    %c5_82 = arith.constant 5 : index
    %c0_83 = arith.constant 0 : index
    %c0_84 = arith.constant 0 : index
    %141 = vector.load %arg7[%c5_82, %c0_83, %c0_84] : memref<18x18x3xbf16, #tpu.memory_space<vmem>>, vector<1x18x3xbf16>
    %142 = vector.shape_cast %141 : vector<1x18x3xbf16> to vector<18x3xbf16>
    %143 = vector.extract_strided_slice %142 {offsets = [0, 0], sizes = [16, 3], strides = [1, 1]} : vector<18x3xbf16> to vector<16x3xbf16>
    %144 = vector.extract_strided_slice %142 {offsets = [1, 0], sizes = [16, 3], strides = [1, 1]} : vector<18x3xbf16> to vector<16x3xbf16>
    %145 = vector.extract_strided_slice %142 {offsets = [2, 0], sizes = [16, 3], strides = [1, 1]} : vector<18x3xbf16> to vector<16x3xbf16>
    %c6_85 = arith.constant 6 : index
    %c0_86 = arith.constant 0 : index
    %c0_87 = arith.constant 0 : index
    %146 = vector.load %arg7[%c6_85, %c0_86, %c0_87] : memref<18x18x3xbf16, #tpu.memory_space<vmem>>, vector<1x18x3xbf16>
    %147 = vector.shape_cast %146 : vector<1x18x3xbf16> to vector<18x3xbf16>
    %148 = vector.extract_strided_slice %147 {offsets = [0, 0], sizes = [16, 3], strides = [1, 1]} : vector<18x3xbf16> to vector<16x3xbf16>
    %149 = vector.extract_strided_slice %147 {offsets = [1, 0], sizes = [16, 3], strides = [1, 1]} : vector<18x3xbf16> to vector<16x3xbf16>
    %150 = vector.extract_strided_slice %147 {offsets = [2, 0], sizes = [16, 3], strides = [1, 1]} : vector<18x3xbf16> to vector<16x3xbf16>
    %151 = tpu.concatenate %138, %139, %140, %143, %144, %145, %148, %149, %150 in 1 : vector<16x3xbf16>, vector<16x3xbf16>, vector<16x3xbf16>, vector<16x3xbf16>, vector<16x3xbf16>, vector<16x3xbf16>, vector<16x3xbf16>, vector<16x3xbf16>, vector<16x3xbf16> -> vector<16x27xbf16>
    %c64 = arith.constant 64 : index
    %c0_88 = arith.constant 0 : index
    %152 = vector.load %arg8[%c64, %c0_88] : memref<256x27xbf16, #tpu.memory_space<vmem>>, vector<16x27xbf16>
    tpu.vector_store %arg8[%c64, %c0_88], %151 {strides = array<i32>} : memref<256x27xbf16, #tpu.memory_space<vmem>>, vector<16x27xbf16>,
    %c5_89 = arith.constant 5 : index
    %c0_90 = arith.constant 0 : index
    %c0_91 = arith.constant 0 : index
    %153 = vector.load %arg7[%c5_89, %c0_90, %c0_91] : memref<18x18x3xbf16, #tpu.memory_space<vmem>>, vector<1x18x3xbf16>
    %154 = vector.shape_cast %153 : vector<1x18x3xbf16> to vector<18x3xbf16>
    %155 = vector.extract_strided_slice %154 {offsets = [0, 0], sizes = [16, 3], strides = [1, 1]} : vector<18x3xbf16> to vector<16x3xbf16>
    %156 = vector.extract_strided_slice %154 {offsets = [1, 0], sizes = [16, 3], strides = [1, 1]} : vector<18x3xbf16> to vector<16x3xbf16>
    %157 = vector.extract_strided_slice %154 {offsets = [2, 0], sizes = [16, 3], strides = [1, 1]} : vector<18x3xbf16> to vector<16x3xbf16>
    %c6_92 = arith.constant 6 : index
    %c0_93 = arith.constant 0 : index
    %c0_94 = arith.constant 0 : index
    %158 = vector.load %arg7[%c6_92, %c0_93, %c0_94] : memref<18x18x3xbf16, #tpu.memory_space<vmem>>, vector<1x18x3xbf16>
    %159 = vector.shape_cast %158 : vector<1x18x3xbf16> to vector<18x3xbf16>
    %160 = vector.extract_strided_slice %159 {offsets = [0, 0], sizes = [16, 3], strides = [1, 1]} : vector<18x3xbf16> to vector<16x3xbf16>
    %161 = vector.extract_strided_slice %159 {offsets = [1, 0], sizes = [16, 3], strides = [1, 1]} : vector<18x3xbf16> to vector<16x3xbf16>
    %162 = vector.extract_strided_slice %159 {offsets = [2, 0], sizes = [16, 3], strides = [1, 1]} : vector<18x3xbf16> to vector<16x3xbf16>
    %c7_95 = arith.constant 7 : index
    %c0_96 = arith.constant 0 : index
    %c0_97 = arith.constant 0 : index
    %163 = vector.load %arg7[%c7_95, %c0_96, %c0_97] : memref<18x18x3xbf16, #tpu.memory_space<vmem>>, vector<1x18x3xbf16>
    %164 = vector.shape_cast %163 : vector<1x18x3xbf16> to vector<18x3xbf16>
    %165 = vector.extract_strided_slice %164 {offsets = [0, 0], sizes = [16, 3], strides = [1, 1]} : vector<18x3xbf16> to vector<16x3xbf16>
    %166 = vector.extract_strided_slice %164 {offsets = [1, 0], sizes = [16, 3], strides = [1, 1]} : vector<18x3xbf16> to vector<16x3xbf16>
    %167 = vector.extract_strided_slice %164 {offsets = [2, 0], sizes = [16, 3], strides = [1, 1]} : vector<18x3xbf16> to vector<16x3xbf16>
    %168 = tpu.concatenate %155, %156, %157, %160, %161, %162, %165, %166, %167 in 1 : vector<16x3xbf16>, vector<16x3xbf16>, vector<16x3xbf16>, vector<16x3xbf16>, vector<16x3xbf16>, vector<16x3xbf16>, vector<16x3xbf16>, vector<16x3xbf16>, vector<16x3xbf16> -> vector<16x27xbf16>
    %c80 = arith.constant 80 : index
    %c0_98 = arith.constant 0 : index
    %169 = vector.load %arg8[%c80, %c0_98] : memref<256x27xbf16, #tpu.memory_space<vmem>>, vector<16x27xbf16>
    tpu.vector_store %arg8[%c80, %c0_98], %168 {strides = array<i32>} : memref<256x27xbf16, #tpu.memory_space<vmem>>, vector<16x27xbf16>,
    %c6_99 = arith.constant 6 : index
    %c0_100 = arith.constant 0 : index
    %c0_101 = arith.constant 0 : index
    %170 = vector.load %arg7[%c6_99, %c0_100, %c0_101] : memref<18x18x3xbf16, #tpu.memory_space<vmem>>, vector<1x18x3xbf16>
    %171 = vector.shape_cast %170 : vector<1x18x3xbf16> to vector<18x3xbf16>
    %172 = vector.extract_strided_slice %171 {offsets = [0, 0], sizes = [16, 3], strides = [1, 1]} : vector<18x3xbf16> to vector<16x3xbf16>
    %173 = vector.extract_strided_slice %171 {offsets = [1, 0], sizes = [16, 3], strides = [1, 1]} : vector<18x3xbf16> to vector<16x3xbf16>
    %174 = vector.extract_strided_slice %171 {offsets = [2, 0], sizes = [16, 3], strides = [1, 1]} : vector<18x3xbf16> to vector<16x3xbf16>
    %c7_102 = arith.constant 7 : index
    %c0_103 = arith.constant 0 : index
    %c0_104 = arith.constant 0 : index
    %175 = vector.load %arg7[%c7_102, %c0_103, %c0_104] : memref<18x18x3xbf16, #tpu.memory_space<vmem>>, vector<1x18x3xbf16>
    %176 = vector.shape_cast %175 : vector<1x18x3xbf16> to vector<18x3xbf16>
    %177 = vector.extract_strided_slice %176 {offsets = [0, 0], sizes = [16, 3], strides = [1, 1]} : vector<18x3xbf16> to vector<16x3xbf16>
    %178 = vector.extract_strided_slice %176 {offsets = [1, 0], sizes = [16, 3], strides = [1, 1]} : vector<18x3xbf16> to vector<16x3xbf16>
    %179 = vector.extract_strided_slice %176 {offsets = [2, 0], sizes = [16, 3], strides = [1, 1]} : vector<18x3xbf16> to vector<16x3xbf16>
    %c8_105 = arith.constant 8 : index
    %c0_106 = arith.constant 0 : index
    %c0_107 = arith.constant 0 : index
    %180 = vector.load %arg7[%c8_105, %c0_106, %c0_107] : memref<18x18x3xbf16, #tpu.memory_space<vmem>>, vector<1x18x3xbf16>
    %181 = vector.shape_cast %180 : vector<1x18x3xbf16> to vector<18x3xbf16>
    %182 = vector.extract_strided_slice %181 {offsets = [0, 0], sizes = [16, 3], strides = [1, 1]} : vector<18x3xbf16> to vector<16x3xbf16>
    %183 = vector.extract_strided_slice %181 {offsets = [1, 0], sizes = [16, 3], strides = [1, 1]} : vector<18x3xbf16> to vector<16x3xbf16>
    %184 = vector.extract_strided_slice %181 {offsets = [2, 0], sizes = [16, 3], strides = [1, 1]} : vector<18x3xbf16> to vector<16x3xbf16>
    %185 = tpu.concatenate %172, %173, %174, %177, %178, %179, %182, %183, %184 in 1 : vector<16x3xbf16>, vector<16x3xbf16>, vector<16x3xbf16>, vector<16x3xbf16>, vector<16x3xbf16>, vector<16x3xbf16>, vector<16x3xbf16>, vector<16x3xbf16>, vector<16x3xbf16> -> vector<16x27xbf16>
    %c96 = arith.constant 96 : index
    %c0_108 = arith.constant 0 : index
    %186 = vector.load %arg8[%c96, %c0_108] : memref<256x27xbf16, #tpu.memory_space<vmem>>, vector<16x27xbf16>
    tpu.vector_store %arg8[%c96, %c0_108], %185 {strides = array<i32>} : memref<256x27xbf16, #tpu.memory_space<vmem>>, vector<16x27xbf16>,
    %c7_109 = arith.constant 7 : index
    %c0_110 = arith.constant 0 : index
    %c0_111 = arith.constant 0 : index
    %187 = vector.load %arg7[%c7_109, %c0_110, %c0_111] : memref<18x18x3xbf16, #tpu.memory_space<vmem>>, vector<1x18x3xbf16>
    %188 = vector.shape_cast %187 : vector<1x18x3xbf16> to vector<18x3xbf16>
    %189 = vector.extract_strided_slice %188 {offsets = [0, 0], sizes = [16, 3], strides = [1, 1]} : vector<18x3xbf16> to vector<16x3xbf16>
    %190 = vector.extract_strided_slice %188 {offsets = [1, 0], sizes = [16, 3], strides = [1, 1]} : vector<18x3xbf16> to vector<16x3xbf16>
    %191 = vector.extract_strided_slice %188 {offsets = [2, 0], sizes = [16, 3], strides = [1, 1]} : vector<18x3xbf16> to vector<16x3xbf16>
    %c8_112 = arith.constant 8 : index
    %c0_113 = arith.constant 0 : index
    %c0_114 = arith.constant 0 : index
    %192 = vector.load %arg7[%c8_112, %c0_113, %c0_114] : memref<18x18x3xbf16, #tpu.memory_space<vmem>>, vector<1x18x3xbf16>
    %193 = vector.shape_cast %192 : vector<1x18x3xbf16> to vector<18x3xbf16>
    %194 = vector.extract_strided_slice %193 {offsets = [0, 0], sizes = [16, 3], strides = [1, 1]} : vector<18x3xbf16> to vector<16x3xbf16>
    %195 = vector.extract_strided_slice %193 {offsets = [1, 0], sizes = [16, 3], strides = [1, 1]} : vector<18x3xbf16> to vector<16x3xbf16>
    %196 = vector.extract_strided_slice %193 {offsets = [2, 0], sizes = [16, 3], strides = [1, 1]} : vector<18x3xbf16> to vector<16x3xbf16>
    %c9_115 = arith.constant 9 : index
    %c0_116 = arith.constant 0 : index
    %c0_117 = arith.constant 0 : index
    %197 = vector.load %arg7[%c9_115, %c0_116, %c0_117] : memref<18x18x3xbf16, #tpu.memory_space<vmem>>, vector<1x18x3xbf16>
    %198 = vector.shape_cast %197 : vector<1x18x3xbf16> to vector<18x3xbf16>
    %199 = vector.extract_strided_slice %198 {offsets = [0, 0], sizes = [16, 3], strides = [1, 1]} : vector<18x3xbf16> to vector<16x3xbf16>
    %200 = vector.extract_strided_slice %198 {offsets = [1, 0], sizes = [16, 3], strides = [1, 1]} : vector<18x3xbf16> to vector<16x3xbf16>
    %201 = vector.extract_strided_slice %198 {offsets = [2, 0], sizes = [16, 3], strides = [1, 1]} : vector<18x3xbf16> to vector<16x3xbf16>
    %202 = tpu.concatenate %189, %190, %191, %194, %195, %196, %199, %200, %201 in 1 : vector<16x3xbf16>, vector<16x3xbf16>, vector<16x3xbf16>, vector<16x3xbf16>, vector<16x3xbf16>, vector<16x3xbf16>, vector<16x3xbf16>, vector<16x3xbf16>, vector<16x3xbf16> -> vector<16x27xbf16>
    %c112 = arith.constant 112 : index
    %c0_118 = arith.constant 0 : index
    %203 = vector.load %arg8[%c112, %c0_118] : memref<256x27xbf16, #tpu.memory_space<vmem>>, vector<16x27xbf16>
    tpu.vector_store %arg8[%c112, %c0_118], %202 {strides = array<i32>} : memref<256x27xbf16, #tpu.memory_space<vmem>>, vector<16x27xbf16>,
    %c8_119 = arith.constant 8 : index
    %c0_120 = arith.constant 0 : index
    %c0_121 = arith.constant 0 : index
    %204 = vector.load %arg7[%c8_119, %c0_120, %c0_121] : memref<18x18x3xbf16, #tpu.memory_space<vmem>>, vector<1x18x3xbf16>
    %205 = vector.shape_cast %204 : vector<1x18x3xbf16> to vector<18x3xbf16>
    %206 = vector.extract_strided_slice %205 {offsets = [0, 0], sizes = [16, 3], strides = [1, 1]} : vector<18x3xbf16> to vector<16x3xbf16>
    %207 = vector.extract_strided_slice %205 {offsets = [1, 0], sizes = [16, 3], strides = [1, 1]} : vector<18x3xbf16> to vector<16x3xbf16>
    %208 = vector.extract_strided_slice %205 {offsets = [2, 0], sizes = [16, 3], strides = [1, 1]} : vector<18x3xbf16> to vector<16x3xbf16>
    %c9_122 = arith.constant 9 : index
    %c0_123 = arith.constant 0 : index
    %c0_124 = arith.constant 0 : index
    %209 = vector.load %arg7[%c9_122, %c0_123, %c0_124] : memref<18x18x3xbf16, #tpu.memory_space<vmem>>, vector<1x18x3xbf16>
    %210 = vector.shape_cast %209 : vector<1x18x3xbf16> to vector<18x3xbf16>
    %211 = vector.extract_strided_slice %210 {offsets = [0, 0], sizes = [16, 3], strides = [1, 1]} : vector<18x3xbf16> to vector<16x3xbf16>
    %212 = vector.extract_strided_slice %210 {offsets = [1, 0], sizes = [16, 3], strides = [1, 1]} : vector<18x3xbf16> to vector<16x3xbf16>
    %213 = vector.extract_strided_slice %210 {offsets = [2, 0], sizes = [16, 3], strides = [1, 1]} : vector<18x3xbf16> to vector<16x3xbf16>
    %c10_125 = arith.constant 10 : index
    %c0_126 = arith.constant 0 : index
    %c0_127 = arith.constant 0 : index
    %214 = vector.load %arg7[%c10_125, %c0_126, %c0_127] : memref<18x18x3xbf16, #tpu.memory_space<vmem>>, vector<1x18x3xbf16>
    %215 = vector.shape_cast %214 : vector<1x18x3xbf16> to vector<18x3xbf16>
    %216 = vector.extract_strided_slice %215 {offsets = [0, 0], sizes = [16, 3], strides = [1, 1]} : vector<18x3xbf16> to vector<16x3xbf16>
    %217 = vector.extract_strided_slice %215 {offsets = [1, 0], sizes = [16, 3], strides = [1, 1]} : vector<18x3xbf16> to vector<16x3xbf16>
    %218 = vector.extract_strided_slice %215 {offsets = [2, 0], sizes = [16, 3], strides = [1, 1]} : vector<18x3xbf16> to vector<16x3xbf16>
    %219 = tpu.concatenate %206, %207, %208, %211, %212, %213, %216, %217, %218 in 1 : vector<16x3xbf16>, vector<16x3xbf16>, vector<16x3xbf16>, vector<16x3xbf16>, vector<16x3xbf16>, vector<16x3xbf16>, vector<16x3xbf16>, vector<16x3xbf16>, vector<16x3xbf16> -> vector<16x27xbf16>
    %c128 = arith.constant 128 : index
    %c0_128 = arith.constant 0 : index
    %220 = vector.load %arg8[%c128, %c0_128] : memref<256x27xbf16, #tpu.memory_space<vmem>>, vector<16x27xbf16>
    tpu.vector_store %arg8[%c128, %c0_128], %219 {strides = array<i32>} : memref<256x27xbf16, #tpu.memory_space<vmem>>, vector<16x27xbf16>,
    %c9_129 = arith.constant 9 : index
    %c0_130 = arith.constant 0 : index
    %c0_131 = arith.constant 0 : index
    %221 = vector.load %arg7[%c9_129, %c0_130, %c0_131] : memref<18x18x3xbf16, #tpu.memory_space<vmem>>, vector<1x18x3xbf16>
    %222 = vector.shape_cast %221 : vector<1x18x3xbf16> to vector<18x3xbf16>
    %223 = vector.extract_strided_slice %222 {offsets = [0, 0], sizes = [16, 3], strides = [1, 1]} : vector<18x3xbf16> to vector<16x3xbf16>
    %224 = vector.extract_strided_slice %222 {offsets = [1, 0], sizes = [16, 3], strides = [1, 1]} : vector<18x3xbf16> to vector<16x3xbf16>
    %225 = vector.extract_strided_slice %222 {offsets = [2, 0], sizes = [16, 3], strides = [1, 1]} : vector<18x3xbf16> to vector<16x3xbf16>
    %c10_132 = arith.constant 10 : index
    %c0_133 = arith.constant 0 : index
    %c0_134 = arith.constant 0 : index
    %226 = vector.load %arg7[%c10_132, %c0_133, %c0_134] : memref<18x18x3xbf16, #tpu.memory_space<vmem>>, vector<1x18x3xbf16>
    %227 = vector.shape_cast %226 : vector<1x18x3xbf16> to vector<18x3xbf16>
    %228 = vector.extract_strided_slice %227 {offsets = [0, 0], sizes = [16, 3], strides = [1, 1]} : vector<18x3xbf16> to vector<16x3xbf16>
    %229 = vector.extract_strided_slice %227 {offsets = [1, 0], sizes = [16, 3], strides = [1, 1]} : vector<18x3xbf16> to vector<16x3xbf16>
    %230 = vector.extract_strided_slice %227 {offsets = [2, 0], sizes = [16, 3], strides = [1, 1]} : vector<18x3xbf16> to vector<16x3xbf16>
    %c11_135 = arith.constant 11 : index
    %c0_136 = arith.constant 0 : index
    %c0_137 = arith.constant 0 : index
    %231 = vector.load %arg7[%c11_135, %c0_136, %c0_137] : memref<18x18x3xbf16, #tpu.memory_space<vmem>>, vector<1x18x3xbf16>
    %232 = vector.shape_cast %231 : vector<1x18x3xbf16> to vector<18x3xbf16>
    %233 = vector.extract_strided_slice %232 {offsets = [0, 0], sizes = [16, 3], strides = [1, 1]} : vector<18x3xbf16> to vector<16x3xbf16>
    %234 = vector.extract_strided_slice %232 {offsets = [1, 0], sizes = [16, 3], strides = [1, 1]} : vector<18x3xbf16> to vector<16x3xbf16>
    %235 = vector.extract_strided_slice %232 {offsets = [2, 0], sizes = [16, 3], strides = [1, 1]} : vector<18x3xbf16> to vector<16x3xbf16>
    %236 = tpu.concatenate %223, %224, %225, %228, %229, %230, %233, %234, %235 in 1 : vector<16x3xbf16>, vector<16x3xbf16>, vector<16x3xbf16>, vector<16x3xbf16>, vector<16x3xbf16>, vector<16x3xbf16>, vector<16x3xbf16>, vector<16x3xbf16>, vector<16x3xbf16> -> vector<16x27xbf16>
    %c144 = arith.constant 144 : index
    %c0_138 = arith.constant 0 : index
    %237 = vector.load %arg8[%c144, %c0_138] : memref<256x27xbf16, #tpu.memory_space<vmem>>, vector<16x27xbf16>
    tpu.vector_store %arg8[%c144, %c0_138], %236 {strides = array<i32>} : memref<256x27xbf16, #tpu.memory_space<vmem>>, vector<16x27xbf16>,
    %c10_139 = arith.constant 10 : index
    %c0_140 = arith.constant 0 : index
    %c0_141 = arith.constant 0 : index
    %238 = vector.load %arg7[%c10_139, %c0_140, %c0_141] : memref<18x18x3xbf16, #tpu.memory_space<vmem>>, vector<1x18x3xbf16>
    %239 = vector.shape_cast %238 : vector<1x18x3xbf16> to vector<18x3xbf16>
    %240 = vector.extract_strided_slice %239 {offsets = [0, 0], sizes = [16, 3], strides = [1, 1]} : vector<18x3xbf16> to vector<16x3xbf16>
    %241 = vector.extract_strided_slice %239 {offsets = [1, 0], sizes = [16, 3], strides = [1, 1]} : vector<18x3xbf16> to vector<16x3xbf16>
    %242 = vector.extract_strided_slice %239 {offsets = [2, 0], sizes = [16, 3], strides = [1, 1]} : vector<18x3xbf16> to vector<16x3xbf16>
    %c11_142 = arith.constant 11 : index
    %c0_143 = arith.constant 0 : index
    %c0_144 = arith.constant 0 : index
    %243 = vector.load %arg7[%c11_142, %c0_143, %c0_144] : memref<18x18x3xbf16, #tpu.memory_space<vmem>>, vector<1x18x3xbf16>
    %244 = vector.shape_cast %243 : vector<1x18x3xbf16> to vector<18x3xbf16>
    %245 = vector.extract_strided_slice %244 {offsets = [0, 0], sizes = [16, 3], strides = [1, 1]} : vector<18x3xbf16> to vector<16x3xbf16>
    %246 = vector.extract_strided_slice %244 {offsets = [1, 0], sizes = [16, 3], strides = [1, 1]} : vector<18x3xbf16> to vector<16x3xbf16>
    %247 = vector.extract_strided_slice %244 {offsets = [2, 0], sizes = [16, 3], strides = [1, 1]} : vector<18x3xbf16> to vector<16x3xbf16>
    %c12_145 = arith.constant 12 : index
    %c0_146 = arith.constant 0 : index
    %c0_147 = arith.constant 0 : index
    %248 = vector.load %arg7[%c12_145, %c0_146, %c0_147] : memref<18x18x3xbf16, #tpu.memory_space<vmem>>, vector<1x18x3xbf16>
    %249 = vector.shape_cast %248 : vector<1x18x3xbf16> to vector<18x3xbf16>
    %250 = vector.extract_strided_slice %249 {offsets = [0, 0], sizes = [16, 3], strides = [1, 1]} : vector<18x3xbf16> to vector<16x3xbf16>
    %251 = vector.extract_strided_slice %249 {offsets = [1, 0], sizes = [16, 3], strides = [1, 1]} : vector<18x3xbf16> to vector<16x3xbf16>
    %252 = vector.extract_strided_slice %249 {offsets = [2, 0], sizes = [16, 3], strides = [1, 1]} : vector<18x3xbf16> to vector<16x3xbf16>
    %253 = tpu.concatenate %240, %241, %242, %245, %246, %247, %250, %251, %252 in 1 : vector<16x3xbf16>, vector<16x3xbf16>, vector<16x3xbf16>, vector<16x3xbf16>, vector<16x3xbf16>, vector<16x3xbf16>, vector<16x3xbf16>, vector<16x3xbf16>, vector<16x3xbf16> -> vector<16x27xbf16>
    %c160 = arith.constant 160 : index
    %c0_148 = arith.constant 0 : index
    %254 = vector.load %arg8[%c160, %c0_148] : memref<256x27xbf16, #tpu.memory_space<vmem>>, vector<16x27xbf16>
    tpu.vector_store %arg8[%c160, %c0_148], %253 {strides = array<i32>} : memref<256x27xbf16, #tpu.memory_space<vmem>>, vector<16x27xbf16>,
    %c11_149 = arith.constant 11 : index
    %c0_150 = arith.constant 0 : index
    %c0_151 = arith.constant 0 : index
    %255 = vector.load %arg7[%c11_149, %c0_150, %c0_151] : memref<18x18x3xbf16, #tpu.memory_space<vmem>>, vector<1x18x3xbf16>
    %256 = vector.shape_cast %255 : vector<1x18x3xbf16> to vector<18x3xbf16>
    %257 = vector.extract_strided_slice %256 {offsets = [0, 0], sizes = [16, 3], strides = [1, 1]} : vector<18x3xbf16> to vector<16x3xbf16>
    %258 = vector.extract_strided_slice %256 {offsets = [1, 0], sizes = [16, 3], strides = [1, 1]} : vector<18x3xbf16> to vector<16x3xbf16>
    %259 = vector.extract_strided_slice %256 {offsets = [2, 0], sizes = [16, 3], strides = [1, 1]} : vector<18x3xbf16> to vector<16x3xbf16>
    %c12_152 = arith.constant 12 : index
    %c0_153 = arith.constant 0 : index
    %c0_154 = arith.constant 0 : index
    %260 = vector.load %arg7[%c12_152, %c0_153, %c0_154] : memref<18x18x3xbf16, #tpu.memory_space<vmem>>, vector<1x18x3xbf16>
    %261 = vector.shape_cast %260 : vector<1x18x3xbf16> to vector<18x3xbf16>
    %262 = vector.extract_strided_slice %261 {offsets = [0, 0], sizes = [16, 3], strides = [1, 1]} : vector<18x3xbf16> to vector<16x3xbf16>
    %263 = vector.extract_strided_slice %261 {offsets = [1, 0], sizes = [16, 3], strides = [1, 1]} : vector<18x3xbf16> to vector<16x3xbf16>
    %264 = vector.extract_strided_slice %261 {offsets = [2, 0], sizes = [16, 3], strides = [1, 1]} : vector<18x3xbf16> to vector<16x3xbf16>
    %c13_155 = arith.constant 13 : index
    %c0_156 = arith.constant 0 : index
    %c0_157 = arith.constant 0 : index
    %265 = vector.load %arg7[%c13_155, %c0_156, %c0_157] : memref<18x18x3xbf16, #tpu.memory_space<vmem>>, vector<1x18x3xbf16>
    %266 = vector.shape_cast %265 : vector<1x18x3xbf16> to vector<18x3xbf16>
    %267 = vector.extract_strided_slice %266 {offsets = [0, 0], sizes = [16, 3], strides = [1, 1]} : vector<18x3xbf16> to vector<16x3xbf16>
    %268 = vector.extract_strided_slice %266 {offsets = [1, 0], sizes = [16, 3], strides = [1, 1]} : vector<18x3xbf16> to vector<16x3xbf16>
    %269 = vector.extract_strided_slice %266 {offsets = [2, 0], sizes = [16, 3], strides = [1, 1]} : vector<18x3xbf16> to vector<16x3xbf16>
    %270 = tpu.concatenate %257, %258, %259, %262, %263, %264, %267, %268, %269 in 1 : vector<16x3xbf16>, vector<16x3xbf16>, vector<16x3xbf16>, vector<16x3xbf16>, vector<16x3xbf16>, vector<16x3xbf16>, vector<16x3xbf16>, vector<16x3xbf16>, vector<16x3xbf16> -> vector<16x27xbf16>
    %c176 = arith.constant 176 : index
    %c0_158 = arith.constant 0 : index
    %271 = vector.load %arg8[%c176, %c0_158] : memref<256x27xbf16, #tpu.memory_space<vmem>>, vector<16x27xbf16>
    tpu.vector_store %arg8[%c176, %c0_158], %270 {strides = array<i32>} : memref<256x27xbf16, #tpu.memory_space<vmem>>, vector<16x27xbf16>,
    %c12_159 = arith.constant 12 : index
    %c0_160 = arith.constant 0 : index
    %c0_161 = arith.constant 0 : index
    %272 = vector.load %arg7[%c12_159, %c0_160, %c0_161] : memref<18x18x3xbf16, #tpu.memory_space<vmem>>, vector<1x18x3xbf16>
    %273 = vector.shape_cast %272 : vector<1x18x3xbf16> to vector<18x3xbf16>
    %274 = vector.extract_strided_slice %273 {offsets = [0, 0], sizes = [16, 3], strides = [1, 1]} : vector<18x3xbf16> to vector<16x3xbf16>
    %275 = vector.extract_strided_slice %273 {offsets = [1, 0], sizes = [16, 3], strides = [1, 1]} : vector<18x3xbf16> to vector<16x3xbf16>
    %276 = vector.extract_strided_slice %273 {offsets = [2, 0], sizes = [16, 3], strides = [1, 1]} : vector<18x3xbf16> to vector<16x3xbf16>
    %c13_162 = arith.constant 13 : index
    %c0_163 = arith.constant 0 : index
    %c0_164 = arith.constant 0 : index
    %277 = vector.load %arg7[%c13_162, %c0_163, %c0_164] : memref<18x18x3xbf16, #tpu.memory_space<vmem>>, vector<1x18x3xbf16>
    %278 = vector.shape_cast %277 : vector<1x18x3xbf16> to vector<18x3xbf16>
    %279 = vector.extract_strided_slice %278 {offsets = [0, 0], sizes = [16, 3], strides = [1, 1]} : vector<18x3xbf16> to vector<16x3xbf16>
    %280 = vector.extract_strided_slice %278 {offsets = [1, 0], sizes = [16, 3], strides = [1, 1]} : vector<18x3xbf16> to vector<16x3xbf16>
    %281 = vector.extract_strided_slice %278 {offsets = [2, 0], sizes = [16, 3], strides = [1, 1]} : vector<18x3xbf16> to vector<16x3xbf16>
    %c14_165 = arith.constant 14 : index
    %c0_166 = arith.constant 0 : index
    %c0_167 = arith.constant 0 : index
    %282 = vector.load %arg7[%c14_165, %c0_166, %c0_167] : memref<18x18x3xbf16, #tpu.memory_space<vmem>>, vector<1x18x3xbf16>
    %283 = vector.shape_cast %282 : vector<1x18x3xbf16> to vector<18x3xbf16>
    %284 = vector.extract_strided_slice %283 {offsets = [0, 0], sizes = [16, 3], strides = [1, 1]} : vector<18x3xbf16> to vector<16x3xbf16>
    %285 = vector.extract_strided_slice %283 {offsets = [1, 0], sizes = [16, 3], strides = [1, 1]} : vector<18x3xbf16> to vector<16x3xbf16>
    %286 = vector.extract_strided_slice %283 {offsets = [2, 0], sizes = [16, 3], strides = [1, 1]} : vector<18x3xbf16> to vector<16x3xbf16>
    %287 = tpu.concatenate %274, %275, %276, %279, %280, %281, %284, %285, %286 in 1 : vector<16x3xbf16>, vector<16x3xbf16>, vector<16x3xbf16>, vector<16x3xbf16>, vector<16x3xbf16>, vector<16x3xbf16>, vector<16x3xbf16>, vector<16x3xbf16>, vector<16x3xbf16> -> vector<16x27xbf16>
    %c192 = arith.constant 192 : index
    %c0_168 = arith.constant 0 : index
    %288 = vector.load %arg8[%c192, %c0_168] : memref<256x27xbf16, #tpu.memory_space<vmem>>, vector<16x27xbf16>
    tpu.vector_store %arg8[%c192, %c0_168], %287 {strides = array<i32>} : memref<256x27xbf16, #tpu.memory_space<vmem>>, vector<16x27xbf16>,
    %c13_169 = arith.constant 13 : index
    %c0_170 = arith.constant 0 : index
    %c0_171 = arith.constant 0 : index
    %289 = vector.load %arg7[%c13_169, %c0_170, %c0_171] : memref<18x18x3xbf16, #tpu.memory_space<vmem>>, vector<1x18x3xbf16>
    %290 = vector.shape_cast %289 : vector<1x18x3xbf16> to vector<18x3xbf16>
    %291 = vector.extract_strided_slice %290 {offsets = [0, 0], sizes = [16, 3], strides = [1, 1]} : vector<18x3xbf16> to vector<16x3xbf16>
    %292 = vector.extract_strided_slice %290 {offsets = [1, 0], sizes = [16, 3], strides = [1, 1]} : vector<18x3xbf16> to vector<16x3xbf16>
    %293 = vector.extract_strided_slice %290 {offsets = [2, 0], sizes = [16, 3], strides = [1, 1]} : vector<18x3xbf16> to vector<16x3xbf16>
    %c14_172 = arith.constant 14 : index
    %c0_173 = arith.constant 0 : index
    %c0_174 = arith.constant 0 : index
    %294 = vector.load %arg7[%c14_172, %c0_173, %c0_174] : memref<18x18x3xbf16, #tpu.memory_space<vmem>>, vector<1x18x3xbf16>
    %295 = vector.shape_cast %294 : vector<1x18x3xbf16> to vector<18x3xbf16>
    %296 = vector.extract_strided_slice %295 {offsets = [0, 0], sizes = [16, 3], strides = [1, 1]} : vector<18x3xbf16> to vector<16x3xbf16>
    %297 = vector.extract_strided_slice %295 {offsets = [1, 0], sizes = [16, 3], strides = [1, 1]} : vector<18x3xbf16> to vector<16x3xbf16>
    %298 = vector.extract_strided_slice %295 {offsets = [2, 0], sizes = [16, 3], strides = [1, 1]} : vector<18x3xbf16> to vector<16x3xbf16>
    %c15_175 = arith.constant 15 : index
    %c0_176 = arith.constant 0 : index
    %c0_177 = arith.constant 0 : index
    %299 = vector.load %arg7[%c15_175, %c0_176, %c0_177] : memref<18x18x3xbf16, #tpu.memory_space<vmem>>, vector<1x18x3xbf16>
    %300 = vector.shape_cast %299 : vector<1x18x3xbf16> to vector<18x3xbf16>
    %301 = vector.extract_strided_slice %300 {offsets = [0, 0], sizes = [16, 3], strides = [1, 1]} : vector<18x3xbf16> to vector<16x3xbf16>
    %302 = vector.extract_strided_slice %300 {offsets = [1, 0], sizes = [16, 3], strides = [1, 1]} : vector<18x3xbf16> to vector<16x3xbf16>
    %303 = vector.extract_strided_slice %300 {offsets = [2, 0], sizes = [16, 3], strides = [1, 1]} : vector<18x3xbf16> to vector<16x3xbf16>
    %304 = tpu.concatenate %291, %292, %293, %296, %297, %298, %301, %302, %303 in 1 : vector<16x3xbf16>, vector<16x3xbf16>, vector<16x3xbf16>, vector<16x3xbf16>, vector<16x3xbf16>, vector<16x3xbf16>, vector<16x3xbf16>, vector<16x3xbf16>, vector<16x3xbf16> -> vector<16x27xbf16>
    %c208 = arith.constant 208 : index
    %c0_178 = arith.constant 0 : index
    %305 = vector.load %arg8[%c208, %c0_178] : memref<256x27xbf16, #tpu.memory_space<vmem>>, vector<16x27xbf16>
    tpu.vector_store %arg8[%c208, %c0_178], %304 {strides = array<i32>} : memref<256x27xbf16, #tpu.memory_space<vmem>>, vector<16x27xbf16>,
    %c14_179 = arith.constant 14 : index
    %c0_180 = arith.constant 0 : index
    %c0_181 = arith.constant 0 : index
    %306 = vector.load %arg7[%c14_179, %c0_180, %c0_181] : memref<18x18x3xbf16, #tpu.memory_space<vmem>>, vector<1x18x3xbf16>
    %307 = vector.shape_cast %306 : vector<1x18x3xbf16> to vector<18x3xbf16>
    %308 = vector.extract_strided_slice %307 {offsets = [0, 0], sizes = [16, 3], strides = [1, 1]} : vector<18x3xbf16> to vector<16x3xbf16>
    %309 = vector.extract_strided_slice %307 {offsets = [1, 0], sizes = [16, 3], strides = [1, 1]} : vector<18x3xbf16> to vector<16x3xbf16>
    %310 = vector.extract_strided_slice %307 {offsets = [2, 0], sizes = [16, 3], strides = [1, 1]} : vector<18x3xbf16> to vector<16x3xbf16>
    %c15_182 = arith.constant 15 : index
    %c0_183 = arith.constant 0 : index
    %c0_184 = arith.constant 0 : index
    %311 = vector.load %arg7[%c15_182, %c0_183, %c0_184] : memref<18x18x3xbf16, #tpu.memory_space<vmem>>, vector<1x18x3xbf16>
    %312 = vector.shape_cast %311 : vector<1x18x3xbf16> to vector<18x3xbf16>
    %313 = vector.extract_strided_slice %312 {offsets = [0, 0], sizes = [16, 3], strides = [1, 1]} : vector<18x3xbf16> to vector<16x3xbf16>
    %314 = vector.extract_strided_slice %312 {offsets = [1, 0], sizes = [16, 3], strides = [1, 1]} : vector<18x3xbf16> to vector<16x3xbf16>
    %315 = vector.extract_strided_slice %312 {offsets = [2, 0], sizes = [16, 3], strides = [1, 1]} : vector<18x3xbf16> to vector<16x3xbf16>
    %c16_185 = arith.constant 16 : index
    %c0_186 = arith.constant 0 : index
    %c0_187 = arith.constant 0 : index
    %316 = vector.load %arg7[%c16_185, %c0_186, %c0_187] : memref<18x18x3xbf16, #tpu.memory_space<vmem>>, vector<1x18x3xbf16>
    %317 = vector.shape_cast %316 : vector<1x18x3xbf16> to vector<18x3xbf16>
    %318 = vector.extract_strided_slice %317 {offsets = [0, 0], sizes = [16, 3], strides = [1, 1]} : vector<18x3xbf16> to vector<16x3xbf16>
    %319 = vector.extract_strided_slice %317 {offsets = [1, 0], sizes = [16, 3], strides = [1, 1]} : vector<18x3xbf16> to vector<16x3xbf16>
    %320 = vector.extract_strided_slice %317 {offsets = [2, 0], sizes = [16, 3], strides = [1, 1]} : vector<18x3xbf16> to vector<16x3xbf16>
    %321 = tpu.concatenate %308, %309, %310, %313, %314, %315, %318, %319, %320 in 1 : vector<16x3xbf16>, vector<16x3xbf16>, vector<16x3xbf16>, vector<16x3xbf16>, vector<16x3xbf16>, vector<16x3xbf16>, vector<16x3xbf16>, vector<16x3xbf16>, vector<16x3xbf16> -> vector<16x27xbf16>
    %c224 = arith.constant 224 : index
    %c0_188 = arith.constant 0 : index
    %322 = vector.load %arg8[%c224, %c0_188] : memref<256x27xbf16, #tpu.memory_space<vmem>>, vector<16x27xbf16>
    tpu.vector_store %arg8[%c224, %c0_188], %321 {strides = array<i32>} : memref<256x27xbf16, #tpu.memory_space<vmem>>, vector<16x27xbf16>,
    %c15_189 = arith.constant 15 : index
    %c0_190 = arith.constant 0 : index
    %c0_191 = arith.constant 0 : index
    %323 = vector.load %arg7[%c15_189, %c0_190, %c0_191] : memref<18x18x3xbf16, #tpu.memory_space<vmem>>, vector<1x18x3xbf16>
    %324 = vector.shape_cast %323 : vector<1x18x3xbf16> to vector<18x3xbf16>
    %325 = vector.extract_strided_slice %324 {offsets = [0, 0], sizes = [16, 3], strides = [1, 1]} : vector<18x3xbf16> to vector<16x3xbf16>
    %326 = vector.extract_strided_slice %324 {offsets = [1, 0], sizes = [16, 3], strides = [1, 1]} : vector<18x3xbf16> to vector<16x3xbf16>
    %327 = vector.extract_strided_slice %324 {offsets = [2, 0], sizes = [16, 3], strides = [1, 1]} : vector<18x3xbf16> to vector<16x3xbf16>
    %c16_192 = arith.constant 16 : index
    %c0_193 = arith.constant 0 : index
    %c0_194 = arith.constant 0 : index
    %328 = vector.load %arg7[%c16_192, %c0_193, %c0_194] : memref<18x18x3xbf16, #tpu.memory_space<vmem>>, vector<1x18x3xbf16>
    %329 = vector.shape_cast %328 : vector<1x18x3xbf16> to vector<18x3xbf16>
    %330 = vector.extract_strided_slice %329 {offsets = [0, 0], sizes = [16, 3], strides = [1, 1]} : vector<18x3xbf16> to vector<16x3xbf16>
    %331 = vector.extract_strided_slice %329 {offsets = [1, 0], sizes = [16, 3], strides = [1, 1]} : vector<18x3xbf16> to vector<16x3xbf16>
    %332 = vector.extract_strided_slice %329 {offsets = [2, 0], sizes = [16, 3], strides = [1, 1]} : vector<18x3xbf16> to vector<16x3xbf16>
    %c17 = arith.constant 17 : index
    %c0_195 = arith.constant 0 : index
    %c0_196 = arith.constant 0 : index
    %333 = vector.load %arg7[%c17, %c0_195, %c0_196] : memref<18x18x3xbf16, #tpu.memory_space<vmem>>, vector<1x18x3xbf16>
    %334 = vector.shape_cast %333 : vector<1x18x3xbf16> to vector<18x3xbf16>
    %335 = vector.extract_strided_slice %334 {offsets = [0, 0], sizes = [16, 3], strides = [1, 1]} : vector<18x3xbf16> to vector<16x3xbf16>
    %336 = vector.extract_strided_slice %334 {offsets = [1, 0], sizes = [16, 3], strides = [1, 1]} : vector<18x3xbf16> to vector<16x3xbf16>
    %337 = vector.extract_strided_slice %334 {offsets = [2, 0], sizes = [16, 3], strides = [1, 1]} : vector<18x3xbf16> to vector<16x3xbf16>
    %338 = tpu.concatenate %325, %326, %327, %330, %331, %332, %335, %336, %337 in 1 : vector<16x3xbf16>, vector<16x3xbf16>, vector<16x3xbf16>, vector<16x3xbf16>, vector<16x3xbf16>, vector<16x3xbf16>, vector<16x3xbf16>, vector<16x3xbf16>, vector<16x3xbf16> -> vector<16x27xbf16>
    %c240 = arith.constant 240 : index
    %c0_197 = arith.constant 0 : index
    %339 = vector.load %arg8[%c240, %c0_197] : memref<256x27xbf16, #tpu.memory_space<vmem>>, vector<16x27xbf16>
    tpu.vector_store %arg8[%c240, %c0_197], %338 {strides = array<i32>} : memref<256x27xbf16, #tpu.memory_space<vmem>>, vector<16x27xbf16>,
    %c0_198 = arith.constant 0 : index
    %c0_199 = arith.constant 0 : index
    %340 = vector.load %arg8[%c0_198, %c0_199] : memref<256x27xbf16, #tpu.memory_space<vmem>>, vector<256x27xbf16>
    %c0_200 = arith.constant 0 : index
    %c0_201 = arith.constant 0 : index
    %341 = vector.load %arg2[%c0_200, %c0_201] : memref<27x8xbf16, #tpu.memory_space<vmem>>, vector<27x8xbf16>
    %cst_202 = arith.constant dense<0.000000e+00> : vector<256x8xf32>
    %342 = tpu.matmul %340, %341, %cst_202 {dimension_numbers = #tpu.dot_dimension_numbers<[1], [0], [0], [1], [0, 0, 1, 1], [], []>} : vector<256x27xbf16>, vector<27x8xbf16>, vector<256x8xf32> -> vector<256x8xf32>
    %c0_203 = arith.constant 0 : index
    %c0_204 = arith.constant 0 : index
    %343 = vector.load %arg3[%c0_203, %c0_204] : memref<1x8xf32, #tpu.memory_space<vmem>>, vector<1x8xf32>
    %344 = vector.broadcast %343 : vector<1x8xf32> to vector<256x8xf32>
    %345 = arith.addf %342, %344 : vector<256x8xf32>
    %cst_205 = arith.constant 0.000000e+00 : f32
    %346 = vector.broadcast %cst_205 : f32 to vector<256x8xf32>
    %347 = arith.maximumf %345, %346 : vector<256x8xf32>
    %cst_206 = arith.constant 0.000000e+00 : bf16
    %348 = vector.broadcast %cst_206 : bf16 to vector<18x18x8xbf16>
    %c0_207 = arith.constant 0 : index
    %c0_208 = arith.constant 0 : index
    %c0_209 = arith.constant 0 : index
    %349 = vector.load %arg9[%c0_207, %c0_208, %c0_209] : memref<18x18x8xbf16, #tpu.memory_space<vmem>>, vector<18x18x8xbf16>
    tpu.vector_store %arg9[%c0_207, %c0_208, %c0_209], %348 {strides = array<i32>} : memref<18x18x8xbf16, #tpu.memory_space<vmem>>, vector<18x18x8xbf16>,
    %350 = vector.extract_strided_slice %347 {offsets = [0, 0], sizes = [16, 8], strides = [1, 1]} : vector<256x8xf32> to vector<16x8xf32>
    %351 = arith.truncf %350 : vector<16x8xf32> to vector<16x8xbf16>
    %c1_210 = arith.constant 1 : index
    %c1_211 = arith.constant 1 : index
    %c0_212 = arith.constant 0 : index
    %352 = vector.load %arg9[%c1_210, %c1_211, %c0_212] : memref<18x18x8xbf16, #tpu.memory_space<vmem>>, vector<1x16x8xbf16>
    %353 = vector.shape_cast %352 : vector<1x16x8xbf16> to vector<16x8xbf16>
    %354 = vector.shape_cast %351 : vector<16x8xbf16> to vector<1x16x8xbf16>
    tpu.vector_store %arg9[%c1_210, %c1_211, %c0_212], %354 {strides = array<i32>} : memref<18x18x8xbf16, #tpu.memory_space<vmem>>, vector<1x16x8xbf16>,
    %355 = vector.extract_strided_slice %347 {offsets = [16, 0], sizes = [16, 8], strides = [1, 1]} : vector<256x8xf32> to vector<16x8xf32>
    %356 = arith.truncf %355 : vector<16x8xf32> to vector<16x8xbf16>
    %c2_213 = arith.constant 2 : index
    %c1_214 = arith.constant 1 : index
    %c0_215 = arith.constant 0 : index
    %357 = vector.load %arg9[%c2_213, %c1_214, %c0_215] : memref<18x18x8xbf16, #tpu.memory_space<vmem>>, vector<1x16x8xbf16>
    %358 = vector.shape_cast %357 : vector<1x16x8xbf16> to vector<16x8xbf16>
    %359 = vector.shape_cast %356 : vector<16x8xbf16> to vector<1x16x8xbf16>
    tpu.vector_store %arg9[%c2_213, %c1_214, %c0_215], %359 {strides = array<i32>} : memref<18x18x8xbf16, #tpu.memory_space<vmem>>, vector<1x16x8xbf16>,
    %360 = vector.extract_strided_slice %347 {offsets = [32, 0], sizes = [16, 8], strides = [1, 1]} : vector<256x8xf32> to vector<16x8xf32>
    %361 = arith.truncf %360 : vector<16x8xf32> to vector<16x8xbf16>
    %c3_216 = arith.constant 3 : index
    %c1_217 = arith.constant 1 : index
    %c0_218 = arith.constant 0 : index
    %362 = vector.load %arg9[%c3_216, %c1_217, %c0_218] : memref<18x18x8xbf16, #tpu.memory_space<vmem>>, vector<1x16x8xbf16>
    %363 = vector.shape_cast %362 : vector<1x16x8xbf16> to vector<16x8xbf16>
    %364 = vector.shape_cast %361 : vector<16x8xbf16> to vector<1x16x8xbf16>
    tpu.vector_store %arg9[%c3_216, %c1_217, %c0_218], %364 {strides = array<i32>} : memref<18x18x8xbf16, #tpu.memory_space<vmem>>, vector<1x16x8xbf16>,
    %365 = vector.extract_strided_slice %347 {offsets = [48, 0], sizes = [16, 8], strides = [1, 1]} : vector<256x8xf32> to vector<16x8xf32>
    %366 = arith.truncf %365 : vector<16x8xf32> to vector<16x8xbf16>
    %c4_219 = arith.constant 4 : index
    %c1_220 = arith.constant 1 : index
    %c0_221 = arith.constant 0 : index
    %367 = vector.load %arg9[%c4_219, %c1_220, %c0_221] : memref<18x18x8xbf16, #tpu.memory_space<vmem>>, vector<1x16x8xbf16>
    %368 = vector.shape_cast %367 : vector<1x16x8xbf16> to vector<16x8xbf16>
    %369 = vector.shape_cast %366 : vector<16x8xbf16> to vector<1x16x8xbf16>
    tpu.vector_store %arg9[%c4_219, %c1_220, %c0_221], %369 {strides = array<i32>} : memref<18x18x8xbf16, #tpu.memory_space<vmem>>, vector<1x16x8xbf16>,
    %370 = vector.extract_strided_slice %347 {offsets = [64, 0], sizes = [16, 8], strides = [1, 1]} : vector<256x8xf32> to vector<16x8xf32>
    %371 = arith.truncf %370 : vector<16x8xf32> to vector<16x8xbf16>
    %c5_222 = arith.constant 5 : index
    %c1_223 = arith.constant 1 : index
    %c0_224 = arith.constant 0 : index
    %372 = vector.load %arg9[%c5_222, %c1_223, %c0_224] : memref<18x18x8xbf16, #tpu.memory_space<vmem>>, vector<1x16x8xbf16>
    %373 = vector.shape_cast %372 : vector<1x16x8xbf16> to vector<16x8xbf16>
    %374 = vector.shape_cast %371 : vector<16x8xbf16> to vector<1x16x8xbf16>
    tpu.vector_store %arg9[%c5_222, %c1_223, %c0_224], %374 {strides = array<i32>} : memref<18x18x8xbf16, #tpu.memory_space<vmem>>, vector<1x16x8xbf16>,
    %375 = vector.extract_strided_slice %347 {offsets = [80, 0], sizes = [16, 8], strides = [1, 1]} : vector<256x8xf32> to vector<16x8xf32>
    %376 = arith.truncf %375 : vector<16x8xf32> to vector<16x8xbf16>
    %c6_225 = arith.constant 6 : index
    %c1_226 = arith.constant 1 : index
    %c0_227 = arith.constant 0 : index
    %377 = vector.load %arg9[%c6_225, %c1_226, %c0_227] : memref<18x18x8xbf16, #tpu.memory_space<vmem>>, vector<1x16x8xbf16>
    %378 = vector.shape_cast %377 : vector<1x16x8xbf16> to vector<16x8xbf16>
    %379 = vector.shape_cast %376 : vector<16x8xbf16> to vector<1x16x8xbf16>
    tpu.vector_store %arg9[%c6_225, %c1_226, %c0_227], %379 {strides = array<i32>} : memref<18x18x8xbf16, #tpu.memory_space<vmem>>, vector<1x16x8xbf16>,
    %380 = vector.extract_strided_slice %347 {offsets = [96, 0], sizes = [16, 8], strides = [1, 1]} : vector<256x8xf32> to vector<16x8xf32>
    %381 = arith.truncf %380 : vector<16x8xf32> to vector<16x8xbf16>
    %c7_228 = arith.constant 7 : index
    %c1_229 = arith.constant 1 : index
    %c0_230 = arith.constant 0 : index
    %382 = vector.load %arg9[%c7_228, %c1_229, %c0_230] : memref<18x18x8xbf16, #tpu.memory_space<vmem>>, vector<1x16x8xbf16>
    %383 = vector.shape_cast %382 : vector<1x16x8xbf16> to vector<16x8xbf16>
    %384 = vector.shape_cast %381 : vector<16x8xbf16> to vector<1x16x8xbf16>
    tpu.vector_store %arg9[%c7_228, %c1_229, %c0_230], %384 {strides = array<i32>} : memref<18x18x8xbf16, #tpu.memory_space<vmem>>, vector<1x16x8xbf16>,
    %385 = vector.extract_strided_slice %347 {offsets = [112, 0], sizes = [16, 8], strides = [1, 1]} : vector<256x8xf32> to vector<16x8xf32>
    %386 = arith.truncf %385 : vector<16x8xf32> to vector<16x8xbf16>
    %c8_231 = arith.constant 8 : index
    %c1_232 = arith.constant 1 : index
    %c0_233 = arith.constant 0 : index
    %387 = vector.load %arg9[%c8_231, %c1_232, %c0_233] : memref<18x18x8xbf16, #tpu.memory_space<vmem>>, vector<1x16x8xbf16>
    %388 = vector.shape_cast %387 : vector<1x16x8xbf16> to vector<16x8xbf16>
    %389 = vector.shape_cast %386 : vector<16x8xbf16> to vector<1x16x8xbf16>
    tpu.vector_store %arg9[%c8_231, %c1_232, %c0_233], %389 {strides = array<i32>} : memref<18x18x8xbf16, #tpu.memory_space<vmem>>, vector<1x16x8xbf16>,
    %390 = vector.extract_strided_slice %347 {offsets = [128, 0], sizes = [16, 8], strides = [1, 1]} : vector<256x8xf32> to vector<16x8xf32>
    %391 = arith.truncf %390 : vector<16x8xf32> to vector<16x8xbf16>
    %c9_234 = arith.constant 9 : index
    %c1_235 = arith.constant 1 : index
    %c0_236 = arith.constant 0 : index
    %392 = vector.load %arg9[%c9_234, %c1_235, %c0_236] : memref<18x18x8xbf16, #tpu.memory_space<vmem>>, vector<1x16x8xbf16>
    %393 = vector.shape_cast %392 : vector<1x16x8xbf16> to vector<16x8xbf16>
    %394 = vector.shape_cast %391 : vector<16x8xbf16> to vector<1x16x8xbf16>
    tpu.vector_store %arg9[%c9_234, %c1_235, %c0_236], %394 {strides = array<i32>} : memref<18x18x8xbf16, #tpu.memory_space<vmem>>, vector<1x16x8xbf16>,
    %395 = vector.extract_strided_slice %347 {offsets = [144, 0], sizes = [16, 8], strides = [1, 1]} : vector<256x8xf32> to vector<16x8xf32>
    %396 = arith.truncf %395 : vector<16x8xf32> to vector<16x8xbf16>
    %c10_237 = arith.constant 10 : index
    %c1_238 = arith.constant 1 : index
    %c0_239 = arith.constant 0 : index
    %397 = vector.load %arg9[%c10_237, %c1_238, %c0_239] : memref<18x18x8xbf16, #tpu.memory_space<vmem>>, vector<1x16x8xbf16>
    %398 = vector.shape_cast %397 : vector<1x16x8xbf16> to vector<16x8xbf16>
    %399 = vector.shape_cast %396 : vector<16x8xbf16> to vector<1x16x8xbf16>
    tpu.vector_store %arg9[%c10_237, %c1_238, %c0_239], %399 {strides = array<i32>} : memref<18x18x8xbf16, #tpu.memory_space<vmem>>, vector<1x16x8xbf16>,
    %400 = vector.extract_strided_slice %347 {offsets = [160, 0], sizes = [16, 8], strides = [1, 1]} : vector<256x8xf32> to vector<16x8xf32>
    %401 = arith.truncf %400 : vector<16x8xf32> to vector<16x8xbf16>
    %c11_240 = arith.constant 11 : index
    %c1_241 = arith.constant 1 : index
    %c0_242 = arith.constant 0 : index
    %402 = vector.load %arg9[%c11_240, %c1_241, %c0_242] : memref<18x18x8xbf16, #tpu.memory_space<vmem>>, vector<1x16x8xbf16>
    %403 = vector.shape_cast %402 : vector<1x16x8xbf16> to vector<16x8xbf16>
    %404 = vector.shape_cast %401 : vector<16x8xbf16> to vector<1x16x8xbf16>
    tpu.vector_store %arg9[%c11_240, %c1_241, %c0_242], %404 {strides = array<i32>} : memref<18x18x8xbf16, #tpu.memory_space<vmem>>, vector<1x16x8xbf16>,
    %405 = vector.extract_strided_slice %347 {offsets = [176, 0], sizes = [16, 8], strides = [1, 1]} : vector<256x8xf32> to vector<16x8xf32>
    %406 = arith.truncf %405 : vector<16x8xf32> to vector<16x8xbf16>
    %c12_243 = arith.constant 12 : index
    %c1_244 = arith.constant 1 : index
    %c0_245 = arith.constant 0 : index
    %407 = vector.load %arg9[%c12_243, %c1_244, %c0_245] : memref<18x18x8xbf16, #tpu.memory_space<vmem>>, vector<1x16x8xbf16>
    %408 = vector.shape_cast %407 : vector<1x16x8xbf16> to vector<16x8xbf16>
    %409 = vector.shape_cast %406 : vector<16x8xbf16> to vector<1x16x8xbf16>
    tpu.vector_store %arg9[%c12_243, %c1_244, %c0_245], %409 {strides = array<i32>} : memref<18x18x8xbf16, #tpu.memory_space<vmem>>, vector<1x16x8xbf16>,
    %410 = vector.extract_strided_slice %347 {offsets = [192, 0], sizes = [16, 8], strides = [1, 1]} : vector<256x8xf32> to vector<16x8xf32>
    %411 = arith.truncf %410 : vector<16x8xf32> to vector<16x8xbf16>
    %c13_246 = arith.constant 13 : index
    %c1_247 = arith.constant 1 : index
    %c0_248 = arith.constant 0 : index
    %412 = vector.load %arg9[%c13_246, %c1_247, %c0_248] : memref<18x18x8xbf16, #tpu.memory_space<vmem>>, vector<1x16x8xbf16>
    %413 = vector.shape_cast %412 : vector<1x16x8xbf16> to vector<16x8xbf16>
    %414 = vector.shape_cast %411 : vector<16x8xbf16> to vector<1x16x8xbf16>
    tpu.vector_store %arg9[%c13_246, %c1_247, %c0_248], %414 {strides = array<i32>} : memref<18x18x8xbf16, #tpu.memory_space<vmem>>, vector<1x16x8xbf16>,
    %415 = vector.extract_strided_slice %347 {offsets = [208, 0], sizes = [16, 8], strides = [1, 1]} : vector<256x8xf32> to vector<16x8xf32>
    %416 = arith.truncf %415 : vector<16x8xf32> to vector<16x8xbf16>
    %c14_249 = arith.constant 14 : index
    %c1_250 = arith.constant 1 : index
    %c0_251 = arith.constant 0 : index
    %417 = vector.load %arg9[%c14_249, %c1_250, %c0_251] : memref<18x18x8xbf16, #tpu.memory_space<vmem>>, vector<1x16x8xbf16>
    %418 = vector.shape_cast %417 : vector<1x16x8xbf16> to vector<16x8xbf16>
    %419 = vector.shape_cast %416 : vector<16x8xbf16> to vector<1x16x8xbf16>
    tpu.vector_store %arg9[%c14_249, %c1_250, %c0_251], %419 {strides = array<i32>} : memref<18x18x8xbf16, #tpu.memory_space<vmem>>, vector<1x16x8xbf16>,
    %420 = vector.extract_strided_slice %347 {offsets = [224, 0], sizes = [16, 8], strides = [1, 1]} : vector<256x8xf32> to vector<16x8xf32>
    %421 = arith.truncf %420 : vector<16x8xf32> to vector<16x8xbf16>
    %c15_252 = arith.constant 15 : index
    %c1_253 = arith.constant 1 : index
    %c0_254 = arith.constant 0 : index
    %422 = vector.load %arg9[%c15_252, %c1_253, %c0_254] : memref<18x18x8xbf16, #tpu.memory_space<vmem>>, vector<1x16x8xbf16>
    %423 = vector.shape_cast %422 : vector<1x16x8xbf16> to vector<16x8xbf16>
    %424 = vector.shape_cast %421 : vector<16x8xbf16> to vector<1x16x8xbf16>
    tpu.vector_store %arg9[%c15_252, %c1_253, %c0_254], %424 {strides = array<i32>} : memref<18x18x8xbf16, #tpu.memory_space<vmem>>, vector<1x16x8xbf16>,
    %425 = vector.extract_strided_slice %347 {offsets = [240, 0], sizes = [16, 8], strides = [1, 1]} : vector<256x8xf32> to vector<16x8xf32>
    %426 = arith.truncf %425 : vector<16x8xf32> to vector<16x8xbf16>
    %c16_255 = arith.constant 16 : index
    %c1_256 = arith.constant 1 : index
    %c0_257 = arith.constant 0 : index
    %427 = vector.load %arg9[%c16_255, %c1_256, %c0_257] : memref<18x18x8xbf16, #tpu.memory_space<vmem>>, vector<1x16x8xbf16>
    %428 = vector.shape_cast %427 : vector<1x16x8xbf16> to vector<16x8xbf16>
    %429 = vector.shape_cast %426 : vector<16x8xbf16> to vector<1x16x8xbf16>
    tpu.vector_store %arg9[%c16_255, %c1_256, %c0_257], %429 {strides = array<i32>} : memref<18x18x8xbf16, #tpu.memory_space<vmem>>, vector<1x16x8xbf16>,
    %c0_258 = arith.constant 0 : index
    %c0_259 = arith.constant 0 : index
    %c0_260 = arith.constant 0 : index
    %430 = vector.load %arg9[%c0_258, %c0_259, %c0_260] : memref<18x18x8xbf16, #tpu.memory_space<vmem>>, vector<1x18x8xbf16>
    %431 = vector.shape_cast %430 : vector<1x18x8xbf16> to vector<18x8xbf16>
    %432 = vector.extract_strided_slice %431 {offsets = [0, 0], sizes = [16, 8], strides = [1, 1]} : vector<18x8xbf16> to vector<16x8xbf16>
    %433 = vector.extract_strided_slice %431 {offsets = [1, 0], sizes = [16, 8], strides = [1, 1]} : vector<18x8xbf16> to vector<16x8xbf16>
    %434 = vector.extract_strided_slice %431 {offsets = [2, 0], sizes = [16, 8], strides = [1, 1]} : vector<18x8xbf16> to vector<16x8xbf16>
    %c1_261 = arith.constant 1 : index
    %c0_262 = arith.constant 0 : index
    %c0_263 = arith.constant 0 : index
    %435 = vector.load %arg9[%c1_261, %c0_262, %c0_263] : memref<18x18x8xbf16, #tpu.memory_space<vmem>>, vector<1x18x8xbf16>
    %436 = vector.shape_cast %435 : vector<1x18x8xbf16> to vector<18x8xbf16>
    %437 = vector.extract_strided_slice %436 {offsets = [0, 0], sizes = [16, 8], strides = [1, 1]} : vector<18x8xbf16> to vector<16x8xbf16>
    %438 = vector.extract_strided_slice %436 {offsets = [1, 0], sizes = [16, 8], strides = [1, 1]} : vector<18x8xbf16> to vector<16x8xbf16>
    %439 = vector.extract_strided_slice %436 {offsets = [2, 0], sizes = [16, 8], strides = [1, 1]} : vector<18x8xbf16> to vector<16x8xbf16>
    %c2_264 = arith.constant 2 : index
    %c0_265 = arith.constant 0 : index
    %c0_266 = arith.constant 0 : index
    %440 = vector.load %arg9[%c2_264, %c0_265, %c0_266] : memref<18x18x8xbf16, #tpu.memory_space<vmem>>, vector<1x18x8xbf16>
    %441 = vector.shape_cast %440 : vector<1x18x8xbf16> to vector<18x8xbf16>
    %442 = vector.extract_strided_slice %441 {offsets = [0, 0], sizes = [16, 8], strides = [1, 1]} : vector<18x8xbf16> to vector<16x8xbf16>
    %443 = vector.extract_strided_slice %441 {offsets = [1, 0], sizes = [16, 8], strides = [1, 1]} : vector<18x8xbf16> to vector<16x8xbf16>
    %444 = vector.extract_strided_slice %441 {offsets = [2, 0], sizes = [16, 8], strides = [1, 1]} : vector<18x8xbf16> to vector<16x8xbf16>
    %445 = tpu.concatenate %432, %433, %434, %437, %438, %439, %442, %443, %444 in 1 : vector<16x8xbf16>, vector<16x8xbf16>, vector<16x8xbf16>, vector<16x8xbf16>, vector<16x8xbf16>, vector<16x8xbf16>, vector<16x8xbf16>, vector<16x8xbf16>, vector<16x8xbf16> -> vector<16x72xbf16>
    %c0_267 = arith.constant 0 : index
    %c0_268 = arith.constant 0 : index
    %446 = vector.load %arg10[%c0_267, %c0_268] : memref<256x72xbf16, #tpu.memory_space<vmem>>, vector<16x72xbf16>
    tpu.vector_store %arg10[%c0_267, %c0_268], %445 {strides = array<i32>} : memref<256x72xbf16, #tpu.memory_space<vmem>>, vector<16x72xbf16>,
    %c1_269 = arith.constant 1 : index
    %c0_270 = arith.constant 0 : index
    %c0_271 = arith.constant 0 : index
    %447 = vector.load %arg9[%c1_269, %c0_270, %c0_271] : memref<18x18x8xbf16, #tpu.memory_space<vmem>>, vector<1x18x8xbf16>
    %448 = vector.shape_cast %447 : vector<1x18x8xbf16> to vector<18x8xbf16>
    %449 = vector.extract_strided_slice %448 {offsets = [0, 0], sizes = [16, 8], strides = [1, 1]} : vector<18x8xbf16> to vector<16x8xbf16>
    %450 = vector.extract_strided_slice %448 {offsets = [1, 0], sizes = [16, 8], strides = [1, 1]} : vector<18x8xbf16> to vector<16x8xbf16>
    %451 = vector.extract_strided_slice %448 {offsets = [2, 0], sizes = [16, 8], strides = [1, 1]} : vector<18x8xbf16> to vector<16x8xbf16>
    %c2_272 = arith.constant 2 : index
    %c0_273 = arith.constant 0 : index
    %c0_274 = arith.constant 0 : index
    %452 = vector.load %arg9[%c2_272, %c0_273, %c0_274] : memref<18x18x8xbf16, #tpu.memory_space<vmem>>, vector<1x18x8xbf16>
    %453 = vector.shape_cast %452 : vector<1x18x8xbf16> to vector<18x8xbf16>
    %454 = vector.extract_strided_slice %453 {offsets = [0, 0], sizes = [16, 8], strides = [1, 1]} : vector<18x8xbf16> to vector<16x8xbf16>
    %455 = vector.extract_strided_slice %453 {offsets = [1, 0], sizes = [16, 8], strides = [1, 1]} : vector<18x8xbf16> to vector<16x8xbf16>
    %456 = vector.extract_strided_slice %453 {offsets = [2, 0], sizes = [16, 8], strides = [1, 1]} : vector<18x8xbf16> to vector<16x8xbf16>
    %c3_275 = arith.constant 3 : index
    %c0_276 = arith.constant 0 : index
    %c0_277 = arith.constant 0 : index
    %457 = vector.load %arg9[%c3_275, %c0_276, %c0_277] : memref<18x18x8xbf16, #tpu.memory_space<vmem>>, vector<1x18x8xbf16>
    %458 = vector.shape_cast %457 : vector<1x18x8xbf16> to vector<18x8xbf16>
    %459 = vector.extract_strided_slice %458 {offsets = [0, 0], sizes = [16, 8], strides = [1, 1]} : vector<18x8xbf16> to vector<16x8xbf16>
    %460 = vector.extract_strided_slice %458 {offsets = [1, 0], sizes = [16, 8], strides = [1, 1]} : vector<18x8xbf16> to vector<16x8xbf16>
    %461 = vector.extract_strided_slice %458 {offsets = [2, 0], sizes = [16, 8], strides = [1, 1]} : vector<18x8xbf16> to vector<16x8xbf16>
    %462 = tpu.concatenate %449, %450, %451, %454, %455, %456, %459, %460, %461 in 1 : vector<16x8xbf16>, vector<16x8xbf16>, vector<16x8xbf16>, vector<16x8xbf16>, vector<16x8xbf16>, vector<16x8xbf16>, vector<16x8xbf16>, vector<16x8xbf16>, vector<16x8xbf16> -> vector<16x72xbf16>
    %c16_278 = arith.constant 16 : index
    %c0_279 = arith.constant 0 : index
    %463 = vector.load %arg10[%c16_278, %c0_279] : memref<256x72xbf16, #tpu.memory_space<vmem>>, vector<16x72xbf16>
    tpu.vector_store %arg10[%c16_278, %c0_279], %462 {strides = array<i32>} : memref<256x72xbf16, #tpu.memory_space<vmem>>, vector<16x72xbf16>,
    %c2_280 = arith.constant 2 : index
    %c0_281 = arith.constant 0 : index
    %c0_282 = arith.constant 0 : index
    %464 = vector.load %arg9[%c2_280, %c0_281, %c0_282] : memref<18x18x8xbf16, #tpu.memory_space<vmem>>, vector<1x18x8xbf16>
    %465 = vector.shape_cast %464 : vector<1x18x8xbf16> to vector<18x8xbf16>
    %466 = vector.extract_strided_slice %465 {offsets = [0, 0], sizes = [16, 8], strides = [1, 1]} : vector<18x8xbf16> to vector<16x8xbf16>
    %467 = vector.extract_strided_slice %465 {offsets = [1, 0], sizes = [16, 8], strides = [1, 1]} : vector<18x8xbf16> to vector<16x8xbf16>
    %468 = vector.extract_strided_slice %465 {offsets = [2, 0], sizes = [16, 8], strides = [1, 1]} : vector<18x8xbf16> to vector<16x8xbf16>
    %c3_283 = arith.constant 3 : index
    %c0_284 = arith.constant 0 : index
    %c0_285 = arith.constant 0 : index
    %469 = vector.load %arg9[%c3_283, %c0_284, %c0_285] : memref<18x18x8xbf16, #tpu.memory_space<vmem>>, vector<1x18x8xbf16>
    %470 = vector.shape_cast %469 : vector<1x18x8xbf16> to vector<18x8xbf16>
    %471 = vector.extract_strided_slice %470 {offsets = [0, 0], sizes = [16, 8], strides = [1, 1]} : vector<18x8xbf16> to vector<16x8xbf16>
    %472 = vector.extract_strided_slice %470 {offsets = [1, 0], sizes = [16, 8], strides = [1, 1]} : vector<18x8xbf16> to vector<16x8xbf16>
    %473 = vector.extract_strided_slice %470 {offsets = [2, 0], sizes = [16, 8], strides = [1, 1]} : vector<18x8xbf16> to vector<16x8xbf16>
    %c4_286 = arith.constant 4 : index
    %c0_287 = arith.constant 0 : index
    %c0_288 = arith.constant 0 : index
    %474 = vector.load %arg9[%c4_286, %c0_287, %c0_288] : memref<18x18x8xbf16, #tpu.memory_space<vmem>>, vector<1x18x8xbf16>
    %475 = vector.shape_cast %474 : vector<1x18x8xbf16> to vector<18x8xbf16>
    %476 = vector.extract_strided_slice %475 {offsets = [0, 0], sizes = [16, 8], strides = [1, 1]} : vector<18x8xbf16> to vector<16x8xbf16>
    %477 = vector.extract_strided_slice %475 {offsets = [1, 0], sizes = [16, 8], strides = [1, 1]} : vector<18x8xbf16> to vector<16x8xbf16>
    %478 = vector.extract_strided_slice %475 {offsets = [2, 0], sizes = [16, 8], strides = [1, 1]} : vector<18x8xbf16> to vector<16x8xbf16>
    %479 = tpu.concatenate %466, %467, %468, %471, %472, %473, %476, %477, %478 in 1 : vector<16x8xbf16>, vector<16x8xbf16>, vector<16x8xbf16>, vector<16x8xbf16>, vector<16x8xbf16>, vector<16x8xbf16>, vector<16x8xbf16>, vector<16x8xbf16>, vector<16x8xbf16> -> vector<16x72xbf16>
    %c32_289 = arith.constant 32 : index
    %c0_290 = arith.constant 0 : index
    %480 = vector.load %arg10[%c32_289, %c0_290] : memref<256x72xbf16, #tpu.memory_space<vmem>>, vector<16x72xbf16>
    tpu.vector_store %arg10[%c32_289, %c0_290], %479 {strides = array<i32>} : memref<256x72xbf16, #tpu.memory_space<vmem>>, vector<16x72xbf16>,
    %c3_291 = arith.constant 3 : index
    %c0_292 = arith.constant 0 : index
    %c0_293 = arith.constant 0 : index
    %481 = vector.load %arg9[%c3_291, %c0_292, %c0_293] : memref<18x18x8xbf16, #tpu.memory_space<vmem>>, vector<1x18x8xbf16>
    %482 = vector.shape_cast %481 : vector<1x18x8xbf16> to vector<18x8xbf16>
    %483 = vector.extract_strided_slice %482 {offsets = [0, 0], sizes = [16, 8], strides = [1, 1]} : vector<18x8xbf16> to vector<16x8xbf16>
    %484 = vector.extract_strided_slice %482 {offsets = [1, 0], sizes = [16, 8], strides = [1, 1]} : vector<18x8xbf16> to vector<16x8xbf16>
    %485 = vector.extract_strided_slice %482 {offsets = [2, 0], sizes = [16, 8], strides = [1, 1]} : vector<18x8xbf16> to vector<16x8xbf16>
    %c4_294 = arith.constant 4 : index
    %c0_295 = arith.constant 0 : index
    %c0_296 = arith.constant 0 : index
    %486 = vector.load %arg9[%c4_294, %c0_295, %c0_296] : memref<18x18x8xbf16, #tpu.memory_space<vmem>>, vector<1x18x8xbf16>
    %487 = vector.shape_cast %486 : vector<1x18x8xbf16> to vector<18x8xbf16>
    %488 = vector.extract_strided_slice %487 {offsets = [0, 0], sizes = [16, 8], strides = [1, 1]} : vector<18x8xbf16> to vector<16x8xbf16>
    %489 = vector.extract_strided_slice %487 {offsets = [1, 0], sizes = [16, 8], strides = [1, 1]} : vector<18x8xbf16> to vector<16x8xbf16>
    %490 = vector.extract_strided_slice %487 {offsets = [2, 0], sizes = [16, 8], strides = [1, 1]} : vector<18x8xbf16> to vector<16x8xbf16>
    %c5_297 = arith.constant 5 : index
    %c0_298 = arith.constant 0 : index
    %c0_299 = arith.constant 0 : index
    %491 = vector.load %arg9[%c5_297, %c0_298, %c0_299] : memref<18x18x8xbf16, #tpu.memory_space<vmem>>, vector<1x18x8xbf16>
    %492 = vector.shape_cast %491 : vector<1x18x8xbf16> to vector<18x8xbf16>
    %493 = vector.extract_strided_slice %492 {offsets = [0, 0], sizes = [16, 8], strides = [1, 1]} : vector<18x8xbf16> to vector<16x8xbf16>
    %494 = vector.extract_strided_slice %492 {offsets = [1, 0], sizes = [16, 8], strides = [1, 1]} : vector<18x8xbf16> to vector<16x8xbf16>
    %495 = vector.extract_strided_slice %492 {offsets = [2, 0], sizes = [16, 8], strides = [1, 1]} : vector<18x8xbf16> to vector<16x8xbf16>
    %496 = tpu.concatenate %483, %484, %485, %488, %489, %490, %493, %494, %495 in 1 : vector<16x8xbf16>, vector<16x8xbf16>, vector<16x8xbf16>, vector<16x8xbf16>, vector<16x8xbf16>, vector<16x8xbf16>, vector<16x8xbf16>, vector<16x8xbf16>, vector<16x8xbf16> -> vector<16x72xbf16>
    %c48_300 = arith.constant 48 : index
    %c0_301 = arith.constant 0 : index
    %497 = vector.load %arg10[%c48_300, %c0_301] : memref<256x72xbf16, #tpu.memory_space<vmem>>, vector<16x72xbf16>
    tpu.vector_store %arg10[%c48_300, %c0_301], %496 {strides = array<i32>} : memref<256x72xbf16, #tpu.memory_space<vmem>>, vector<16x72xbf16>,
    %c4_302 = arith.constant 4 : index
    %c0_303 = arith.constant 0 : index
    %c0_304 = arith.constant 0 : index
    %498 = vector.load %arg9[%c4_302, %c0_303, %c0_304] : memref<18x18x8xbf16, #tpu.memory_space<vmem>>, vector<1x18x8xbf16>
    %499 = vector.shape_cast %498 : vector<1x18x8xbf16> to vector<18x8xbf16>
    %500 = vector.extract_strided_slice %499 {offsets = [0, 0], sizes = [16, 8], strides = [1, 1]} : vector<18x8xbf16> to vector<16x8xbf16>
    %501 = vector.extract_strided_slice %499 {offsets = [1, 0], sizes = [16, 8], strides = [1, 1]} : vector<18x8xbf16> to vector<16x8xbf16>
    %502 = vector.extract_strided_slice %499 {offsets = [2, 0], sizes = [16, 8], strides = [1, 1]} : vector<18x8xbf16> to vector<16x8xbf16>
    %c5_305 = arith.constant 5 : index
    %c0_306 = arith.constant 0 : index
    %c0_307 = arith.constant 0 : index
    %503 = vector.load %arg9[%c5_305, %c0_306, %c0_307] : memref<18x18x8xbf16, #tpu.memory_space<vmem>>, vector<1x18x8xbf16>
    %504 = vector.shape_cast %503 : vector<1x18x8xbf16> to vector<18x8xbf16>
    %505 = vector.extract_strided_slice %504 {offsets = [0, 0], sizes = [16, 8], strides = [1, 1]} : vector<18x8xbf16> to vector<16x8xbf16>
    %506 = vector.extract_strided_slice %504 {offsets = [1, 0], sizes = [16, 8], strides = [1, 1]} : vector<18x8xbf16> to vector<16x8xbf16>
    %507 = vector.extract_strided_slice %504 {offsets = [2, 0], sizes = [16, 8], strides = [1, 1]} : vector<18x8xbf16> to vector<16x8xbf16>
    %c6_308 = arith.constant 6 : index
    %c0_309 = arith.constant 0 : index
    %c0_310 = arith.constant 0 : index
    %508 = vector.load %arg9[%c6_308, %c0_309, %c0_310] : memref<18x18x8xbf16, #tpu.memory_space<vmem>>, vector<1x18x8xbf16>
    %509 = vector.shape_cast %508 : vector<1x18x8xbf16> to vector<18x8xbf16>
    %510 = vector.extract_strided_slice %509 {offsets = [0, 0], sizes = [16, 8], strides = [1, 1]} : vector<18x8xbf16> to vector<16x8xbf16>
    %511 = vector.extract_strided_slice %509 {offsets = [1, 0], sizes = [16, 8], strides = [1, 1]} : vector<18x8xbf16> to vector<16x8xbf16>
    %512 = vector.extract_strided_slice %509 {offsets = [2, 0], sizes = [16, 8], strides = [1, 1]} : vector<18x8xbf16> to vector<16x8xbf16>
    %513 = tpu.concatenate %500, %501, %502, %505, %506, %507, %510, %511, %512 in 1 : vector<16x8xbf16>, vector<16x8xbf16>, vector<16x8xbf16>, vector<16x8xbf16>, vector<16x8xbf16>, vector<16x8xbf16>, vector<16x8xbf16>, vector<16x8xbf16>, vector<16x8xbf16> -> vector<16x72xbf16>
    %c64_311 = arith.constant 64 : index
    %c0_312 = arith.constant 0 : index
    %514 = vector.load %arg10[%c64_311, %c0_312] : memref<256x72xbf16, #tpu.memory_space<vmem>>, vector<16x72xbf16>
    tpu.vector_store %arg10[%c64_311, %c0_312], %513 {strides = array<i32>} : memref<256x72xbf16, #tpu.memory_space<vmem>>, vector<16x72xbf16>,
    %c5_313 = arith.constant 5 : index
    %c0_314 = arith.constant 0 : index
    %c0_315 = arith.constant 0 : index
    %515 = vector.load %arg9[%c5_313, %c0_314, %c0_315] : memref<18x18x8xbf16, #tpu.memory_space<vmem>>, vector<1x18x8xbf16>
    %516 = vector.shape_cast %515 : vector<1x18x8xbf16> to vector<18x8xbf16>
    %517 = vector.extract_strided_slice %516 {offsets = [0, 0], sizes = [16, 8], strides = [1, 1]} : vector<18x8xbf16> to vector<16x8xbf16>
    %518 = vector.extract_strided_slice %516 {offsets = [1, 0], sizes = [16, 8], strides = [1, 1]} : vector<18x8xbf16> to vector<16x8xbf16>
    %519 = vector.extract_strided_slice %516 {offsets = [2, 0], sizes = [16, 8], strides = [1, 1]} : vector<18x8xbf16> to vector<16x8xbf16>
    %c6_316 = arith.constant 6 : index
    %c0_317 = arith.constant 0 : index
    %c0_318 = arith.constant 0 : index
    %520 = vector.load %arg9[%c6_316, %c0_317, %c0_318] : memref<18x18x8xbf16, #tpu.memory_space<vmem>>, vector<1x18x8xbf16>
    %521 = vector.shape_cast %520 : vector<1x18x8xbf16> to vector<18x8xbf16>
    %522 = vector.extract_strided_slice %521 {offsets = [0, 0], sizes = [16, 8], strides = [1, 1]} : vector<18x8xbf16> to vector<16x8xbf16>
    %523 = vector.extract_strided_slice %521 {offsets = [1, 0], sizes = [16, 8], strides = [1, 1]} : vector<18x8xbf16> to vector<16x8xbf16>
    %524 = vector.extract_strided_slice %521 {offsets = [2, 0], sizes = [16, 8], strides = [1, 1]} : vector<18x8xbf16> to vector<16x8xbf16>
    %c7_319 = arith.constant 7 : index
    %c0_320 = arith.constant 0 : index
    %c0_321 = arith.constant 0 : index
    %525 = vector.load %arg9[%c7_319, %c0_320, %c0_321] : memref<18x18x8xbf16, #tpu.memory_space<vmem>>, vector<1x18x8xbf16>
    %526 = vector.shape_cast %525 : vector<1x18x8xbf16> to vector<18x8xbf16>
    %527 = vector.extract_strided_slice %526 {offsets = [0, 0], sizes = [16, 8], strides = [1, 1]} : vector<18x8xbf16> to vector<16x8xbf16>
    %528 = vector.extract_strided_slice %526 {offsets = [1, 0], sizes = [16, 8], strides = [1, 1]} : vector<18x8xbf16> to vector<16x8xbf16>
    %529 = vector.extract_strided_slice %526 {offsets = [2, 0], sizes = [16, 8], strides = [1, 1]} : vector<18x8xbf16> to vector<16x8xbf16>
    %530 = tpu.concatenate %517, %518, %519, %522, %523, %524, %527, %528, %529 in 1 : vector<16x8xbf16>, vector<16x8xbf16>, vector<16x8xbf16>, vector<16x8xbf16>, vector<16x8xbf16>, vector<16x8xbf16>, vector<16x8xbf16>, vector<16x8xbf16>, vector<16x8xbf16> -> vector<16x72xbf16>
    %c80_322 = arith.constant 80 : index
    %c0_323 = arith.constant 0 : index
    %531 = vector.load %arg10[%c80_322, %c0_323] : memref<256x72xbf16, #tpu.memory_space<vmem>>, vector<16x72xbf16>
    tpu.vector_store %arg10[%c80_322, %c0_323], %530 {strides = array<i32>} : memref<256x72xbf16, #tpu.memory_space<vmem>>, vector<16x72xbf16>,
    %c6_324 = arith.constant 6 : index
    %c0_325 = arith.constant 0 : index
    %c0_326 = arith.constant 0 : index
    %532 = vector.load %arg9[%c6_324, %c0_325, %c0_326] : memref<18x18x8xbf16, #tpu.memory_space<vmem>>, vector<1x18x8xbf16>
    %533 = vector.shape_cast %532 : vector<1x18x8xbf16> to vector<18x8xbf16>
    %534 = vector.extract_strided_slice %533 {offsets = [0, 0], sizes = [16, 8], strides = [1, 1]} : vector<18x8xbf16> to vector<16x8xbf16>
    %535 = vector.extract_strided_slice %533 {offsets = [1, 0], sizes = [16, 8], strides = [1, 1]} : vector<18x8xbf16> to vector<16x8xbf16>
    %536 = vector.extract_strided_slice %533 {offsets = [2, 0], sizes = [16, 8], strides = [1, 1]} : vector<18x8xbf16> to vector<16x8xbf16>
    %c7_327 = arith.constant 7 : index
    %c0_328 = arith.constant 0 : index
    %c0_329 = arith.constant 0 : index
    %537 = vector.load %arg9[%c7_327, %c0_328, %c0_329] : memref<18x18x8xbf16, #tpu.memory_space<vmem>>, vector<1x18x8xbf16>
    %538 = vector.shape_cast %537 : vector<1x18x8xbf16> to vector<18x8xbf16>
    %539 = vector.extract_strided_slice %538 {offsets = [0, 0], sizes = [16, 8], strides = [1, 1]} : vector<18x8xbf16> to vector<16x8xbf16>
    %540 = vector.extract_strided_slice %538 {offsets = [1, 0], sizes = [16, 8], strides = [1, 1]} : vector<18x8xbf16> to vector<16x8xbf16>
    %541 = vector.extract_strided_slice %538 {offsets = [2, 0], sizes = [16, 8], strides = [1, 1]} : vector<18x8xbf16> to vector<16x8xbf16>
    %c8_330 = arith.constant 8 : index
    %c0_331 = arith.constant 0 : index
    %c0_332 = arith.constant 0 : index
    %542 = vector.load %arg9[%c8_330, %c0_331, %c0_332] : memref<18x18x8xbf16, #tpu.memory_space<vmem>>, vector<1x18x8xbf16>
    %543 = vector.shape_cast %542 : vector<1x18x8xbf16> to vector<18x8xbf16>
    %544 = vector.extract_strided_slice %543 {offsets = [0, 0], sizes = [16, 8], strides = [1, 1]} : vector<18x8xbf16> to vector<16x8xbf16>
    %545 = vector.extract_strided_slice %543 {offsets = [1, 0], sizes = [16, 8], strides = [1, 1]} : vector<18x8xbf16> to vector<16x8xbf16>
    %546 = vector.extract_strided_slice %543 {offsets = [2, 0], sizes = [16, 8], strides = [1, 1]} : vector<18x8xbf16> to vector<16x8xbf16>
    %547 = tpu.concatenate %534, %535, %536, %539, %540, %541, %544, %545, %546 in 1 : vector<16x8xbf16>, vector<16x8xbf16>, vector<16x8xbf16>, vector<16x8xbf16>, vector<16x8xbf16>, vector<16x8xbf16>, vector<16x8xbf16>, vector<16x8xbf16>, vector<16x8xbf16> -> vector<16x72xbf16>
    %c96_333 = arith.constant 96 : index
    %c0_334 = arith.constant 0 : index
    %548 = vector.load %arg10[%c96_333, %c0_334] : memref<256x72xbf16, #tpu.memory_space<vmem>>, vector<16x72xbf16>
    tpu.vector_store %arg10[%c96_333, %c0_334], %547 {strides = array<i32>} : memref<256x72xbf16, #tpu.memory_space<vmem>>, vector<16x72xbf16>,
    %c7_335 = arith.constant 7 : index
    %c0_336 = arith.constant 0 : index
    %c0_337 = arith.constant 0 : index
    %549 = vector.load %arg9[%c7_335, %c0_336, %c0_337] : memref<18x18x8xbf16, #tpu.memory_space<vmem>>, vector<1x18x8xbf16>
    %550 = vector.shape_cast %549 : vector<1x18x8xbf16> to vector<18x8xbf16>
    %551 = vector.extract_strided_slice %550 {offsets = [0, 0], sizes = [16, 8], strides = [1, 1]} : vector<18x8xbf16> to vector<16x8xbf16>
    %552 = vector.extract_strided_slice %550 {offsets = [1, 0], sizes = [16, 8], strides = [1, 1]} : vector<18x8xbf16> to vector<16x8xbf16>
    %553 = vector.extract_strided_slice %550 {offsets = [2, 0], sizes = [16, 8], strides = [1, 1]} : vector<18x8xbf16> to vector<16x8xbf16>
    %c8_338 = arith.constant 8 : index
    %c0_339 = arith.constant 0 : index
    %c0_340 = arith.constant 0 : index
    %554 = vector.load %arg9[%c8_338, %c0_339, %c0_340] : memref<18x18x8xbf16, #tpu.memory_space<vmem>>, vector<1x18x8xbf16>
    %555 = vector.shape_cast %554 : vector<1x18x8xbf16> to vector<18x8xbf16>
    %556 = vector.extract_strided_slice %555 {offsets = [0, 0], sizes = [16, 8], strides = [1, 1]} : vector<18x8xbf16> to vector<16x8xbf16>
    %557 = vector.extract_strided_slice %555 {offsets = [1, 0], sizes = [16, 8], strides = [1, 1]} : vector<18x8xbf16> to vector<16x8xbf16>
    %558 = vector.extract_strided_slice %555 {offsets = [2, 0], sizes = [16, 8], strides = [1, 1]} : vector<18x8xbf16> to vector<16x8xbf16>
    %c9_341 = arith.constant 9 : index
    %c0_342 = arith.constant 0 : index
    %c0_343 = arith.constant 0 : index
    %559 = vector.load %arg9[%c9_341, %c0_342, %c0_343] : memref<18x18x8xbf16, #tpu.memory_space<vmem>>, vector<1x18x8xbf16>
    %560 = vector.shape_cast %559 : vector<1x18x8xbf16> to vector<18x8xbf16>
    %561 = vector.extract_strided_slice %560 {offsets = [0, 0], sizes = [16, 8], strides = [1, 1]} : vector<18x8xbf16> to vector<16x8xbf16>
    %562 = vector.extract_strided_slice %560 {offsets = [1, 0], sizes = [16, 8], strides = [1, 1]} : vector<18x8xbf16> to vector<16x8xbf16>
    %563 = vector.extract_strided_slice %560 {offsets = [2, 0], sizes = [16, 8], strides = [1, 1]} : vector<18x8xbf16> to vector<16x8xbf16>
    %564 = tpu.concatenate %551, %552, %553, %556, %557, %558, %561, %562, %563 in 1 : vector<16x8xbf16>, vector<16x8xbf16>, vector<16x8xbf16>, vector<16x8xbf16>, vector<16x8xbf16>, vector<16x8xbf16>, vector<16x8xbf16>, vector<16x8xbf16>, vector<16x8xbf16> -> vector<16x72xbf16>
    %c112_344 = arith.constant 112 : index
    %c0_345 = arith.constant 0 : index
    %565 = vector.load %arg10[%c112_344, %c0_345] : memref<256x72xbf16, #tpu.memory_space<vmem>>, vector<16x72xbf16>
    tpu.vector_store %arg10[%c112_344, %c0_345], %564 {strides = array<i32>} : memref<256x72xbf16, #tpu.memory_space<vmem>>, vector<16x72xbf16>,
    %c8_346 = arith.constant 8 : index
    %c0_347 = arith.constant 0 : index
    %c0_348 = arith.constant 0 : index
    %566 = vector.load %arg9[%c8_346, %c0_347, %c0_348] : memref<18x18x8xbf16, #tpu.memory_space<vmem>>, vector<1x18x8xbf16>
    %567 = vector.shape_cast %566 : vector<1x18x8xbf16> to vector<18x8xbf16>
    %568 = vector.extract_strided_slice %567 {offsets = [0, 0], sizes = [16, 8], strides = [1, 1]} : vector<18x8xbf16> to vector<16x8xbf16>
    %569 = vector.extract_strided_slice %567 {offsets = [1, 0], sizes = [16, 8], strides = [1, 1]} : vector<18x8xbf16> to vector<16x8xbf16>
    %570 = vector.extract_strided_slice %567 {offsets = [2, 0], sizes = [16, 8], strides = [1, 1]} : vector<18x8xbf16> to vector<16x8xbf16>
    %c9_349 = arith.constant 9 : index
    %c0_350 = arith.constant 0 : index
    %c0_351 = arith.constant 0 : index
    %571 = vector.load %arg9[%c9_349, %c0_350, %c0_351] : memref<18x18x8xbf16, #tpu.memory_space<vmem>>, vector<1x18x8xbf16>
    %572 = vector.shape_cast %571 : vector<1x18x8xbf16> to vector<18x8xbf16>
    %573 = vector.extract_strided_slice %572 {offsets = [0, 0], sizes = [16, 8], strides = [1, 1]} : vector<18x8xbf16> to vector<16x8xbf16>
    %574 = vector.extract_strided_slice %572 {offsets = [1, 0], sizes = [16, 8], strides = [1, 1]} : vector<18x8xbf16> to vector<16x8xbf16>
    %575 = vector.extract_strided_slice %572 {offsets = [2, 0], sizes = [16, 8], strides = [1, 1]} : vector<18x8xbf16> to vector<16x8xbf16>
    %c10_352 = arith.constant 10 : index
    %c0_353 = arith.constant 0 : index
    %c0_354 = arith.constant 0 : index
    %576 = vector.load %arg9[%c10_352, %c0_353, %c0_354] : memref<18x18x8xbf16, #tpu.memory_space<vmem>>, vector<1x18x8xbf16>
    %577 = vector.shape_cast %576 : vector<1x18x8xbf16> to vector<18x8xbf16>
    %578 = vector.extract_strided_slice %577 {offsets = [0, 0], sizes = [16, 8], strides = [1, 1]} : vector<18x8xbf16> to vector<16x8xbf16>
    %579 = vector.extract_strided_slice %577 {offsets = [1, 0], sizes = [16, 8], strides = [1, 1]} : vector<18x8xbf16> to vector<16x8xbf16>
    %580 = vector.extract_strided_slice %577 {offsets = [2, 0], sizes = [16, 8], strides = [1, 1]} : vector<18x8xbf16> to vector<16x8xbf16>
    %581 = tpu.concatenate %568, %569, %570, %573, %574, %575, %578, %579, %580 in 1 : vector<16x8xbf16>, vector<16x8xbf16>, vector<16x8xbf16>, vector<16x8xbf16>, vector<16x8xbf16>, vector<16x8xbf16>, vector<16x8xbf16>, vector<16x8xbf16>, vector<16x8xbf16> -> vector<16x72xbf16>
    %c128_355 = arith.constant 128 : index
    %c0_356 = arith.constant 0 : index
    %582 = vector.load %arg10[%c128_355, %c0_356] : memref<256x72xbf16, #tpu.memory_space<vmem>>, vector<16x72xbf16>
    tpu.vector_store %arg10[%c128_355, %c0_356], %581 {strides = array<i32>} : memref<256x72xbf16, #tpu.memory_space<vmem>>, vector<16x72xbf16>,
    %c9_357 = arith.constant 9 : index
    %c0_358 = arith.constant 0 : index
    %c0_359 = arith.constant 0 : index
    %583 = vector.load %arg9[%c9_357, %c0_358, %c0_359] : memref<18x18x8xbf16, #tpu.memory_space<vmem>>, vector<1x18x8xbf16>
    %584 = vector.shape_cast %583 : vector<1x18x8xbf16> to vector<18x8xbf16>
    %585 = vector.extract_strided_slice %584 {offsets = [0, 0], sizes = [16, 8], strides = [1, 1]} : vector<18x8xbf16> to vector<16x8xbf16>
    %586 = vector.extract_strided_slice %584 {offsets = [1, 0], sizes = [16, 8], strides = [1, 1]} : vector<18x8xbf16> to vector<16x8xbf16>
    %587 = vector.extract_strided_slice %584 {offsets = [2, 0], sizes = [16, 8], strides = [1, 1]} : vector<18x8xbf16> to vector<16x8xbf16>
    %c10_360 = arith.constant 10 : index
    %c0_361 = arith.constant 0 : index
    %c0_362 = arith.constant 0 : index
    %588 = vector.load %arg9[%c10_360, %c0_361, %c0_362] : memref<18x18x8xbf16, #tpu.memory_space<vmem>>, vector<1x18x8xbf16>
    %589 = vector.shape_cast %588 : vector<1x18x8xbf16> to vector<18x8xbf16>
    %590 = vector.extract_strided_slice %589 {offsets = [0, 0], sizes = [16, 8], strides = [1, 1]} : vector<18x8xbf16> to vector<16x8xbf16>
    %591 = vector.extract_strided_slice %589 {offsets = [1, 0], sizes = [16, 8], strides = [1, 1]} : vector<18x8xbf16> to vector<16x8xbf16>
    %592 = vector.extract_strided_slice %589 {offsets = [2, 0], sizes = [16, 8], strides = [1, 1]} : vector<18x8xbf16> to vector<16x8xbf16>
    %c11_363 = arith.constant 11 : index
    %c0_364 = arith.constant 0 : index
    %c0_365 = arith.constant 0 : index
    %593 = vector.load %arg9[%c11_363, %c0_364, %c0_365] : memref<18x18x8xbf16, #tpu.memory_space<vmem>>, vector<1x18x8xbf16>
    %594 = vector.shape_cast %593 : vector<1x18x8xbf16> to vector<18x8xbf16>
    %595 = vector.extract_strided_slice %594 {offsets = [0, 0], sizes = [16, 8], strides = [1, 1]} : vector<18x8xbf16> to vector<16x8xbf16>
    %596 = vector.extract_strided_slice %594 {offsets = [1, 0], sizes = [16, 8], strides = [1, 1]} : vector<18x8xbf16> to vector<16x8xbf16>
    %597 = vector.extract_strided_slice %594 {offsets = [2, 0], sizes = [16, 8], strides = [1, 1]} : vector<18x8xbf16> to vector<16x8xbf16>
    %598 = tpu.concatenate %585, %586, %587, %590, %591, %592, %595, %596, %597 in 1 : vector<16x8xbf16>, vector<16x8xbf16>, vector<16x8xbf16>, vector<16x8xbf16>, vector<16x8xbf16>, vector<16x8xbf16>, vector<16x8xbf16>, vector<16x8xbf16>, vector<16x8xbf16> -> vector<16x72xbf16>
    %c144_366 = arith.constant 144 : index
    %c0_367 = arith.constant 0 : index
    %599 = vector.load %arg10[%c144_366, %c0_367] : memref<256x72xbf16, #tpu.memory_space<vmem>>, vector<16x72xbf16>
    tpu.vector_store %arg10[%c144_366, %c0_367], %598 {strides = array<i32>} : memref<256x72xbf16, #tpu.memory_space<vmem>>, vector<16x72xbf16>,
    %c10_368 = arith.constant 10 : index
    %c0_369 = arith.constant 0 : index
    %c0_370 = arith.constant 0 : index
    %600 = vector.load %arg9[%c10_368, %c0_369, %c0_370] : memref<18x18x8xbf16, #tpu.memory_space<vmem>>, vector<1x18x8xbf16>
    %601 = vector.shape_cast %600 : vector<1x18x8xbf16> to vector<18x8xbf16>
    %602 = vector.extract_strided_slice %601 {offsets = [0, 0], sizes = [16, 8], strides = [1, 1]} : vector<18x8xbf16> to vector<16x8xbf16>
    %603 = vector.extract_strided_slice %601 {offsets = [1, 0], sizes = [16, 8], strides = [1, 1]} : vector<18x8xbf16> to vector<16x8xbf16>
    %604 = vector.extract_strided_slice %601 {offsets = [2, 0], sizes = [16, 8], strides = [1, 1]} : vector<18x8xbf16> to vector<16x8xbf16>
    %c11_371 = arith.constant 11 : index
    %c0_372 = arith.constant 0 : index
    %c0_373 = arith.constant 0 : index
    %605 = vector.load %arg9[%c11_371, %c0_372, %c0_373] : memref<18x18x8xbf16, #tpu.memory_space<vmem>>, vector<1x18x8xbf16>
    %606 = vector.shape_cast %605 : vector<1x18x8xbf16> to vector<18x8xbf16>
    %607 = vector.extract_strided_slice %606 {offsets = [0, 0], sizes = [16, 8], strides = [1, 1]} : vector<18x8xbf16> to vector<16x8xbf16>
    %608 = vector.extract_strided_slice %606 {offsets = [1, 0], sizes = [16, 8], strides = [1, 1]} : vector<18x8xbf16> to vector<16x8xbf16>
    %609 = vector.extract_strided_slice %606 {offsets = [2, 0], sizes = [16, 8], strides = [1, 1]} : vector<18x8xbf16> to vector<16x8xbf16>
    %c12_374 = arith.constant 12 : index
    %c0_375 = arith.constant 0 : index
    %c0_376 = arith.constant 0 : index
    %610 = vector.load %arg9[%c12_374, %c0_375, %c0_376] : memref<18x18x8xbf16, #tpu.memory_space<vmem>>, vector<1x18x8xbf16>
    %611 = vector.shape_cast %610 : vector<1x18x8xbf16> to vector<18x8xbf16>
    %612 = vector.extract_strided_slice %611 {offsets = [0, 0], sizes = [16, 8], strides = [1, 1]} : vector<18x8xbf16> to vector<16x8xbf16>
    %613 = vector.extract_strided_slice %611 {offsets = [1, 0], sizes = [16, 8], strides = [1, 1]} : vector<18x8xbf16> to vector<16x8xbf16>
    %614 = vector.extract_strided_slice %611 {offsets = [2, 0], sizes = [16, 8], strides = [1, 1]} : vector<18x8xbf16> to vector<16x8xbf16>
    %615 = tpu.concatenate %602, %603, %604, %607, %608, %609, %612, %613, %614 in 1 : vector<16x8xbf16>, vector<16x8xbf16>, vector<16x8xbf16>, vector<16x8xbf16>, vector<16x8xbf16>, vector<16x8xbf16>, vector<16x8xbf16>, vector<16x8xbf16>, vector<16x8xbf16> -> vector<16x72xbf16>
    %c160_377 = arith.constant 160 : index
    %c0_378 = arith.constant 0 : index
    %616 = vector.load %arg10[%c160_377, %c0_378] : memref<256x72xbf16, #tpu.memory_space<vmem>>, vector<16x72xbf16>
    tpu.vector_store %arg10[%c160_377, %c0_378], %615 {strides = array<i32>} : memref<256x72xbf16, #tpu.memory_space<vmem>>, vector<16x72xbf16>,
    %c11_379 = arith.constant 11 : index
    %c0_380 = arith.constant 0 : index
    %c0_381 = arith.constant 0 : index
    %617 = vector.load %arg9[%c11_379, %c0_380, %c0_381] : memref<18x18x8xbf16, #tpu.memory_space<vmem>>, vector<1x18x8xbf16>
    %618 = vector.shape_cast %617 : vector<1x18x8xbf16> to vector<18x8xbf16>
    %619 = vector.extract_strided_slice %618 {offsets = [0, 0], sizes = [16, 8], strides = [1, 1]} : vector<18x8xbf16> to vector<16x8xbf16>
    %620 = vector.extract_strided_slice %618 {offsets = [1, 0], sizes = [16, 8], strides = [1, 1]} : vector<18x8xbf16> to vector<16x8xbf16>
    %621 = vector.extract_strided_slice %618 {offsets = [2, 0], sizes = [16, 8], strides = [1, 1]} : vector<18x8xbf16> to vector<16x8xbf16>
    %c12_382 = arith.constant 12 : index
    %c0_383 = arith.constant 0 : index
    %c0_384 = arith.constant 0 : index
    %622 = vector.load %arg9[%c12_382, %c0_383, %c0_384] : memref<18x18x8xbf16, #tpu.memory_space<vmem>>, vector<1x18x8xbf16>
    %623 = vector.shape_cast %622 : vector<1x18x8xbf16> to vector<18x8xbf16>
    %624 = vector.extract_strided_slice %623 {offsets = [0, 0], sizes = [16, 8], strides = [1, 1]} : vector<18x8xbf16> to vector<16x8xbf16>
    %625 = vector.extract_strided_slice %623 {offsets = [1, 0], sizes = [16, 8], strides = [1, 1]} : vector<18x8xbf16> to vector<16x8xbf16>
    %626 = vector.extract_strided_slice %623 {offsets = [2, 0], sizes = [16, 8], strides = [1, 1]} : vector<18x8xbf16> to vector<16x8xbf16>
    %c13_385 = arith.constant 13 : index
    %c0_386 = arith.constant 0 : index
    %c0_387 = arith.constant 0 : index
    %627 = vector.load %arg9[%c13_385, %c0_386, %c0_387] : memref<18x18x8xbf16, #tpu.memory_space<vmem>>, vector<1x18x8xbf16>
    %628 = vector.shape_cast %627 : vector<1x18x8xbf16> to vector<18x8xbf16>
    %629 = vector.extract_strided_slice %628 {offsets = [0, 0], sizes = [16, 8], strides = [1, 1]} : vector<18x8xbf16> to vector<16x8xbf16>
    %630 = vector.extract_strided_slice %628 {offsets = [1, 0], sizes = [16, 8], strides = [1, 1]} : vector<18x8xbf16> to vector<16x8xbf16>
    %631 = vector.extract_strided_slice %628 {offsets = [2, 0], sizes = [16, 8], strides = [1, 1]} : vector<18x8xbf16> to vector<16x8xbf16>
    %632 = tpu.concatenate %619, %620, %621, %624, %625, %626, %629, %630, %631 in 1 : vector<16x8xbf16>, vector<16x8xbf16>, vector<16x8xbf16>, vector<16x8xbf16>, vector<16x8xbf16>, vector<16x8xbf16>, vector<16x8xbf16>, vector<16x8xbf16>, vector<16x8xbf16> -> vector<16x72xbf16>
    %c176_388 = arith.constant 176 : index
    %c0_389 = arith.constant 0 : index
    %633 = vector.load %arg10[%c176_388, %c0_389] : memref<256x72xbf16, #tpu.memory_space<vmem>>, vector<16x72xbf16>
    tpu.vector_store %arg10[%c176_388, %c0_389], %632 {strides = array<i32>} : memref<256x72xbf16, #tpu.memory_space<vmem>>, vector<16x72xbf16>,
    %c12_390 = arith.constant 12 : index
    %c0_391 = arith.constant 0 : index
    %c0_392 = arith.constant 0 : index
    %634 = vector.load %arg9[%c12_390, %c0_391, %c0_392] : memref<18x18x8xbf16, #tpu.memory_space<vmem>>, vector<1x18x8xbf16>
    %635 = vector.shape_cast %634 : vector<1x18x8xbf16> to vector<18x8xbf16>
    %636 = vector.extract_strided_slice %635 {offsets = [0, 0], sizes = [16, 8], strides = [1, 1]} : vector<18x8xbf16> to vector<16x8xbf16>
    %637 = vector.extract_strided_slice %635 {offsets = [1, 0], sizes = [16, 8], strides = [1, 1]} : vector<18x8xbf16> to vector<16x8xbf16>
    %638 = vector.extract_strided_slice %635 {offsets = [2, 0], sizes = [16, 8], strides = [1, 1]} : vector<18x8xbf16> to vector<16x8xbf16>
    %c13_393 = arith.constant 13 : index
    %c0_394 = arith.constant 0 : index
    %c0_395 = arith.constant 0 : index
    %639 = vector.load %arg9[%c13_393, %c0_394, %c0_395] : memref<18x18x8xbf16, #tpu.memory_space<vmem>>, vector<1x18x8xbf16>
    %640 = vector.shape_cast %639 : vector<1x18x8xbf16> to vector<18x8xbf16>
    %641 = vector.extract_strided_slice %640 {offsets = [0, 0], sizes = [16, 8], strides = [1, 1]} : vector<18x8xbf16> to vector<16x8xbf16>
    %642 = vector.extract_strided_slice %640 {offsets = [1, 0], sizes = [16, 8], strides = [1, 1]} : vector<18x8xbf16> to vector<16x8xbf16>
    %643 = vector.extract_strided_slice %640 {offsets = [2, 0], sizes = [16, 8], strides = [1, 1]} : vector<18x8xbf16> to vector<16x8xbf16>
    %c14_396 = arith.constant 14 : index
    %c0_397 = arith.constant 0 : index
    %c0_398 = arith.constant 0 : index
    %644 = vector.load %arg9[%c14_396, %c0_397, %c0_398] : memref<18x18x8xbf16, #tpu.memory_space<vmem>>, vector<1x18x8xbf16>
    %645 = vector.shape_cast %644 : vector<1x18x8xbf16> to vector<18x8xbf16>
    %646 = vector.extract_strided_slice %645 {offsets = [0, 0], sizes = [16, 8], strides = [1, 1]} : vector<18x8xbf16> to vector<16x8xbf16>
    %647 = vector.extract_strided_slice %645 {offsets = [1, 0], sizes = [16, 8], strides = [1, 1]} : vector<18x8xbf16> to vector<16x8xbf16>
    %648 = vector.extract_strided_slice %645 {offsets = [2, 0], sizes = [16, 8], strides = [1, 1]} : vector<18x8xbf16> to vector<16x8xbf16>
    %649 = tpu.concatenate %636, %637, %638, %641, %642, %643, %646, %647, %648 in 1 : vector<16x8xbf16>, vector<16x8xbf16>, vector<16x8xbf16>, vector<16x8xbf16>, vector<16x8xbf16>, vector<16x8xbf16>, vector<16x8xbf16>, vector<16x8xbf16>, vector<16x8xbf16> -> vector<16x72xbf16>
    %c192_399 = arith.constant 192 : index
    %c0_400 = arith.constant 0 : index
    %650 = vector.load %arg10[%c192_399, %c0_400] : memref<256x72xbf16, #tpu.memory_space<vmem>>, vector<16x72xbf16>
    tpu.vector_store %arg10[%c192_399, %c0_400], %649 {strides = array<i32>} : memref<256x72xbf16, #tpu.memory_space<vmem>>, vector<16x72xbf16>,
    %c13_401 = arith.constant 13 : index
    %c0_402 = arith.constant 0 : index
    %c0_403 = arith.constant 0 : index
    %651 = vector.load %arg9[%c13_401, %c0_402, %c0_403] : memref<18x18x8xbf16, #tpu.memory_space<vmem>>, vector<1x18x8xbf16>
    %652 = vector.shape_cast %651 : vector<1x18x8xbf16> to vector<18x8xbf16>
    %653 = vector.extract_strided_slice %652 {offsets = [0, 0], sizes = [16, 8], strides = [1, 1]} : vector<18x8xbf16> to vector<16x8xbf16>
    %654 = vector.extract_strided_slice %652 {offsets = [1, 0], sizes = [16, 8], strides = [1, 1]} : vector<18x8xbf16> to vector<16x8xbf16>
    %655 = vector.extract_strided_slice %652 {offsets = [2, 0], sizes = [16, 8], strides = [1, 1]} : vector<18x8xbf16> to vector<16x8xbf16>
    %c14_404 = arith.constant 14 : index
    %c0_405 = arith.constant 0 : index
    %c0_406 = arith.constant 0 : index
    %656 = vector.load %arg9[%c14_404, %c0_405, %c0_406] : memref<18x18x8xbf16, #tpu.memory_space<vmem>>, vector<1x18x8xbf16>
    %657 = vector.shape_cast %656 : vector<1x18x8xbf16> to vector<18x8xbf16>
    %658 = vector.extract_strided_slice %657 {offsets = [0, 0], sizes = [16, 8], strides = [1, 1]} : vector<18x8xbf16> to vector<16x8xbf16>
    %659 = vector.extract_strided_slice %657 {offsets = [1, 0], sizes = [16, 8], strides = [1, 1]} : vector<18x8xbf16> to vector<16x8xbf16>
    %660 = vector.extract_strided_slice %657 {offsets = [2, 0], sizes = [16, 8], strides = [1, 1]} : vector<18x8xbf16> to vector<16x8xbf16>
    %c15_407 = arith.constant 15 : index
    %c0_408 = arith.constant 0 : index
    %c0_409 = arith.constant 0 : index
    %661 = vector.load %arg9[%c15_407, %c0_408, %c0_409] : memref<18x18x8xbf16, #tpu.memory_space<vmem>>, vector<1x18x8xbf16>
    %662 = vector.shape_cast %661 : vector<1x18x8xbf16> to vector<18x8xbf16>
    %663 = vector.extract_strided_slice %662 {offsets = [0, 0], sizes = [16, 8], strides = [1, 1]} : vector<18x8xbf16> to vector<16x8xbf16>
    %664 = vector.extract_strided_slice %662 {offsets = [1, 0], sizes = [16, 8], strides = [1, 1]} : vector<18x8xbf16> to vector<16x8xbf16>
    %665 = vector.extract_strided_slice %662 {offsets = [2, 0], sizes = [16, 8], strides = [1, 1]} : vector<18x8xbf16> to vector<16x8xbf16>
    %666 = tpu.concatenate %653, %654, %655, %658, %659, %660, %663, %664, %665 in 1 : vector<16x8xbf16>, vector<16x8xbf16>, vector<16x8xbf16>, vector<16x8xbf16>, vector<16x8xbf16>, vector<16x8xbf16>, vector<16x8xbf16>, vector<16x8xbf16>, vector<16x8xbf16> -> vector<16x72xbf16>
    %c208_410 = arith.constant 208 : index
    %c0_411 = arith.constant 0 : index
    %667 = vector.load %arg10[%c208_410, %c0_411] : memref<256x72xbf16, #tpu.memory_space<vmem>>, vector<16x72xbf16>
    tpu.vector_store %arg10[%c208_410, %c0_411], %666 {strides = array<i32>} : memref<256x72xbf16, #tpu.memory_space<vmem>>, vector<16x72xbf16>,
    %c14_412 = arith.constant 14 : index
    %c0_413 = arith.constant 0 : index
    %c0_414 = arith.constant 0 : index
    %668 = vector.load %arg9[%c14_412, %c0_413, %c0_414] : memref<18x18x8xbf16, #tpu.memory_space<vmem>>, vector<1x18x8xbf16>
    %669 = vector.shape_cast %668 : vector<1x18x8xbf16> to vector<18x8xbf16>
    %670 = vector.extract_strided_slice %669 {offsets = [0, 0], sizes = [16, 8], strides = [1, 1]} : vector<18x8xbf16> to vector<16x8xbf16>
    %671 = vector.extract_strided_slice %669 {offsets = [1, 0], sizes = [16, 8], strides = [1, 1]} : vector<18x8xbf16> to vector<16x8xbf16>
    %672 = vector.extract_strided_slice %669 {offsets = [2, 0], sizes = [16, 8], strides = [1, 1]} : vector<18x8xbf16> to vector<16x8xbf16>
    %c15_415 = arith.constant 15 : index
    %c0_416 = arith.constant 0 : index
    %c0_417 = arith.constant 0 : index
    %673 = vector.load %arg9[%c15_415, %c0_416, %c0_417] : memref<18x18x8xbf16, #tpu.memory_space<vmem>>, vector<1x18x8xbf16>
    %674 = vector.shape_cast %673 : vector<1x18x8xbf16> to vector<18x8xbf16>
    %675 = vector.extract_strided_slice %674 {offsets = [0, 0], sizes = [16, 8], strides = [1, 1]} : vector<18x8xbf16> to vector<16x8xbf16>
    %676 = vector.extract_strided_slice %674 {offsets = [1, 0], sizes = [16, 8], strides = [1, 1]} : vector<18x8xbf16> to vector<16x8xbf16>
    %677 = vector.extract_strided_slice %674 {offsets = [2, 0], sizes = [16, 8], strides = [1, 1]} : vector<18x8xbf16> to vector<16x8xbf16>
    %c16_418 = arith.constant 16 : index
    %c0_419 = arith.constant 0 : index
    %c0_420 = arith.constant 0 : index
    %678 = vector.load %arg9[%c16_418, %c0_419, %c0_420] : memref<18x18x8xbf16, #tpu.memory_space<vmem>>, vector<1x18x8xbf16>
    %679 = vector.shape_cast %678 : vector<1x18x8xbf16> to vector<18x8xbf16>
    %680 = vector.extract_strided_slice %679 {offsets = [0, 0], sizes = [16, 8], strides = [1, 1]} : vector<18x8xbf16> to vector<16x8xbf16>
    %681 = vector.extract_strided_slice %679 {offsets = [1, 0], sizes = [16, 8], strides = [1, 1]} : vector<18x8xbf16> to vector<16x8xbf16>
    %682 = vector.extract_strided_slice %679 {offsets = [2, 0], sizes = [16, 8], strides = [1, 1]} : vector<18x8xbf16> to vector<16x8xbf16>
    %683 = tpu.concatenate %670, %671, %672, %675, %676, %677, %680, %681, %682 in 1 : vector<16x8xbf16>, vector<16x8xbf16>, vector<16x8xbf16>, vector<16x8xbf16>, vector<16x8xbf16>, vector<16x8xbf16>, vector<16x8xbf16>, vector<16x8xbf16>, vector<16x8xbf16> -> vector<16x72xbf16>
    %c224_421 = arith.constant 224 : index
    %c0_422 = arith.constant 0 : index
    %684 = vector.load %arg10[%c224_421, %c0_422] : memref<256x72xbf16, #tpu.memory_space<vmem>>, vector<16x72xbf16>
    tpu.vector_store %arg10[%c224_421, %c0_422], %683 {strides = array<i32>} : memref<256x72xbf16, #tpu.memory_space<vmem>>, vector<16x72xbf16>,
    %c15_423 = arith.constant 15 : index
    %c0_424 = arith.constant 0 : index
    %c0_425 = arith.constant 0 : index
    %685 = vector.load %arg9[%c15_423, %c0_424, %c0_425] : memref<18x18x8xbf16, #tpu.memory_space<vmem>>, vector<1x18x8xbf16>
    %686 = vector.shape_cast %685 : vector<1x18x8xbf16> to vector<18x8xbf16>
    %687 = vector.extract_strided_slice %686 {offsets = [0, 0], sizes = [16, 8], strides = [1, 1]} : vector<18x8xbf16> to vector<16x8xbf16>
    %688 = vector.extract_strided_slice %686 {offsets = [1, 0], sizes = [16, 8], strides = [1, 1]} : vector<18x8xbf16> to vector<16x8xbf16>
    %689 = vector.extract_strided_slice %686 {offsets = [2, 0], sizes = [16, 8], strides = [1, 1]} : vector<18x8xbf16> to vector<16x8xbf16>
    %c16_426 = arith.constant 16 : index
    %c0_427 = arith.constant 0 : index
    %c0_428 = arith.constant 0 : index
    %690 = vector.load %arg9[%c16_426, %c0_427, %c0_428] : memref<18x18x8xbf16, #tpu.memory_space<vmem>>, vector<1x18x8xbf16>
    %691 = vector.shape_cast %690 : vector<1x18x8xbf16> to vector<18x8xbf16>
    %692 = vector.extract_strided_slice %691 {offsets = [0, 0], sizes = [16, 8], strides = [1, 1]} : vector<18x8xbf16> to vector<16x8xbf16>
    %693 = vector.extract_strided_slice %691 {offsets = [1, 0], sizes = [16, 8], strides = [1, 1]} : vector<18x8xbf16> to vector<16x8xbf16>
    %694 = vector.extract_strided_slice %691 {offsets = [2, 0], sizes = [16, 8], strides = [1, 1]} : vector<18x8xbf16> to vector<16x8xbf16>
    %c17_429 = arith.constant 17 : index
    %c0_430 = arith.constant 0 : index
    %c0_431 = arith.constant 0 : index
    %695 = vector.load %arg9[%c17_429, %c0_430, %c0_431] : memref<18x18x8xbf16, #tpu.memory_space<vmem>>, vector<1x18x8xbf16>
    %696 = vector.shape_cast %695 : vector<1x18x8xbf16> to vector<18x8xbf16>
    %697 = vector.extract_strided_slice %696 {offsets = [0, 0], sizes = [16, 8], strides = [1, 1]} : vector<18x8xbf16> to vector<16x8xbf16>
    %698 = vector.extract_strided_slice %696 {offsets = [1, 0], sizes = [16, 8], strides = [1, 1]} : vector<18x8xbf16> to vector<16x8xbf16>
    %699 = vector.extract_strided_slice %696 {offsets = [2, 0], sizes = [16, 8], strides = [1, 1]} : vector<18x8xbf16> to vector<16x8xbf16>
    %700 = tpu.concatenate %687, %688, %689, %692, %693, %694, %697, %698, %699 in 1 : vector<16x8xbf16>, vector<16x8xbf16>, vector<16x8xbf16>, vector<16x8xbf16>, vector<16x8xbf16>, vector<16x8xbf16>, vector<16x8xbf16>, vector<16x8xbf16>, vector<16x8xbf16> -> vector<16x72xbf16>
    %c240_432 = arith.constant 240 : index
    %c0_433 = arith.constant 0 : index
    %701 = vector.load %arg10[%c240_432, %c0_433] : memref<256x72xbf16, #tpu.memory_space<vmem>>, vector<16x72xbf16>
    tpu.vector_store %arg10[%c240_432, %c0_433], %700 {strides = array<i32>} : memref<256x72xbf16, #tpu.memory_space<vmem>>, vector<16x72xbf16>,
    %c0_434 = arith.constant 0 : index
    %c0_435 = arith.constant 0 : index
    %702 = vector.load %arg10[%c0_434, %c0_435] : memref<256x72xbf16, #tpu.memory_space<vmem>>, vector<256x72xbf16>
    %c0_436 = arith.constant 0 : index
    %c0_437 = arith.constant 0 : index
    %703 = vector.load %arg4[%c0_436, %c0_437] : memref<72x8xbf16, #tpu.memory_space<vmem>>, vector<72x8xbf16>
    %cst_438 = arith.constant dense<0.000000e+00> : vector<256x8xf32>
    %704 = tpu.matmul %702, %703, %cst_438 {dimension_numbers = #tpu.dot_dimension_numbers<[1], [0], [0], [1], [0, 0, 1, 1], [], []>} : vector<256x72xbf16>, vector<72x8xbf16>, vector<256x8xf32> -> vector<256x8xf32>
    %c0_439 = arith.constant 0 : index
    %c0_440 = arith.constant 0 : index
    %705 = vector.load %arg5[%c0_439, %c0_440] : memref<1x8xf32, #tpu.memory_space<vmem>>, vector<1x8xf32>
    %706 = vector.broadcast %705 : vector<1x8xf32> to vector<256x8xf32>
    %707 = arith.addf %704, %706 : vector<256x8xf32>
    %cst_441 = arith.constant 0.000000e+00 : f32
    %708 = vector.broadcast %cst_441 : f32 to vector<256x8xf32>
    %709 = arith.maximumf %707, %708 : vector<256x8xf32>
    %710 = arith.truncf %709 : vector<256x8xf32> to vector<256x8xbf16>
    %c0_442 = arith.constant 0 : index
    %c0_443 = arith.constant 0 : index
    %c0_444 = arith.constant 0 : index
    %711 = vector.load %arg6[%c0_442, %c0_443, %c0_444] : memref<1x256x8xbf16, #tpu.memory_space<vmem>>, vector<1x256x8xbf16>
    %712 = vector.shape_cast %711 : vector<1x256x8xbf16> to vector<256x8xbf16>
    %713 = vector.shape_cast %710 : vector<256x8xbf16> to vector<1x256x8xbf16>
    tpu.vector_store %arg6[%c0_442, %c0_443, %c0_444], %713 {strides = array<i32>} : memref<1x256x8xbf16, #tpu.memory_space<vmem>>, vector<1x256x8xbf16>,
    return
  }
  func.func @transform_0(%arg0: i32) -> (i32, i32, i32) {
    %c0_i32 = arith.constant 0 : i32
    %c0_i32_0 = arith.constant 0 : i32
    %c0_i32_1 = arith.constant 0 : i32
    return %arg0, %c0_i32, %c0_i32_0 : i32, i32, i32
  }
  func.func @transform_1(%arg0: i32) -> (i32, i32) {
    %c0_i32 = arith.constant 0 : i32
    %c0_i32_0 = arith.constant 0 : i32
    %c0_i32_1 = arith.constant 0 : i32
    return %c0_i32, %c0_i32_0 : i32, i32
  }
  func.func @transform_2(%arg0: i32) -> (i32, i32) {
    %c0_i32 = arith.constant 0 : i32
    %c0_i32_0 = arith.constant 0 : i32
    %c0_i32_1 = arith.constant 0 : i32
    return %c0_i32, %c0_i32_0 : i32, i32
  }
  func.func @transform_3(%arg0: i32) -> (i32, i32) {
    %c0_i32 = arith.constant 0 : i32
    %c0_i32_0 = arith.constant 0 : i32
    %c0_i32_1 = arith.constant 0 : i32
    return %c0_i32, %c0_i32_0 : i32, i32
  }
  func.func @transform_4(%arg0: i32) -> (i32, i32) {
    %c0_i32 = arith.constant 0 : i32
    %c0_i32_0 = arith.constant 0 : i32
    %c0_i32_1 = arith.constant 0 : i32
    return %c0_i32, %c0_i32_0 : i32, i32
  }
  func.func @transform_5(%arg0: i32) -> (i32, i32, i32) {
    %c0_i32 = arith.constant 0 : i32
    %c0_i32_0 = arith.constant 0 : i32
    %c0_i32_1 = arith.constant 0 : i32
    return %arg0, %c0_i32, %c0_i32_0 : i32, i32, i32
  }
}

</mosaic_0001>

<llo_original>
// kernel: tpu_custom_call.1
$region0: #{tpu_custom_call.1}
  #allocation0 [shape = 'u32[]', space=smem, size = 0x4, offset = 0x4, fixed_abs, tag = 'smem constant byte address 0x4 - core index']
  #allocation1 [shape = 'u32[72,128]{1,0:T(1,128)}', space=vmem, size = 0x9000, scoped, tag = 'internal scratch']
  #allocation2 [shape = 'bf16[18,18,3]{2,1,0:T(8,128)(2,1)}', space=vmem, size = 0x1b000, scoped, tag = 'scratch operand']
  #allocation3 [shape = 'bf16[256,27]{1,0:T(8,128)(2,1)}', space=vmem, size = 0x10000, scoped, tag = 'scratch operand']
  #allocation4 [shape = 'bf16[18,18,8]{2,1,0:T(8,128)(2,1)}', space=vmem, size = 0x1b000, scoped, tag = 'scratch operand']
  #allocation5 [shape = 'bf16[256,72]{1,0:T(8,128)(2,1)}', space=vmem, size = 0x10000, scoped, tag = 'scratch operand']
  %s0 = inlined_call_operand.vmem [shape: bf16[2,256,3], index: 0, kind: input, shape index: {}]
  %s1 = inlined_call_operand.vmem [shape: bf16[27,8], index: 1, kind: input, shape index: {}]
  %s2 = inlined_call_operand.vmem [shape: f32[1,8], index: 2, kind: input, shape index: {}]
  %s3 = inlined_call_operand.vmem [shape: bf16[72,8], index: 3, kind: input, shape index: {}]
  %s4 = inlined_call_operand.vmem [shape: f32[1,8], index: 4, kind: input, shape index: {}]
  %s5 = inlined_call_operand.vmem [shape: bf16[2,256,8], index: 5, kind: output, shape index: {}]
  %s6 = sld [smem:[#allocation0]]
  $region53: #{tpu_custom_call.1} parent=0
    _
  %s8 = ssub.s32 1, %s6
  %s9 = scalar_select 0, %s8, %s6
  loop: start=0, step=1, limit=4
  $region2: #{tpu_custom_call.1} parent=0 // loop_pre_header
    _
  $region3: #{tpu_custom_call.1} parent=0 // loop_header
    %s11 = sphi 0, %s15
    %p12 = scmp.ge.s32.totalorder %s11, 4
    %s21 = sphi 0, %s23
    %s24 = sphi 0, %s21
    %s25 = sphi 0, %s24
    %s41 = sphi 0, %s25
    %s45 = sphi 0, %s45
    %s47 = sphi 0, %s45
    %s48 = sphi 0, %s47
    %s62 = sphi 0, %s48
    %s66 = sphi 0, %s66
    %s68 = sphi 0, %s66
    %s69 = sphi 0, %s68
    %s83 = sphi 0, %s69
    %s87 = sphi 0, %s87
    %s89 = sphi 0, %s87
    %s90 = sphi 0, %s89
    %s104 = sphi 0, %s90
    %s108 = sphi 0, %s108
    %s110 = sphi 0, %s108
    %s111 = sphi 0, %s110
    %s125 = sphi 0, %s111
    %s131 = sphi 0, %s133
    %s134 = sphi 0, %s131
    %s135 = sphi 0, %s134
    %s151 = sphi 0, %s135
  $region4: #{tpu_custom_call.1} parent=0 // loop_header_branch
    %14 = sbr.rel (%p12) target = $region8
  $region5: #{tpu_custom_call.1} parent=0 // loop_body
    %s16 = ssub.s32 %s11, 1
    %s17 = ssub.s32 %s11, 2
    %s18 = sadd.s32 %s11, 1
    %s19 = ssub.s32 %s11, %s18
    %p20 = scmp.eq.s32.totalorder %s19, 0
    %s22 = sadd.s32 %s21, 1
    %s23 = scalar_select %p20, %s21, %s22
    %p26 = pneg %p20
    %p27 = scmp.eq.s32.totalorder %s11, 1
    %p28 = por %p26, %p27
    %p29 = scmp.ne.s32.totalorder %s21, %s24
    %p30 = scmp.eq.s32.totalorder %s11, 0
    %p31 = por %p29, %p30
    %p32 = scmp.ne.s32.totalorder %s21, %s24
    %p33 = scmp.eq.s32.totalorder %s16, 1
    %p34 = por %p32, %p33
    %p35 = scmp.ne.s32.totalorder %s24, %s25
    %p36 = scmp.eq.s32.totalorder %s16, 0
    %p37 = por %p35, %p36
    %p38 = scmp.ne.s32.totalorder %s24, %s25
    %p39 = scmp.eq.s32.totalorder %s17, 1
    %p40 = por %p38, %p39
    %p42 = scmp.ne.s32.totalorder %s25, %s41
    %p43 = scmp.eq.s32.totalorder %s17, 0
    %p44 = por %p42, %p43
    %s46 = sadd.s32 %s45, 1
    %p49 = scmp.eq.s32.totalorder %s11, 1
    %p50 = scmp.ne.s32.totalorder %s45, %s47
    %p51 = scmp.eq.s32.totalorder %s11, 0
    %p52 = por %p50, %p51
    %p53 = scmp.ne.s32.totalorder %s45, %s47
    %p54 = scmp.eq.s32.totalorder %s16, 1
    %p55 = por %p53, %p54
    %p56 = scmp.ne.s32.totalorder %s47, %s48
    %p57 = scmp.eq.s32.totalorder %s16, 0
    %p58 = por %p56, %p57
    %p59 = scmp.ne.s32.totalorder %s47, %s48
    %p60 = scmp.eq.s32.totalorder %s17, 1
    %p61 = por %p59, %p60
    %p63 = scmp.ne.s32.totalorder %s48, %s62
    %p64 = scmp.eq.s32.totalorder %s17, 0
    %p65 = por %p63, %p64
    %s67 = sadd.s32 %s66, 1
    %p70 = scmp.eq.s32.totalorder %s11, 1
    %p71 = scmp.ne.s32.totalorder %s66, %s68
    %p72 = scmp.eq.s32.totalorder %s11, 0
    %p73 = por %p71, %p72
    %p74 = scmp.ne.s32.totalorder %s66, %s68
    %p75 = scmp.eq.s32.totalorder %s16, 1
    %p76 = por %p74, %p75
    %p77 = scmp.ne.s32.totalorder %s68, %s69
    %p78 = scmp.eq.s32.totalorder %s16, 0
    %p79 = por %p77, %p78
    %p80 = scmp.ne.s32.totalorder %s68, %s69
    %p81 = scmp.eq.s32.totalorder %s17, 1
    %p82 = por %p80, %p81
    %p84 = scmp.ne.s32.totalorder %s69, %s83
    %p85 = scmp.eq.s32.totalorder %s17, 0
    %p86 = por %p84, %p85
    %s88 = sadd.s32 %s87, 1
    %p91 = scmp.eq.s32.totalorder %s11, 1
    %p92 = scmp.ne.s32.totalorder %s87, %s89
    %p93 = scmp.eq.s32.totalorder %s11, 0
    %p94 = por %p92, %p93
    %p95 = scmp.ne.s32.totalorder %s87, %s89
    %p96 = scmp.eq.s32.totalorder %s16, 1
    %p97 = por %p95, %p96
    %p98 = scmp.ne.s32.totalorder %s89, %s90
    %p99 = scmp.eq.s32.totalorder %s16, 0
    %p100 = por %p98, %p99
    %p101 = scmp.ne.s32.totalorder %s89, %s90
    %p102 = scmp.eq.s32.totalorder %s17, 1
    %p103 = por %p101, %p102
    %p105 = scmp.ne.s32.totalorder %s90, %s104
    %p106 = scmp.eq.s32.totalorder %s17, 0
    %p107 = por %p105, %p106
    %s109 = sadd.s32 %s108, 1
    %p112 = scmp.eq.s32.totalorder %s11, 1
    %p113 = scmp.ne.s32.totalorder %s108, %s110
    %p114 = scmp.eq.s32.totalorder %s11, 0
    %p115 = por %p113, %p114
    %p116 = scmp.ne.s32.totalorder %s108, %s110
    %p117 = scmp.eq.s32.totalorder %s16, 1
    %p118 = por %p116, %p117
    %p119 = scmp.ne.s32.totalorder %s110, %s111
    %p120 = scmp.eq.s32.totalorder %s16, 0
    %p121 = por %p119, %p120
    %p122 = scmp.ne.s32.totalorder %s110, %s111
    %p123 = scmp.eq.s32.totalorder %s17, 1
    %p124 = por %p122, %p123
    %p126 = scmp.ne.s32.totalorder %s111, %s125
    %p127 = scmp.eq.s32.totalorder %s17, 0
    %p128 = por %p126, %p127
    %s129 = ssub.s32 %s11, %s18
    %p130 = scmp.eq.s32.totalorder %s129, 0
    %s132 = sadd.s32 %s131, 1
    %s133 = scalar_select %p130, %s131, %s132
    %p136 = pneg %p130
    %p137 = scmp.eq.s32.totalorder %s11, 1
    %p138 = por %p136, %p137
    %p139 = scmp.ne.s32.totalorder %s131, %s134
    %p140 = scmp.eq.s32.totalorder %s11, 0
    %p141 = por %p139, %p140
    %p142 = scmp.ne.s32.totalorder %s131, %s134
    %p143 = scmp.eq.s32.totalorder %s16, 1
    %p144 = por %p142, %p143
    %p145 = scmp.ne.s32.totalorder %s134, %s135
    %p146 = scmp.eq.s32.totalorder %s16, 0
    %p147 = por %p145, %p146
    %p148 = scmp.ne.s32.totalorder %s134, %s135
    %p149 = scmp.eq.s32.totalorder %s17, 1
    %p150 = por %p148, %p149
    %p152 = scmp.ne.s32.totalorder %s135, %s151
    %p153 = scmp.eq.s32.totalorder %s17, 0
    %p154 = por %p152, %p153
    %p155 = scmp.le.s32.totalorder 1, %s11
    %p156 = scmp.lt.s32.totalorder %s11, 3
    %p157 = pnand %p155, %p156
    %p158 = pneg %p157
    // Predicated region
    $region9: #{tpu_custom_call.1} parent=5 // pred_check
      _
    $region10: #{tpu_custom_call.1} parent=5 // pred_check_branch
      %160 = sbr.rel (%p157) target = $region12
    $region11: #{tpu_custom_call.1} parent=5 // pred_region
      %s161 = ssub.s32 %s11, 1
      // Predicated region
      $region13: #{tpu_custom_call.1} parent=11 // pred_check
        %p162 = pneg %p58
      $region14: #{tpu_custom_call.1} parent=11 // pred_check_branch
        %164 = sbr.rel (%p162) target = $region16
      $region15: #{tpu_custom_call.1} parent=11 // pred_region
        _
      $region16: #{tpu_custom_call.1} parent=11 // pred_fallthru
        _
      // Predicated region
      $region17: #{tpu_custom_call.1} parent=11 // pred_check
        %p165 = pneg %p79
      $region18: #{tpu_custom_call.1} parent=11 // pred_check_branch
        %167 = sbr.rel (%p165) target = $region20
      $region19: #{tpu_custom_call.1} parent=11 // pred_region
        _
      $region20: #{tpu_custom_call.1} parent=11 // pred_fallthru
        _
      // Predicated region
      $region21: #{tpu_custom_call.1} parent=11 // pred_check
        %p168 = pneg %p100
      $region22: #{tpu_custom_call.1} parent=11 // pred_check_branch
        %170 = sbr.rel (%p168) target = $region24
      $region23: #{tpu_custom_call.1} parent=11 // pred_region
        _
      $region24: #{tpu_custom_call.1} parent=11 // pred_fallthru
        _
      // Predicated region
      $region25: #{tpu_custom_call.1} parent=11 // pred_check
        %p171 = pneg %p121
      $region26: #{tpu_custom_call.1} parent=11 // pred_check_branch
        %173 = sbr.rel (%p171) target = $region28
      $region27: #{tpu_custom_call.1} parent=11 // pred_region
        _
      $region28: #{tpu_custom_call.1} parent=11 // pred_fallthru
        _
    $region12: #{tpu_custom_call.1} parent=5 // pred_fallthru
      _
    %p174 = scmp.lt.s32.totalorder %s11, 2
    // Predicated region
    $region29: #{tpu_custom_call.1} parent=5 // pred_check
      %p175 = pneg %p174
    $region30: #{tpu_custom_call.1} parent=5 // pred_check_branch
      %177 = sbr.rel (%p175) target = $region32
    $region31: #{tpu_custom_call.1} parent=5 // pred_region
      // Predicated region
      $region33: #{tpu_custom_call.1} parent=31 // pred_check
        %p178 = pneg %p31
      $region34: #{tpu_custom_call.1} parent=31 // pred_check_branch
        %180 = sbr.rel (%p178) target = $region36
      $region35: #{tpu_custom_call.1} parent=31 // pred_region
        %p181 = scmp.lt.s32.totalorder %s11, 1
        %s182 = scalar_select %p181, %s11, 1
        %s183 = smul.addr %s182, 32
        %s184 = smul.addr %s183, 4
        %s185 = scalar_lea.vmem %s0, %s184
      $region36: #{tpu_custom_call.1} parent=31 // pred_fallthru
        _
    $region32: #{tpu_custom_call.1} parent=5 // pred_fallthru
      _
    %p186 = scmp.le.s32.totalorder 1, %s11
    %p187 = scmp.lt.s32.totalorder %s11, 3
    %p188 = pnand %p186, %p187
    %p189 = pneg %p188
    // Predicated region
    $region37: #{tpu_custom_call.1} parent=5 // pred_check
      _
    $region38: #{tpu_custom_call.1} parent=5 // pred_check_branch
      %191 = sbr.rel (%p188) target = $region40
    $region39: #{tpu_custom_call.1} parent=5 // pred_region
      %s192 = ssub.s32 %s11, 1
      %p193 = scmp.lt.s32.totalorder %s16, 1
      %s194 = scalar_select %p193, %s16, 1
      %s195 = smul.addr %s194, 32
      %s196 = smul.addr %s195, 4
      %s197 = scalar_lea.vmem %s0, %s196
      %p198 = pneg %p37
      %p199 = pneg %p34
      %p200 = pneg %p58
      %p201 = pneg %p55
      %p202 = pneg %p79
      %p203 = pneg %p76
      %p204 = pneg %p100
      %p205 = pneg %p97
      %p206 = pneg %p121
      %p207 = pneg %p118
      %p208 = pneg %p147
      %p209 = pneg %p144
      %p210 = scmp.lt.s32.totalorder %s16, 1
      %s211 = scalar_select %p210, %s16, 1
      %s212 = smul.addr %s211, 32
      %s213 = smul.addr %s212, 4
      %s214 = scalar_lea.vmem %s5, %s213
      %p215 = scmp.lt.s32.totalorder %s16, 1
      %s216 = scalar_select %p215, %s16, 1
      %s217 = smul.addr %s216, 32
      %s218 = smul.addr %s217, 4
      %s219 = scalar_lea.vmem %s0, %s218
      %p220 = scmp.lt.s32.totalorder %s16, 1
      %s221 = scalar_select %p220, %s16, 1
      %s222 = smul.addr %s221, 32
      %s223 = smul.addr %s222, 4
      %s224 = scalar_lea.vmem %s5, %s223
      %v226 = vld [vmem:[%s219] sm:$0xf]
      %v227 = vld [vmem:[%s219 + $0x4] sm:$0xf]
      %v228 = vld [vmem:[%s219 + $0x8] sm:$0xf]
      %v229 = vld [vmem:[%s219 + $0xc] sm:$0xf]
      %v230 = vld [vmem:[%s219 + $0x10] sm:$0xf]
      %v231 = vld [vmem:[%s219 + $0x14] sm:$0xf]
      %v232 = vld [vmem:[%s219 + $0x18] sm:$0xf]
      %v233 = vld [vmem:[%s219 + $0x1c] sm:$0xf]
      %v234 = vld [vmem:[%s219 + $0x20] sm:$0xf]
      %v235 = vld [vmem:[%s219 + $0x24] sm:$0xf]
      %v236 = vld [vmem:[%s219 + $0x28] sm:$0xf]
      %v237 = vld [vmem:[%s219 + $0x2c] sm:$0xf]
      %v238 = vld [vmem:[%s219 + $0x30] sm:$0xf]
      %v239 = vld [vmem:[%s219 + $0x34] sm:$0xf]
      %v240 = vld [vmem:[%s219 + $0x38] sm:$0xf]
      %v241 = vld [vmem:[%s219 + $0x3c] sm:$0xf]
      %v242 = vld [vmem:[%s219 + $0x40] sm:$0xf]
      %v243 = vld [vmem:[%s219 + $0x44] sm:$0xf]
      %v244 = vld [vmem:[%s219 + $0x48] sm:$0xf]
      %v245 = vld [vmem:[%s219 + $0x4c] sm:$0xf]
      %v246 = vld [vmem:[%s219 + $0x50] sm:$0xf]
      %v247 = vld [vmem:[%s219 + $0x54] sm:$0xf]
      %v248 = vld [vmem:[%s219 + $0x58] sm:$0xf]
      %v249 = vld [vmem:[%s219 + $0x5c] sm:$0xf]
      %v250 = vld [vmem:[%s219 + $0x60] sm:$0xf]
      %v251 = vld [vmem:[%s219 + $0x64] sm:$0xf]
      %v252 = vld [vmem:[%s219 + $0x68] sm:$0xf]
      %v253 = vld [vmem:[%s219 + $0x6c] sm:$0xf]
      %v254 = vld [vmem:[%s219 + $0x70] sm:$0xf]
      %v255 = vld [vmem:[%s219 + $0x74] sm:$0xf]
      %v256 = vld [vmem:[%s219 + $0x78] sm:$0xf]
      %v257 = vld [vmem:[%s219 + $0x7c] sm:$0xf]
      %vm258 = vcmask 19456
      %259 = vst.msk [vmem:[#allocation2] sm:$0xf] %vm258, 0
      %260 = vst.msk [vmem:[#allocation2 + $0x4] sm:$0xf] %vm258, 0
      %vm261 = vcmask 16384
      %262 = vst.msk [vmem:[#allocation2 + $0x8] sm:$0x1] %vm261, 0
      %263 = vst.msk [vmem:[#allocation2 + $0xc] sm:$0xf] %vm258, 0
      %264 = vst.msk [vmem:[#allocation2 + $0x10] sm:$0xf] %vm258, 0
      %265 = vst.msk [vmem:[#allocation2 + $0x14] sm:$0x1] %vm261, 0
      %266 = vst.msk [vmem:[#allocation2 + $0x18] sm:$0xf] %vm258, 0
      %267 = vst.msk [vmem:[#allocation2 + $0x1c] sm:$0xf] %vm258, 0
      %268 = vst.msk [vmem:[#allocation2 + $0x20] sm:$0x1] %vm261, 0
      %269 = vst.msk [vmem:[#allocation2 + $0x24] sm:$0xf] %vm258, 0
      %270 = vst.msk [vmem:[#allocation2 + $0x28] sm:$0xf] %vm258, 0
      %271 = vst.msk [vmem:[#allocation2 + $0x2c] sm:$0x1] %vm261, 0
      %272 = vst.msk [vmem:[#allocation2 + $0x30] sm:$0xf] %vm258, 0
      %273 = vst.msk [vmem:[#allocation2 + $0x34] sm:$0xf] %vm258, 0
      %274 = vst.msk [vmem:[#allocation2 + $0x38] sm:$0x1] %vm261, 0
      %275 = vst.msk [vmem:[#allocation2 + $0x3c] sm:$0xf] %vm258, 0
      %276 = vst.msk [vmem:[#allocation2 + $0x40] sm:$0xf] %vm258, 0
      %277 = vst.msk [vmem:[#allocation2 + $0x44] sm:$0x1] %vm261, 0
      %278 = vst.msk [vmem:[#allocation2 + $0x48] sm:$0xf] %vm258, 0
      %279 = vst.msk [vmem:[#allocation2 + $0x4c] sm:$0xf] %vm258, 0
      %280 = vst.msk [vmem:[#allocation2 + $0x50] sm:$0x1] %vm261, 0
      %281 = vst.msk [vmem:[#allocation2 + $0x54] sm:$0xf] %vm258, 0
      %282 = vst.msk [vmem:[#allocation2 + $0x58] sm:$0xf] %vm258, 0
      %283 = vst.msk [vmem:[#allocation2 + $0x5c] sm:$0x1] %vm261, 0
      %284 = vst.msk [vmem:[#allocation2 + $0x60] sm:$0xf] %vm258, 0
      %285 = vst.msk [vmem:[#allocation2 + $0x64] sm:$0xf] %vm258, 0
      %286 = vst.msk [vmem:[#allocation2 + $0x68] sm:$0x1] %vm261, 0
      %287 = vst.msk [vmem:[#allocation2 + $0x6c] sm:$0xf] %vm258, 0
      %288 = vst.msk [vmem:[#allocation2 + $0x70] sm:$0xf] %vm258, 0
      %289 = vst.msk [vmem:[#allocation2 + $0x74] sm:$0x1] %vm261, 0
      %290 = vst.msk [vmem:[#allocation2 + $0x78] sm:$0xf] %vm258, 0
      %291 = vst.msk [vmem:[#allocation2 + $0x7c] sm:$0xf] %vm258, 0
      %292 = vst.msk [vmem:[#allocation2 + $0x80] sm:$0x1] %vm261, 0
      %293 = vst.msk [vmem:[#allocation2 + $0x84] sm:$0xf] %vm258, 0
      %294 = vst.msk [vmem:[#allocation2 + $0x88] sm:$0xf] %vm258, 0
      %295 = vst.msk [vmem:[#allocation2 + $0x8c] sm:$0x1] %vm261, 0
      %296 = vst.msk [vmem:[#allocation2 + $0x90] sm:$0xf] %vm258, 0
      %297 = vst.msk [vmem:[#allocation2 + $0x94] sm:$0xf] %vm258, 0
      %298 = vst.msk [vmem:[#allocation2 + $0x98] sm:$0x1] %vm261, 0
      %299 = vst.msk [vmem:[#allocation2 + $0x9c] sm:$0xf] %vm258, 0
      %300 = vst.msk [vmem:[#allocation2 + $0xa0] sm:$0xf] %vm258, 0
      %301 = vst.msk [vmem:[#allocation2 + $0xa4] sm:$0x1] %vm261, 0
      %302 = vst.msk [vmem:[#allocation2 + $0xa8] sm:$0xf] %vm258, 0
      %303 = vst.msk [vmem:[#allocation2 + $0xac] sm:$0xf] %vm258, 0
      %304 = vst.msk [vmem:[#allocation2 + $0xb0] sm:$0x1] %vm261, 0
      %305 = vst.msk [vmem:[#allocation2 + $0xb4] sm:$0xf] %vm258, 0
      %306 = vst.msk [vmem:[#allocation2 + $0xb8] sm:$0xf] %vm258, 0
      %307 = vst.msk [vmem:[#allocation2 + $0xbc] sm:$0x1] %vm261, 0
      %308 = vst.msk [vmem:[#allocation2 + $0xc0] sm:$0xf] %vm258, 0
      %309 = vst.msk [vmem:[#allocation2 + $0xc4] sm:$0xf] %vm258, 0
      %310 = vst.msk [vmem:[#allocation2 + $0xc8] sm:$0x1] %vm261, 0
      %311 = vst.msk [vmem:[#allocation2 + $0xcc] sm:$0xf] %vm258, 0
      %312 = vst.msk [vmem:[#allocation2 + $0xd0] sm:$0xf] %vm258, 0
      %313 = vst.msk [vmem:[#allocation2 + $0xd4] sm:$0x1] %vm261, 0
      %vm314 = vsmask.f32 256
      %vm315 = vsmask.f32 4368
      %vm316 = vmor %vm314, %vm315
      %v318 = vshrl.u32 %v226, 16
      %v320 = vrot.slane %v318, 7
      %v321 = vshll.u32 %v226, 16
      %v323 = vor.u32 %v320, %v321
      %v324 = vrot.slane %v320, 4
      %v326 = vshrl.u32 %v227, 16
      %v328 = vrot.slane %v326, 7
      %v329 = vshll.u32 %v227, 16
      %v331 = vor.u32 %v328, %v329
      %v332 = vsel %vm316, %v324, %v331
      %v333 = vrot.slane %v328, 4
      %s337 = scalar_lea.vmem [#allocation2], 12
      %vm338 = vcmask 19456
      %vm339 = vsmask.f32 7938
      %vm340 = vmand %vm338, %vm339
      %v341 = vld [vmem:[%s337] sm:$0xf]
      %v342 = vsel %vm340, %v323, %v341
      %343 = vst [vmem:[%s337] sm:$0xf] %v342
      %344 = vst.msk [vmem:[%s337 + $0x4] sm:$0xf] %vm258, %v332
      %vm345 = vcmask 16384
      %vm346 = vmand %vm345, %vm314
      %v347 = vld [vmem:[%s337 + $0x8] sm:$0x1]
      %v348 = vsel %vm346, %v333, %v347
      %349 = vst [vmem:[%s337 + $0x8] sm:$0x1] %v348
      %v351 = vshrl.u32 %v228, 16
      %v353 = vrot.slane %v351, 7
      %v354 = vshll.u32 %v228, 16
      %v356 = vor.u32 %v353, %v354
      %v357 = vrot.slane %v353, 4
      %v359 = vshrl.u32 %v229, 16
      %v361 = vrot.slane %v359, 7
      %v362 = vshll.u32 %v229, 16
      %v364 = vor.u32 %v361, %v362
      %v365 = vsel %vm316, %v357, %v364
      %v366 = vrot.slane %v361, 4
      %s370 = scalar_lea.vmem [#allocation2], 24
      %v371 = vld [vmem:[%s370] sm:$0xf]
      %v372 = vsel %vm340, %v356, %v371
      %373 = vst [vmem:[%s370] sm:$0xf] %v372
      %374 = vst.msk [vmem:[%s370 + $0x4] sm:$0xf] %vm258, %v365
      %v375 = vld [vmem:[%s370 + $0x8] sm:$0x1]
      %v376 = vsel %vm346, %v366, %v375
      %377 = vst [vmem:[%s370 + $0x8] sm:$0x1] %v376
      %v379 = vshrl.u32 %v230, 16
      %v381 = vrot.slane %v379, 7
      %v382 = vshll.u32 %v230, 16
      %v384 = vor.u32 %v381, %v382
      %v385 = vrot.slane %v381, 4
      %v387 = vshrl.u32 %v231, 16
      %v389 = vrot.slane %v387, 7
      %v390 = vshll.u32 %v231, 16
      %v392 = vor.u32 %v389, %v390
      %v393 = vsel %vm316, %v385, %v392
      %v394 = vrot.slane %v389, 4
      %s398 = scalar_lea.vmem [#allocation2], 36
      %v399 = vld [vmem:[%s398] sm:$0xf]
      %v400 = vsel %vm340, %v384, %v399
      %401 = vst [vmem:[%s398] sm:$0xf] %v400
      %402 = vst.msk [vmem:[%s398 + $0x4] sm:$0xf] %vm258, %v393
      %v403 = vld [vmem:[%s398 + $0x8] sm:$0x1]
      %v404 = vsel %vm346, %v394, %v403
      %405 = vst [vmem:[%s398 + $0x8] sm:$0x1] %v404
      %v407 = vshrl.u32 %v232, 16
      %v409 = vrot.slane %v407, 7
      %v410 = vshll.u32 %v232, 16
      %v412 = vor.u32 %v409, %v410
      %v413 = vrot.slane %v409, 4
      %v415 = vshrl.u32 %v233, 16
      %v417 = vrot.slane %v415, 7
      %v418 = vshll.u32 %v233, 16
      %v420 = vor.u32 %v417, %v418
      %v421 = vsel %vm316, %v413, %v420
      %v422 = vrot.slane %v417, 4
      %s426 = scalar_lea.vmem [#allocation2], 48
      %v427 = vld [vmem:[%s426] sm:$0xf]
      %v428 = vsel %vm340, %v412, %v427
      %429 = vst [vmem:[%s426] sm:$0xf] %v428
      %430 = vst.msk [vmem:[%s426 + $0x4] sm:$0xf] %vm258, %v421
      %v431 = vld [vmem:[%s426 + $0x8] sm:$0x1]
      %v432 = vsel %vm346, %v422, %v431
      %433 = vst [vmem:[%s426 + $0x8] sm:$0x1] %v432
      %v435 = vshrl.u32 %v234, 16
      %v437 = vrot.slane %v435, 7
      %v438 = vshll.u32 %v234, 16
      %v440 = vor.u32 %v437, %v438
      %v441 = vrot.slane %v437, 4
      %v443 = vshrl.u32 %v235, 16
      %v445 = vrot.slane %v443, 7
      %v446 = vshll.u32 %v235, 16
      %v448 = vor.u32 %v445, %v446
      %v449 = vsel %vm316, %v441, %v448
      %v450 = vrot.slane %v445, 4
      %s454 = scalar_lea.vmem [#allocation2], 60
      %v455 = vld [vmem:[%s454] sm:$0xf]
      %v456 = vsel %vm340, %v440, %v455
      %457 = vst [vmem:[%s454] sm:$0xf] %v456
      %458 = vst.msk [vmem:[%s454 + $0x4] sm:$0xf] %vm258, %v449
      %v459 = vld [vmem:[%s454 + $0x8] sm:$0x1]
      %v460 = vsel %vm346, %v450, %v459
      %461 = vst [vmem:[%s454 + $0x8] sm:$0x1] %v460
      %v463 = vshrl.u32 %v236, 16
      %v465 = vrot.slane %v463, 7
      %v466 = vshll.u32 %v236, 16
      %v468 = vor.u32 %v465, %v466
      %v469 = vrot.slane %v465, 4
      %v471 = vshrl.u32 %v237, 16
      %v473 = vrot.slane %v471, 7
      %v474 = vshll.u32 %v237, 16
      %v476 = vor.u32 %v473, %v474
      %v477 = vsel %vm316, %v469, %v476
      %v478 = vrot.slane %v473, 4
      %s482 = scalar_lea.vmem [#allocation2], 72
      %v483 = vld [vmem:[%s482] sm:$0xf]
      %v484 = vsel %vm340, %v468, %v483
      %485 = vst [vmem:[%s482] sm:$0xf] %v484
      %486 = vst.msk [vmem:[%s482 + $0x4] sm:$0xf] %vm258, %v477
      %v487 = vld [vmem:[%s482 + $0x8] sm:$0x1]
      %v488 = vsel %vm346, %v478, %v487
      %489 = vst [vmem:[%s482 + $0x8] sm:$0x1] %v488
      %v491 = vshrl.u32 %v238, 16
      %v493 = vrot.slane %v491, 7
      %v494 = vshll.u32 %v238, 16
      %v496 = vor.u32 %v493, %v494
      %v497 = vrot.slane %v493, 4
      %v499 = vshrl.u32 %v239, 16
      %v501 = vrot.slane %v499, 7
      %v502 = vshll.u32 %v239, 16
      %v504 = vor.u32 %v501, %v502
      %v505 = vsel %vm316, %v497, %v504
      %v506 = vrot.slane %v501, 4
      %s510 = scalar_lea.vmem [#allocation2], 84
      %v511 = vld [vmem:[%s510] sm:$0xf]
      %v512 = vsel %vm340, %v496, %v511
      %513 = vst [vmem:[%s510] sm:$0xf] %v512
      %514 = vst.msk [vmem:[%s510 + $0x4] sm:$0xf] %vm258, %v505
      %v515 = vld [vmem:[%s510 + $0x8] sm:$0x1]
      %v516 = vsel %vm346, %v506, %v515
      %517 = vst [vmem:[%s510 + $0x8] sm:$0x1] %v516
      %v519 = vshrl.u32 %v240, 16
      %v521 = vrot.slane %v519, 7
      %v522 = vshll.u32 %v240, 16
      %v524 = vor.u32 %v521, %v522
      %v525 = vrot.slane %v521, 4
      %v527 = vshrl.u32 %v241, 16
      %v529 = vrot.slane %v527, 7
      %v530 = vshll.u32 %v241, 16
      %v532 = vor.u32 %v529, %v530
      %v533 = vsel %vm316, %v525, %v532
      %v534 = vrot.slane %v529, 4
      %s538 = scalar_lea.vmem [#allocation2], 96
      %v539 = vld [vmem:[%s538] sm:$0xf]
      %v540 = vsel %vm340, %v524, %v539
      %541 = vst [vmem:[%s538] sm:$0xf] %v540
      %542 = vst.msk [vmem:[%s538 + $0x4] sm:$0xf] %vm258, %v533
      %v543 = vld [vmem:[%s538 + $0x8] sm:$0x1]
      %v544 = vsel %vm346, %v534, %v543
      %545 = vst [vmem:[%s538 + $0x8] sm:$0x1] %v544
      %v547 = vshrl.u32 %v242, 16
      %v549 = vrot.slane %v547, 7
      %v550 = vshll.u32 %v242, 16
      %v552 = vor.u32 %v549, %v550
      %v553 = vrot.slane %v549, 4
      %v555 = vshrl.u32 %v243, 16
      %v557 = vrot.slane %v555, 7
      %v558 = vshll.u32 %v243, 16
      %v560 = vor.u32 %v557, %v558
      %v561 = vsel %vm316, %v553, %v560
      %v562 = vrot.slane %v557, 4
      %s566 = scalar_lea.vmem [#allocation2], 108
      %v567 = vld [vmem:[%s566] sm:$0xf]
      %v568 = vsel %vm340, %v552, %v567
      %569 = vst [vmem:[%s566] sm:$0xf] %v568
      %570 = vst.msk [vmem:[%s566 + $0x4] sm:$0xf] %vm258, %v561
      %v571 = vld [vmem:[%s566 + $0x8] sm:$0x1]
      %v572 = vsel %vm346, %v562, %v571
      %573 = vst [vmem:[%s566 + $0x8] sm:$0x1] %v572
      %v575 = vshrl.u32 %v244, 16
      %v577 = vrot.slane %v575, 7
      %v578 = vshll.u32 %v244, 16
      %v580 = vor.u32 %v577, %v578
      %v581 = vrot.slane %v577, 4
      %v583 = vshrl.u32 %v245, 16
      %v585 = vrot.slane %v583, 7
      %v586 = vshll.u32 %v245, 16
      %v588 = vor.u32 %v585, %v586
      %v589 = vsel %vm316, %v581, %v588
      %v590 = vrot.slane %v585, 4
      %s594 = scalar_lea.vmem [#allocation2], 120
      %v595 = vld [vmem:[%s594] sm:$0xf]
      %v596 = vsel %vm340, %v580, %v595
      %597 = vst [vmem:[%s594] sm:$0xf] %v596
      %598 = vst.msk [vmem:[%s594 + $0x4] sm:$0xf] %vm258, %v589
      %v599 = vld [vmem:[%s594 + $0x8] sm:$0x1]
      %v600 = vsel %vm346, %v590, %v599
      %601 = vst [vmem:[%s594 + $0x8] sm:$0x1] %v600
      %v603 = vshrl.u32 %v246, 16
      %v605 = vrot.slane %v603, 7
      %v606 = vshll.u32 %v246, 16
      %v608 = vor.u32 %v605, %v606
      %v609 = vrot.slane %v605, 4
      %v611 = vshrl.u32 %v247, 16
      %v613 = vrot.slane %v611, 7
      %v614 = vshll.u32 %v247, 16
      %v616 = vor.u32 %v613, %v614
      %v617 = vsel %vm316, %v609, %v616
      %v618 = vrot.slane %v613, 4
      %s622 = scalar_lea.vmem [#allocation2], 132
      %v623 = vld [vmem:[%s622] sm:$0xf]
      %v624 = vsel %vm340, %v608, %v623
      %625 = vst [vmem:[%s622] sm:$0xf] %v624
      %626 = vst.msk [vmem:[%s622 + $0x4] sm:$0xf] %vm258, %v617
      %v627 = vld [vmem:[%s622 + $0x8] sm:$0x1]
      %v628 = vsel %vm346, %v618, %v627
      %629 = vst [vmem:[%s622 + $0x8] sm:$0x1] %v628
      %v631 = vshrl.u32 %v248, 16
      %v633 = vrot.slane %v631, 7
      %v634 = vshll.u32 %v248, 16
      %v636 = vor.u32 %v633, %v634
      %v637 = vrot.slane %v633, 4
      %v639 = vshrl.u32 %v249, 16
      %v641 = vrot.slane %v639, 7
      %v642 = vshll.u32 %v249, 16
      %v644 = vor.u32 %v641, %v642
      %v645 = vsel %vm316, %v637, %v644
      %v646 = vrot.slane %v641, 4
      %s650 = scalar_lea.vmem [#allocation2], 144
      %v651 = vld [vmem:[%s650] sm:$0xf]
      %v652 = vsel %vm340, %v636, %v651
      %653 = vst [vmem:[%s650] sm:$0xf] %v652
      %654 = vst.msk [vmem:[%s650 + $0x4] sm:$0xf] %vm258, %v645
      %v655 = vld [vmem:[%s650 + $0x8] sm:$0x1]
      %v656 = vsel %vm346, %v646, %v655
      %657 = vst [vmem:[%s650 + $0x8] sm:$0x1] %v656
      %v659 = vshrl.u32 %v250, 16
      %v661 = vrot.slane %v659, 7
      %v662 = vshll.u32 %v250, 16
      %v664 = vor.u32 %v661, %v662
      %v665 = vrot.slane %v661, 4
      %v667 = vshrl.u32 %v251, 16
      %v669 = vrot.slane %v667, 7
      %v670 = vshll.u32 %v251, 16
      %v672 = vor.u32 %v669, %v670
      %v673 = vsel %vm316, %v665, %v672
      %v674 = vrot.slane %v669, 4
      %s678 = scalar_lea.vmem [#allocation2], 156
      %v679 = vld [vmem:[%s678] sm:$0xf]
      %v680 = vsel %vm340, %v664, %v679
      %681 = vst [vmem:[%s678] sm:$0xf] %v680
      %682 = vst.msk [vmem:[%s678 + $0x4] sm:$0xf] %vm258, %v673
      %v683 = vld [vmem:[%s678 + $0x8] sm:$0x1]
      %v684 = vsel %vm346, %v674, %v683
      %685 = vst [vmem:[%s678 + $0x8] sm:$0x1] %v684
      %v687 = vshrl.u32 %v252, 16
      %v689 = vrot.slane %v687, 7
      %v690 = vshll.u32 %v252, 16
      %v692 = vor.u32 %v689, %v690
      %v693 = vrot.slane %v689, 4
      %v695 = vshrl.u32 %v253, 16
      %v697 = vrot.slane %v695, 7
      %v698 = vshll.u32 %v253, 16
      %v700 = vor.u32 %v697, %v698
      %v701 = vsel %vm316, %v693, %v700
      %v702 = vrot.slane %v697, 4
      %s706 = scalar_lea.vmem [#allocation2], 168
      %v707 = vld [vmem:[%s706] sm:$0xf]
      %v708 = vsel %vm340, %v692, %v707
      %709 = vst [vmem:[%s706] sm:$0xf] %v708
      %710 = vst.msk [vmem:[%s706 + $0x4] sm:$0xf] %vm258, %v701
      %v711 = vld [vmem:[%s706 + $0x8] sm:$0x1]
      %v712 = vsel %vm346, %v702, %v711
      %713 = vst [vmem:[%s706 + $0x8] sm:$0x1] %v712
      %v715 = vshrl.u32 %v254, 16
      %v717 = vrot.slane %v715, 7
      %v718 = vshll.u32 %v254, 16
      %v720 = vor.u32 %v717, %v718
      %v721 = vrot.slane %v717, 4
      %v723 = vshrl.u32 %v255, 16
      %v725 = vrot.slane %v723, 7
      %v726 = vshll.u32 %v255, 16
      %v728 = vor.u32 %v725, %v726
      %v729 = vsel %vm316, %v721, %v728
      %v730 = vrot.slane %v725, 4
      %s734 = scalar_lea.vmem [#allocation2], 180
      %v735 = vld [vmem:[%s734] sm:$0xf]
      %v736 = vsel %vm340, %v720, %v735
      %737 = vst [vmem:[%s734] sm:$0xf] %v736
      %738 = vst.msk [vmem:[%s734 + $0x4] sm:$0xf] %vm258, %v729
      %v739 = vld [vmem:[%s734 + $0x8] sm:$0x1]
      %v740 = vsel %vm346, %v730, %v739
      %741 = vst [vmem:[%s734 + $0x8] sm:$0x1] %v740
      %v743 = vshrl.u32 %v256, 16
      %v745 = vrot.slane %v743, 7
      %v746 = vshll.u32 %v256, 16
      %v748 = vor.u32 %v745, %v746
      %v749 = vrot.slane %v745, 4
      %v751 = vshrl.u32 %v257, 16
      %v753 = vrot.slane %v751, 7
      %v754 = vshll.u32 %v257, 16
      %v756 = vor.u32 %v753, %v754
      %v757 = vsel %vm316, %v749, %v756
      %v758 = vrot.slane %v753, 4
      %s762 = scalar_lea.vmem [#allocation2], 192
      %v763 = vld [vmem:[%s762] sm:$0xf]
      %v764 = vsel %vm340, %v748, %v763
      %765 = vst [vmem:[%s762] sm:$0xf] %v764
      %766 = vst.msk [vmem:[%s762 + $0x4] sm:$0xf] %vm258, %v757
      %v767 = vld [vmem:[%s762 + $0x8] sm:$0x1]
      %v768 = vsel %vm346, %v758, %v767
      %769 = vst [vmem:[%s762 + $0x8] sm:$0x1] %v768
      %v770 = vld [vmem:[#allocation2] sm:$0xf]
      %v771 = vld [vmem:[#allocation2 + $0x4] sm:$0xf]
      %v772 = vld [vmem:[#allocation2 + $0x8] sm:$0x1]
      %v773 = vld [vmem:[%s337] sm:$0xf]
      %v774 = vld [vmem:[%s337 + $0x4] sm:$0xf]
      %v775 = vld [vmem:[%s337 + $0x8] sm:$0x1]
      %v776 = vld [vmem:[%s370] sm:$0xf]
      %v777 = vld [vmem:[%s370 + $0x4] sm:$0xf]
      %v778 = vld [vmem:[%s370 + $0x8] sm:$0x1]
      %v781 = vunpack.c.l.b16 %v770
      %v782 = vunpack.c.l.b16 %v771
      %v783 = vpack.c.b16 %v782, %v781
      %v785 = vunpack.c.l.b16 %v772
      %v786 = vpack.c.b16 %v785, %v785
      %vm787 = vsmask.f32 7424
      %v789 = vshrl.u32 %v783, 16
      %v791 = vshll.u32 %v783, 16
      %v793 = vrot.slane %v791, 1
      %v794 = vor.u32 %v789, %v793
      %v796 = vshll.u32 %v786, 16
      %v798 = vrot.slane %v796, 1
      %v799 = vsel %vm787, %v794, %v798
      %800 = vrot.lane.b32.xlu0 %v799, 3
      %v801 = vpop.permute.xlu0 %800
      %vm802 = vcmask 1046528
      %v803 = vrot.slane %v783, 1
      %v804 = vrot.slane %v786, 1
      %v805 = vsel %vm802, %v803, %v804
      %806 = vrot.lane.b32.xlu0 %v805, 6
      %v807 = vpop.permute.xlu0 %806
      %v810 = vunpack.c.l.b16 %v773
      %v811 = vunpack.c.l.b16 %v774
      %v812 = vpack.c.b16 %v811, %v810
      %813 = vrot.lane.b32.xlu0 %v812, 9
      %v814 = vpop.permute.xlu0 %813
      %v816 = vunpack.c.l.b16 %v775
      %v817 = vpack.c.b16 %v816, %v816
      %v819 = vshrl.u32 %v812, 16
      %v821 = vshll.u32 %v812, 16
      %v823 = vrot.slane %v821, 1
      %v824 = vor.u32 %v819, %v823
      %v826 = vshll.u32 %v817, 16
      %v828 = vrot.slane %v826, 1
      %v829 = vsel %vm787, %v824, %v828
      %830 = vrot.lane.b32.xlu0 %v829, 12
      %v831 = vpop.permute.xlu0 %830
      %v832 = vrot.slane %v812, 1
      %v833 = vrot.slane %v817, 1
      %v834 = vsel %vm802, %v832, %v833
      %835 = vrot.lane.b32.xlu0 %v834, 15
      %v836 = vpop.permute.xlu0 %835
      %v839 = vunpack.c.l.b16 %v776
      %v840 = vunpack.c.l.b16 %v777
      %v841 = vpack.c.b16 %v840, %v839
      %842 = vrot.lane.b32.xlu0 %v841, 18
      %v843 = vpop.permute.xlu0 %842
      %v845 = vunpack.c.l.b16 %v778
      %v846 = vpack.c.b16 %v845, %v845
      %v848 = vshrl.u32 %v841, 16
      %v850 = vshll.u32 %v841, 16
      %v852 = vrot.slane %v850, 1
      %v853 = vor.u32 %v848, %v852
      %v855 = vshll.u32 %v846, 16
      %v857 = vrot.slane %v855, 1
      %v858 = vsel %vm787, %v853, %v857
      %859 = vrot.lane.b32.xlu0 %v858, 21
      %v860 = vpop.permute.xlu0 %859
      %v861 = vrot.slane %v841, 1
      %v862 = vrot.slane %v846, 1
      %v863 = vsel %vm802, %v861, %v862
      %864 = vrot.lane.b32.xlu0 %v863, 24
      %v865 = vpop.permute.xlu0 %864
      %vm866 = vcmask 23552
      %v868 = vsel %vm866, %v783, %v801
      %vm869 = vcmask 48128
      %v871 = vsel %vm869, %v868, %v807
      %vm872 = vcmask 72704
      %v874 = vsel %vm872, %v871, %v814
      %vm875 = vcmask 97280
      %v877 = vsel %vm875, %v874, %v831
      %vm878 = vcmask 121856
      %v880 = vsel %vm878, %v877, %v836
      %vm881 = vcmask 146432
      %v883 = vsel %vm881, %v880, %v843
      %vm884 = vcmask 171008
      %v886 = vsel %vm884, %v883, %v860
      %vm887 = vcmask 195584
      %v889 = vsel %vm887, %v886, %v865
      %v891 = vunpack.c.l.b16 %v889
      %v892 = vunpack.c.h.b16 %v889
      %v893 = vpack.c.b16 %v891, %v891
      %v894 = vpack.c.b16 %v892, %v892
      %vm897 = vcmask 216064
      %898 = vst.msk [vmem:[#allocation3] sm:$0xf] %vm897, %v893
      %899 = vst.msk [vmem:[#allocation3 + $0x4] sm:$0xf] %vm897, %v894
      %v900 = vld [vmem:[%s337] sm:$0xf]
      %v901 = vld [vmem:[%s337 + $0x4] sm:$0xf]
      %v902 = vld [vmem:[%s337 + $0x8] sm:$0x1]
      %v903 = vld [vmem:[%s370] sm:$0xf]
      %v904 = vld [vmem:[%s370 + $0x4] sm:$0xf]
      %v905 = vld [vmem:[%s370 + $0x8] sm:$0x1]
      %v906 = vld [vmem:[%s398] sm:$0xf]
      %v907 = vld [vmem:[%s398 + $0x4] sm:$0xf]
      %v908 = vld [vmem:[%s398 + $0x8] sm:$0x1]
      %v911 = vunpack.c.l.b16 %v900
      %v912 = vunpack.c.l.b16 %v901
      %v913 = vpack.c.b16 %v912, %v911
      %v915 = vunpack.c.l.b16 %v902
      %v916 = vpack.c.b16 %v915, %v915
      %v918 = vshrl.u32 %v913, 16
      %v920 = vshll.u32 %v913, 16
      %v922 = vrot.slane %v920, 1
      %v923 = vor.u32 %v918, %v922
      %v925 = vshll.u32 %v916, 16
      %v927 = vrot.slane %v925, 1
      %v928 = vsel %vm787, %v923, %v927
      %929 = vrot.lane.b32.xlu0 %v928, 3
      %v930 = vpop.permute.xlu0 %929
      %v931 = vrot.slane %v913, 1
      %v932 = vrot.slane %v916, 1
      %v933 = vsel %vm802, %v931, %v932
      %934 = vrot.lane.b32.xlu0 %v933, 6
      %v935 = vpop.permute.xlu0 %934
      %v938 = vunpack.c.l.b16 %v903
      %v939 = vunpack.c.l.b16 %v904
      %v940 = vpack.c.b16 %v939, %v938
      %941 = vrot.lane.b32.xlu0 %v940, 9
      %v942 = vpop.permute.xlu0 %941
      %v944 = vunpack.c.l.b16 %v905
      %v945 = vpack.c.b16 %v944, %v944
      %v947 = vshrl.u32 %v940, 16
      %v949 = vshll.u32 %v940, 16
      %v951 = vrot.slane %v949, 1
      %v952 = vor.u32 %v947, %v951
      %v954 = vshll.u32 %v945, 16
      %v956 = vrot.slane %v954, 1
      %v957 = vsel %vm787, %v952, %v956
      %958 = vrot.lane.b32.xlu0 %v957, 12
      %v959 = vpop.permute.xlu0 %958
      %v960 = vrot.slane %v940, 1
      %v961 = vrot.slane %v945, 1
      %v962 = vsel %vm802, %v960, %v961
      %963 = vrot.lane.b32.xlu0 %v962, 15
      %v964 = vpop.permute.xlu0 %963
      %v967 = vunpack.c.l.b16 %v906
      %v968 = vunpack.c.l.b16 %v907
      %v969 = vpack.c.b16 %v968, %v967
      %970 = vrot.lane.b32.xlu0 %v969, 18
      %v971 = vpop.permute.xlu0 %970
      %v973 = vunpack.c.l.b16 %v908
      %v974 = vpack.c.b16 %v973, %v973
      %v976 = vshrl.u32 %v969, 16
      %v978 = vshll.u32 %v969, 16
      %v980 = vrot.slane %v978, 1
      %v981 = vor.u32 %v976, %v980
      %v983 = vshll.u32 %v974, 16
      %v985 = vrot.slane %v983, 1
      %v986 = vsel %vm787, %v981, %v985
      %987 = vrot.lane.b32.xlu0 %v986, 21
      %v988 = vpop.permute.xlu0 %987
      %v989 = vrot.slane %v969, 1
      %v990 = vrot.slane %v974, 1
      %v991 = vsel %vm802, %v989, %v990
      %992 = vrot.lane.b32.xlu0 %v991, 24
      %v993 = vpop.permute.xlu0 %992
      %v995 = vsel %vm866, %v913, %v930
      %v997 = vsel %vm869, %v995, %v935
      %v999 = vsel %vm872, %v997, %v942
      %v1001 = vsel %vm875, %v999, %v959
      %v1003 = vsel %vm878, %v1001, %v964
      %v1005 = vsel %vm881, %v1003, %v971
      %v1007 = vsel %vm884, %v1005, %v988
      %v1009 = vsel %vm887, %v1007, %v993
      %v1011 = vunpack.c.l.b16 %v1009
      %v1012 = vunpack.c.h.b16 %v1009
      %v1013 = vpack.c.b16 %v1011, %v1011
      %v1014 = vpack.c.b16 %v1012, %v1012
      %1017 = vst.msk [vmem:[#allocation3 + $0x8] sm:$0xf] %vm897, %v1013
      %1018 = vst.msk [vmem:[#allocation3 + $0xc] sm:$0xf] %vm897, %v1014
      %v1019 = vld [vmem:[%s370] sm:$0xf]
      %v1020 = vld [vmem:[%s370 + $0x4] sm:$0xf]
      %v1021 = vld [vmem:[%s370 + $0x8] sm:$0x1]
      %v1022 = vld [vmem:[%s398] sm:$0xf]
      %v1023 = vld [vmem:[%s398 + $0x4] sm:$0xf]
      %v1024 = vld [vmem:[%s398 + $0x8] sm:$0x1]
      %v1025 = vld [vmem:[%s426] sm:$0xf]
      %v1026 = vld [vmem:[%s426 + $0x4] sm:$0xf]
      %v1027 = vld [vmem:[%s426 + $0x8] sm:$0x1]
      %v1030 = vunpack.c.l.b16 %v1019
      %v1031 = vunpack.c.l.b16 %v1020
      %v1032 = vpack.c.b16 %v1031, %v1030
      %v1034 = vunpack.c.l.b16 %v1021
      %v1035 = vpack.c.b16 %v1034, %v1034
      %v1037 = vshrl.u32 %v1032, 16
      %v1039 = vshll.u32 %v1032, 16
      %v1041 = vrot.slane %v1039, 1
      %v1042 = vor.u32 %v1037, %v1041
      %v1044 = vshll.u32 %v1035, 16
      %v1046 = vrot.slane %v1044, 1
      %v1047 = vsel %vm787, %v1042, %v1046
      %1048 = vrot.lane.b32.xlu0 %v1047, 3
      %v1049 = vpop.permute.xlu0 %1048
      %v1050 = vrot.slane %v1032, 1
      %v1051 = vrot.slane %v1035, 1
      %v1052 = vsel %vm802, %v1050, %v1051
      %1053 = vrot.lane.b32.xlu0 %v1052, 6
      %v1054 = vpop.permute.xlu0 %1053
      %v1057 = vunpack.c.l.b16 %v1022
      %v1058 = vunpack.c.l.b16 %v1023
      %v1059 = vpack.c.b16 %v1058, %v1057
      %1060 = vrot.lane.b32.xlu0 %v1059, 9
      %v1061 = vpop.permute.xlu0 %1060
      %v1063 = vunpack.c.l.b16 %v1024
      %v1064 = vpack.c.b16 %v1063, %v1063
      %v1066 = vshrl.u32 %v1059, 16
      %v1068 = vshll.u32 %v1059, 16
      %v1070 = vrot.slane %v1068, 1
      %v1071 = vor.u32 %v1066, %v1070
      %v1073 = vshll.u32 %v1064, 16
      %v1075 = vrot.slane %v1073, 1
      %v1076 = vsel %vm787, %v1071, %v1075
      %1077 = vrot.lane.b32.xlu0 %v1076, 12
      %v1078 = vpop.permute.xlu0 %1077
      %v1079 = vrot.slane %v1059, 1
      %v1080 = vrot.slane %v1064, 1
      %v1081 = vsel %vm802, %v1079, %v1080
      %1082 = vrot.lane.b32.xlu0 %v1081, 15
      %v1083 = vpop.permute.xlu0 %1082
      %v1086 = vunpack.c.l.b16 %v1025
      %v1087 = vunpack.c.l.b16 %v1026
      %v1088 = vpack.c.b16 %v1087, %v1086
      %1089 = vrot.lane.b32.xlu0 %v1088, 18
      %v1090 = vpop.permute.xlu0 %1089
      %v1092 = vunpack.c.l.b16 %v1027
      %v1093 = vpack.c.b16 %v1092, %v1092
      %v1095 = vshrl.u32 %v1088, 16
      %v1097 = vshll.u32 %v1088, 16
      %v1099 = vrot.slane %v1097, 1
      %v1100 = vor.u32 %v1095, %v1099
      %v1102 = vshll.u32 %v1093, 16
      %v1104 = vrot.slane %v1102, 1
      %v1105 = vsel %vm787, %v1100, %v1104
      %1106 = vrot.lane.b32.xlu0 %v1105, 21
      %v1107 = vpop.permute.xlu0 %1106
      %v1108 = vrot.slane %v1088, 1
      %v1109 = vrot.slane %v1093, 1
      %v1110 = vsel %vm802, %v1108, %v1109
      %1111 = vrot.lane.b32.xlu0 %v1110, 24
      %v1112 = vpop.permute.xlu0 %1111
      %v1114 = vsel %vm866, %v1032, %v1049
      %v1116 = vsel %vm869, %v1114, %v1054
      %v1118 = vsel %vm872, %v1116, %v1061
      %v1120 = vsel %vm875, %v1118, %v1078
      %v1122 = vsel %vm878, %v1120, %v1083
      %v1124 = vsel %vm881, %v1122, %v1090
      %v1126 = vsel %vm884, %v1124, %v1107
      %v1128 = vsel %vm887, %v1126, %v1112
      %v1130 = vunpack.c.l.b16 %v1128
      %v1131 = vunpack.c.h.b16 %v1128
      %v1132 = vpack.c.b16 %v1130, %v1130
      %v1133 = vpack.c.b16 %v1131, %v1131
      %1136 = vst.msk [vmem:[#allocation3 + $0x10] sm:$0xf] %vm897, %v1132
      %1137 = vst.msk [vmem:[#allocation3 + $0x14] sm:$0xf] %vm897, %v1133
      %v1138 = vld [vmem:[%s398] sm:$0xf]
      %v1139 = vld [vmem:[%s398 + $0x4] sm:$0xf]
      %v1140 = vld [vmem:[%s398 + $0x8] sm:$0x1]
      %v1141 = vld [vmem:[%s426] sm:$0xf]
      %v1142 = vld [vmem:[%s426 + $0x4] sm:$0xf]
      %v1143 = vld [vmem:[%s426 + $0x8] sm:$0x1]
      %v1144 = vld [vmem:[%s454] sm:$0xf]
      %v1145 = vld [vmem:[%s454 + $0x4] sm:$0xf]
      %v1146 = vld [vmem:[%s454 + $0x8] sm:$0x1]
      %v1149 = vunpack.c.l.b16 %v1138
      %v1150 = vunpack.c.l.b16 %v1139
      %v1151 = vpack.c.b16 %v1150, %v1149
      %v1153 = vunpack.c.l.b16 %v1140
      %v1154 = vpack.c.b16 %v1153, %v1153
      %v1156 = vshrl.u32 %v1151, 16
      %v1158 = vshll.u32 %v1151, 16
      %v1160 = vrot.slane %v1158, 1
      %v1161 = vor.u32 %v1156, %v1160
      %v1163 = vshll.u32 %v1154, 16
      %v1165 = vrot.slane %v1163, 1
      %v1166 = vsel %vm787, %v1161, %v1165
      %1167 = vrot.lane.b32.xlu0 %v1166, 3
      %v1168 = vpop.permute.xlu0 %1167
      %v1169 = vrot.slane %v1151, 1
      %v1170 = vrot.slane %v1154, 1
      %v1171 = vsel %vm802, %v1169, %v1170
      %1172 = vrot.lane.b32.xlu0 %v1171, 6
      %v1173 = vpop.permute.xlu0 %1172
      %v1176 = vunpack.c.l.b16 %v1141
      %v1177 = vunpack.c.l.b16 %v1142
      %v1178 = vpack.c.b16 %v1177, %v1176
      %1179 = vrot.lane.b32.xlu0 %v1178, 9
      %v1180 = vpop.permute.xlu0 %1179
      %v1182 = vunpack.c.l.b16 %v1143
      %v1183 = vpack.c.b16 %v1182, %v1182
      %v1185 = vshrl.u32 %v1178, 16
      %v1187 = vshll.u32 %v1178, 16
      %v1189 = vrot.slane %v1187, 1
      %v1190 = vor.u32 %v1185, %v1189
      %v1192 = vshll.u32 %v1183, 16
      %v1194 = vrot.slane %v1192, 1
      %v1195 = vsel %vm787, %v1190, %v1194
      %1196 = vrot.lane.b32.xlu0 %v1195, 12
      %v1197 = vpop.permute.xlu0 %1196
      %v1198 = vrot.slane %v1178, 1
      %v1199 = vrot.slane %v1183, 1
      %v1200 = vsel %vm802, %v1198, %v1199
      %1201 = vrot.lane.b32.xlu0 %v1200, 15
      %v1202 = vpop.permute.xlu0 %1201
      %v1205 = vunpack.c.l.b16 %v1144
      %v1206 = vunpack.c.l.b16 %v1145
      %v1207 = vpack.c.b16 %v1206, %v1205
      %1208 = vrot.lane.b32.xlu0 %v1207, 18
      %v1209 = vpop.permute.xlu0 %1208
      %v1211 = vunpack.c.l.b16 %v1146
      %v1212 = vpack.c.b16 %v1211, %v1211
      %v1214 = vshrl.u32 %v1207, 16
      %v1216 = vshll.u32 %v1207, 16
      %v1218 = vrot.slane %v1216, 1
      %v1219 = vor.u32 %v1214, %v1218
      %v1221 = vshll.u32 %v1212, 16
      %v1223 = vrot.slane %v1221, 1
      %v1224 = vsel %vm787, %v1219, %v1223
      %1225 = vrot.lane.b32.xlu0 %v1224, 21
      %v1226 = vpop.permute.xlu0 %1225
      %v1227 = vrot.slane %v1207, 1
      %v1228 = vrot.slane %v1212, 1
      %v1229 = vsel %vm802, %v1227, %v1228
      %1230 = vrot.lane.b32.xlu0 %v1229, 24
      %v1231 = vpop.permute.xlu0 %1230
      %v1233 = vsel %vm866, %v1151, %v1168
      %v1235 = vsel %vm869, %v1233, %v1173
      %v1237 = vsel %vm872, %v1235, %v1180
      %v1239 = vsel %vm875, %v1237, %v1197
      %v1241 = vsel %vm878, %v1239, %v1202
      %v1243 = vsel %vm881, %v1241, %v1209
      %v1245 = vsel %vm884, %v1243, %v1226
      %v1247 = vsel %vm887, %v1245, %v1231
      %v1249 = vunpack.c.l.b16 %v1247
      %v1250 = vunpack.c.h.b16 %v1247
      %v1251 = vpack.c.b16 %v1249, %v1249
      %v1252 = vpack.c.b16 %v1250, %v1250
      %1255 = vst.msk [vmem:[#allocation3 + $0x18] sm:$0xf] %vm897, %v1251
      %1256 = vst.msk [vmem:[#allocation3 + $0x1c] sm:$0xf] %vm897, %v1252
      %v1257 = vld [vmem:[%s426] sm:$0xf]
      %v1258 = vld [vmem:[%s426 + $0x4] sm:$0xf]
      %v1259 = vld [vmem:[%s426 + $0x8] sm:$0x1]
      %v1260 = vld [vmem:[%s454] sm:$0xf]
      %v1261 = vld [vmem:[%s454 + $0x4] sm:$0xf]
      %v1262 = vld [vmem:[%s454 + $0x8] sm:$0x1]
      %v1263 = vld [vmem:[%s482] sm:$0xf]
      %v1264 = vld [vmem:[%s482 + $0x4] sm:$0xf]
      %v1265 = vld [vmem:[%s482 + $0x8] sm:$0x1]
      %v1268 = vunpack.c.l.b16 %v1257
      %v1269 = vunpack.c.l.b16 %v1258
      %v1270 = vpack.c.b16 %v1269, %v1268
      %v1272 = vunpack.c.l.b16 %v1259
      %v1273 = vpack.c.b16 %v1272, %v1272
      %v1275 = vshrl.u32 %v1270, 16
      %v1277 = vshll.u32 %v1270, 16
      %v1279 = vrot.slane %v1277, 1
      %v1280 = vor.u32 %v1275, %v1279
      %v1282 = vshll.u32 %v1273, 16
      %v1284 = vrot.slane %v1282, 1
      %v1285 = vsel %vm787, %v1280, %v1284
      %1286 = vrot.lane.b32.xlu0 %v1285, 3
      %v1287 = vpop.permute.xlu0 %1286
      %v1288 = vrot.slane %v1270, 1
      %v1289 = vrot.slane %v1273, 1
      %v1290 = vsel %vm802, %v1288, %v1289
      %1291 = vrot.lane.b32.xlu0 %v1290, 6
      %v1292 = vpop.permute.xlu0 %1291
      %v1295 = vunpack.c.l.b16 %v1260
      %v1296 = vunpack.c.l.b16 %v1261
      %v1297 = vpack.c.b16 %v1296, %v1295
      %1298 = vrot.lane.b32.xlu0 %v1297, 9
      %v1299 = vpop.permute.xlu0 %1298
      %v1301 = vunpack.c.l.b16 %v1262
      %v1302 = vpack.c.b16 %v1301, %v1301
      %v1304 = vshrl.u32 %v1297, 16
      %v1306 = vshll.u32 %v1297, 16
      %v1308 = vrot.slane %v1306, 1
      %v1309 = vor.u32 %v1304, %v1308
      %v1311 = vshll.u32 %v1302, 16
      %v1313 = vrot.slane %v1311, 1
      %v1314 = vsel %vm787, %v1309, %v1313
      %1315 = vrot.lane.b32.xlu0 %v1314, 12
      %v1316 = vpop.permute.xlu0 %1315
      %v1317 = vrot.slane %v1297, 1
      %v1318 = vrot.slane %v1302, 1
      %v1319 = vsel %vm802, %v1317, %v1318
      %1320 = vrot.lane.b32.xlu0 %v1319, 15
      %v1321 = vpop.permute.xlu0 %1320
      %v1324 = vunpack.c.l.b16 %v1263
      %v1325 = vunpack.c.l.b16 %v1264
      %v1326 = vpack.c.b16 %v1325, %v1324
      %1327 = vrot.lane.b32.xlu0 %v1326, 18
      %v1328 = vpop.permute.xlu0 %1327
      %v1330 = vunpack.c.l.b16 %v1265
      %v1331 = vpack.c.b16 %v1330, %v1330
      %v1333 = vshrl.u32 %v1326, 16
      %v1335 = vshll.u32 %v1326, 16
      %v1337 = vrot.slane %v1335, 1
      %v1338 = vor.u32 %v1333, %v1337
      %v1340 = vshll.u32 %v1331, 16
      %v1342 = vrot.slane %v1340, 1
      %v1343 = vsel %vm787, %v1338, %v1342
      %1344 = vrot.lane.b32.xlu0 %v1343, 21
      %v1345 = vpop.permute.xlu0 %1344
      %v1346 = vrot.slane %v1326, 1
      %v1347 = vrot.slane %v1331, 1
      %v1348 = vsel %vm802, %v1346, %v1347
      %1349 = vrot.lane.b32.xlu0 %v1348, 24
      %v1350 = vpop.permute.xlu0 %1349
      %v1352 = vsel %vm866, %v1270, %v1287
      %v1354 = vsel %vm869, %v1352, %v1292
      %v1356 = vsel %vm872, %v1354, %v1299
      %v1358 = vsel %vm875, %v1356, %v1316
      %v1360 = vsel %vm878, %v1358, %v1321
      %v1362 = vsel %vm881, %v1360, %v1328
      %v1364 = vsel %vm884, %v1362, %v1345
      %v1366 = vsel %vm887, %v1364, %v1350
      %v1368 = vunpack.c.l.b16 %v1366
      %v1369 = vunpack.c.h.b16 %v1366
      %v1370 = vpack.c.b16 %v1368, %v1368
      %v1371 = vpack.c.b16 %v1369, %v1369
      %1374 = vst.msk [vmem:[#allocation3 + $0x20] sm:$0xf] %vm897, %v1370
      %1375 = vst.msk [vmem:[#allocation3 + $0x24] sm:$0xf] %vm897, %v1371
      %v1376 = vld [vmem:[%s454] sm:$0xf]
      %v1377 = vld [vmem:[%s454 + $0x4] sm:$0xf]
      %v1378 = vld [vmem:[%s454 + $0x8] sm:$0x1]
      %v1379 = vld [vmem:[%s482] sm:$0xf]
      %v1380 = vld [vmem:[%s482 + $0x4] sm:$0xf]
      %v1381 = vld [vmem:[%s482 + $0x8] sm:$0x1]
      %v1382 = vld [vmem:[%s510] sm:$0xf]
      %v1383 = vld [vmem:[%s510 + $0x4] sm:$0xf]
      %v1384 = vld [vmem:[%s510 + $0x8] sm:$0x1]
      %v1387 = vunpack.c.l.b16 %v1376
      %v1388 = vunpack.c.l.b16 %v1377
      %v1389 = vpack.c.b16 %v1388, %v1387
      %v1391 = vunpack.c.l.b16 %v1378
      %v1392 = vpack.c.b16 %v1391, %v1391
      %v1394 = vshrl.u32 %v1389, 16
      %v1396 = vshll.u32 %v1389, 16
      %v1398 = vrot.slane %v1396, 1
      %v1399 = vor.u32 %v1394, %v1398
      %v1401 = vshll.u32 %v1392, 16
      %v1403 = vrot.slane %v1401, 1
      %v1404 = vsel %vm787, %v1399, %v1403
      %1405 = vrot.lane.b32.xlu0 %v1404, 3
      %v1406 = vpop.permute.xlu0 %1405
      %v1407 = vrot.slane %v1389, 1
      %v1408 = vrot.slane %v1392, 1
      %v1409 = vsel %vm802, %v1407, %v1408
      %1410 = vrot.lane.b32.xlu0 %v1409, 6
      %v1411 = vpop.permute.xlu0 %1410
      %v1414 = vunpack.c.l.b16 %v1379
      %v1415 = vunpack.c.l.b16 %v1380
      %v1416 = vpack.c.b16 %v1415, %v1414
      %1417 = vrot.lane.b32.xlu0 %v1416, 9
      %v1418 = vpop.permute.xlu0 %1417
      %v1420 = vunpack.c.l.b16 %v1381
      %v1421 = vpack.c.b16 %v1420, %v1420
      %v1423 = vshrl.u32 %v1416, 16
      %v1425 = vshll.u32 %v1416, 16
      %v1427 = vrot.slane %v1425, 1
      %v1428 = vor.u32 %v1423, %v1427
      %v1430 = vshll.u32 %v1421, 16
      %v1432 = vrot.slane %v1430, 1
      %v1433 = vsel %vm787, %v1428, %v1432
      %1434 = vrot.lane.b32.xlu0 %v1433, 12
      %v1435 = vpop.permute.xlu0 %1434
      %v1436 = vrot.slane %v1416, 1
      %v1437 = vrot.slane %v1421, 1
      %v1438 = vsel %vm802, %v1436, %v1437
      %1439 = vrot.lane.b32.xlu0 %v1438, 15
      %v1440 = vpop.permute.xlu0 %1439
      %v1443 = vunpack.c.l.b16 %v1382
      %v1444 = vunpack.c.l.b16 %v1383
      %v1445 = vpack.c.b16 %v1444, %v1443
      %1446 = vrot.lane.b32.xlu0 %v1445, 18
      %v1447 = vpop.permute.xlu0 %1446
      %v1449 = vunpack.c.l.b16 %v1384
      %v1450 = vpack.c.b16 %v1449, %v1449
      %v1452 = vshrl.u32 %v1445, 16
      %v1454 = vshll.u32 %v1445, 16
      %v1456 = vrot.slane %v1454, 1
      %v1457 = vor.u32 %v1452, %v1456
      %v1459 = vshll.u32 %v1450, 16
      %v1461 = vrot.slane %v1459, 1
      %v1462 = vsel %vm787, %v1457, %v1461
      %1463 = vrot.lane.b32.xlu0 %v1462, 21
      %v1464 = vpop.permute.xlu0 %1463
      %v1465 = vrot.slane %v1445, 1
      %v1466 = vrot.slane %v1450, 1
      %v1467 = vsel %vm802, %v1465, %v1466
      %1468 = vrot.lane.b32.xlu0 %v1467, 24
      %v1469 = vpop.permute.xlu0 %1468
      %v1471 = vsel %vm866, %v1389, %v1406
      %v1473 = vsel %vm869, %v1471, %v1411
      %v1475 = vsel %vm872, %v1473, %v1418
      %v1477 = vsel %vm875, %v1475, %v1435
      %v1479 = vsel %vm878, %v1477, %v1440
      %v1481 = vsel %vm881, %v1479, %v1447
      %v1483 = vsel %vm884, %v1481, %v1464
      %v1485 = vsel %vm887, %v1483, %v1469
      %v1487 = vunpack.c.l.b16 %v1485
      %v1488 = vunpack.c.h.b16 %v1485
      %v1489 = vpack.c.b16 %v1487, %v1487
      %v1490 = vpack.c.b16 %v1488, %v1488
      %1493 = vst.msk [vmem:[#allocation3 + $0x28] sm:$0xf] %vm897, %v1489
      %1494 = vst.msk [vmem:[#allocation3 + $0x2c] sm:$0xf] %vm897, %v1490
      %v1495 = vld [vmem:[%s482] sm:$0xf]
      %v1496 = vld [vmem:[%s482 + $0x4] sm:$0xf]
      %v1497 = vld [vmem:[%s482 + $0x8] sm:$0x1]
      %v1498 = vld [vmem:[%s510] sm:$0xf]
      %v1499 = vld [vmem:[%s510 + $0x4] sm:$0xf]
      %v1500 = vld [vmem:[%s510 + $0x8] sm:$0x1]
      %v1501 = vld [vmem:[%s538] sm:$0xf]
      %v1502 = vld [vmem:[%s538 + $0x4] sm:$0xf]
      %v1503 = vld [vmem:[%s538 + $0x8] sm:$0x1]
      %v1506 = vunpack.c.l.b16 %v1495
      %v1507 = vunpack.c.l.b16 %v1496
      %v1508 = vpack.c.b16 %v1507, %v1506
      %v1510 = vunpack.c.l.b16 %v1497
      %v1511 = vpack.c.b16 %v1510, %v1510
      %v1513 = vshrl.u32 %v1508, 16
      %v1515 = vshll.u32 %v1508, 16
      %v1517 = vrot.slane %v1515, 1
      %v1518 = vor.u32 %v1513, %v1517
      %v1520 = vshll.u32 %v1511, 16
      %v1522 = vrot.slane %v1520, 1
      %v1523 = vsel %vm787, %v1518, %v1522
      %1524 = vrot.lane.b32.xlu0 %v1523, 3
      %v1525 = vpop.permute.xlu0 %1524
      %v1526 = vrot.slane %v1508, 1
      %v1527 = vrot.slane %v1511, 1
      %v1528 = vsel %vm802, %v1526, %v1527
      %1529 = vrot.lane.b32.xlu0 %v1528, 6
      %v1530 = vpop.permute.xlu0 %1529
      %v1533 = vunpack.c.l.b16 %v1498
      %v1534 = vunpack.c.l.b16 %v1499
      %v1535 = vpack.c.b16 %v1534, %v1533
      %1536 = vrot.lane.b32.xlu0 %v1535, 9
      %v1537 = vpop.permute.xlu0 %1536
      %v1539 = vunpack.c.l.b16 %v1500
      %v1540 = vpack.c.b16 %v1539, %v1539
      %v1542 = vshrl.u32 %v1535, 16
      %v1544 = vshll.u32 %v1535, 16
      %v1546 = vrot.slane %v1544, 1
      %v1547 = vor.u32 %v1542, %v1546
      %v1549 = vshll.u32 %v1540, 16
      %v1551 = vrot.slane %v1549, 1
      %v1552 = vsel %vm787, %v1547, %v1551
      %1553 = vrot.lane.b32.xlu0 %v1552, 12
      %v1554 = vpop.permute.xlu0 %1553
      %v1555 = vrot.slane %v1535, 1
      %v1556 = vrot.slane %v1540, 1
      %v1557 = vsel %vm802, %v1555, %v1556
      %1558 = vrot.lane.b32.xlu0 %v1557, 15
      %v1559 = vpop.permute.xlu0 %1558
      %v1562 = vunpack.c.l.b16 %v1501
      %v1563 = vunpack.c.l.b16 %v1502
      %v1564 = vpack.c.b16 %v1563, %v1562
      %1565 = vrot.lane.b32.xlu0 %v1564, 18
      %v1566 = vpop.permute.xlu0 %1565
      %v1568 = vunpack.c.l.b16 %v1503
      %v1569 = vpack.c.b16 %v1568, %v1568
      %v1571 = vshrl.u32 %v1564, 16
      %v1573 = vshll.u32 %v1564, 16
      %v1575 = vrot.slane %v1573, 1
      %v1576 = vor.u32 %v1571, %v1575
      %v1578 = vshll.u32 %v1569, 16
      %v1580 = vrot.slane %v1578, 1
      %v1581 = vsel %vm787, %v1576, %v1580
      %1582 = vrot.lane.b32.xlu0 %v1581, 21
      %v1583 = vpop.permute.xlu0 %1582
      %v1584 = vrot.slane %v1564, 1
      %v1585 = vrot.slane %v1569, 1
      %v1586 = vsel %vm802, %v1584, %v1585
      %1587 = vrot.lane.b32.xlu0 %v1586, 24
      %v1588 = vpop.permute.xlu0 %1587
      %v1590 = vsel %vm866, %v1508, %v1525
      %v1592 = vsel %vm869, %v1590, %v1530
      %v1594 = vsel %vm872, %v1592, %v1537
      %v1596 = vsel %vm875, %v1594, %v1554
      %v1598 = vsel %vm878, %v1596, %v1559
      %v1600 = vsel %vm881, %v1598, %v1566
      %v1602 = vsel %vm884, %v1600, %v1583
      %v1604 = vsel %vm887, %v1602, %v1588
      %v1606 = vunpack.c.l.b16 %v1604
      %v1607 = vunpack.c.h.b16 %v1604
      %v1608 = vpack.c.b16 %v1606, %v1606
      %v1609 = vpack.c.b16 %v1607, %v1607
      %1612 = vst.msk [vmem:[#allocation3 + $0x30] sm:$0xf] %vm897, %v1608
      %1613 = vst.msk [vmem:[#allocation3 + $0x34] sm:$0xf] %vm897, %v1609
      %v1614 = vld [vmem:[%s510] sm:$0xf]
      %v1615 = vld [vmem:[%s510 + $0x4] sm:$0xf]
      %v1616 = vld [vmem:[%s510 + $0x8] sm:$0x1]
      %v1617 = vld [vmem:[%s538] sm:$0xf]
      %v1618 = vld [vmem:[%s538 + $0x4] sm:$0xf]
      %v1619 = vld [vmem:[%s538 + $0x8] sm:$0x1]
      %v1620 = vld [vmem:[%s566] sm:$0xf]
      %v1621 = vld [vmem:[%s566 + $0x4] sm:$0xf]
      %v1622 = vld [vmem:[%s566 + $0x8] sm:$0x1]
      %v1625 = vunpack.c.l.b16 %v1614
      %v1626 = vunpack.c.l.b16 %v1615
      %v1627 = vpack.c.b16 %v1626, %v1625
      %v1629 = vunpack.c.l.b16 %v1616
      %v1630 = vpack.c.b16 %v1629, %v1629
      %v1632 = vshrl.u32 %v1627, 16
      %v1634 = vshll.u32 %v1627, 16
      %v1636 = vrot.slane %v1634, 1
      %v1637 = vor.u32 %v1632, %v1636
      %v1639 = vshll.u32 %v1630, 16
      %v1641 = vrot.slane %v1639, 1
      %v1642 = vsel %vm787, %v1637, %v1641
      %1643 = vrot.lane.b32.xlu0 %v1642, 3
      %v1644 = vpop.permute.xlu0 %1643
      %v1645 = vrot.slane %v1627, 1
      %v1646 = vrot.slane %v1630, 1
      %v1647 = vsel %vm802, %v1645, %v1646
      %1648 = vrot.lane.b32.xlu0 %v1647, 6
      %v1649 = vpop.permute.xlu0 %1648
      %v1652 = vunpack.c.l.b16 %v1617
      %v1653 = vunpack.c.l.b16 %v1618
      %v1654 = vpack.c.b16 %v1653, %v1652
      %1655 = vrot.lane.b32.xlu0 %v1654, 9
      %v1656 = vpop.permute.xlu0 %1655
      %v1658 = vunpack.c.l.b16 %v1619
      %v1659 = vpack.c.b16 %v1658, %v1658
      %v1661 = vshrl.u32 %v1654, 16
      %v1663 = vshll.u32 %v1654, 16
      %v1665 = vrot.slane %v1663, 1
      %v1666 = vor.u32 %v1661, %v1665
      %v1668 = vshll.u32 %v1659, 16
      %v1670 = vrot.slane %v1668, 1
      %v1671 = vsel %vm787, %v1666, %v1670
      %1672 = vrot.lane.b32.xlu0 %v1671, 12
      %v1673 = vpop.permute.xlu0 %1672
      %v1674 = vrot.slane %v1654, 1
      %v1675 = vrot.slane %v1659, 1
      %v1676 = vsel %vm802, %v1674, %v1675
      %1677 = vrot.lane.b32.xlu0 %v1676, 15
      %v1678 = vpop.permute.xlu0 %1677
      %v1681 = vunpack.c.l.b16 %v1620
      %v1682 = vunpack.c.l.b16 %v1621
      %v1683 = vpack.c.b16 %v1682, %v1681
      %1684 = vrot.lane.b32.xlu0 %v1683, 18
      %v1685 = vpop.permute.xlu0 %1684
      %v1687 = vunpack.c.l.b16 %v1622
      %v1688 = vpack.c.b16 %v1687, %v1687
      %v1690 = vshrl.u32 %v1683, 16
      %v1692 = vshll.u32 %v1683, 16
      %v1694 = vrot.slane %v1692, 1
      %v1695 = vor.u32 %v1690, %v1694
      %v1697 = vshll.u32 %v1688, 16
      %v1699 = vrot.slane %v1697, 1
      %v1700 = vsel %vm787, %v1695, %v1699
      %1701 = vrot.lane.b32.xlu0 %v1700, 21
      %v1702 = vpop.permute.xlu0 %1701
      %v1703 = vrot.slane %v1683, 1
      %v1704 = vrot.slane %v1688, 1
      %v1705 = vsel %vm802, %v1703, %v1704
      %1706 = vrot.lane.b32.xlu0 %v1705, 24
      %v1707 = vpop.permute.xlu0 %1706
      %v1709 = vsel %vm866, %v1627, %v1644
      %v1711 = vsel %vm869, %v1709, %v1649
      %v1713 = vsel %vm872, %v1711, %v1656
      %v1715 = vsel %vm875, %v1713, %v1673
      %v1717 = vsel %vm878, %v1715, %v1678
      %v1719 = vsel %vm881, %v1717, %v1685
      %v1721 = vsel %vm884, %v1719, %v1702
      %v1723 = vsel %vm887, %v1721, %v1707
      %v1725 = vunpack.c.l.b16 %v1723
      %v1726 = vunpack.c.h.b16 %v1723
      %v1727 = vpack.c.b16 %v1725, %v1725
      %v1728 = vpack.c.b16 %v1726, %v1726
      %1731 = vst.msk [vmem:[#allocation3 + $0x38] sm:$0xf] %vm897, %v1727
      %1732 = vst.msk [vmem:[#allocation3 + $0x3c] sm:$0xf] %vm897, %v1728
      %v1733 = vld [vmem:[%s538] sm:$0xf]
      %v1734 = vld [vmem:[%s538 + $0x4] sm:$0xf]
      %v1735 = vld [vmem:[%s538 + $0x8] sm:$0x1]
      %v1736 = vld [vmem:[%s566] sm:$0xf]
      %v1737 = vld [vmem:[%s566 + $0x4] sm:$0xf]
      %v1738 = vld [vmem:[%s566 + $0x8] sm:$0x1]
      %v1739 = vld [vmem:[%s594] sm:$0xf]
      %v1740 = vld [vmem:[%s594 + $0x4] sm:$0xf]
      %v1741 = vld [vmem:[%s594 + $0x8] sm:$0x1]
      %v1744 = vunpack.c.l.b16 %v1733
      %v1745 = vunpack.c.l.b16 %v1734
      %v1746 = vpack.c.b16 %v1745, %v1744
      %v1748 = vunpack.c.l.b16 %v1735
      %v1749 = vpack.c.b16 %v1748, %v1748
      %v1751 = vshrl.u32 %v1746, 16
      %v1753 = vshll.u32 %v1746, 16
      %v1755 = vrot.slane %v1753, 1
      %v1756 = vor.u32 %v1751, %v1755
      %v1758 = vshll.u32 %v1749, 16
      %v1760 = vrot.slane %v1758, 1
      %v1761 = vsel %vm787, %v1756, %v1760
      %1762 = vrot.lane.b32.xlu0 %v1761, 3
      %v1763 = vpop.permute.xlu0 %1762
      %v1764 = vrot.slane %v1746, 1
      %v1765 = vrot.slane %v1749, 1
      %v1766 = vsel %vm802, %v1764, %v1765
      %1767 = vrot.lane.b32.xlu0 %v1766, 6
      %v1768 = vpop.permute.xlu0 %1767
      %v1771 = vunpack.c.l.b16 %v1736
      %v1772 = vunpack.c.l.b16 %v1737
      %v1773 = vpack.c.b16 %v1772, %v1771
      %1774 = vrot.lane.b32.xlu0 %v1773, 9
      %v1775 = vpop.permute.xlu0 %1774
      %v1777 = vunpack.c.l.b16 %v1738
      %v1778 = vpack.c.b16 %v1777, %v1777
      %v1780 = vshrl.u32 %v1773, 16
      %v1782 = vshll.u32 %v1773, 16
      %v1784 = vrot.slane %v1782, 1
      %v1785 = vor.u32 %v1780, %v1784
      %v1787 = vshll.u32 %v1778, 16
      %v1789 = vrot.slane %v1787, 1
      %v1790 = vsel %vm787, %v1785, %v1789
      %1791 = vrot.lane.b32.xlu0 %v1790, 12
      %v1792 = vpop.permute.xlu0 %1791
      %v1793 = vrot.slane %v1773, 1
      %v1794 = vrot.slane %v1778, 1
      %v1795 = vsel %vm802, %v1793, %v1794
      %1796 = vrot.lane.b32.xlu0 %v1795, 15
      %v1797 = vpop.permute.xlu0 %1796
      %v1800 = vunpack.c.l.b16 %v1739
      %v1801 = vunpack.c.l.b16 %v1740
      %v1802 = vpack.c.b16 %v1801, %v1800
      %1803 = vrot.lane.b32.xlu0 %v1802, 18
      %v1804 = vpop.permute.xlu0 %1803
      %v1806 = vunpack.c.l.b16 %v1741
      %v1807 = vpack.c.b16 %v1806, %v1806
      %v1809 = vshrl.u32 %v1802, 16
      %v1811 = vshll.u32 %v1802, 16
      %v1813 = vrot.slane %v1811, 1
      %v1814 = vor.u32 %v1809, %v1813
      %v1816 = vshll.u32 %v1807, 16
      %v1818 = vrot.slane %v1816, 1
      %v1819 = vsel %vm787, %v1814, %v1818
      %1820 = vrot.lane.b32.xlu0 %v1819, 21
      %v1821 = vpop.permute.xlu0 %1820
      %v1822 = vrot.slane %v1802, 1
      %v1823 = vrot.slane %v1807, 1
      %v1824 = vsel %vm802, %v1822, %v1823
      %1825 = vrot.lane.b32.xlu0 %v1824, 24
      %v1826 = vpop.permute.xlu0 %1825
      %v1828 = vsel %vm866, %v1746, %v1763
      %v1830 = vsel %vm869, %v1828, %v1768
      %v1832 = vsel %vm872, %v1830, %v1775
      %v1834 = vsel %vm875, %v1832, %v1792
      %v1836 = vsel %vm878, %v1834, %v1797
      %v1838 = vsel %vm881, %v1836, %v1804
      %v1840 = vsel %vm884, %v1838, %v1821
      %v1842 = vsel %vm887, %v1840, %v1826
      %v1844 = vunpack.c.l.b16 %v1842
      %v1845 = vunpack.c.h.b16 %v1842
      %v1846 = vpack.c.b16 %v1844, %v1844
      %v1847 = vpack.c.b16 %v1845, %v1845
      %1850 = vst.msk [vmem:[#allocation3 + $0x40] sm:$0xf] %vm897, %v1846
      %1851 = vst.msk [vmem:[#allocation3 + $0x44] sm:$0xf] %vm897, %v1847
      %v1852 = vld [vmem:[%s566] sm:$0xf]
      %v1853 = vld [vmem:[%s566 + $0x4] sm:$0xf]
      %v1854 = vld [vmem:[%s566 + $0x8] sm:$0x1]
      %v1855 = vld [vmem:[%s594] sm:$0xf]
      %v1856 = vld [vmem:[%s594 + $0x4] sm:$0xf]
      %v1857 = vld [vmem:[%s594 + $0x8] sm:$0x1]
      %v1858 = vld [vmem:[%s622] sm:$0xf]
      %v1859 = vld [vmem:[%s622 + $0x4] sm:$0xf]
      %v1860 = vld [vmem:[%s622 + $0x8] sm:$0x1]
      %v1863 = vunpack.c.l.b16 %v1852
      %v1864 = vunpack.c.l.b16 %v1853
      %v1865 = vpack.c.b16 %v1864, %v1863
      %v1867 = vunpack.c.l.b16 %v1854
      %v1868 = vpack.c.b16 %v1867, %v1867
      %v1870 = vshrl.u32 %v1865, 16
      %v1872 = vshll.u32 %v1865, 16
      %v1874 = vrot.slane %v1872, 1
      %v1875 = vor.u32 %v1870, %v1874
      %v1877 = vshll.u32 %v1868, 16
      %v1879 = vrot.slane %v1877, 1
      %v1880 = vsel %vm787, %v1875, %v1879
      %1881 = vrot.lane.b32.xlu0 %v1880, 3
      %v1882 = vpop.permute.xlu0 %1881
      %v1883 = vrot.slane %v1865, 1
      %v1884 = vrot.slane %v1868, 1
      %v1885 = vsel %vm802, %v1883, %v1884
      %1886 = vrot.lane.b32.xlu0 %v1885, 6
      %v1887 = vpop.permute.xlu0 %1886
      %v1890 = vunpack.c.l.b16 %v1855
      %v1891 = vunpack.c.l.b16 %v1856
      %v1892 = vpack.c.b16 %v1891, %v1890
      %1893 = vrot.lane.b32.xlu0 %v1892, 9
      %v1894 = vpop.permute.xlu0 %1893
      %v1896 = vunpack.c.l.b16 %v1857
      %v1897 = vpack.c.b16 %v1896, %v1896
      %v1899 = vshrl.u32 %v1892, 16
      %v1901 = vshll.u32 %v1892, 16
      %v1903 = vrot.slane %v1901, 1
      %v1904 = vor.u32 %v1899, %v1903
      %v1906 = vshll.u32 %v1897, 16
      %v1908 = vrot.slane %v1906, 1
      %v1909 = vsel %vm787, %v1904, %v1908
      %1910 = vrot.lane.b32.xlu0 %v1909, 12
      %v1911 = vpop.permute.xlu0 %1910
      %v1912 = vrot.slane %v1892, 1
      %v1913 = vrot.slane %v1897, 1
      %v1914 = vsel %vm802, %v1912, %v1913
      %1915 = vrot.lane.b32.xlu0 %v1914, 15
      %v1916 = vpop.permute.xlu0 %1915
      %v1919 = vunpack.c.l.b16 %v1858
      %v1920 = vunpack.c.l.b16 %v1859
      %v1921 = vpack.c.b16 %v1920, %v1919
      %1922 = vrot.lane.b32.xlu0 %v1921, 18
      %v1923 = vpop.permute.xlu0 %1922
      %v1925 = vunpack.c.l.b16 %v1860
      %v1926 = vpack.c.b16 %v1925, %v1925
      %v1928 = vshrl.u32 %v1921, 16
      %v1930 = vshll.u32 %v1921, 16
      %v1932 = vrot.slane %v1930, 1
      %v1933 = vor.u32 %v1928, %v1932
      %v1935 = vshll.u32 %v1926, 16
      %v1937 = vrot.slane %v1935, 1
      %v1938 = vsel %vm787, %v1933, %v1937
      %1939 = vrot.lane.b32.xlu0 %v1938, 21
      %v1940 = vpop.permute.xlu0 %1939
      %v1941 = vrot.slane %v1921, 1
      %v1942 = vrot.slane %v1926, 1
      %v1943 = vsel %vm802, %v1941, %v1942
      %1944 = vrot.lane.b32.xlu0 %v1943, 24
      %v1945 = vpop.permute.xlu0 %1944
      %v1947 = vsel %vm866, %v1865, %v1882
      %v1949 = vsel %vm869, %v1947, %v1887
      %v1951 = vsel %vm872, %v1949, %v1894
      %v1953 = vsel %vm875, %v1951, %v1911
      %v1955 = vsel %vm878, %v1953, %v1916
      %v1957 = vsel %vm881, %v1955, %v1923
      %v1959 = vsel %vm884, %v1957, %v1940
      %v1961 = vsel %vm887, %v1959, %v1945
      %v1963 = vunpack.c.l.b16 %v1961
      %v1964 = vunpack.c.h.b16 %v1961
      %v1965 = vpack.c.b16 %v1963, %v1963
      %v1966 = vpack.c.b16 %v1964, %v1964
      %1969 = vst.msk [vmem:[#allocation3 + $0x48] sm:$0xf] %vm897, %v1965
      %1970 = vst.msk [vmem:[#allocation3 + $0x4c] sm:$0xf] %vm897, %v1966
      %v1971 = vld [vmem:[%s594] sm:$0xf]
      %v1972 = vld [vmem:[%s594 + $0x4] sm:$0xf]
      %v1973 = vld [vmem:[%s594 + $0x8] sm:$0x1]
      %v1974 = vld [vmem:[%s622] sm:$0xf]
      %v1975 = vld [vmem:[%s622 + $0x4] sm:$0xf]
      %v1976 = vld [vmem:[%s622 + $0x8] sm:$0x1]
      %v1977 = vld [vmem:[%s650] sm:$0xf]
      %v1978 = vld [vmem:[%s650 + $0x4] sm:$0xf]
      %v1979 = vld [vmem:[%s650 + $0x8] sm:$0x1]
      %v1982 = vunpack.c.l.b16 %v1971
      %v1983 = vunpack.c.l.b16 %v1972
      %v1984 = vpack.c.b16 %v1983, %v1982
      %v1986 = vunpack.c.l.b16 %v1973
      %v1987 = vpack.c.b16 %v1986, %v1986
      %v1989 = vshrl.u32 %v1984, 16
      %v1991 = vshll.u32 %v1984, 16
      %v1993 = vrot.slane %v1991, 1
      %v1994 = vor.u32 %v1989, %v1993
      %v1996 = vshll.u32 %v1987, 16
      %v1998 = vrot.slane %v1996, 1
      %v1999 = vsel %vm787, %v1994, %v1998
      %2000 = vrot.lane.b32.xlu0 %v1999, 3
      %v2001 = vpop.permute.xlu0 %2000
      %v2002 = vrot.slane %v1984, 1
      %v2003 = vrot.slane %v1987, 1
      %v2004 = vsel %vm802, %v2002, %v2003
      %2005 = vrot.lane.b32.xlu0 %v2004, 6
      %v2006 = vpop.permute.xlu0 %2005
      %v2009 = vunpack.c.l.b16 %v1974
      %v2010 = vunpack.c.l.b16 %v1975
      %v2011 = vpack.c.b16 %v2010, %v2009
      %2012 = vrot.lane.b32.xlu0 %v2011, 9
      %v2013 = vpop.permute.xlu0 %2012
      %v2015 = vunpack.c.l.b16 %v1976
      %v2016 = vpack.c.b16 %v2015, %v2015
      %v2018 = vshrl.u32 %v2011, 16
      %v2020 = vshll.u32 %v2011, 16
      %v2022 = vrot.slane %v2020, 1
      %v2023 = vor.u32 %v2018, %v2022
      %v2025 = vshll.u32 %v2016, 16
      %v2027 = vrot.slane %v2025, 1
      %v2028 = vsel %vm787, %v2023, %v2027
      %2029 = vrot.lane.b32.xlu0 %v2028, 12
      %v2030 = vpop.permute.xlu0 %2029
      %v2031 = vrot.slane %v2011, 1
      %v2032 = vrot.slane %v2016, 1
      %v2033 = vsel %vm802, %v2031, %v2032
      %2034 = vrot.lane.b32.xlu0 %v2033, 15
      %v2035 = vpop.permute.xlu0 %2034
      %v2038 = vunpack.c.l.b16 %v1977
      %v2039 = vunpack.c.l.b16 %v1978
      %v2040 = vpack.c.b16 %v2039, %v2038
      %2041 = vrot.lane.b32.xlu0 %v2040, 18
      %v2042 = vpop.permute.xlu0 %2041
      %v2044 = vunpack.c.l.b16 %v1979
      %v2045 = vpack.c.b16 %v2044, %v2044
      %v2047 = vshrl.u32 %v2040, 16
      %v2049 = vshll.u32 %v2040, 16
      %v2051 = vrot.slane %v2049, 1
      %v2052 = vor.u32 %v2047, %v2051
      %v2054 = vshll.u32 %v2045, 16
      %v2056 = vrot.slane %v2054, 1
      %v2057 = vsel %vm787, %v2052, %v2056
      %2058 = vrot.lane.b32.xlu0 %v2057, 21
      %v2059 = vpop.permute.xlu0 %2058
      %v2060 = vrot.slane %v2040, 1
      %v2061 = vrot.slane %v2045, 1
      %v2062 = vsel %vm802, %v2060, %v2061
      %2063 = vrot.lane.b32.xlu0 %v2062, 24
      %v2064 = vpop.permute.xlu0 %2063
      %v2066 = vsel %vm866, %v1984, %v2001
      %v2068 = vsel %vm869, %v2066, %v2006
      %v2070 = vsel %vm872, %v2068, %v2013
      %v2072 = vsel %vm875, %v2070, %v2030
      %v2074 = vsel %vm878, %v2072, %v2035
      %v2076 = vsel %vm881, %v2074, %v2042
      %v2078 = vsel %vm884, %v2076, %v2059
      %v2080 = vsel %vm887, %v2078, %v2064
      %v2082 = vunpack.c.l.b16 %v2080
      %v2083 = vunpack.c.h.b16 %v2080
      %v2084 = vpack.c.b16 %v2082, %v2082
      %v2085 = vpack.c.b16 %v2083, %v2083
      %2088 = vst.msk [vmem:[#allocation3 + $0x50] sm:$0xf] %vm897, %v2084
      %2089 = vst.msk [vmem:[#allocation3 + $0x54] sm:$0xf] %vm897, %v2085
      %v2090 = vld [vmem:[%s622] sm:$0xf]
      %v2091 = vld [vmem:[%s622 + $0x4] sm:$0xf]
      %v2092 = vld [vmem:[%s622 + $0x8] sm:$0x1]
      %v2093 = vld [vmem:[%s650] sm:$0xf]
      %v2094 = vld [vmem:[%s650 + $0x4] sm:$0xf]
      %v2095 = vld [vmem:[%s650 + $0x8] sm:$0x1]
      %v2096 = vld [vmem:[%s678] sm:$0xf]
      %v2097 = vld [vmem:[%s678 + $0x4] sm:$0xf]
      %v2098 = vld [vmem:[%s678 + $0x8] sm:$0x1]
      %v2101 = vunpack.c.l.b16 %v2090
      %v2102 = vunpack.c.l.b16 %v2091
      %v2103 = vpack.c.b16 %v2102, %v2101
      %v2105 = vunpack.c.l.b16 %v2092
      %v2106 = vpack.c.b16 %v2105, %v2105
      %v2108 = vshrl.u32 %v2103, 16
      %v2110 = vshll.u32 %v2103, 16
      %v2112 = vrot.slane %v2110, 1
      %v2113 = vor.u32 %v2108, %v2112
      %v2115 = vshll.u32 %v2106, 16
      %v2117 = vrot.slane %v2115, 1
      %v2118 = vsel %vm787, %v2113, %v2117
      %2119 = vrot.lane.b32.xlu0 %v2118, 3
      %v2120 = vpop.permute.xlu0 %2119
      %v2121 = vrot.slane %v2103, 1
      %v2122 = vrot.slane %v2106, 1
      %v2123 = vsel %vm802, %v2121, %v2122
      %2124 = vrot.lane.b32.xlu0 %v2123, 6
      %v2125 = vpop.permute.xlu0 %2124
      %v2128 = vunpack.c.l.b16 %v2093
      %v2129 = vunpack.c.l.b16 %v2094
      %v2130 = vpack.c.b16 %v2129, %v2128
      %2131 = vrot.lane.b32.xlu0 %v2130, 9
      %v2132 = vpop.permute.xlu0 %2131
      %v2134 = vunpack.c.l.b16 %v2095
      %v2135 = vpack.c.b16 %v2134, %v2134
      %v2137 = vshrl.u32 %v2130, 16
      %v2139 = vshll.u32 %v2130, 16
      %v2141 = vrot.slane %v2139, 1
      %v2142 = vor.u32 %v2137, %v2141
      %v2144 = vshll.u32 %v2135, 16
      %v2146 = vrot.slane %v2144, 1
      %v2147 = vsel %vm787, %v2142, %v2146
      %2148 = vrot.lane.b32.xlu0 %v2147, 12
      %v2149 = vpop.permute.xlu0 %2148
      %v2150 = vrot.slane %v2130, 1
      %v2151 = vrot.slane %v2135, 1
      %v2152 = vsel %vm802, %v2150, %v2151
      %2153 = vrot.lane.b32.xlu0 %v2152, 15
      %v2154 = vpop.permute.xlu0 %2153
      %v2157 = vunpack.c.l.b16 %v2096
      %v2158 = vunpack.c.l.b16 %v2097
      %v2159 = vpack.c.b16 %v2158, %v2157
      %2160 = vrot.lane.b32.xlu0 %v2159, 18
      %v2161 = vpop.permute.xlu0 %2160
      %v2163 = vunpack.c.l.b16 %v2098
      %v2164 = vpack.c.b16 %v2163, %v2163
      %v2166 = vshrl.u32 %v2159, 16
      %v2168 = vshll.u32 %v2159, 16
      %v2170 = vrot.slane %v2168, 1
      %v2171 = vor.u32 %v2166, %v2170
      %v2173 = vshll.u32 %v2164, 16
      %v2175 = vrot.slane %v2173, 1
      %v2176 = vsel %vm787, %v2171, %v2175
      %2177 = vrot.lane.b32.xlu0 %v2176, 21
      %v2178 = vpop.permute.xlu0 %2177
      %v2179 = vrot.slane %v2159, 1
      %v2180 = vrot.slane %v2164, 1
      %v2181 = vsel %vm802, %v2179, %v2180
      %2182 = vrot.lane.b32.xlu0 %v2181, 24
      %v2183 = vpop.permute.xlu0 %2182
      %v2185 = vsel %vm866, %v2103, %v2120
      %v2187 = vsel %vm869, %v2185, %v2125
      %v2189 = vsel %vm872, %v2187, %v2132
      %v2191 = vsel %vm875, %v2189, %v2149
      %v2193 = vsel %vm878, %v2191, %v2154
      %v2195 = vsel %vm881, %v2193, %v2161
      %v2197 = vsel %vm884, %v2195, %v2178
      %v2199 = vsel %vm887, %v2197, %v2183
      %v2201 = vunpack.c.l.b16 %v2199
      %v2202 = vunpack.c.h.b16 %v2199
      %v2203 = vpack.c.b16 %v2201, %v2201
      %v2204 = vpack.c.b16 %v2202, %v2202
      %2207 = vst.msk [vmem:[#allocation3 + $0x58] sm:$0xf] %vm897, %v2203
      %2208 = vst.msk [vmem:[#allocation3 + $0x5c] sm:$0xf] %vm897, %v2204
      %v2209 = vld [vmem:[%s650] sm:$0xf]
      %v2210 = vld [vmem:[%s650 + $0x4] sm:$0xf]
      %v2211 = vld [vmem:[%s650 + $0x8] sm:$0x1]
      %v2212 = vld [vmem:[%s678] sm:$0xf]
      %v2213 = vld [vmem:[%s678 + $0x4] sm:$0xf]
      %v2214 = vld [vmem:[%s678 + $0x8] sm:$0x1]
      %v2215 = vld [vmem:[%s706] sm:$0xf]
      %v2216 = vld [vmem:[%s706 + $0x4] sm:$0xf]
      %v2217 = vld [vmem:[%s706 + $0x8] sm:$0x1]
      %v2220 = vunpack.c.l.b16 %v2209
      %v2221 = vunpack.c.l.b16 %v2210
      %v2222 = vpack.c.b16 %v2221, %v2220
      %v2224 = vunpack.c.l.b16 %v2211
      %v2225 = vpack.c.b16 %v2224, %v2224
      %v2227 = vshrl.u32 %v2222, 16
      %v2229 = vshll.u32 %v2222, 16
      %v2231 = vrot.slane %v2229, 1
      %v2232 = vor.u32 %v2227, %v2231
      %v2234 = vshll.u32 %v2225, 16
      %v2236 = vrot.slane %v2234, 1
      %v2237 = vsel %vm787, %v2232, %v2236
      %2238 = vrot.lane.b32.xlu0 %v2237, 3
      %v2239 = vpop.permute.xlu0 %2238
      %v2240 = vrot.slane %v2222, 1
      %v2241 = vrot.slane %v2225, 1
      %v2242 = vsel %vm802, %v2240, %v2241
      %2243 = vrot.lane.b32.xlu0 %v2242, 6
      %v2244 = vpop.permute.xlu0 %2243
      %v2247 = vunpack.c.l.b16 %v2212
      %v2248 = vunpack.c.l.b16 %v2213
      %v2249 = vpack.c.b16 %v2248, %v2247
      %2250 = vrot.lane.b32.xlu0 %v2249, 9
      %v2251 = vpop.permute.xlu0 %2250
      %v2253 = vunpack.c.l.b16 %v2214
      %v2254 = vpack.c.b16 %v2253, %v2253
      %v2256 = vshrl.u32 %v2249, 16
      %v2258 = vshll.u32 %v2249, 16
      %v2260 = vrot.slane %v2258, 1
      %v2261 = vor.u32 %v2256, %v2260
      %v2263 = vshll.u32 %v2254, 16
      %v2265 = vrot.slane %v2263, 1
      %v2266 = vsel %vm787, %v2261, %v2265
      %2267 = vrot.lane.b32.xlu0 %v2266, 12
      %v2268 = vpop.permute.xlu0 %2267
      %v2269 = vrot.slane %v2249, 1
      %v2270 = vrot.slane %v2254, 1
      %v2271 = vsel %vm802, %v2269, %v2270
      %2272 = vrot.lane.b32.xlu0 %v2271, 15
      %v2273 = vpop.permute.xlu0 %2272
      %v2276 = vunpack.c.l.b16 %v2215
      %v2277 = vunpack.c.l.b16 %v2216
      %v2278 = vpack.c.b16 %v2277, %v2276
      %2279 = vrot.lane.b32.xlu0 %v2278, 18
      %v2280 = vpop.permute.xlu0 %2279
      %v2282 = vunpack.c.l.b16 %v2217
      %v2283 = vpack.c.b16 %v2282, %v2282
      %v2285 = vshrl.u32 %v2278, 16
      %v2287 = vshll.u32 %v2278, 16
      %v2289 = vrot.slane %v2287, 1
      %v2290 = vor.u32 %v2285, %v2289
      %v2292 = vshll.u32 %v2283, 16
      %v2294 = vrot.slane %v2292, 1
      %v2295 = vsel %vm787, %v2290, %v2294
      %2296 = vrot.lane.b32.xlu0 %v2295, 21
      %v2297 = vpop.permute.xlu0 %2296
      %v2298 = vrot.slane %v2278, 1
      %v2299 = vrot.slane %v2283, 1
      %v2300 = vsel %vm802, %v2298, %v2299
      %2301 = vrot.lane.b32.xlu0 %v2300, 24
      %v2302 = vpop.permute.xlu0 %2301
      %v2304 = vsel %vm866, %v2222, %v2239
      %v2306 = vsel %vm869, %v2304, %v2244
      %v2308 = vsel %vm872, %v2306, %v2251
      %v2310 = vsel %vm875, %v2308, %v2268
      %v2312 = vsel %vm878, %v2310, %v2273
      %v2314 = vsel %vm881, %v2312, %v2280
      %v2316 = vsel %vm884, %v2314, %v2297
      %v2318 = vsel %vm887, %v2316, %v2302
      %v2320 = vunpack.c.l.b16 %v2318
      %v2321 = vunpack.c.h.b16 %v2318
      %v2322 = vpack.c.b16 %v2320, %v2320
      %v2323 = vpack.c.b16 %v2321, %v2321
      %2326 = vst.msk [vmem:[#allocation3 + $0x60] sm:$0xf] %vm897, %v2322
      %2327 = vst.msk [vmem:[#allocation3 + $0x64] sm:$0xf] %vm897, %v2323
      %v2328 = vld [vmem:[%s678] sm:$0xf]
      %v2329 = vld [vmem:[%s678 + $0x4] sm:$0xf]
      %v2330 = vld [vmem:[%s678 + $0x8] sm:$0x1]
      %v2331 = vld [vmem:[%s706] sm:$0xf]
      %v2332 = vld [vmem:[%s706 + $0x4] sm:$0xf]
      %v2333 = vld [vmem:[%s706 + $0x8] sm:$0x1]
      %v2334 = vld [vmem:[%s734] sm:$0xf]
      %v2335 = vld [vmem:[%s734 + $0x4] sm:$0xf]
      %v2336 = vld [vmem:[%s734 + $0x8] sm:$0x1]
      %v2339 = vunpack.c.l.b16 %v2328
      %v2340 = vunpack.c.l.b16 %v2329
      %v2341 = vpack.c.b16 %v2340, %v2339
      %v2343 = vunpack.c.l.b16 %v2330
      %v2344 = vpack.c.b16 %v2343, %v2343
      %v2346 = vshrl.u32 %v2341, 16
      %v2348 = vshll.u32 %v2341, 16
      %v2350 = vrot.slane %v2348, 1
      %v2351 = vor.u32 %v2346, %v2350
      %v2353 = vshll.u32 %v2344, 16
      %v2355 = vrot.slane %v2353, 1
      %v2356 = vsel %vm787, %v2351, %v2355
      %2357 = vrot.lane.b32.xlu0 %v2356, 3
      %v2358 = vpop.permute.xlu0 %2357
      %v2359 = vrot.slane %v2341, 1
      %v2360 = vrot.slane %v2344, 1
      %v2361 = vsel %vm802, %v2359, %v2360
      %2362 = vrot.lane.b32.xlu0 %v2361, 6
      %v2363 = vpop.permute.xlu0 %2362
      %v2366 = vunpack.c.l.b16 %v2331
      %v2367 = vunpack.c.l.b16 %v2332
      %v2368 = vpack.c.b16 %v2367, %v2366
      %2369 = vrot.lane.b32.xlu0 %v2368, 9
      %v2370 = vpop.permute.xlu0 %2369
      %v2372 = vunpack.c.l.b16 %v2333
      %v2373 = vpack.c.b16 %v2372, %v2372
      %v2375 = vshrl.u32 %v2368, 16
      %v2377 = vshll.u32 %v2368, 16
      %v2379 = vrot.slane %v2377, 1
      %v2380 = vor.u32 %v2375, %v2379
      %v2382 = vshll.u32 %v2373, 16
      %v2384 = vrot.slane %v2382, 1
      %v2385 = vsel %vm787, %v2380, %v2384
      %2386 = vrot.lane.b32.xlu0 %v2385, 12
      %v2387 = vpop.permute.xlu0 %2386
      %v2388 = vrot.slane %v2368, 1
      %v2389 = vrot.slane %v2373, 1
      %v2390 = vsel %vm802, %v2388, %v2389
      %2391 = vrot.lane.b32.xlu0 %v2390, 15
      %v2392 = vpop.permute.xlu0 %2391
      %v2395 = vunpack.c.l.b16 %v2334
      %v2396 = vunpack.c.l.b16 %v2335
      %v2397 = vpack.c.b16 %v2396, %v2395
      %2398 = vrot.lane.b32.xlu0 %v2397, 18
      %v2399 = vpop.permute.xlu0 %2398
      %v2401 = vunpack.c.l.b16 %v2336
      %v2402 = vpack.c.b16 %v2401, %v2401
      %v2404 = vshrl.u32 %v2397, 16
      %v2406 = vshll.u32 %v2397, 16
      %v2408 = vrot.slane %v2406, 1
      %v2409 = vor.u32 %v2404, %v2408
      %v2411 = vshll.u32 %v2402, 16
      %v2413 = vrot.slane %v2411, 1
      %v2414 = vsel %vm787, %v2409, %v2413
      %2415 = vrot.lane.b32.xlu0 %v2414, 21
      %v2416 = vpop.permute.xlu0 %2415
      %v2417 = vrot.slane %v2397, 1
      %v2418 = vrot.slane %v2402, 1
      %v2419 = vsel %vm802, %v2417, %v2418
      %2420 = vrot.lane.b32.xlu0 %v2419, 24
      %v2421 = vpop.permute.xlu0 %2420
      %v2423 = vsel %vm866, %v2341, %v2358
      %v2425 = vsel %vm869, %v2423, %v2363
      %v2427 = vsel %vm872, %v2425, %v2370
      %v2429 = vsel %vm875, %v2427, %v2387
      %v2431 = vsel %vm878, %v2429, %v2392
      %v2433 = vsel %vm881, %v2431, %v2399
      %v2435 = vsel %vm884, %v2433, %v2416
      %v2437 = vsel %vm887, %v2435, %v2421
      %v2439 = vunpack.c.l.b16 %v2437
      %v2440 = vunpack.c.h.b16 %v2437
      %v2441 = vpack.c.b16 %v2439, %v2439
      %v2442 = vpack.c.b16 %v2440, %v2440
      %2445 = vst.msk [vmem:[#allocation3 + $0x68] sm:$0xf] %vm897, %v2441
      %2446 = vst.msk [vmem:[#allocation3 + $0x6c] sm:$0xf] %vm897, %v2442
      %v2447 = vld [vmem:[%s706] sm:$0xf]
      %v2448 = vld [vmem:[%s706 + $0x4] sm:$0xf]
      %v2449 = vld [vmem:[%s706 + $0x8] sm:$0x1]
      %v2450 = vld [vmem:[%s734] sm:$0xf]
      %v2451 = vld [vmem:[%s734 + $0x4] sm:$0xf]
      %v2452 = vld [vmem:[%s734 + $0x8] sm:$0x1]
      %v2453 = vld [vmem:[%s762] sm:$0xf]
      %v2454 = vld [vmem:[%s762 + $0x4] sm:$0xf]
      %v2455 = vld [vmem:[%s762 + $0x8] sm:$0x1]
      %v2458 = vunpack.c.l.b16 %v2447
      %v2459 = vunpack.c.l.b16 %v2448
      %v2460 = vpack.c.b16 %v2459, %v2458
      %v2462 = vunpack.c.l.b16 %v2449
      %v2463 = vpack.c.b16 %v2462, %v2462
      %v2465 = vshrl.u32 %v2460, 16
      %v2467 = vshll.u32 %v2460, 16
      %v2469 = vrot.slane %v2467, 1
      %v2470 = vor.u32 %v2465, %v2469
      %v2472 = vshll.u32 %v2463, 16
      %v2474 = vrot.slane %v2472, 1
      %v2475 = vsel %vm787, %v2470, %v2474
      %2476 = vrot.lane.b32.xlu0 %v2475, 3
      %v2477 = vpop.permute.xlu0 %2476
      %v2478 = vrot.slane %v2460, 1
      %v2479 = vrot.slane %v2463, 1
      %v2480 = vsel %vm802, %v2478, %v2479
      %2481 = vrot.lane.b32.xlu0 %v2480, 6
      %v2482 = vpop.permute.xlu0 %2481
      %v2485 = vunpack.c.l.b16 %v2450
      %v2486 = vunpack.c.l.b16 %v2451
      %v2487 = vpack.c.b16 %v2486, %v2485
      %2488 = vrot.lane.b32.xlu0 %v2487, 9
      %v2489 = vpop.permute.xlu0 %2488
      %v2491 = vunpack.c.l.b16 %v2452
      %v2492 = vpack.c.b16 %v2491, %v2491
      %v2494 = vshrl.u32 %v2487, 16
      %v2496 = vshll.u32 %v2487, 16
      %v2498 = vrot.slane %v2496, 1
      %v2499 = vor.u32 %v2494, %v2498
      %v2501 = vshll.u32 %v2492, 16
      %v2503 = vrot.slane %v2501, 1
      %v2504 = vsel %vm787, %v2499, %v2503
      %2505 = vrot.lane.b32.xlu0 %v2504, 12
      %v2506 = vpop.permute.xlu0 %2505
      %v2507 = vrot.slane %v2487, 1
      %v2508 = vrot.slane %v2492, 1
      %v2509 = vsel %vm802, %v2507, %v2508
      %2510 = vrot.lane.b32.xlu0 %v2509, 15
      %v2511 = vpop.permute.xlu0 %2510
      %v2514 = vunpack.c.l.b16 %v2453
      %v2515 = vunpack.c.l.b16 %v2454
      %v2516 = vpack.c.b16 %v2515, %v2514
      %2517 = vrot.lane.b32.xlu0 %v2516, 18
      %v2518 = vpop.permute.xlu0 %2517
      %v2520 = vunpack.c.l.b16 %v2455
      %v2521 = vpack.c.b16 %v2520, %v2520
      %v2523 = vshrl.u32 %v2516, 16
      %v2525 = vshll.u32 %v2516, 16
      %v2527 = vrot.slane %v2525, 1
      %v2528 = vor.u32 %v2523, %v2527
      %v2530 = vshll.u32 %v2521, 16
      %v2532 = vrot.slane %v2530, 1
      %v2533 = vsel %vm787, %v2528, %v2532
      %2534 = vrot.lane.b32.xlu0 %v2533, 21
      %v2535 = vpop.permute.xlu0 %2534
      %v2536 = vrot.slane %v2516, 1
      %v2537 = vrot.slane %v2521, 1
      %v2538 = vsel %vm802, %v2536, %v2537
      %2539 = vrot.lane.b32.xlu0 %v2538, 24
      %v2540 = vpop.permute.xlu0 %2539
      %v2542 = vsel %vm866, %v2460, %v2477
      %v2544 = vsel %vm869, %v2542, %v2482
      %v2546 = vsel %vm872, %v2544, %v2489
      %v2548 = vsel %vm875, %v2546, %v2506
      %v2550 = vsel %vm878, %v2548, %v2511
      %v2552 = vsel %vm881, %v2550, %v2518
      %v2554 = vsel %vm884, %v2552, %v2535
      %v2556 = vsel %vm887, %v2554, %v2540
      %v2558 = vunpack.c.l.b16 %v2556
      %v2559 = vunpack.c.h.b16 %v2556
      %v2560 = vpack.c.b16 %v2558, %v2558
      %v2561 = vpack.c.b16 %v2559, %v2559
      %2564 = vst.msk [vmem:[#allocation3 + $0x70] sm:$0xf] %vm897, %v2560
      %2565 = vst.msk [vmem:[#allocation3 + $0x74] sm:$0xf] %vm897, %v2561
      %v2566 = vld [vmem:[%s734] sm:$0xf]
      %v2567 = vld [vmem:[%s734 + $0x4] sm:$0xf]
      %v2568 = vld [vmem:[%s734 + $0x8] sm:$0x1]
      %v2569 = vld [vmem:[%s762] sm:$0xf]
      %v2570 = vld [vmem:[%s762 + $0x4] sm:$0xf]
      %v2571 = vld [vmem:[%s762 + $0x8] sm:$0x1]
      %s2572 = scalar_lea.vmem [#allocation2], 204
      %v2573 = vld [vmem:[%s2572] sm:$0xf]
      %v2574 = vld [vmem:[%s2572 + $0x4] sm:$0xf]
      %v2575 = vld [vmem:[%s2572 + $0x8] sm:$0x1]
      %v2578 = vunpack.c.l.b16 %v2566
      %v2579 = vunpack.c.l.b16 %v2567
      %v2580 = vpack.c.b16 %v2579, %v2578
      %v2582 = vunpack.c.l.b16 %v2568
      %v2583 = vpack.c.b16 %v2582, %v2582
      %v2585 = vshrl.u32 %v2580, 16
      %v2587 = vshll.u32 %v2580, 16
      %v2589 = vrot.slane %v2587, 1
      %v2590 = vor.u32 %v2585, %v2589
      %v2592 = vshll.u32 %v2583, 16
      %v2594 = vrot.slane %v2592, 1
      %v2595 = vsel %vm787, %v2590, %v2594
      %2596 = vrot.lane.b32.xlu0 %v2595, 3
      %v2597 = vpop.permute.xlu0 %2596
      %v2598 = vrot.slane %v2580, 1
      %v2599 = vrot.slane %v2583, 1
      %v2600 = vsel %vm802, %v2598, %v2599
      %2601 = vrot.lane.b32.xlu0 %v2600, 6
      %v2602 = vpop.permute.xlu0 %2601
      %v2605 = vunpack.c.l.b16 %v2569
      %v2606 = vunpack.c.l.b16 %v2570
      %v2607 = vpack.c.b16 %v2606, %v2605
      %2608 = vrot.lane.b32.xlu0 %v2607, 9
      %v2609 = vpop.permute.xlu0 %2608
      %v2611 = vunpack.c.l.b16 %v2571
      %v2612 = vpack.c.b16 %v2611, %v2611
      %v2614 = vshrl.u32 %v2607, 16
      %v2616 = vshll.u32 %v2607, 16
      %v2618 = vrot.slane %v2616, 1
      %v2619 = vor.u32 %v2614, %v2618
      %v2621 = vshll.u32 %v2612, 16
      %v2623 = vrot.slane %v2621, 1
      %v2624 = vsel %vm787, %v2619, %v2623
      %2625 = vrot.lane.b32.xlu0 %v2624, 12
      %v2626 = vpop.permute.xlu0 %2625
      %v2627 = vrot.slane %v2607, 1
      %v2628 = vrot.slane %v2612, 1
      %v2629 = vsel %vm802, %v2627, %v2628
      %2630 = vrot.lane.b32.xlu0 %v2629, 15
      %v2631 = vpop.permute.xlu0 %2630
      %v2634 = vunpack.c.l.b16 %v2573
      %v2635 = vunpack.c.l.b16 %v2574
      %v2636 = vpack.c.b16 %v2635, %v2634
      %2637 = vrot.lane.b32.xlu0 %v2636, 18
      %v2638 = vpop.permute.xlu0 %2637
      %v2640 = vunpack.c.l.b16 %v2575
      %v2641 = vpack.c.b16 %v2640, %v2640
      %v2643 = vshrl.u32 %v2636, 16
      %v2645 = vshll.u32 %v2636, 16
      %v2647 = vrot.slane %v2645, 1
      %v2648 = vor.u32 %v2643, %v2647
      %v2650 = vshll.u32 %v2641, 16
      %v2652 = vrot.slane %v2650, 1
      %v2653 = vsel %vm787, %v2648, %v2652
      %2654 = vrot.lane.b32.xlu0 %v2653, 21
      %v2655 = vpop.permute.xlu0 %2654
      %v2656 = vrot.slane %v2636, 1
      %v2657 = vrot.slane %v2641, 1
      %v2658 = vsel %vm802, %v2656, %v2657
      %2659 = vrot.lane.b32.xlu0 %v2658, 24
      %v2660 = vpop.permute.xlu0 %2659
      %v2662 = vsel %vm866, %v2580, %v2597
      %v2664 = vsel %vm869, %v2662, %v2602
      %v2666 = vsel %vm872, %v2664, %v2609
      %v2668 = vsel %vm875, %v2666, %v2626
      %v2670 = vsel %vm878, %v2668, %v2631
      %v2672 = vsel %vm881, %v2670, %v2638
      %v2674 = vsel %vm884, %v2672, %v2655
      %v2676 = vsel %vm887, %v2674, %v2660
      %v2678 = vunpack.c.l.b16 %v2676
      %v2679 = vunpack.c.h.b16 %v2676
      %v2680 = vpack.c.b16 %v2678, %v2678
      %v2681 = vpack.c.b16 %v2679, %v2679
      %2684 = vst.msk [vmem:[#allocation3 + $0x78] sm:$0xf] %vm897, %v2680
      %2685 = vst.msk [vmem:[#allocation3 + $0x7c] sm:$0xf] %vm897, %v2681
      %v2686 = vld [vmem:[#allocation3] sm:$0xf]
      %v2687 = vld [vmem:[#allocation3 + $0x4] sm:$0xf]
      %v2688 = vld [vmem:[#allocation3 + $0x8] sm:$0xf]
      %v2689 = vld [vmem:[#allocation3 + $0xc] sm:$0xf]
      %v2690 = vld [vmem:[#allocation3 + $0x10] sm:$0xf]
      %v2691 = vld [vmem:[#allocation3 + $0x14] sm:$0xf]
      %v2692 = vld [vmem:[#allocation3 + $0x18] sm:$0xf]
      %v2693 = vld [vmem:[#allocation3 + $0x1c] sm:$0xf]
      %v2694 = vld [vmem:[#allocation3 + $0x20] sm:$0xf]
      %v2695 = vld [vmem:[#allocation3 + $0x24] sm:$0xf]
      %v2696 = vld [vmem:[#allocation3 + $0x28] sm:$0xf]
      %v2697 = vld [vmem:[#allocation3 + $0x2c] sm:$0xf]
      %v2698 = vld [vmem:[#allocation3 + $0x30] sm:$0xf]
      %v2699 = vld [vmem:[#allocation3 + $0x34] sm:$0xf]
      %v2700 = vld [vmem:[#allocation3 + $0x38] sm:$0xf]
      %v2701 = vld [vmem:[#allocation3 + $0x3c] sm:$0xf]
      %v2702 = vld [vmem:[#allocation3 + $0x40] sm:$0xf]
      %v2703 = vld [vmem:[#allocation3 + $0x44] sm:$0xf]
      %v2704 = vld [vmem:[#allocation3 + $0x48] sm:$0xf]
      %v2705 = vld [vmem:[#allocation3 + $0x4c] sm:$0xf]
      %v2706 = vld [vmem:[#allocation3 + $0x50] sm:$0xf]
      %v2707 = vld [vmem:[#allocation3 + $0x54] sm:$0xf]
      %v2708 = vld [vmem:[#allocation3 + $0x58] sm:$0xf]
      %v2709 = vld [vmem:[#allocation3 + $0x5c] sm:$0xf]
      %v2710 = vld [vmem:[#allocation3 + $0x60] sm:$0xf]
      %v2711 = vld [vmem:[#allocation3 + $0x64] sm:$0xf]
      %v2712 = vld [vmem:[#allocation3 + $0x68] sm:$0xf]
      %v2713 = vld [vmem:[#allocation3 + $0x6c] sm:$0xf]
      %v2714 = vld [vmem:[#allocation3 + $0x70] sm:$0xf]
      %v2715 = vld [vmem:[#allocation3 + $0x74] sm:$0xf]
      %v2716 = vld [vmem:[#allocation3 + $0x78] sm:$0xf]
      %v2717 = vld [vmem:[#allocation3 + $0x7c] sm:$0xf]
      %v2718 = vld [vmem:[%s1] sm:$0xf]
      %v2719 = vld [vmem:[%s1 + $0x4] sm:$0xf]
      %v2720 = vld [vmem:[%s1 + $0x8] sm:$0xf]
      %v2721 = vld [vmem:[%s1 + $0xc] sm:$0x3]
      %v2722 = vld [vmem:[%s2] sm:$0x1]
      %v2724 = vperm.slane %v2722, 0
      %v2758 = vunpack.c.l.b16 %v2686
      %v2759 = vunpack.c.l.b16 %v2687
      %v2760 = vunpack.c.l.b16 %v2688
      %v2761 = vunpack.c.l.b16 %v2689
      %v2762 = vunpack.c.l.b16 %v2690
      %v2763 = vunpack.c.l.b16 %v2691
      %v2764 = vunpack.c.l.b16 %v2692
      %v2765 = vunpack.c.l.b16 %v2693
      %v2766 = vunpack.c.l.b16 %v2694
      %v2767 = vunpack.c.l.b16 %v2695
      %v2768 = vunpack.c.l.b16 %v2696
      %v2769 = vunpack.c.l.b16 %v2697
      %v2770 = vunpack.c.l.b16 %v2698
      %v2771 = vunpack.c.l.b16 %v2699
      %v2772 = vunpack.c.l.b16 %v2700
      %v2773 = vunpack.c.l.b16 %v2701
      %v2774 = vunpack.c.l.b16 %v2702
      %v2775 = vunpack.c.l.b16 %v2703
      %v2776 = vunpack.c.l.b16 %v2704
      %v2777 = vunpack.c.l.b16 %v2705
      %v2778 = vunpack.c.l.b16 %v2706
      %v2779 = vunpack.c.l.b16 %v2707
      %v2780 = vunpack.c.l.b16 %v2708
      %v2781 = vunpack.c.l.b16 %v2709
      %v2782 = vunpack.c.l.b16 %v2710
      %v2783 = vunpack.c.l.b16 %v2711
      %v2784 = vunpack.c.l.b16 %v2712
      %v2785 = vunpack.c.l.b16 %v2713
      %v2786 = vunpack.c.l.b16 %v2714
      %v2787 = vunpack.c.l.b16 %v2715
      %v2788 = vunpack.c.l.b16 %v2716
      %v2789 = vunpack.c.l.b16 %v2717
      %v2790 = vpack.c.b16 %v2759, %v2758
      %v2791 = vpack.c.b16 %v2761, %v2760
      %v2792 = vpack.c.b16 %v2763, %v2762
      %v2793 = vpack.c.b16 %v2765, %v2764
      %v2794 = vpack.c.b16 %v2767, %v2766
      %v2795 = vpack.c.b16 %v2769, %v2768
      %v2796 = vpack.c.b16 %v2771, %v2770
      %v2797 = vpack.c.b16 %v2773, %v2772
      %v2798 = vpack.c.b16 %v2775, %v2774
      %v2799 = vpack.c.b16 %v2777, %v2776
      %v2800 = vpack.c.b16 %v2779, %v2778
      %v2801 = vpack.c.b16 %v2781, %v2780
      %v2802 = vpack.c.b16 %v2783, %v2782
      %v2803 = vpack.c.b16 %v2785, %v2784
      %v2804 = vpack.c.b16 %v2787, %v2786
      %v2805 = vpack.c.b16 %v2789, %v2788
      %v2810 = vunpack.c.l.b16 %v2718
      %v2811 = vunpack.c.l.b16 %v2719
      %v2812 = vunpack.c.l.b16 %v2720
      %v2813 = vunpack.c.l.b16 %v2721
      %v2814 = vpack.c.b16 %v2811, %v2810
      %v2815 = vpack.c.b16 %v2813, %v2812
      %vm2817 = vcmask 220160
      %v2819 = vsel %vm2817, %v2790, 0
      %v2822 = vsel %vm2817, %v2791, 0
      %v2825 = vsel %vm2817, %v2792, 0
      %v2828 = vsel %vm2817, %v2793, 0
      %v2831 = vsel %vm2817, %v2794, 0
      %v2834 = vsel %vm2817, %v2795, 0
      %v2837 = vsel %vm2817, %v2796, 0
      %v2840 = vsel %vm2817, %v2797, 0
      %v2843 = vsel %vm2817, %v2798, 0
      %v2846 = vsel %vm2817, %v2799, 0
      %v2849 = vsel %vm2817, %v2800, 0
      %v2852 = vsel %vm2817, %v2801, 0
      %v2855 = vsel %vm2817, %v2802, 0
      %v2858 = vsel %vm2817, %v2803, 0
      %v2861 = vsel %vm2817, %v2804, 0
      %v2864 = vsel %vm2817, %v2805, 0
      %vm2866 = vcmask 1044480
      %vm2867 = vcmask 1045504
      %v2868 = vsel %vm2866, 4294967295, 65535
      %v2869 = vsel %vm2867, %v2868, 0
      %v2871 = vand.u32 %v2815, %v2869
      %2873 = vmatpush.bf16.msra.mxu0 0
      %2874 = vmatpush.bf16.msra.mxu0 0
      %2875 = vmatpush.bf16.msra.mxu0 0
      %2876 = vmatpush.bf16.msra.mxu0 0
      %2877 = vmatpush.bf16.msra.mxu0 0
      %2878 = vmatpush.bf16.msra.mxu0 0
      %2879 = vmatpush.bf16.msra.mxu0 %v2871
      %2880 = vmatpush.bf16.msra.mxu0 %v2814
      %2881 = vmatmul.bf16.gmra.mxu0 %v2819
      %v2882 = vpop.f32.mrf.mxu0
      %v2883 = vadd.f32 %v2724, %v2882
      %v2884 = vpop.f32.mrf.mxu0
      %v2885 = vadd.f32 %v2724, %v2884
      %2886 = vmatmul.bf16.gmra.mxu0 %v2822
      %v2887 = vpop.f32.mrf.mxu0
      %v2888 = vadd.f32 %v2724, %v2887
      %v2889 = vpop.f32.mrf.mxu0
      %v2890 = vadd.f32 %v2724, %v2889
      %2891 = vmatmul.bf16.gmra.mxu0 %v2825
      %v2892 = vpop.f32.mrf.mxu0
      %v2893 = vadd.f32 %v2724, %v2892
      %v2894 = vpop.f32.mrf.mxu0
      %v2895 = vadd.f32 %v2724, %v2894
      %2896 = vmatmul.bf16.gmra.mxu0 %v2828
      %v2897 = vpop.f32.mrf.mxu0
      %v2898 = vadd.f32 %v2724, %v2897
      %v2899 = vpop.f32.mrf.mxu0
      %v2900 = vadd.f32 %v2724, %v2899
      %2901 = vmatmul.bf16.gmra.mxu0 %v2831
      %v2902 = vpop.f32.mrf.mxu0
      %v2903 = vadd.f32 %v2724, %v2902
      %v2904 = vpop.f32.mrf.mxu0
      %v2905 = vadd.f32 %v2724, %v2904
      %2906 = vmatmul.bf16.gmra.mxu0 %v2834
      %v2907 = vpop.f32.mrf.mxu0
      %v2908 = vadd.f32 %v2724, %v2907
      %v2909 = vpop.f32.mrf.mxu0
      %v2910 = vadd.f32 %v2724, %v2909
      %2911 = vmatmul.bf16.gmra.mxu0 %v2837
      %v2912 = vpop.f32.mrf.mxu0
      %v2913 = vadd.f32 %v2724, %v2912
      %v2914 = vpop.f32.mrf.mxu0
      %v2915 = vadd.f32 %v2724, %v2914
      %2916 = vmatmul.bf16.gmra.mxu0 %v2840
      %v2917 = vpop.f32.mrf.mxu0
      %v2918 = vadd.f32 %v2724, %v2917
      %v2919 = vpop.f32.mrf.mxu0
      %v2920 = vadd.f32 %v2724, %v2919
      %2921 = vmatmul.bf16.gmra.mxu0 %v2843
      %v2922 = vpop.f32.mrf.mxu0
      %v2923 = vadd.f32 %v2724, %v2922
      %v2924 = vpop.f32.mrf.mxu0
      %v2925 = vadd.f32 %v2724, %v2924
      %2926 = vmatmul.bf16.gmra.mxu0 %v2846
      %v2927 = vpop.f32.mrf.mxu0
      %v2928 = vadd.f32 %v2724, %v2927
      %v2929 = vpop.f32.mrf.mxu0
      %v2930 = vadd.f32 %v2724, %v2929
      %2931 = vmatmul.bf16.gmra.mxu0 %v2849
      %v2932 = vpop.f32.mrf.mxu0
      %v2933 = vadd.f32 %v2724, %v2932
      %v2934 = vpop.f32.mrf.mxu0
      %v2935 = vadd.f32 %v2724, %v2934
      %2936 = vmatmul.bf16.gmra.mxu0 %v2852
      %v2937 = vpop.f32.mrf.mxu0
      %v2938 = vadd.f32 %v2724, %v2937
      %v2939 = vpop.f32.mrf.mxu0
      %v2940 = vadd.f32 %v2724, %v2939
      %2941 = vmatmul.bf16.gmra.mxu0 %v2855
      %v2942 = vpop.f32.mrf.mxu0
      %v2943 = vadd.f32 %v2724, %v2942
      %v2944 = vpop.f32.mrf.mxu0
      %v2945 = vadd.f32 %v2724, %v2944
      %2946 = vmatmul.bf16.gmra.mxu0 %v2858
      %v2947 = vpop.f32.mrf.mxu0
      %v2948 = vadd.f32 %v2724, %v2947
      %v2949 = vpop.f32.mrf.mxu0
      %v2950 = vadd.f32 %v2724, %v2949
      %2951 = vmatmul.bf16.gmra.mxu0 %v2861
      %v2952 = vpop.f32.mrf.mxu0
      %v2953 = vadd.f32 %v2724, %v2952
      %v2954 = vpop.f32.mrf.mxu0
      %v2955 = vadd.f32 %v2724, %v2954
      %2956 = vmatmul.bf16.gmra.mxu0 %v2864
      %v2957 = vpop.f32.mrf.mxu0
      %v2958 = vadd.f32 %v2724, %v2957
      %v2959 = vpop.f32.mrf.mxu0
      %v2960 = vadd.f32 %v2724, %v2959
      %2961 = vdwg.mxu0
      %v2962 = vmax.f32 %v2883, 0.0
      %v2963 = vmax.f32 %v2885, 0.0
      %v2964 = vmax.f32 %v2888, 0.0
      %v2965 = vmax.f32 %v2890, 0.0
      %v2966 = vmax.f32 %v2893, 0.0
      %v2967 = vmax.f32 %v2895, 0.0
      %v2968 = vmax.f32 %v2898, 0.0
      %v2969 = vmax.f32 %v2900, 0.0
      %v2970 = vmax.f32 %v2903, 0.0
      %v2971 = vmax.f32 %v2905, 0.0
      %v2972 = vmax.f32 %v2908, 0.0
      %v2973 = vmax.f32 %v2910, 0.0
      %v2974 = vmax.f32 %v2913, 0.0
      %v2975 = vmax.f32 %v2915, 0.0
      %v2976 = vmax.f32 %v2918, 0.0
      %v2977 = vmax.f32 %v2920, 0.0
      %v2978 = vmax.f32 %v2923, 0.0
      %v2979 = vmax.f32 %v2925, 0.0
      %v2980 = vmax.f32 %v2928, 0.0
      %v2981 = vmax.f32 %v2930, 0.0
      %v2982 = vmax.f32 %v2933, 0.0
      %v2983 = vmax.f32 %v2935, 0.0
      %v2984 = vmax.f32 %v2938, 0.0
      %v2985 = vmax.f32 %v2940, 0.0
      %v2986 = vmax.f32 %v2943, 0.0
      %v2987 = vmax.f32 %v2945, 0.0
      %v2988 = vmax.f32 %v2948, 0.0
      %v2989 = vmax.f32 %v2950, 0.0
      %v2990 = vmax.f32 %v2953, 0.0
      %v2991 = vmax.f32 %v2955, 0.0
      %v2992 = vmax.f32 %v2958, 0.0
      %v2993 = vmax.f32 %v2960, 0.0
      %vm2994 = vcmask 60416
      %2995 = vst.msk [vmem:[#allocation4] sm:$0xf] %vm2994, 0
      %2996 = vst.msk [vmem:[#allocation4 + $0x4] sm:$0xf] %vm2994, 0
      %vm2997 = vcmask 57344
      %2998 = vst.msk [vmem:[#allocation4 + $0x8] sm:$0x1] %vm2997, 0
      %2999 = vst.msk [vmem:[#allocation4 + $0xc] sm:$0xf] %vm2994, 0
      %3000 = vst.msk [vmem:[#allocation4 + $0x10] sm:$0xf] %vm2994, 0
      %3001 = vst.msk [vmem:[#allocation4 + $0x14] sm:$0x1] %vm2997, 0
      %3002 = vst.msk [vmem:[#allocation4 + $0x18] sm:$0xf] %vm2994, 0
      %3003 = vst.msk [vmem:[#allocation4 + $0x1c] sm:$0xf] %vm2994, 0
      %3004 = vst.msk [vmem:[#allocation4 + $0x20] sm:$0x1] %vm2997, 0
      %3005 = vst.msk [vmem:[#allocation4 + $0x24] sm:$0xf] %vm2994, 0
      %3006 = vst.msk [vmem:[#allocation4 + $0x28] sm:$0xf] %vm2994, 0
      %3007 = vst.msk [vmem:[#allocation4 + $0x2c] sm:$0x1] %vm2997, 0
      %3008 = vst.msk [vmem:[#allocation4 + $0x30] sm:$0xf] %vm2994, 0
      %3009 = vst.msk [vmem:[#allocation4 + $0x34] sm:$0xf] %vm2994, 0
      %3010 = vst.msk [vmem:[#allocation4 + $0x38] sm:$0x1] %vm2997, 0
      %3011 = vst.msk [vmem:[#allocation4 + $0x3c] sm:$0xf] %vm2994, 0
      %3012 = vst.msk [vmem:[#allocation4 + $0x40] sm:$0xf] %vm2994, 0
      %3013 = vst.msk [vmem:[#allocation4 + $0x44] sm:$0x1] %vm2997, 0
      %3014 = vst.msk [vmem:[#allocation4 + $0x48] sm:$0xf] %vm2994, 0
      %3015 = vst.msk [vmem:[#allocation4 + $0x4c] sm:$0xf] %vm2994, 0
      %3016 = vst.msk [vmem:[#allocation4 + $0x50] sm:$0x1] %vm2997, 0
      %3017 = vst.msk [vmem:[#allocation4 + $0x54] sm:$0xf] %vm2994, 0
      %3018 = vst.msk [vmem:[#allocation4 + $0x58] sm:$0xf] %vm2994, 0
      %3019 = vst.msk [vmem:[#allocation4 + $0x5c] sm:$0x1] %vm2997, 0
      %3020 = vst.msk [vmem:[#allocation4 + $0x60] sm:$0xf] %vm2994, 0
      %3021 = vst.msk [vmem:[#allocation4 + $0x64] sm:$0xf] %vm2994, 0
      %3022 = vst.msk [vmem:[#allocation4 + $0x68] sm:$0x1] %vm2997, 0
      %3023 = vst.msk [vmem:[#allocation4 + $0x6c] sm:$0xf] %vm2994, 0
      %3024 = vst.msk [vmem:[#allocation4 + $0x70] sm:$0xf] %vm2994, 0
      %3025 = vst.msk [vmem:[#allocation4 + $0x74] sm:$0x1] %vm2997, 0
      %3026 = vst.msk [vmem:[#allocation4 + $0x78] sm:$0xf] %vm2994, 0
      %3027 = vst.msk [vmem:[#allocation4 + $0x7c] sm:$0xf] %vm2994, 0
      %3028 = vst.msk [vmem:[#allocation4 + $0x80] sm:$0x1] %vm2997, 0
      %3029 = vst.msk [vmem:[#allocation4 + $0x84] sm:$0xf] %vm2994, 0
      %3030 = vst.msk [vmem:[#allocation4 + $0x88] sm:$0xf] %vm2994, 0
      %3031 = vst.msk [vmem:[#allocation4 + $0x8c] sm:$0x1] %vm2997, 0
      %3032 = vst.msk [vmem:[#allocation4 + $0x90] sm:$0xf] %vm2994, 0
      %3033 = vst.msk [vmem:[#allocation4 + $0x94] sm:$0xf] %vm2994, 0
      %3034 = vst.msk [vmem:[#allocation4 + $0x98] sm:$0x1] %vm2997, 0
      %3035 = vst.msk [vmem:[#allocation4 + $0x9c] sm:$0xf] %vm2994, 0
      %3036 = vst.msk [vmem:[#allocation4 + $0xa0] sm:$0xf] %vm2994, 0
      %3037 = vst.msk [vmem:[#allocation4 + $0xa4] sm:$0x1] %vm2997, 0
      %3038 = vst.msk [vmem:[#allocation4 + $0xa8] sm:$0xf] %vm2994, 0
      %3039 = vst.msk [vmem:[#allocation4 + $0xac] sm:$0xf] %vm2994, 0
      %3040 = vst.msk [vmem:[#allocation4 + $0xb0] sm:$0x1] %vm2997, 0
      %3041 = vst.msk [vmem:[#allocation4 + $0xb4] sm:$0xf] %vm2994, 0
      %3042 = vst.msk [vmem:[#allocation4 + $0xb8] sm:$0xf] %vm2994, 0
      %3043 = vst.msk [vmem:[#allocation4 + $0xbc] sm:$0x1] %vm2997, 0
      %3044 = vst.msk [vmem:[#allocation4 + $0xc0] sm:$0xf] %vm2994, 0
      %3045 = vst.msk [vmem:[#allocation4 + $0xc4] sm:$0xf] %vm2994, 0
      %3046 = vst.msk [vmem:[#allocation4 + $0xc8] sm:$0x1] %vm2997, 0
      %3047 = vst.msk [vmem:[#allocation4 + $0xcc] sm:$0xf] %vm2994, 0
      %3048 = vst.msk [vmem:[#allocation4 + $0xd0] sm:$0xf] %vm2994, 0
      %3049 = vst.msk [vmem:[#allocation4 + $0xd4] sm:$0x1] %vm2997, 0
      %v3050 = vpack.c.bf16 %v2962, %v2962
      %v3051 = vpack.c.bf16 %v2963, %v2963
      %v3053 = vshrl.u32 %v3050, 16
      %v3055 = vrot.slane %v3053, 7
      %v3056 = vshll.u32 %v3050, 16
      %v3058 = vor.u32 %v3055, %v3056
      %v3059 = vrot.slane %v3055, 4
      %v3061 = vshrl.u32 %v3051, 16
      %v3063 = vrot.slane %v3061, 7
      %v3064 = vshll.u32 %v3051, 16
      %v3066 = vor.u32 %v3063, %v3064
      %v3067 = vsel %vm316, %v3059, %v3066
      %v3068 = vrot.slane %v3063, 4
      %s3072 = scalar_lea.vmem [#allocation4], 12
      %vm3073 = vcmask 60416
      %vm3074 = vmand %vm3073, %vm339
      %v3075 = vld [vmem:[%s3072] sm:$0xf]
      %v3076 = vsel %vm3074, %v3058, %v3075
      %3077 = vst [vmem:[%s3072] sm:$0xf] %v3076
      %3078 = vst.msk [vmem:[%s3072 + $0x4] sm:$0xf] %vm2994, %v3067
      %vm3079 = vcmask 57344
      %vm3080 = vmand %vm3079, %vm314
      %v3081 = vld [vmem:[%s3072 + $0x8] sm:$0x1]
      %v3082 = vsel %vm3080, %v3068, %v3081
      %3083 = vst [vmem:[%s3072 + $0x8] sm:$0x1] %v3082
      %v3084 = vpack.c.bf16 %v2964, %v2964
      %v3085 = vpack.c.bf16 %v2965, %v2965
      %v3087 = vshrl.u32 %v3084, 16
      %v3089 = vrot.slane %v3087, 7
      %v3090 = vshll.u32 %v3084, 16
      %v3092 = vor.u32 %v3089, %v3090
      %v3093 = vrot.slane %v3089, 4
      %v3095 = vshrl.u32 %v3085, 16
      %v3097 = vrot.slane %v3095, 7
      %v3098 = vshll.u32 %v3085, 16
      %v3100 = vor.u32 %v3097, %v3098
      %v3101 = vsel %vm316, %v3093, %v3100
      %v3102 = vrot.slane %v3097, 4
      %s3106 = scalar_lea.vmem [#allocation4], 24
      %v3107 = vld [vmem:[%s3106] sm:$0xf]
      %v3108 = vsel %vm3074, %v3092, %v3107
      %3109 = vst [vmem:[%s3106] sm:$0xf] %v3108
      %3110 = vst.msk [vmem:[%s3106 + $0x4] sm:$0xf] %vm2994, %v3101
      %v3111 = vld [vmem:[%s3106 + $0x8] sm:$0x1]
      %v3112 = vsel %vm3080, %v3102, %v3111
      %3113 = vst [vmem:[%s3106 + $0x8] sm:$0x1] %v3112
      %v3114 = vpack.c.bf16 %v2966, %v2966
      %v3115 = vpack.c.bf16 %v2967, %v2967
      %v3117 = vshrl.u32 %v3114, 16
      %v3119 = vrot.slane %v3117, 7
      %v3120 = vshll.u32 %v3114, 16
      %v3122 = vor.u32 %v3119, %v3120
      %v3123 = vrot.slane %v3119, 4
      %v3125 = vshrl.u32 %v3115, 16
      %v3127 = vrot.slane %v3125, 7
      %v3128 = vshll.u32 %v3115, 16
      %v3130 = vor.u32 %v3127, %v3128
      %v3131 = vsel %vm316, %v3123, %v3130
      %v3132 = vrot.slane %v3127, 4
      %s3136 = scalar_lea.vmem [#allocation4], 36
      %v3137 = vld [vmem:[%s3136] sm:$0xf]
      %v3138 = vsel %vm3074, %v3122, %v3137
      %3139 = vst [vmem:[%s3136] sm:$0xf] %v3138
      %3140 = vst.msk [vmem:[%s3136 + $0x4] sm:$0xf] %vm2994, %v3131
      %v3141 = vld [vmem:[%s3136 + $0x8] sm:$0x1]
      %v3142 = vsel %vm3080, %v3132, %v3141
      %3143 = vst [vmem:[%s3136 + $0x8] sm:$0x1] %v3142
      %v3144 = vpack.c.bf16 %v2968, %v2968
      %v3145 = vpack.c.bf16 %v2969, %v2969
      %v3147 = vshrl.u32 %v3144, 16
      %v3149 = vrot.slane %v3147, 7
      %v3150 = vshll.u32 %v3144, 16
      %v3152 = vor.u32 %v3149, %v3150
      %v3153 = vrot.slane %v3149, 4
      %v3155 = vshrl.u32 %v3145, 16
      %v3157 = vrot.slane %v3155, 7
      %v3158 = vshll.u32 %v3145, 16
      %v3160 = vor.u32 %v3157, %v3158
      %v3161 = vsel %vm316, %v3153, %v3160
      %v3162 = vrot.slane %v3157, 4
      %s3166 = scalar_lea.vmem [#allocation4], 48
      %v3167 = vld [vmem:[%s3166] sm:$0xf]
      %v3168 = vsel %vm3074, %v3152, %v3167
      %3169 = vst [vmem:[%s3166] sm:$0xf] %v3168
      %3170 = vst.msk [vmem:[%s3166 + $0x4] sm:$0xf] %vm2994, %v3161
      %v3171 = vld [vmem:[%s3166 + $0x8] sm:$0x1]
      %v3172 = vsel %vm3080, %v3162, %v3171
      %3173 = vst [vmem:[%s3166 + $0x8] sm:$0x1] %v3172
      %v3174 = vpack.c.bf16 %v2970, %v2970
      %v3175 = vpack.c.bf16 %v2971, %v2971
      %v3177 = vshrl.u32 %v3174, 16
      %v3179 = vrot.slane %v3177, 7
      %v3180 = vshll.u32 %v3174, 16
      %v3182 = vor.u32 %v3179, %v3180
      %v3183 = vrot.slane %v3179, 4
      %v3185 = vshrl.u32 %v3175, 16
      %v3187 = vrot.slane %v3185, 7
      %v3188 = vshll.u32 %v3175, 16
      %v3190 = vor.u32 %v3187, %v3188
      %v3191 = vsel %vm316, %v3183, %v3190
      %v3192 = vrot.slane %v3187, 4
      %s3196 = scalar_lea.vmem [#allocation4], 60
      %v3197 = vld [vmem:[%s3196] sm:$0xf]
      %v3198 = vsel %vm3074, %v3182, %v3197
      %3199 = vst [vmem:[%s3196] sm:$0xf] %v3198
      %3200 = vst.msk [vmem:[%s3196 + $0x4] sm:$0xf] %vm2994, %v3191
      %v3201 = vld [vmem:[%s3196 + $0x8] sm:$0x1]
      %v3202 = vsel %vm3080, %v3192, %v3201
      %3203 = vst [vmem:[%s3196 + $0x8] sm:$0x1] %v3202
      %v3204 = vpack.c.bf16 %v2972, %v2972
      %v3205 = vpack.c.bf16 %v2973, %v2973
      %v3207 = vshrl.u32 %v3204, 16
      %v3209 = vrot.slane %v3207, 7
      %v3210 = vshll.u32 %v3204, 16
      %v3212 = vor.u32 %v3209, %v3210
      %v3213 = vrot.slane %v3209, 4
      %v3215 = vshrl.u32 %v3205, 16
      %v3217 = vrot.slane %v3215, 7
      %v3218 = vshll.u32 %v3205, 16
      %v3220 = vor.u32 %v3217, %v3218
      %v3221 = vsel %vm316, %v3213, %v3220
      %v3222 = vrot.slane %v3217, 4
      %s3226 = scalar_lea.vmem [#allocation4], 72
      %v3227 = vld [vmem:[%s3226] sm:$0xf]
      %v3228 = vsel %vm3074, %v3212, %v3227
      %3229 = vst [vmem:[%s3226] sm:$0xf] %v3228
      %3230 = vst.msk [vmem:[%s3226 + $0x4] sm:$0xf] %vm2994, %v3221
      %v3231 = vld [vmem:[%s3226 + $0x8] sm:$0x1]
      %v3232 = vsel %vm3080, %v3222, %v3231
      %3233 = vst [vmem:[%s3226 + $0x8] sm:$0x1] %v3232
      %v3234 = vpack.c.bf16 %v2974, %v2974
      %v3235 = vpack.c.bf16 %v2975, %v2975
      %v3237 = vshrl.u32 %v3234, 16
      %v3239 = vrot.slane %v3237, 7
      %v3240 = vshll.u32 %v3234, 16
      %v3242 = vor.u32 %v3239, %v3240
      %v3243 = vrot.slane %v3239, 4
      %v3245 = vshrl.u32 %v3235, 16
      %v3247 = vrot.slane %v3245, 7
      %v3248 = vshll.u32 %v3235, 16
      %v3250 = vor.u32 %v3247, %v3248
      %v3251 = vsel %vm316, %v3243, %v3250
      %v3252 = vrot.slane %v3247, 4
      %s3256 = scalar_lea.vmem [#allocation4], 84
      %v3257 = vld [vmem:[%s3256] sm:$0xf]
      %v3258 = vsel %vm3074, %v3242, %v3257
      %3259 = vst [vmem:[%s3256] sm:$0xf] %v3258
      %3260 = vst.msk [vmem:[%s3256 + $0x4] sm:$0xf] %vm2994, %v3251
      %v3261 = vld [vmem:[%s3256 + $0x8] sm:$0x1]
      %v3262 = vsel %vm3080, %v3252, %v3261
      %3263 = vst [vmem:[%s3256 + $0x8] sm:$0x1] %v3262
      %v3264 = vpack.c.bf16 %v2976, %v2976
      %v3265 = vpack.c.bf16 %v2977, %v2977
      %v3267 = vshrl.u32 %v3264, 16
      %v3269 = vrot.slane %v3267, 7
      %v3270 = vshll.u32 %v3264, 16
      %v3272 = vor.u32 %v3269, %v3270
      %v3273 = vrot.slane %v3269, 4
      %v3275 = vshrl.u32 %v3265, 16
      %v3277 = vrot.slane %v3275, 7
      %v3278 = vshll.u32 %v3265, 16
      %v3280 = vor.u32 %v3277, %v3278
      %v3281 = vsel %vm316, %v3273, %v3280
      %v3282 = vrot.slane %v3277, 4
      %s3286 = scalar_lea.vmem [#allocation4], 96
      %v3287 = vld [vmem:[%s3286] sm:$0xf]
      %v3288 = vsel %vm3074, %v3272, %v3287
      %3289 = vst [vmem:[%s3286] sm:$0xf] %v3288
      %3290 = vst.msk [vmem:[%s3286 + $0x4] sm:$0xf] %vm2994, %v3281
      %v3291 = vld [vmem:[%s3286 + $0x8] sm:$0x1]
      %v3292 = vsel %vm3080, %v3282, %v3291
      %3293 = vst [vmem:[%s3286 + $0x8] sm:$0x1] %v3292
      %v3294 = vpack.c.bf16 %v2978, %v2978
      %v3295 = vpack.c.bf16 %v2979, %v2979
      %v3297 = vshrl.u32 %v3294, 16
      %v3299 = vrot.slane %v3297, 7
      %v3300 = vshll.u32 %v3294, 16
      %v3302 = vor.u32 %v3299, %v3300
      %v3303 = vrot.slane %v3299, 4
      %v3305 = vshrl.u32 %v3295, 16
      %v3307 = vrot.slane %v3305, 7
      %v3308 = vshll.u32 %v3295, 16
      %v3310 = vor.u32 %v3307, %v3308
      %v3311 = vsel %vm316, %v3303, %v3310
      %v3312 = vrot.slane %v3307, 4
      %s3316 = scalar_lea.vmem [#allocation4], 108
      %v3317 = vld [vmem:[%s3316] sm:$0xf]
      %v3318 = vsel %vm3074, %v3302, %v3317
      %3319 = vst [vmem:[%s3316] sm:$0xf] %v3318
      %3320 = vst.msk [vmem:[%s3316 + $0x4] sm:$0xf] %vm2994, %v3311
      %v3321 = vld [vmem:[%s3316 + $0x8] sm:$0x1]
      %v3322 = vsel %vm3080, %v3312, %v3321
      %3323 = vst [vmem:[%s3316 + $0x8] sm:$0x1] %v3322
      %v3324 = vpack.c.bf16 %v2980, %v2980
      %v3325 = vpack.c.bf16 %v2981, %v2981
      %v3327 = vshrl.u32 %v3324, 16
      %v3329 = vrot.slane %v3327, 7
      %v3330 = vshll.u32 %v3324, 16
      %v3332 = vor.u32 %v3329, %v3330
      %v3333 = vrot.slane %v3329, 4
      %v3335 = vshrl.u32 %v3325, 16
      %v3337 = vrot.slane %v3335, 7
      %v3338 = vshll.u32 %v3325, 16
      %v3340 = vor.u32 %v3337, %v3338
      %v3341 = vsel %vm316, %v3333, %v3340
      %v3342 = vrot.slane %v3337, 4
      %s3346 = scalar_lea.vmem [#allocation4], 120
      %v3347 = vld [vmem:[%s3346] sm:$0xf]
      %v3348 = vsel %vm3074, %v3332, %v3347
      %3349 = vst [vmem:[%s3346] sm:$0xf] %v3348
      %3350 = vst.msk [vmem:[%s3346 + $0x4] sm:$0xf] %vm2994, %v3341
      %v3351 = vld [vmem:[%s3346 + $0x8] sm:$0x1]
      %v3352 = vsel %vm3080, %v3342, %v3351
      %3353 = vst [vmem:[%s3346 + $0x8] sm:$0x1] %v3352
      %v3354 = vpack.c.bf16 %v2982, %v2982
      %v3355 = vpack.c.bf16 %v2983, %v2983
      %v3357 = vshrl.u32 %v3354, 16
      %v3359 = vrot.slane %v3357, 7
      %v3360 = vshll.u32 %v3354, 16
      %v3362 = vor.u32 %v3359, %v3360
      %v3363 = vrot.slane %v3359, 4
      %v3365 = vshrl.u32 %v3355, 16
      %v3367 = vrot.slane %v3365, 7
      %v3368 = vshll.u32 %v3355, 16
      %v3370 = vor.u32 %v3367, %v3368
      %v3371 = vsel %vm316, %v3363, %v3370
      %v3372 = vrot.slane %v3367, 4
      %s3376 = scalar_lea.vmem [#allocation4], 132
      %v3377 = vld [vmem:[%s3376] sm:$0xf]
      %v3378 = vsel %vm3074, %v3362, %v3377
      %3379 = vst [vmem:[%s3376] sm:$0xf] %v3378
      %3380 = vst.msk [vmem:[%s3376 + $0x4] sm:$0xf] %vm2994, %v3371
      %v3381 = vld [vmem:[%s3376 + $0x8] sm:$0x1]
      %v3382 = vsel %vm3080, %v3372, %v3381
      %3383 = vst [vmem:[%s3376 + $0x8] sm:$0x1] %v3382
      %v3384 = vpack.c.bf16 %v2984, %v2984
      %v3385 = vpack.c.bf16 %v2985, %v2985
      %v3387 = vshrl.u32 %v3384, 16
      %v3389 = vrot.slane %v3387, 7
      %v3390 = vshll.u32 %v3384, 16
      %v3392 = vor.u32 %v3389, %v3390
      %v3393 = vrot.slane %v3389, 4
      %v3395 = vshrl.u32 %v3385, 16
      %v3397 = vrot.slane %v3395, 7
      %v3398 = vshll.u32 %v3385, 16
      %v3400 = vor.u32 %v3397, %v3398
      %v3401 = vsel %vm316, %v3393, %v3400
      %v3402 = vrot.slane %v3397, 4
      %s3406 = scalar_lea.vmem [#allocation4], 144
      %v3407 = vld [vmem:[%s3406] sm:$0xf]
      %v3408 = vsel %vm3074, %v3392, %v3407
      %3409 = vst [vmem:[%s3406] sm:$0xf] %v3408
      %3410 = vst.msk [vmem:[%s3406 + $0x4] sm:$0xf] %vm2994, %v3401
      %v3411 = vld [vmem:[%s3406 + $0x8] sm:$0x1]
      %v3412 = vsel %vm3080, %v3402, %v3411
      %3413 = vst [vmem:[%s3406 + $0x8] sm:$0x1] %v3412
      %v3414 = vpack.c.bf16 %v2986, %v2986
      %v3415 = vpack.c.bf16 %v2987, %v2987
      %v3417 = vshrl.u32 %v3414, 16
      %v3419 = vrot.slane %v3417, 7
      %v3420 = vshll.u32 %v3414, 16
      %v3422 = vor.u32 %v3419, %v3420
      %v3423 = vrot.slane %v3419, 4
      %v3425 = vshrl.u32 %v3415, 16
      %v3427 = vrot.slane %v3425, 7
      %v3428 = vshll.u32 %v3415, 16
      %v3430 = vor.u32 %v3427, %v3428
      %v3431 = vsel %vm316, %v3423, %v3430
      %v3432 = vrot.slane %v3427, 4
      %s3436 = scalar_lea.vmem [#allocation4], 156
      %v3437 = vld [vmem:[%s3436] sm:$0xf]
      %v3438 = vsel %vm3074, %v3422, %v3437
      %3439 = vst [vmem:[%s3436] sm:$0xf] %v3438
      %3440 = vst.msk [vmem:[%s3436 + $0x4] sm:$0xf] %vm2994, %v3431
      %v3441 = vld [vmem:[%s3436 + $0x8] sm:$0x1]
      %v3442 = vsel %vm3080, %v3432, %v3441
      %3443 = vst [vmem:[%s3436 + $0x8] sm:$0x1] %v3442
      %v3444 = vpack.c.bf16 %v2988, %v2988
      %v3445 = vpack.c.bf16 %v2989, %v2989
      %v3447 = vshrl.u32 %v3444, 16
      %v3449 = vrot.slane %v3447, 7
      %v3450 = vshll.u32 %v3444, 16
      %v3452 = vor.u32 %v3449, %v3450
      %v3453 = vrot.slane %v3449, 4
      %v3455 = vshrl.u32 %v3445, 16
      %v3457 = vrot.slane %v3455, 7
      %v3458 = vshll.u32 %v3445, 16
      %v3460 = vor.u32 %v3457, %v3458
      %v3461 = vsel %vm316, %v3453, %v3460
      %v3462 = vrot.slane %v3457, 4
      %s3466 = scalar_lea.vmem [#allocation4], 168
      %v3467 = vld [vmem:[%s3466] sm:$0xf]
      %v3468 = vsel %vm3074, %v3452, %v3467
      %3469 = vst [vmem:[%s3466] sm:$0xf] %v3468
      %3470 = vst.msk [vmem:[%s3466 + $0x4] sm:$0xf] %vm2994, %v3461
      %v3471 = vld [vmem:[%s3466 + $0x8] sm:$0x1]
      %v3472 = vsel %vm3080, %v3462, %v3471
      %3473 = vst [vmem:[%s3466 + $0x8] sm:$0x1] %v3472
      %v3474 = vpack.c.bf16 %v2990, %v2990
      %v3475 = vpack.c.bf16 %v2991, %v2991
      %v3477 = vshrl.u32 %v3474, 16
      %v3479 = vrot.slane %v3477, 7
      %v3480 = vshll.u32 %v3474, 16
      %v3482 = vor.u32 %v3479, %v3480
      %v3483 = vrot.slane %v3479, 4
      %v3485 = vshrl.u32 %v3475, 16
      %v3487 = vrot.slane %v3485, 7
      %v3488 = vshll.u32 %v3475, 16
      %v3490 = vor.u32 %v3487, %v3488
      %v3491 = vsel %vm316, %v3483, %v3490
      %v3492 = vrot.slane %v3487, 4
      %s3496 = scalar_lea.vmem [#allocation4], 180
      %v3497 = vld [vmem:[%s3496] sm:$0xf]
      %v3498 = vsel %vm3074, %v3482, %v3497
      %3499 = vst [vmem:[%s3496] sm:$0xf] %v3498
      %3500 = vst.msk [vmem:[%s3496 + $0x4] sm:$0xf] %vm2994, %v3491
      %v3501 = vld [vmem:[%s3496 + $0x8] sm:$0x1]
      %v3502 = vsel %vm3080, %v3492, %v3501
      %3503 = vst [vmem:[%s3496 + $0x8] sm:$0x1] %v3502
      %v3504 = vpack.c.bf16 %v2992, %v2992
      %v3505 = vpack.c.bf16 %v2993, %v2993
      %v3507 = vshrl.u32 %v3504, 16
      %v3509 = vrot.slane %v3507, 7
      %v3510 = vshll.u32 %v3504, 16
      %v3512 = vor.u32 %v3509, %v3510
      %v3513 = vrot.slane %v3509, 4
      %v3515 = vshrl.u32 %v3505, 16
      %v3517 = vrot.slane %v3515, 7
      %v3518 = vshll.u32 %v3505, 16
      %v3520 = vor.u32 %v3517, %v3518
      %v3521 = vsel %vm316, %v3513, %v3520
      %v3522 = vrot.slane %v3517, 4
      %s3526 = scalar_lea.vmem [#allocation4], 192
      %v3527 = vld [vmem:[%s3526] sm:$0xf]
      %v3528 = vsel %vm3074, %v3512, %v3527
      %3529 = vst [vmem:[%s3526] sm:$0xf] %v3528
      %3530 = vst.msk [vmem:[%s3526 + $0x4] sm:$0xf] %vm2994, %v3521
      %v3531 = vld [vmem:[%s3526 + $0x8] sm:$0x1]
      %v3532 = vsel %vm3080, %v3522, %v3531
      %3533 = vst [vmem:[%s3526 + $0x8] sm:$0x1] %v3532
      %v3534 = vld [vmem:[#allocation4] sm:$0xf]
      %v3535 = vld [vmem:[#allocation4 + $0x4] sm:$0xf]
      %v3536 = vld [vmem:[#allocation4 + $0x8] sm:$0x1]
      %v3537 = vld [vmem:[%s3072] sm:$0xf]
      %v3538 = vld [vmem:[%s3072 + $0x4] sm:$0xf]
      %v3539 = vld [vmem:[%s3072 + $0x8] sm:$0x1]
      %v3540 = vld [vmem:[%s3106] sm:$0xf]
      %v3541 = vld [vmem:[%s3106 + $0x4] sm:$0xf]
      %v3542 = vld [vmem:[%s3106 + $0x8] sm:$0x1]
      %v3545 = vunpack.c.l.b16 %v3534
      %v3546 = vunpack.c.l.b16 %v3535
      %v3547 = vpack.c.b16 %v3546, %v3545
      %v3549 = vunpack.c.l.b16 %v3536
      %v3550 = vpack.c.b16 %v3549, %v3549
      %v3552 = vshrl.u32 %v3547, 16
      %v3554 = vshll.u32 %v3547, 16
      %v3556 = vrot.slane %v3554, 1
      %v3557 = vor.u32 %v3552, %v3556
      %v3559 = vshll.u32 %v3550, 16
      %v3561 = vrot.slane %v3559, 1
      %v3562 = vsel %vm787, %v3557, %v3561
      %3563 = vrot.lane.b32.xlu0 %v3562, 8
      %v3564 = vpop.permute.xlu0 %3563
      %v3565 = vrot.slane %v3547, 1
      %v3566 = vrot.slane %v3550, 1
      %v3567 = vsel %vm802, %v3565, %v3566
      %3568 = vrot.lane.b32.xlu0 %v3567, 16
      %v3569 = vpop.permute.xlu0 %3568
      %v3572 = vunpack.c.l.b16 %v3537
      %v3573 = vunpack.c.l.b16 %v3538
      %v3574 = vpack.c.b16 %v3573, %v3572
      %3575 = vrot.lane.b32.xlu0 %v3574, 24
      %v3576 = vpop.permute.xlu0 %3575
      %v3578 = vunpack.c.l.b16 %v3539
      %v3579 = vpack.c.b16 %v3578, %v3578
      %v3581 = vshrl.u32 %v3574, 16
      %v3583 = vshll.u32 %v3574, 16
      %v3585 = vrot.slane %v3583, 1
      %v3586 = vor.u32 %v3581, %v3585
      %v3588 = vshll.u32 %v3579, 16
      %v3590 = vrot.slane %v3588, 1
      %v3591 = vsel %vm787, %v3586, %v3590
      %3592 = vrot.lane.b32.xlu0 %v3591, 32
      %v3593 = vpop.permute.xlu0 %3592
      %v3594 = vrot.slane %v3574, 1
      %v3595 = vrot.slane %v3579, 1
      %v3596 = vsel %vm802, %v3594, %v3595
      %3597 = vrot.lane.b32.xlu0 %v3596, 40
      %v3598 = vpop.permute.xlu0 %3597
      %v3601 = vunpack.c.l.b16 %v3540
      %v3602 = vunpack.c.l.b16 %v3541
      %v3603 = vpack.c.b16 %v3602, %v3601
      %3604 = vrot.lane.b32.xlu0 %v3603, 48
      %v3605 = vpop.permute.xlu0 %3604
      %v3607 = vunpack.c.l.b16 %v3542
      %v3608 = vpack.c.b16 %v3607, %v3607
      %v3610 = vshrl.u32 %v3603, 16
      %v3612 = vshll.u32 %v3603, 16
      %v3614 = vrot.slane %v3612, 1
      %v3615 = vor.u32 %v3610, %v3614
      %v3617 = vshll.u32 %v3608, 16
      %v3619 = vrot.slane %v3617, 1
      %v3620 = vsel %vm787, %v3615, %v3619
      %3621 = vrot.lane.b32.xlu0 %v3620, 56
      %v3622 = vpop.permute.xlu0 %3621
      %v3623 = vrot.slane %v3603, 1
      %v3624 = vrot.slane %v3608, 1
      %v3625 = vsel %vm802, %v3623, %v3624
      %3626 = vrot.lane.b32.xlu0 %v3625, 64
      %v3627 = vpop.permute.xlu0 %3626
      %vm3628 = vcmask 64512
      %v3630 = vsel %vm3628, %v3547, %v3564
      %vm3631 = vcmask 130048
      %v3633 = vsel %vm3631, %v3630, %v3569
      %v3635 = vsel %vm887, %v3633, %v3576
      %vm3636 = vcmask 261120
      %v3638 = vsel %vm3636, %v3635, %v3593
      %vm3639 = vcmask 326656
      %v3641 = vsel %vm3639, %v3638, %v3598
      %vm3642 = vcmask 392192
      %v3644 = vsel %vm3642, %v3641, %v3605
      %vm3645 = vcmask 457728
      %v3647 = vsel %vm3645, %v3644, %v3622
      %vm3648 = vcmask 523264
      %v3650 = vsel %vm3648, %v3647, %v3627
      %v3652 = vunpack.c.l.b16 %v3650
      %v3653 = vunpack.c.h.b16 %v3650
      %v3654 = vpack.c.b16 %v3652, %v3652
      %v3655 = vpack.c.b16 %v3653, %v3653
      %vm3658 = vcmask 584704
      %3659 = vst.msk [vmem:[#allocation5] sm:$0xf] %vm3658, %v3654
      %3660 = vst.msk [vmem:[#allocation5 + $0x4] sm:$0xf] %vm3658, %v3655
      %v3661 = vld [vmem:[%s3072] sm:$0xf]
      %v3662 = vld [vmem:[%s3072 + $0x4] sm:$0xf]
      %v3663 = vld [vmem:[%s3072 + $0x8] sm:$0x1]
      %v3664 = vld [vmem:[%s3106] sm:$0xf]
      %v3665 = vld [vmem:[%s3106 + $0x4] sm:$0xf]
      %v3666 = vld [vmem:[%s3106 + $0x8] sm:$0x1]
      %v3667 = vld [vmem:[%s3136] sm:$0xf]
      %v3668 = vld [vmem:[%s3136 + $0x4] sm:$0xf]
      %v3669 = vld [vmem:[%s3136 + $0x8] sm:$0x1]
      %v3672 = vunpack.c.l.b16 %v3661
      %v3673 = vunpack.c.l.b16 %v3662
      %v3674 = vpack.c.b16 %v3673, %v3672
      %v3676 = vunpack.c.l.b16 %v3663
      %v3677 = vpack.c.b16 %v3676, %v3676
      %v3679 = vshrl.u32 %v3674, 16
      %v3681 = vshll.u32 %v3674, 16
      %v3683 = vrot.slane %v3681, 1
      %v3684 = vor.u32 %v3679, %v3683
      %v3686 = vshll.u32 %v3677, 16
      %v3688 = vrot.slane %v3686, 1
      %v3689 = vsel %vm787, %v3684, %v3688
      %3690 = vrot.lane.b32.xlu0 %v3689, 8
      %v3691 = vpop.permute.xlu0 %3690
      %v3692 = vrot.slane %v3674, 1
      %v3693 = vrot.slane %v3677, 1
      %v3694 = vsel %vm802, %v3692, %v3693
      %3695 = vrot.lane.b32.xlu0 %v3694, 16
      %v3696 = vpop.permute.xlu0 %3695
      %v3699 = vunpack.c.l.b16 %v3664
      %v3700 = vunpack.c.l.b16 %v3665
      %v3701 = vpack.c.b16 %v3700, %v3699
      %3702 = vrot.lane.b32.xlu0 %v3701, 24
      %v3703 = vpop.permute.xlu0 %3702
      %v3705 = vunpack.c.l.b16 %v3666
      %v3706 = vpack.c.b16 %v3705, %v3705
      %v3708 = vshrl.u32 %v3701, 16
      %v3710 = vshll.u32 %v3701, 16
      %v3712 = vrot.slane %v3710, 1
      %v3713 = vor.u32 %v3708, %v3712
      %v3715 = vshll.u32 %v3706, 16
      %v3717 = vrot.slane %v3715, 1
      %v3718 = vsel %vm787, %v3713, %v3717
      %3719 = vrot.lane.b32.xlu0 %v3718, 32
      %v3720 = vpop.permute.xlu0 %3719
      %v3721 = vrot.slane %v3701, 1
      %v3722 = vrot.slane %v3706, 1
      %v3723 = vsel %vm802, %v3721, %v3722
      %3724 = vrot.lane.b32.xlu0 %v3723, 40
      %v3725 = vpop.permute.xlu0 %3724
      %v3728 = vunpack.c.l.b16 %v3667
      %v3729 = vunpack.c.l.b16 %v3668
      %v3730 = vpack.c.b16 %v3729, %v3728
      %3731 = vrot.lane.b32.xlu0 %v3730, 48
      %v3732 = vpop.permute.xlu0 %3731
      %v3734 = vunpack.c.l.b16 %v3669
      %v3735 = vpack.c.b16 %v3734, %v3734
      %v3737 = vshrl.u32 %v3730, 16
      %v3739 = vshll.u32 %v3730, 16
      %v3741 = vrot.slane %v3739, 1
      %v3742 = vor.u32 %v3737, %v3741
      %v3744 = vshll.u32 %v3735, 16
      %v3746 = vrot.slane %v3744, 1
      %v3747 = vsel %vm787, %v3742, %v3746
      %3748 = vrot.lane.b32.xlu0 %v3747, 56
      %v3749 = vpop.permute.xlu0 %3748
      %v3750 = vrot.slane %v3730, 1
      %v3751 = vrot.slane %v3735, 1
      %v3752 = vsel %vm802, %v3750, %v3751
      %3753 = vrot.lane.b32.xlu0 %v3752, 64
      %v3754 = vpop.permute.xlu0 %3753
      %v3756 = vsel %vm3628, %v3674, %v3691
      %v3758 = vsel %vm3631, %v3756, %v3696
      %v3760 = vsel %vm887, %v3758, %v3703
      %v3762 = vsel %vm3636, %v3760, %v3720
      %v3764 = vsel %vm3639, %v3762, %v3725
      %v3766 = vsel %vm3642, %v3764, %v3732
      %v3768 = vsel %vm3645, %v3766, %v3749
      %v3770 = vsel %vm3648, %v3768, %v3754
      %v3772 = vunpack.c.l.b16 %v3770
      %v3773 = vunpack.c.h.b16 %v3770
      %v3774 = vpack.c.b16 %v3772, %v3772
      %v3775 = vpack.c.b16 %v3773, %v3773
      %3778 = vst.msk [vmem:[#allocation5 + $0x8] sm:$0xf] %vm3658, %v3774
      %3779 = vst.msk [vmem:[#allocation5 + $0xc] sm:$0xf] %vm3658, %v3775
      %v3780 = vld [vmem:[%s3106] sm:$0xf]
      %v3781 = vld [vmem:[%s3106 + $0x4] sm:$0xf]
      %v3782 = vld [vmem:[%s3106 + $0x8] sm:$0x1]
      %v3783 = vld [vmem:[%s3136] sm:$0xf]
      %v3784 = vld [vmem:[%s3136 + $0x4] sm:$0xf]
      %v3785 = vld [vmem:[%s3136 + $0x8] sm:$0x1]
      %v3786 = vld [vmem:[%s3166] sm:$0xf]
      %v3787 = vld [vmem:[%s3166 + $0x4] sm:$0xf]
      %v3788 = vld [vmem:[%s3166 + $0x8] sm:$0x1]
      %v3791 = vunpack.c.l.b16 %v3780
      %v3792 = vunpack.c.l.b16 %v3781
      %v3793 = vpack.c.b16 %v3792, %v3791
      %v3795 = vunpack.c.l.b16 %v3782
      %v3796 = vpack.c.b16 %v3795, %v3795
      %v3798 = vshrl.u32 %v3793, 16
      %v3800 = vshll.u32 %v3793, 16
      %v3802 = vrot.slane %v3800, 1
      %v3803 = vor.u32 %v3798, %v3802
      %v3805 = vshll.u32 %v3796, 16
      %v3807 = vrot.slane %v3805, 1
      %v3808 = vsel %vm787, %v3803, %v3807
      %3809 = vrot.lane.b32.xlu0 %v3808, 8
      %v3810 = vpop.permute.xlu0 %3809
      %v3811 = vrot.slane %v3793, 1
      %v3812 = vrot.slane %v3796, 1
      %v3813 = vsel %vm802, %v3811, %v3812
      %3814 = vrot.lane.b32.xlu0 %v3813, 16
      %v3815 = vpop.permute.xlu0 %3814
      %v3818 = vunpack.c.l.b16 %v3783
      %v3819 = vunpack.c.l.b16 %v3784
      %v3820 = vpack.c.b16 %v3819, %v3818
      %3821 = vrot.lane.b32.xlu0 %v3820, 24
      %v3822 = vpop.permute.xlu0 %3821
      %v3824 = vunpack.c.l.b16 %v3785
      %v3825 = vpack.c.b16 %v3824, %v3824
      %v3827 = vshrl.u32 %v3820, 16
      %v3829 = vshll.u32 %v3820, 16
      %v3831 = vrot.slane %v3829, 1
      %v3832 = vor.u32 %v3827, %v3831
      %v3834 = vshll.u32 %v3825, 16
      %v3836 = vrot.slane %v3834, 1
      %v3837 = vsel %vm787, %v3832, %v3836
      %3838 = vrot.lane.b32.xlu0 %v3837, 32
      %v3839 = vpop.permute.xlu0 %3838
      %v3840 = vrot.slane %v3820, 1
      %v3841 = vrot.slane %v3825, 1
      %v3842 = vsel %vm802, %v3840, %v3841
      %3843 = vrot.lane.b32.xlu0 %v3842, 40
      %v3844 = vpop.permute.xlu0 %3843
      %v3847 = vunpack.c.l.b16 %v3786
      %v3848 = vunpack.c.l.b16 %v3787
      %v3849 = vpack.c.b16 %v3848, %v3847
      %3850 = vrot.lane.b32.xlu0 %v3849, 48
      %v3851 = vpop.permute.xlu0 %3850
      %v3853 = vunpack.c.l.b16 %v3788
      %v3854 = vpack.c.b16 %v3853, %v3853
      %v3856 = vshrl.u32 %v3849, 16
      %v3858 = vshll.u32 %v3849, 16
      %v3860 = vrot.slane %v3858, 1
      %v3861 = vor.u32 %v3856, %v3860
      %v3863 = vshll.u32 %v3854, 16
      %v3865 = vrot.slane %v3863, 1
      %v3866 = vsel %vm787, %v3861, %v3865
      %3867 = vrot.lane.b32.xlu0 %v3866, 56
      %v3868 = vpop.permute.xlu0 %3867
      %v3869 = vrot.slane %v3849, 1
      %v3870 = vrot.slane %v3854, 1
      %v3871 = vsel %vm802, %v3869, %v3870
      %3872 = vrot.lane.b32.xlu0 %v3871, 64
      %v3873 = vpop.permute.xlu0 %3872
      %v3875 = vsel %vm3628, %v3793, %v3810
      %v3877 = vsel %vm3631, %v3875, %v3815
      %v3879 = vsel %vm887, %v3877, %v3822
      %v3881 = vsel %vm3636, %v3879, %v3839
      %v3883 = vsel %vm3639, %v3881, %v3844
      %v3885 = vsel %vm3642, %v3883, %v3851
      %v3887 = vsel %vm3645, %v3885, %v3868
      %v3889 = vsel %vm3648, %v3887, %v3873
      %v3891 = vunpack.c.l.b16 %v3889
      %v3892 = vunpack.c.h.b16 %v3889
      %v3893 = vpack.c.b16 %v3891, %v3891
      %v3894 = vpack.c.b16 %v3892, %v3892
      %3897 = vst.msk [vmem:[#allocation5 + $0x10] sm:$0xf] %vm3658, %v3893
      %3898 = vst.msk [vmem:[#allocation5 + $0x14] sm:$0xf] %vm3658, %v3894
      %v3899 = vld [vmem:[%s3136] sm:$0xf]
      %v3900 = vld [vmem:[%s3136 + $0x4] sm:$0xf]
      %v3901 = vld [vmem:[%s3136 + $0x8] sm:$0x1]
      %v3902 = vld [vmem:[%s3166] sm:$0xf]
      %v3903 = vld [vmem:[%s3166 + $0x4] sm:$0xf]
      %v3904 = vld [vmem:[%s3166 + $0x8] sm:$0x1]
      %v3905 = vld [vmem:[%s3196] sm:$0xf]
      %v3906 = vld [vmem:[%s3196 + $0x4] sm:$0xf]
      %v3907 = vld [vmem:[%s3196 + $0x8] sm:$0x1]
      %v3910 = vunpack.c.l.b16 %v3899
      %v3911 = vunpack.c.l.b16 %v3900
      %v3912 = vpack.c.b16 %v3911, %v3910
      %v3914 = vunpack.c.l.b16 %v3901
      %v3915 = vpack.c.b16 %v3914, %v3914
      %v3917 = vshrl.u32 %v3912, 16
      %v3919 = vshll.u32 %v3912, 16
      %v3921 = vrot.slane %v3919, 1
      %v3922 = vor.u32 %v3917, %v3921
      %v3924 = vshll.u32 %v3915, 16
      %v3926 = vrot.slane %v3924, 1
      %v3927 = vsel %vm787, %v3922, %v3926
      %3928 = vrot.lane.b32.xlu0 %v3927, 8
      %v3929 = vpop.permute.xlu0 %3928
      %v3930 = vrot.slane %v3912, 1
      %v3931 = vrot.slane %v3915, 1
      %v3932 = vsel %vm802, %v3930, %v3931
      %3933 = vrot.lane.b32.xlu0 %v3932, 16
      %v3934 = vpop.permute.xlu0 %3933
      %v3937 = vunpack.c.l.b16 %v3902
      %v3938 = vunpack.c.l.b16 %v3903
      %v3939 = vpack.c.b16 %v3938, %v3937
      %3940 = vrot.lane.b32.xlu0 %v3939, 24
      %v3941 = vpop.permute.xlu0 %3940
      %v3943 = vunpack.c.l.b16 %v3904
      %v3944 = vpack.c.b16 %v3943, %v3943
      %v3946 = vshrl.u32 %v3939, 16
      %v3948 = vshll.u32 %v3939, 16
      %v3950 = vrot.slane %v3948, 1
      %v3951 = vor.u32 %v3946, %v3950
      %v3953 = vshll.u32 %v3944, 16
      %v3955 = vrot.slane %v3953, 1
      %v3956 = vsel %vm787, %v3951, %v3955
      %3957 = vrot.lane.b32.xlu0 %v3956, 32
      %v3958 = vpop.permute.xlu0 %3957
      %v3959 = vrot.slane %v3939, 1
      %v3960 = vrot.slane %v3944, 1
      %v3961 = vsel %vm802, %v3959, %v3960
      %3962 = vrot.lane.b32.xlu0 %v3961, 40
      %v3963 = vpop.permute.xlu0 %3962
      %v3966 = vunpack.c.l.b16 %v3905
      %v3967 = vunpack.c.l.b16 %v3906
      %v3968 = vpack.c.b16 %v3967, %v3966
      %3969 = vrot.lane.b32.xlu0 %v3968, 48
      %v3970 = vpop.permute.xlu0 %3969
      %v3972 = vunpack.c.l.b16 %v3907
      %v3973 = vpack.c.b16 %v3972, %v3972
      %v3975 = vshrl.u32 %v3968, 16
      %v3977 = vshll.u32 %v3968, 16
      %v3979 = vrot.slane %v3977, 1
      %v3980 = vor.u32 %v3975, %v3979
      %v3982 = vshll.u32 %v3973, 16
      %v3984 = vrot.slane %v3982, 1
      %v3985 = vsel %vm787, %v3980, %v3984
      %3986 = vrot.lane.b32.xlu0 %v3985, 56
      %v3987 = vpop.permute.xlu0 %3986
      %v3988 = vrot.slane %v3968, 1
      %v3989 = vrot.slane %v3973, 1
      %v3990 = vsel %vm802, %v3988, %v3989
      %3991 = vrot.lane.b32.xlu0 %v3990, 64
      %v3992 = vpop.permute.xlu0 %3991
      %v3994 = vsel %vm3628, %v3912, %v3929
      %v3996 = vsel %vm3631, %v3994, %v3934
      %v3998 = vsel %vm887, %v3996, %v3941
      %v4000 = vsel %vm3636, %v3998, %v3958
      %v4002 = vsel %vm3639, %v4000, %v3963
      %v4004 = vsel %vm3642, %v4002, %v3970
      %v4006 = vsel %vm3645, %v4004, %v3987
      %v4008 = vsel %vm3648, %v4006, %v3992
      %v4010 = vunpack.c.l.b16 %v4008
      %v4011 = vunpack.c.h.b16 %v4008
      %v4012 = vpack.c.b16 %v4010, %v4010
      %v4013 = vpack.c.b16 %v4011, %v4011
      %4016 = vst.msk [vmem:[#allocation5 + $0x18] sm:$0xf] %vm3658, %v4012
      %4017 = vst.msk [vmem:[#allocation5 + $0x1c] sm:$0xf] %vm3658, %v4013
      %v4018 = vld [vmem:[%s3166] sm:$0xf]
      %v4019 = vld [vmem:[%s3166 + $0x4] sm:$0xf]
      %v4020 = vld [vmem:[%s3166 + $0x8] sm:$0x1]
      %v4021 = vld [vmem:[%s3196] sm:$0xf]
      %v4022 = vld [vmem:[%s3196 + $0x4] sm:$0xf]
      %v4023 = vld [vmem:[%s3196 + $0x8] sm:$0x1]
      %v4024 = vld [vmem:[%s3226] sm:$0xf]
      %v4025 = vld [vmem:[%s3226 + $0x4] sm:$0xf]
      %v4026 = vld [vmem:[%s3226 + $0x8] sm:$0x1]
      %v4029 = vunpack.c.l.b16 %v4018
      %v4030 = vunpack.c.l.b16 %v4019
      %v4031 = vpack.c.b16 %v4030, %v4029
      %v4033 = vunpack.c.l.b16 %v4020
      %v4034 = vpack.c.b16 %v4033, %v4033
      %v4036 = vshrl.u32 %v4031, 16
      %v4038 = vshll.u32 %v4031, 16
      %v4040 = vrot.slane %v4038, 1
      %v4041 = vor.u32 %v4036, %v4040
      %v4043 = vshll.u32 %v4034, 16
      %v4045 = vrot.slane %v4043, 1
      %v4046 = vsel %vm787, %v4041, %v4045
      %4047 = vrot.lane.b32.xlu0 %v4046, 8
      %v4048 = vpop.permute.xlu0 %4047
      %v4049 = vrot.slane %v4031, 1
      %v4050 = vrot.slane %v4034, 1
      %v4051 = vsel %vm802, %v4049, %v4050
      %4052 = vrot.lane.b32.xlu0 %v4051, 16
      %v4053 = vpop.permute.xlu0 %4052
      %v4056 = vunpack.c.l.b16 %v4021
      %v4057 = vunpack.c.l.b16 %v4022
      %v4058 = vpack.c.b16 %v4057, %v4056
      %4059 = vrot.lane.b32.xlu0 %v4058, 24
      %v4060 = vpop.permute.xlu0 %4059
      %v4062 = vunpack.c.l.b16 %v4023
      %v4063 = vpack.c.b16 %v4062, %v4062
      %v4065 = vshrl.u32 %v4058, 16
      %v4067 = vshll.u32 %v4058, 16
      %v4069 = vrot.slane %v4067, 1
      %v4070 = vor.u32 %v4065, %v4069
      %v4072 = vshll.u32 %v4063, 16
      %v4074 = vrot.slane %v4072, 1
      %v4075 = vsel %vm787, %v4070, %v4074
      %4076 = vrot.lane.b32.xlu0 %v4075, 32
      %v4077 = vpop.permute.xlu0 %4076
      %v4078 = vrot.slane %v4058, 1
      %v4079 = vrot.slane %v4063, 1
      %v4080 = vsel %vm802, %v4078, %v4079
      %4081 = vrot.lane.b32.xlu0 %v4080, 40
      %v4082 = vpop.permute.xlu0 %4081
      %v4085 = vunpack.c.l.b16 %v4024
      %v4086 = vunpack.c.l.b16 %v4025
      %v4087 = vpack.c.b16 %v4086, %v4085
      %4088 = vrot.lane.b32.xlu0 %v4087, 48
      %v4089 = vpop.permute.xlu0 %4088
      %v4091 = vunpack.c.l.b16 %v4026
      %v4092 = vpack.c.b16 %v4091, %v4091
      %v4094 = vshrl.u32 %v4087, 16
      %v4096 = vshll.u32 %v4087, 16
      %v4098 = vrot.slane %v4096, 1
      %v4099 = vor.u32 %v4094, %v4098
      %v4101 = vshll.u32 %v4092, 16
      %v4103 = vrot.slane %v4101, 1
      %v4104 = vsel %vm787, %v4099, %v4103
      %4105 = vrot.lane.b32.xlu0 %v4104, 56
      %v4106 = vpop.permute.xlu0 %4105
      %v4107 = vrot.slane %v4087, 1
      %v4108 = vrot.slane %v4092, 1
      %v4109 = vsel %vm802, %v4107, %v4108
      %4110 = vrot.lane.b32.xlu0 %v4109, 64
      %v4111 = vpop.permute.xlu0 %4110
      %v4113 = vsel %vm3628, %v4031, %v4048
      %v4115 = vsel %vm3631, %v4113, %v4053
      %v4117 = vsel %vm887, %v4115, %v4060
      %v4119 = vsel %vm3636, %v4117, %v4077
      %v4121 = vsel %vm3639, %v4119, %v4082
      %v4123 = vsel %vm3642, %v4121, %v4089
      %v4125 = vsel %vm3645, %v4123, %v4106
      %v4127 = vsel %vm3648, %v4125, %v4111
      %v4129 = vunpack.c.l.b16 %v4127
      %v4130 = vunpack.c.h.b16 %v4127
      %v4131 = vpack.c.b16 %v4129, %v4129
      %v4132 = vpack.c.b16 %v4130, %v4130
      %4135 = vst.msk [vmem:[#allocation5 + $0x20] sm:$0xf] %vm3658, %v4131
      %4136 = vst.msk [vmem:[#allocation5 + $0x24] sm:$0xf] %vm3658, %v4132
      %v4137 = vld [vmem:[%s3196] sm:$0xf]
      %v4138 = vld [vmem:[%s3196 + $0x4] sm:$0xf]
      %v4139 = vld [vmem:[%s3196 + $0x8] sm:$0x1]
      %v4140 = vld [vmem:[%s3226] sm:$0xf]
      %v4141 = vld [vmem:[%s3226 + $0x4] sm:$0xf]
      %v4142 = vld [vmem:[%s3226 + $0x8] sm:$0x1]
      %v4143 = vld [vmem:[%s3256] sm:$0xf]
      %v4144 = vld [vmem:[%s3256 + $0x4] sm:$0xf]
      %v4145 = vld [vmem:[%s3256 + $0x8] sm:$0x1]
      %v4148 = vunpack.c.l.b16 %v4137
      %v4149 = vunpack.c.l.b16 %v4138
      %v4150 = vpack.c.b16 %v4149, %v4148
      %v4152 = vunpack.c.l.b16 %v4139
      %v4153 = vpack.c.b16 %v4152, %v4152
      %v4155 = vshrl.u32 %v4150, 16
      %v4157 = vshll.u32 %v4150, 16
      %v4159 = vrot.slane %v4157, 1
      %v4160 = vor.u32 %v4155, %v4159
      %v4162 = vshll.u32 %v4153, 16
      %v4164 = vrot.slane %v4162, 1
      %v4165 = vsel %vm787, %v4160, %v4164
      %4166 = vrot.lane.b32.xlu0 %v4165, 8
      %v4167 = vpop.permute.xlu0 %4166
      %v4168 = vrot.slane %v4150, 1
      %v4169 = vrot.slane %v4153, 1
      %v4170 = vsel %vm802, %v4168, %v4169
      %4171 = vrot.lane.b32.xlu0 %v4170, 16
      %v4172 = vpop.permute.xlu0 %4171
      %v4175 = vunpack.c.l.b16 %v4140
      %v4176 = vunpack.c.l.b16 %v4141
      %v4177 = vpack.c.b16 %v4176, %v4175
      %4178 = vrot.lane.b32.xlu0 %v4177, 24
      %v4179 = vpop.permute.xlu0 %4178
      %v4181 = vunpack.c.l.b16 %v4142
      %v4182 = vpack.c.b16 %v4181, %v4181
      %v4184 = vshrl.u32 %v4177, 16
      %v4186 = vshll.u32 %v4177, 16
      %v4188 = vrot.slane %v4186, 1
      %v4189 = vor.u32 %v4184, %v4188
      %v4191 = vshll.u32 %v4182, 16
      %v4193 = vrot.slane %v4191, 1
      %v4194 = vsel %vm787, %v4189, %v4193
      %4195 = vrot.lane.b32.xlu0 %v4194, 32
      %v4196 = vpop.permute.xlu0 %4195
      %v4197 = vrot.slane %v4177, 1
      %v4198 = vrot.slane %v4182, 1
      %v4199 = vsel %vm802, %v4197, %v4198
      %4200 = vrot.lane.b32.xlu0 %v4199, 40
      %v4201 = vpop.permute.xlu0 %4200
      %v4204 = vunpack.c.l.b16 %v4143
      %v4205 = vunpack.c.l.b16 %v4144
      %v4206 = vpack.c.b16 %v4205, %v4204
      %4207 = vrot.lane.b32.xlu0 %v4206, 48
      %v4208 = vpop.permute.xlu0 %4207
      %v4210 = vunpack.c.l.b16 %v4145
      %v4211 = vpack.c.b16 %v4210, %v4210
      %v4213 = vshrl.u32 %v4206, 16
      %v4215 = vshll.u32 %v4206, 16
      %v4217 = vrot.slane %v4215, 1
      %v4218 = vor.u32 %v4213, %v4217
      %v4220 = vshll.u32 %v4211, 16
      %v4222 = vrot.slane %v4220, 1
      %v4223 = vsel %vm787, %v4218, %v4222
      %4224 = vrot.lane.b32.xlu0 %v4223, 56
      %v4225 = vpop.permute.xlu0 %4224
      %v4226 = vrot.slane %v4206, 1
      %v4227 = vrot.slane %v4211, 1
      %v4228 = vsel %vm802, %v4226, %v4227
      %4229 = vrot.lane.b32.xlu0 %v4228, 64
      %v4230 = vpop.permute.xlu0 %4229
      %v4232 = vsel %vm3628, %v4150, %v4167
      %v4234 = vsel %vm3631, %v4232, %v4172
      %v4236 = vsel %vm887, %v4234, %v4179
      %v4238 = vsel %vm3636, %v4236, %v4196
      %v4240 = vsel %vm3639, %v4238, %v4201
      %v4242 = vsel %vm3642, %v4240, %v4208
      %v4244 = vsel %vm3645, %v4242, %v4225
      %v4246 = vsel %vm3648, %v4244, %v4230
      %v4248 = vunpack.c.l.b16 %v4246
      %v4249 = vunpack.c.h.b16 %v4246
      %v4250 = vpack.c.b16 %v4248, %v4248
      %v4251 = vpack.c.b16 %v4249, %v4249
      %4254 = vst.msk [vmem:[#allocation5 + $0x28] sm:$0xf] %vm3658, %v4250
      %4255 = vst.msk [vmem:[#allocation5 + $0x2c] sm:$0xf] %vm3658, %v4251
      %v4256 = vld [vmem:[%s3226] sm:$0xf]
      %v4257 = vld [vmem:[%s3226 + $0x4] sm:$0xf]
      %v4258 = vld [vmem:[%s3226 + $0x8] sm:$0x1]
      %v4259 = vld [vmem:[%s3256] sm:$0xf]
      %v4260 = vld [vmem:[%s3256 + $0x4] sm:$0xf]
      %v4261 = vld [vmem:[%s3256 + $0x8] sm:$0x1]
      %v4262 = vld [vmem:[%s3286] sm:$0xf]
      %v4263 = vld [vmem:[%s3286 + $0x4] sm:$0xf]
      %v4264 = vld [vmem:[%s3286 + $0x8] sm:$0x1]
      %v4267 = vunpack.c.l.b16 %v4256
      %v4268 = vunpack.c.l.b16 %v4257
      %v4269 = vpack.c.b16 %v4268, %v4267
      %v4271 = vunpack.c.l.b16 %v4258
      %v4272 = vpack.c.b16 %v4271, %v4271
      %v4274 = vshrl.u32 %v4269, 16
      %v4276 = vshll.u32 %v4269, 16
      %v4278 = vrot.slane %v4276, 1
      %v4279 = vor.u32 %v4274, %v4278
      %v4281 = vshll.u32 %v4272, 16
      %v4283 = vrot.slane %v4281, 1
      %v4284 = vsel %vm787, %v4279, %v4283
      %4285 = vrot.lane.b32.xlu0 %v4284, 8
      %v4286 = vpop.permute.xlu0 %4285
      %v4287 = vrot.slane %v4269, 1
      %v4288 = vrot.slane %v4272, 1
      %v4289 = vsel %vm802, %v4287, %v4288
      %4290 = vrot.lane.b32.xlu0 %v4289, 16
      %v4291 = vpop.permute.xlu0 %4290
      %v4294 = vunpack.c.l.b16 %v4259
      %v4295 = vunpack.c.l.b16 %v4260
      %v4296 = vpack.c.b16 %v4295, %v4294
      %4297 = vrot.lane.b32.xlu0 %v4296, 24
      %v4298 = vpop.permute.xlu0 %4297
      %v4300 = vunpack.c.l.b16 %v4261
      %v4301 = vpack.c.b16 %v4300, %v4300
      %v4303 = vshrl.u32 %v4296, 16
      %v4305 = vshll.u32 %v4296, 16
      %v4307 = vrot.slane %v4305, 1
      %v4308 = vor.u32 %v4303, %v4307
      %v4310 = vshll.u32 %v4301, 16
      %v4312 = vrot.slane %v4310, 1
      %v4313 = vsel %vm787, %v4308, %v4312
      %4314 = vrot.lane.b32.xlu0 %v4313, 32
      %v4315 = vpop.permute.xlu0 %4314
      %v4316 = vrot.slane %v4296, 1
      %v4317 = vrot.slane %v4301, 1
      %v4318 = vsel %vm802, %v4316, %v4317
      %4319 = vrot.lane.b32.xlu0 %v4318, 40
      %v4320 = vpop.permute.xlu0 %4319
      %v4323 = vunpack.c.l.b16 %v4262
      %v4324 = vunpack.c.l.b16 %v4263
      %v4325 = vpack.c.b16 %v4324, %v4323
      %4326 = vrot.lane.b32.xlu0 %v4325, 48
      %v4327 = vpop.permute.xlu0 %4326
      %v4329 = vunpack.c.l.b16 %v4264
      %v4330 = vpack.c.b16 %v4329, %v4329
      %v4332 = vshrl.u32 %v4325, 16
      %v4334 = vshll.u32 %v4325, 16
      %v4336 = vrot.slane %v4334, 1
      %v4337 = vor.u32 %v4332, %v4336
      %v4339 = vshll.u32 %v4330, 16
      %v4341 = vrot.slane %v4339, 1
      %v4342 = vsel %vm787, %v4337, %v4341
      %4343 = vrot.lane.b32.xlu0 %v4342, 56
      %v4344 = vpop.permute.xlu0 %4343
      %v4345 = vrot.slane %v4325, 1
      %v4346 = vrot.slane %v4330, 1
      %v4347 = vsel %vm802, %v4345, %v4346
      %4348 = vrot.lane.b32.xlu0 %v4347, 64
      %v4349 = vpop.permute.xlu0 %4348
      %v4351 = vsel %vm3628, %v4269, %v4286
      %v4353 = vsel %vm3631, %v4351, %v4291
      %v4355 = vsel %vm887, %v4353, %v4298
      %v4357 = vsel %vm3636, %v4355, %v4315
      %v4359 = vsel %vm3639, %v4357, %v4320
      %v4361 = vsel %vm3642, %v4359, %v4327
      %v4363 = vsel %vm3645, %v4361, %v4344
      %v4365 = vsel %vm3648, %v4363, %v4349
      %v4367 = vunpack.c.l.b16 %v4365
      %v4368 = vunpack.c.h.b16 %v4365
      %v4369 = vpack.c.b16 %v4367, %v4367
      %v4370 = vpack.c.b16 %v4368, %v4368
      %4373 = vst.msk [vmem:[#allocation5 + $0x30] sm:$0xf] %vm3658, %v4369
      %4374 = vst.msk [vmem:[#allocation5 + $0x34] sm:$0xf] %vm3658, %v4370
      %v4375 = vld [vmem:[%s3256] sm:$0xf]
      %v4376 = vld [vmem:[%s3256 + $0x4] sm:$0xf]
      %v4377 = vld [vmem:[%s3256 + $0x8] sm:$0x1]
      %v4378 = vld [vmem:[%s3286] sm:$0xf]
      %v4379 = vld [vmem:[%s3286 + $0x4] sm:$0xf]
      %v4380 = vld [vmem:[%s3286 + $0x8] sm:$0x1]
      %v4381 = vld [vmem:[%s3316] sm:$0xf]
      %v4382 = vld [vmem:[%s3316 + $0x4] sm:$0xf]
      %v4383 = vld [vmem:[%s3316 + $0x8] sm:$0x1]
      %v4386 = vunpack.c.l.b16 %v4375
      %v4387 = vunpack.c.l.b16 %v4376
      %v4388 = vpack.c.b16 %v4387, %v4386
      %v4390 = vunpack.c.l.b16 %v4377
      %v4391 = vpack.c.b16 %v4390, %v4390
      %v4393 = vshrl.u32 %v4388, 16
      %v4395 = vshll.u32 %v4388, 16
      %v4397 = vrot.slane %v4395, 1
      %v4398 = vor.u32 %v4393, %v4397
      %v4400 = vshll.u32 %v4391, 16
      %v4402 = vrot.slane %v4400, 1
      %v4403 = vsel %vm787, %v4398, %v4402
      %4404 = vrot.lane.b32.xlu0 %v4403, 8
      %v4405 = vpop.permute.xlu0 %4404
      %v4406 = vrot.slane %v4388, 1
      %v4407 = vrot.slane %v4391, 1
      %v4408 = vsel %vm802, %v4406, %v4407
      %4409 = vrot.lane.b32.xlu0 %v4408, 16
      %v4410 = vpop.permute.xlu0 %4409
      %v4413 = vunpack.c.l.b16 %v4378
      %v4414 = vunpack.c.l.b16 %v4379
      %v4415 = vpack.c.b16 %v4414, %v4413
      %4416 = vrot.lane.b32.xlu0 %v4415, 24
      %v4417 = vpop.permute.xlu0 %4416
      %v4419 = vunpack.c.l.b16 %v4380
      %v4420 = vpack.c.b16 %v4419, %v4419
      %v4422 = vshrl.u32 %v4415, 16
      %v4424 = vshll.u32 %v4415, 16
      %v4426 = vrot.slane %v4424, 1
      %v4427 = vor.u32 %v4422, %v4426
      %v4429 = vshll.u32 %v4420, 16
      %v4431 = vrot.slane %v4429, 1
      %v4432 = vsel %vm787, %v4427, %v4431
      %4433 = vrot.lane.b32.xlu0 %v4432, 32
      %v4434 = vpop.permute.xlu0 %4433
      %v4435 = vrot.slane %v4415, 1
      %v4436 = vrot.slane %v4420, 1
      %v4437 = vsel %vm802, %v4435, %v4436
      %4438 = vrot.lane.b32.xlu0 %v4437, 40
      %v4439 = vpop.permute.xlu0 %4438
      %v4442 = vunpack.c.l.b16 %v4381
      %v4443 = vunpack.c.l.b16 %v4382
      %v4444 = vpack.c.b16 %v4443, %v4442
      %4445 = vrot.lane.b32.xlu0 %v4444, 48
      %v4446 = vpop.permute.xlu0 %4445
      %v4448 = vunpack.c.l.b16 %v4383
      %v4449 = vpack.c.b16 %v4448, %v4448
      %v4451 = vshrl.u32 %v4444, 16
      %v4453 = vshll.u32 %v4444, 16
      %v4455 = vrot.slane %v4453, 1
      %v4456 = vor.u32 %v4451, %v4455
      %v4458 = vshll.u32 %v4449, 16
      %v4460 = vrot.slane %v4458, 1
      %v4461 = vsel %vm787, %v4456, %v4460
      %4462 = vrot.lane.b32.xlu0 %v4461, 56
      %v4463 = vpop.permute.xlu0 %4462
      %v4464 = vrot.slane %v4444, 1
      %v4465 = vrot.slane %v4449, 1
      %v4466 = vsel %vm802, %v4464, %v4465
      %4467 = vrot.lane.b32.xlu0 %v4466, 64
      %v4468 = vpop.permute.xlu0 %4467
      %v4470 = vsel %vm3628, %v4388, %v4405
      %v4472 = vsel %vm3631, %v4470, %v4410
      %v4474 = vsel %vm887, %v4472, %v4417
      %v4476 = vsel %vm3636, %v4474, %v4434
      %v4478 = vsel %vm3639, %v4476, %v4439
      %v4480 = vsel %vm3642, %v4478, %v4446
      %v4482 = vsel %vm3645, %v4480, %v4463
      %v4484 = vsel %vm3648, %v4482, %v4468
      %v4486 = vunpack.c.l.b16 %v4484
      %v4487 = vunpack.c.h.b16 %v4484
      %v4488 = vpack.c.b16 %v4486, %v4486
      %v4489 = vpack.c.b16 %v4487, %v4487
      %4492 = vst.msk [vmem:[#allocation5 + $0x38] sm:$0xf] %vm3658, %v4488
      %4493 = vst.msk [vmem:[#allocation5 + $0x3c] sm:$0xf] %vm3658, %v4489
      %v4494 = vld [vmem:[%s3286] sm:$0xf]
      %v4495 = vld [vmem:[%s3286 + $0x4] sm:$0xf]
      %v4496 = vld [vmem:[%s3286 + $0x8] sm:$0x1]
      %v4497 = vld [vmem:[%s3316] sm:$0xf]
      %v4498 = vld [vmem:[%s3316 + $0x4] sm:$0xf]
      %v4499 = vld [vmem:[%s3316 + $0x8] sm:$0x1]
      %v4500 = vld [vmem:[%s3346] sm:$0xf]
      %v4501 = vld [vmem:[%s3346 + $0x4] sm:$0xf]
      %v4502 = vld [vmem:[%s3346 + $0x8] sm:$0x1]
      %v4505 = vunpack.c.l.b16 %v4494
      %v4506 = vunpack.c.l.b16 %v4495
      %v4507 = vpack.c.b16 %v4506, %v4505
      %v4509 = vunpack.c.l.b16 %v4496
      %v4510 = vpack.c.b16 %v4509, %v4509
      %v4512 = vshrl.u32 %v4507, 16
      %v4514 = vshll.u32 %v4507, 16
      %v4516 = vrot.slane %v4514, 1
      %v4517 = vor.u32 %v4512, %v4516
      %v4519 = vshll.u32 %v4510, 16
      %v4521 = vrot.slane %v4519, 1
      %v4522 = vsel %vm787, %v4517, %v4521
      %4523 = vrot.lane.b32.xlu0 %v4522, 8
      %v4524 = vpop.permute.xlu0 %4523
      %v4525 = vrot.slane %v4507, 1
      %v4526 = vrot.slane %v4510, 1
      %v4527 = vsel %vm802, %v4525, %v4526
      %4528 = vrot.lane.b32.xlu0 %v4527, 16
      %v4529 = vpop.permute.xlu0 %4528
      %v4532 = vunpack.c.l.b16 %v4497
      %v4533 = vunpack.c.l.b16 %v4498
      %v4534 = vpack.c.b16 %v4533, %v4532
      %4535 = vrot.lane.b32.xlu0 %v4534, 24
      %v4536 = vpop.permute.xlu0 %4535
      %v4538 = vunpack.c.l.b16 %v4499
      %v4539 = vpack.c.b16 %v4538, %v4538
      %v4541 = vshrl.u32 %v4534, 16
      %v4543 = vshll.u32 %v4534, 16
      %v4545 = vrot.slane %v4543, 1
      %v4546 = vor.u32 %v4541, %v4545
      %v4548 = vshll.u32 %v4539, 16
      %v4550 = vrot.slane %v4548, 1
      %v4551 = vsel %vm787, %v4546, %v4550
      %4552 = vrot.lane.b32.xlu0 %v4551, 32
      %v4553 = vpop.permute.xlu0 %4552
      %v4554 = vrot.slane %v4534, 1
      %v4555 = vrot.slane %v4539, 1
      %v4556 = vsel %vm802, %v4554, %v4555
      %4557 = vrot.lane.b32.xlu0 %v4556, 40
      %v4558 = vpop.permute.xlu0 %4557
      %v4561 = vunpack.c.l.b16 %v4500
      %v4562 = vunpack.c.l.b16 %v4501
      %v4563 = vpack.c.b16 %v4562, %v4561
      %4564 = vrot.lane.b32.xlu0 %v4563, 48
      %v4565 = vpop.permute.xlu0 %4564
      %v4567 = vunpack.c.l.b16 %v4502
      %v4568 = vpack.c.b16 %v4567, %v4567
      %v4570 = vshrl.u32 %v4563, 16
      %v4572 = vshll.u32 %v4563, 16
      %v4574 = vrot.slane %v4572, 1
      %v4575 = vor.u32 %v4570, %v4574
      %v4577 = vshll.u32 %v4568, 16
      %v4579 = vrot.slane %v4577, 1
      %v4580 = vsel %vm787, %v4575, %v4579
      %4581 = vrot.lane.b32.xlu0 %v4580, 56
      %v4582 = vpop.permute.xlu0 %4581
      %v4583 = vrot.slane %v4563, 1
      %v4584 = vrot.slane %v4568, 1
      %v4585 = vsel %vm802, %v4583, %v4584
      %4586 = vrot.lane.b32.xlu0 %v4585, 64
      %v4587 = vpop.permute.xlu0 %4586
      %v4589 = vsel %vm3628, %v4507, %v4524
      %v4591 = vsel %vm3631, %v4589, %v4529
      %v4593 = vsel %vm887, %v4591, %v4536
      %v4595 = vsel %vm3636, %v4593, %v4553
      %v4597 = vsel %vm3639, %v4595, %v4558
      %v4599 = vsel %vm3642, %v4597, %v4565
      %v4601 = vsel %vm3645, %v4599, %v4582
      %v4603 = vsel %vm3648, %v4601, %v4587
      %v4605 = vunpack.c.l.b16 %v4603
      %v4606 = vunpack.c.h.b16 %v4603
      %v4607 = vpack.c.b16 %v4605, %v4605
      %v4608 = vpack.c.b16 %v4606, %v4606
      %4611 = vst.msk [vmem:[#allocation5 + $0x40] sm:$0xf] %vm3658, %v4607
      %4612 = vst.msk [vmem:[#allocation5 + $0x44] sm:$0xf] %vm3658, %v4608
      %v4613 = vld [vmem:[%s3316] sm:$0xf]
      %v4614 = vld [vmem:[%s3316 + $0x4] sm:$0xf]
      %v4615 = vld [vmem:[%s3316 + $0x8] sm:$0x1]
      %v4616 = vld [vmem:[%s3346] sm:$0xf]
      %v4617 = vld [vmem:[%s3346 + $0x4] sm:$0xf]
      %v4618 = vld [vmem:[%s3346 + $0x8] sm:$0x1]
      %v4619 = vld [vmem:[%s3376] sm:$0xf]
      %v4620 = vld [vmem:[%s3376 + $0x4] sm:$0xf]
      %v4621 = vld [vmem:[%s3376 + $0x8] sm:$0x1]
      %v4624 = vunpack.c.l.b16 %v4613
      %v4625 = vunpack.c.l.b16 %v4614
      %v4626 = vpack.c.b16 %v4625, %v4624
      %v4628 = vunpack.c.l.b16 %v4615
      %v4629 = vpack.c.b16 %v4628, %v4628
      %v4631 = vshrl.u32 %v4626, 16
      %v4633 = vshll.u32 %v4626, 16
      %v4635 = vrot.slane %v4633, 1
      %v4636 = vor.u32 %v4631, %v4635
      %v4638 = vshll.u32 %v4629, 16
      %v4640 = vrot.slane %v4638, 1
      %v4641 = vsel %vm787, %v4636, %v4640
      %4642 = vrot.lane.b32.xlu0 %v4641, 8
      %v4643 = vpop.permute.xlu0 %4642
      %v4644 = vrot.slane %v4626, 1
      %v4645 = vrot.slane %v4629, 1
      %v4646 = vsel %vm802, %v4644, %v4645
      %4647 = vrot.lane.b32.xlu0 %v4646, 16
      %v4648 = vpop.permute.xlu0 %4647
      %v4651 = vunpack.c.l.b16 %v4616
      %v4652 = vunpack.c.l.b16 %v4617
      %v4653 = vpack.c.b16 %v4652, %v4651
      %4654 = vrot.lane.b32.xlu0 %v4653, 24
      %v4655 = vpop.permute.xlu0 %4654
      %v4657 = vunpack.c.l.b16 %v4618
      %v4658 = vpack.c.b16 %v4657, %v4657
      %v4660 = vshrl.u32 %v4653, 16
      %v4662 = vshll.u32 %v4653, 16
      %v4664 = vrot.slane %v4662, 1
      %v4665 = vor.u32 %v4660, %v4664
      %v4667 = vshll.u32 %v4658, 16
      %v4669 = vrot.slane %v4667, 1
      %v4670 = vsel %vm787, %v4665, %v4669
      %4671 = vrot.lane.b32.xlu0 %v4670, 32
      %v4672 = vpop.permute.xlu0 %4671
      %v4673 = vrot.slane %v4653, 1
      %v4674 = vrot.slane %v4658, 1
      %v4675 = vsel %vm802, %v4673, %v4674
      %4676 = vrot.lane.b32.xlu0 %v4675, 40
      %v4677 = vpop.permute.xlu0 %4676
      %v4680 = vunpack.c.l.b16 %v4619
      %v4681 = vunpack.c.l.b16 %v4620
      %v4682 = vpack.c.b16 %v4681, %v4680
      %4683 = vrot.lane.b32.xlu0 %v4682, 48
      %v4684 = vpop.permute.xlu0 %4683
      %v4686 = vunpack.c.l.b16 %v4621
      %v4687 = vpack.c.b16 %v4686, %v4686
      %v4689 = vshrl.u32 %v4682, 16
      %v4691 = vshll.u32 %v4682, 16
      %v4693 = vrot.slane %v4691, 1
      %v4694 = vor.u32 %v4689, %v4693
      %v4696 = vshll.u32 %v4687, 16
      %v4698 = vrot.slane %v4696, 1
      %v4699 = vsel %vm787, %v4694, %v4698
      %4700 = vrot.lane.b32.xlu0 %v4699, 56
      %v4701 = vpop.permute.xlu0 %4700
      %v4702 = vrot.slane %v4682, 1
      %v4703 = vrot.slane %v4687, 1
      %v4704 = vsel %vm802, %v4702, %v4703
      %4705 = vrot.lane.b32.xlu0 %v4704, 64
      %v4706 = vpop.permute.xlu0 %4705
      %v4708 = vsel %vm3628, %v4626, %v4643
      %v4710 = vsel %vm3631, %v4708, %v4648
      %v4712 = vsel %vm887, %v4710, %v4655
      %v4714 = vsel %vm3636, %v4712, %v4672
      %v4716 = vsel %vm3639, %v4714, %v4677
      %v4718 = vsel %vm3642, %v4716, %v4684
      %v4720 = vsel %vm3645, %v4718, %v4701
      %v4722 = vsel %vm3648, %v4720, %v4706
      %v4724 = vunpack.c.l.b16 %v4722
      %v4725 = vunpack.c.h.b16 %v4722
      %v4726 = vpack.c.b16 %v4724, %v4724
      %v4727 = vpack.c.b16 %v4725, %v4725
      %4730 = vst.msk [vmem:[#allocation5 + $0x48] sm:$0xf] %vm3658, %v4726
      %4731 = vst.msk [vmem:[#allocation5 + $0x4c] sm:$0xf] %vm3658, %v4727
      %v4732 = vld [vmem:[%s3346] sm:$0xf]
      %v4733 = vld [vmem:[%s3346 + $0x4] sm:$0xf]
      %v4734 = vld [vmem:[%s3346 + $0x8] sm:$0x1]
      %v4735 = vld [vmem:[%s3376] sm:$0xf]
      %v4736 = vld [vmem:[%s3376 + $0x4] sm:$0xf]
      %v4737 = vld [vmem:[%s3376 + $0x8] sm:$0x1]
      %v4738 = vld [vmem:[%s3406] sm:$0xf]
      %v4739 = vld [vmem:[%s3406 + $0x4] sm:$0xf]
      %v4740 = vld [vmem:[%s3406 + $0x8] sm:$0x1]
      %v4743 = vunpack.c.l.b16 %v4732
      %v4744 = vunpack.c.l.b16 %v4733
      %v4745 = vpack.c.b16 %v4744, %v4743
      %v4747 = vunpack.c.l.b16 %v4734
      %v4748 = vpack.c.b16 %v4747, %v4747
      %v4750 = vshrl.u32 %v4745, 16
      %v4752 = vshll.u32 %v4745, 16
      %v4754 = vrot.slane %v4752, 1
      %v4755 = vor.u32 %v4750, %v4754
      %v4757 = vshll.u32 %v4748, 16
      %v4759 = vrot.slane %v4757, 1
      %v4760 = vsel %vm787, %v4755, %v4759
      %4761 = vrot.lane.b32.xlu0 %v4760, 8
      %v4762 = vpop.permute.xlu0 %4761
      %v4763 = vrot.slane %v4745, 1
      %v4764 = vrot.slane %v4748, 1
      %v4765 = vsel %vm802, %v4763, %v4764
      %4766 = vrot.lane.b32.xlu0 %v4765, 16
      %v4767 = vpop.permute.xlu0 %4766
      %v4770 = vunpack.c.l.b16 %v4735
      %v4771 = vunpack.c.l.b16 %v4736
      %v4772 = vpack.c.b16 %v4771, %v4770
      %4773 = vrot.lane.b32.xlu0 %v4772, 24
      %v4774 = vpop.permute.xlu0 %4773
      %v4776 = vunpack.c.l.b16 %v4737
      %v4777 = vpack.c.b16 %v4776, %v4776
      %v4779 = vshrl.u32 %v4772, 16
      %v4781 = vshll.u32 %v4772, 16
      %v4783 = vrot.slane %v4781, 1
      %v4784 = vor.u32 %v4779, %v4783
      %v4786 = vshll.u32 %v4777, 16
      %v4788 = vrot.slane %v4786, 1
      %v4789 = vsel %vm787, %v4784, %v4788
      %4790 = vrot.lane.b32.xlu0 %v4789, 32
      %v4791 = vpop.permute.xlu0 %4790
      %v4792 = vrot.slane %v4772, 1
      %v4793 = vrot.slane %v4777, 1
      %v4794 = vsel %vm802, %v4792, %v4793
      %4795 = vrot.lane.b32.xlu0 %v4794, 40
      %v4796 = vpop.permute.xlu0 %4795
      %v4799 = vunpack.c.l.b16 %v4738
      %v4800 = vunpack.c.l.b16 %v4739
      %v4801 = vpack.c.b16 %v4800, %v4799
      %4802 = vrot.lane.b32.xlu0 %v4801, 48
      %v4803 = vpop.permute.xlu0 %4802
      %v4805 = vunpack.c.l.b16 %v4740
      %v4806 = vpack.c.b16 %v4805, %v4805
      %v4808 = vshrl.u32 %v4801, 16
      %v4810 = vshll.u32 %v4801, 16
      %v4812 = vrot.slane %v4810, 1
      %v4813 = vor.u32 %v4808, %v4812
      %v4815 = vshll.u32 %v4806, 16
      %v4817 = vrot.slane %v4815, 1
      %v4818 = vsel %vm787, %v4813, %v4817
      %4819 = vrot.lane.b32.xlu0 %v4818, 56
      %v4820 = vpop.permute.xlu0 %4819
      %v4821 = vrot.slane %v4801, 1
      %v4822 = vrot.slane %v4806, 1
      %v4823 = vsel %vm802, %v4821, %v4822
      %4824 = vrot.lane.b32.xlu0 %v4823, 64
      %v4825 = vpop.permute.xlu0 %4824
      %v4827 = vsel %vm3628, %v4745, %v4762
      %v4829 = vsel %vm3631, %v4827, %v4767
      %v4831 = vsel %vm887, %v4829, %v4774
      %v4833 = vsel %vm3636, %v4831, %v4791
      %v4835 = vsel %vm3639, %v4833, %v4796
      %v4837 = vsel %vm3642, %v4835, %v4803
      %v4839 = vsel %vm3645, %v4837, %v4820
      %v4841 = vsel %vm3648, %v4839, %v4825
      %v4843 = vunpack.c.l.b16 %v4841
      %v4844 = vunpack.c.h.b16 %v4841
      %v4845 = vpack.c.b16 %v4843, %v4843
      %v4846 = vpack.c.b16 %v4844, %v4844
      %4849 = vst.msk [vmem:[#allocation5 + $0x50] sm:$0xf] %vm3658, %v4845
      %4850 = vst.msk [vmem:[#allocation5 + $0x54] sm:$0xf] %vm3658, %v4846
      %v4851 = vld [vmem:[%s3376] sm:$0xf]
      %v4852 = vld [vmem:[%s3376 + $0x4] sm:$0xf]
      %v4853 = vld [vmem:[%s3376 + $0x8] sm:$0x1]
      %v4854 = vld [vmem:[%s3406] sm:$0xf]
      %v4855 = vld [vmem:[%s3406 + $0x4] sm:$0xf]
      %v4856 = vld [vmem:[%s3406 + $0x8] sm:$0x1]
      %v4857 = vld [vmem:[%s3436] sm:$0xf]
      %v4858 = vld [vmem:[%s3436 + $0x4] sm:$0xf]
      %v4859 = vld [vmem:[%s3436 + $0x8] sm:$0x1]
      %v4862 = vunpack.c.l.b16 %v4851
      %v4863 = vunpack.c.l.b16 %v4852
      %v4864 = vpack.c.b16 %v4863, %v4862
      %v4866 = vunpack.c.l.b16 %v4853
      %v4867 = vpack.c.b16 %v4866, %v4866
      %v4869 = vshrl.u32 %v4864, 16
      %v4871 = vshll.u32 %v4864, 16
      %v4873 = vrot.slane %v4871, 1
      %v4874 = vor.u32 %v4869, %v4873
      %v4876 = vshll.u32 %v4867, 16
      %v4878 = vrot.slane %v4876, 1
      %v4879 = vsel %vm787, %v4874, %v4878
      %4880 = vrot.lane.b32.xlu0 %v4879, 8
      %v4881 = vpop.permute.xlu0 %4880
      %v4882 = vrot.slane %v4864, 1
      %v4883 = vrot.slane %v4867, 1
      %v4884 = vsel %vm802, %v4882, %v4883
      %4885 = vrot.lane.b32.xlu0 %v4884, 16
      %v4886 = vpop.permute.xlu0 %4885
      %v4889 = vunpack.c.l.b16 %v4854
      %v4890 = vunpack.c.l.b16 %v4855
      %v4891 = vpack.c.b16 %v4890, %v4889
      %4892 = vrot.lane.b32.xlu0 %v4891, 24
      %v4893 = vpop.permute.xlu0 %4892
      %v4895 = vunpack.c.l.b16 %v4856
      %v4896 = vpack.c.b16 %v4895, %v4895
      %v4898 = vshrl.u32 %v4891, 16
      %v4900 = vshll.u32 %v4891, 16
      %v4902 = vrot.slane %v4900, 1
      %v4903 = vor.u32 %v4898, %v4902
      %v4905 = vshll.u32 %v4896, 16
      %v4907 = vrot.slane %v4905, 1
      %v4908 = vsel %vm787, %v4903, %v4907
      %4909 = vrot.lane.b32.xlu0 %v4908, 32
      %v4910 = vpop.permute.xlu0 %4909
      %v4911 = vrot.slane %v4891, 1
      %v4912 = vrot.slane %v4896, 1
      %v4913 = vsel %vm802, %v4911, %v4912
      %4914 = vrot.lane.b32.xlu0 %v4913, 40
      %v4915 = vpop.permute.xlu0 %4914
      %v4918 = vunpack.c.l.b16 %v4857
      %v4919 = vunpack.c.l.b16 %v4858
      %v4920 = vpack.c.b16 %v4919, %v4918
      %4921 = vrot.lane.b32.xlu0 %v4920, 48
      %v4922 = vpop.permute.xlu0 %4921
      %v4924 = vunpack.c.l.b16 %v4859
      %v4925 = vpack.c.b16 %v4924, %v4924
      %v4927 = vshrl.u32 %v4920, 16
      %v4929 = vshll.u32 %v4920, 16
      %v4931 = vrot.slane %v4929, 1
      %v4932 = vor.u32 %v4927, %v4931
      %v4934 = vshll.u32 %v4925, 16
      %v4936 = vrot.slane %v4934, 1
      %v4937 = vsel %vm787, %v4932, %v4936
      %4938 = vrot.lane.b32.xlu0 %v4937, 56
      %v4939 = vpop.permute.xlu0 %4938
      %v4940 = vrot.slane %v4920, 1
      %v4941 = vrot.slane %v4925, 1
      %v4942 = vsel %vm802, %v4940, %v4941
      %4943 = vrot.lane.b32.xlu0 %v4942, 64
      %v4944 = vpop.permute.xlu0 %4943
      %v4946 = vsel %vm3628, %v4864, %v4881
      %v4948 = vsel %vm3631, %v4946, %v4886
      %v4950 = vsel %vm887, %v4948, %v4893
      %v4952 = vsel %vm3636, %v4950, %v4910
      %v4954 = vsel %vm3639, %v4952, %v4915
      %v4956 = vsel %vm3642, %v4954, %v4922
      %v4958 = vsel %vm3645, %v4956, %v4939
      %v4960 = vsel %vm3648, %v4958, %v4944
      %v4962 = vunpack.c.l.b16 %v4960
      %v4963 = vunpack.c.h.b16 %v4960
      %v4964 = vpack.c.b16 %v4962, %v4962
      %v4965 = vpack.c.b16 %v4963, %v4963
      %4968 = vst.msk [vmem:[#allocation5 + $0x58] sm:$0xf] %vm3658, %v4964
      %4969 = vst.msk [vmem:[#allocation5 + $0x5c] sm:$0xf] %vm3658, %v4965
      %v4970 = vld [vmem:[%s3406] sm:$0xf]
      %v4971 = vld [vmem:[%s3406 + $0x4] sm:$0xf]
      %v4972 = vld [vmem:[%s3406 + $0x8] sm:$0x1]
      %v4973 = vld [vmem:[%s3436] sm:$0xf]
      %v4974 = vld [vmem:[%s3436 + $0x4] sm:$0xf]
      %v4975 = vld [vmem:[%s3436 + $0x8] sm:$0x1]
      %v4976 = vld [vmem:[%s3466] sm:$0xf]
      %v4977 = vld [vmem:[%s3466 + $0x4] sm:$0xf]
      %v4978 = vld [vmem:[%s3466 + $0x8] sm:$0x1]
      %v4981 = vunpack.c.l.b16 %v4970
      %v4982 = vunpack.c.l.b16 %v4971
      %v4983 = vpack.c.b16 %v4982, %v4981
      %v4985 = vunpack.c.l.b16 %v4972
      %v4986 = vpack.c.b16 %v4985, %v4985
      %v4988 = vshrl.u32 %v4983, 16
      %v4990 = vshll.u32 %v4983, 16
      %v4992 = vrot.slane %v4990, 1
      %v4993 = vor.u32 %v4988, %v4992
      %v4995 = vshll.u32 %v4986, 16
      %v4997 = vrot.slane %v4995, 1
      %v4998 = vsel %vm787, %v4993, %v4997
      %4999 = vrot.lane.b32.xlu0 %v4998, 8
      %v5000 = vpop.permute.xlu0 %4999
      %v5001 = vrot.slane %v4983, 1
      %v5002 = vrot.slane %v4986, 1
      %v5003 = vsel %vm802, %v5001, %v5002
      %5004 = vrot.lane.b32.xlu0 %v5003, 16
      %v5005 = vpop.permute.xlu0 %5004
      %v5008 = vunpack.c.l.b16 %v4973
      %v5009 = vunpack.c.l.b16 %v4974
      %v5010 = vpack.c.b16 %v5009, %v5008
      %5011 = vrot.lane.b32.xlu0 %v5010, 24
      %v5012 = vpop.permute.xlu0 %5011
      %v5014 = vunpack.c.l.b16 %v4975
      %v5015 = vpack.c.b16 %v5014, %v5014
      %v5017 = vshrl.u32 %v5010, 16
      %v5019 = vshll.u32 %v5010, 16
      %v5021 = vrot.slane %v5019, 1
      %v5022 = vor.u32 %v5017, %v5021
      %v5024 = vshll.u32 %v5015, 16
      %v5026 = vrot.slane %v5024, 1
      %v5027 = vsel %vm787, %v5022, %v5026
      %5028 = vrot.lane.b32.xlu0 %v5027, 32
      %v5029 = vpop.permute.xlu0 %5028
      %v5030 = vrot.slane %v5010, 1
      %v5031 = vrot.slane %v5015, 1
      %v5032 = vsel %vm802, %v5030, %v5031
      %5033 = vrot.lane.b32.xlu0 %v5032, 40
      %v5034 = vpop.permute.xlu0 %5033
      %v5037 = vunpack.c.l.b16 %v4976
      %v5038 = vunpack.c.l.b16 %v4977
      %v5039 = vpack.c.b16 %v5038, %v5037
      %5040 = vrot.lane.b32.xlu0 %v5039, 48
      %v5041 = vpop.permute.xlu0 %5040
      %v5043 = vunpack.c.l.b16 %v4978
      %v5044 = vpack.c.b16 %v5043, %v5043
      %v5046 = vshrl.u32 %v5039, 16
      %v5048 = vshll.u32 %v5039, 16
      %v5050 = vrot.slane %v5048, 1
      %v5051 = vor.u32 %v5046, %v5050
      %v5053 = vshll.u32 %v5044, 16
      %v5055 = vrot.slane %v5053, 1
      %v5056 = vsel %vm787, %v5051, %v5055
      %5057 = vrot.lane.b32.xlu0 %v5056, 56
      %v5058 = vpop.permute.xlu0 %5057
      %v5059 = vrot.slane %v5039, 1
      %v5060 = vrot.slane %v5044, 1
      %v5061 = vsel %vm802, %v5059, %v5060
      %5062 = vrot.lane.b32.xlu0 %v5061, 64
      %v5063 = vpop.permute.xlu0 %5062
      %v5065 = vsel %vm3628, %v4983, %v5000
      %v5067 = vsel %vm3631, %v5065, %v5005
      %v5069 = vsel %vm887, %v5067, %v5012
      %v5071 = vsel %vm3636, %v5069, %v5029
      %v5073 = vsel %vm3639, %v5071, %v5034
      %v5075 = vsel %vm3642, %v5073, %v5041
      %v5077 = vsel %vm3645, %v5075, %v5058
      %v5079 = vsel %vm3648, %v5077, %v5063
      %v5081 = vunpack.c.l.b16 %v5079
      %v5082 = vunpack.c.h.b16 %v5079
      %v5083 = vpack.c.b16 %v5081, %v5081
      %v5084 = vpack.c.b16 %v5082, %v5082
      %5087 = vst.msk [vmem:[#allocation5 + $0x60] sm:$0xf] %vm3658, %v5083
      %5088 = vst.msk [vmem:[#allocation5 + $0x64] sm:$0xf] %vm3658, %v5084
      %v5089 = vld [vmem:[%s3436] sm:$0xf]
      %v5090 = vld [vmem:[%s3436 + $0x4] sm:$0xf]
      %v5091 = vld [vmem:[%s3436 + $0x8] sm:$0x1]
      %v5092 = vld [vmem:[%s3466] sm:$0xf]
      %v5093 = vld [vmem:[%s3466 + $0x4] sm:$0xf]
      %v5094 = vld [vmem:[%s3466 + $0x8] sm:$0x1]
      %v5095 = vld [vmem:[%s3496] sm:$0xf]
      %v5096 = vld [vmem:[%s3496 + $0x4] sm:$0xf]
      %v5097 = vld [vmem:[%s3496 + $0x8] sm:$0x1]
      %v5100 = vunpack.c.l.b16 %v5089
      %v5101 = vunpack.c.l.b16 %v5090
      %v5102 = vpack.c.b16 %v5101, %v5100
      %v5104 = vunpack.c.l.b16 %v5091
      %v5105 = vpack.c.b16 %v5104, %v5104
      %v5107 = vshrl.u32 %v5102, 16
      %v5109 = vshll.u32 %v5102, 16
      %v5111 = vrot.slane %v5109, 1
      %v5112 = vor.u32 %v5107, %v5111
      %v5114 = vshll.u32 %v5105, 16
      %v5116 = vrot.slane %v5114, 1
      %v5117 = vsel %vm787, %v5112, %v5116
      %5118 = vrot.lane.b32.xlu0 %v5117, 8
      %v5119 = vpop.permute.xlu0 %5118
      %v5120 = vrot.slane %v5102, 1
      %v5121 = vrot.slane %v5105, 1
      %v5122 = vsel %vm802, %v5120, %v5121
      %5123 = vrot.lane.b32.xlu0 %v5122, 16
      %v5124 = vpop.permute.xlu0 %5123
      %v5127 = vunpack.c.l.b16 %v5092
      %v5128 = vunpack.c.l.b16 %v5093
      %v5129 = vpack.c.b16 %v5128, %v5127
      %5130 = vrot.lane.b32.xlu0 %v5129, 24
      %v5131 = vpop.permute.xlu0 %5130
      %v5133 = vunpack.c.l.b16 %v5094
      %v5134 = vpack.c.b16 %v5133, %v5133
      %v5136 = vshrl.u32 %v5129, 16
      %v5138 = vshll.u32 %v5129, 16
      %v5140 = vrot.slane %v5138, 1
      %v5141 = vor.u32 %v5136, %v5140
      %v5143 = vshll.u32 %v5134, 16
      %v5145 = vrot.slane %v5143, 1
      %v5146 = vsel %vm787, %v5141, %v5145
      %5147 = vrot.lane.b32.xlu0 %v5146, 32
      %v5148 = vpop.permute.xlu0 %5147
      %v5149 = vrot.slane %v5129, 1
      %v5150 = vrot.slane %v5134, 1
      %v5151 = vsel %vm802, %v5149, %v5150
      %5152 = vrot.lane.b32.xlu0 %v5151, 40
      %v5153 = vpop.permute.xlu0 %5152
      %v5156 = vunpack.c.l.b16 %v5095
      %v5157 = vunpack.c.l.b16 %v5096
      %v5158 = vpack.c.b16 %v5157, %v5156
      %5159 = vrot.lane.b32.xlu0 %v5158, 48
      %v5160 = vpop.permute.xlu0 %5159
      %v5162 = vunpack.c.l.b16 %v5097
      %v5163 = vpack.c.b16 %v5162, %v5162
      %v5165 = vshrl.u32 %v5158, 16
      %v5167 = vshll.u32 %v5158, 16
      %v5169 = vrot.slane %v5167, 1
      %v5170 = vor.u32 %v5165, %v5169
      %v5172 = vshll.u32 %v5163, 16
      %v5174 = vrot.slane %v5172, 1
      %v5175 = vsel %vm787, %v5170, %v5174
      %5176 = vrot.lane.b32.xlu0 %v5175, 56
      %v5177 = vpop.permute.xlu0 %5176
      %v5178 = vrot.slane %v5158, 1
      %v5179 = vrot.slane %v5163, 1
      %v5180 = vsel %vm802, %v5178, %v5179
      %5181 = vrot.lane.b32.xlu0 %v5180, 64
      %v5182 = vpop.permute.xlu0 %5181
      %v5184 = vsel %vm3628, %v5102, %v5119
      %v5186 = vsel %vm3631, %v5184, %v5124
      %v5188 = vsel %vm887, %v5186, %v5131
      %v5190 = vsel %vm3636, %v5188, %v5148
      %v5192 = vsel %vm3639, %v5190, %v5153
      %v5194 = vsel %vm3642, %v5192, %v5160
      %v5196 = vsel %vm3645, %v5194, %v5177
      %v5198 = vsel %vm3648, %v5196, %v5182
      %v5200 = vunpack.c.l.b16 %v5198
      %v5201 = vunpack.c.h.b16 %v5198
      %v5202 = vpack.c.b16 %v5200, %v5200
      %v5203 = vpack.c.b16 %v5201, %v5201
      %5206 = vst.msk [vmem:[#allocation5 + $0x68] sm:$0xf] %vm3658, %v5202
      %5207 = vst.msk [vmem:[#allocation5 + $0x6c] sm:$0xf] %vm3658, %v5203
      %v5208 = vld [vmem:[%s3466] sm:$0xf]
      %v5209 = vld [vmem:[%s3466 + $0x4] sm:$0xf]
      %v5210 = vld [vmem:[%s3466 + $0x8] sm:$0x1]
      %v5211 = vld [vmem:[%s3496] sm:$0xf]
      %v5212 = vld [vmem:[%s3496 + $0x4] sm:$0xf]
      %v5213 = vld [vmem:[%s3496 + $0x8] sm:$0x1]
      %v5214 = vld [vmem:[%s3526] sm:$0xf]
      %v5215 = vld [vmem:[%s3526 + $0x4] sm:$0xf]
      %v5216 = vld [vmem:[%s3526 + $0x8] sm:$0x1]
      %v5219 = vunpack.c.l.b16 %v5208
      %v5220 = vunpack.c.l.b16 %v5209
      %v5221 = vpack.c.b16 %v5220, %v5219
      %v5223 = vunpack.c.l.b16 %v5210
      %v5224 = vpack.c.b16 %v5223, %v5223
      %v5226 = vshrl.u32 %v5221, 16
      %v5228 = vshll.u32 %v5221, 16
      %v5230 = vrot.slane %v5228, 1
      %v5231 = vor.u32 %v5226, %v5230
      %v5233 = vshll.u32 %v5224, 16
      %v5235 = vrot.slane %v5233, 1
      %v5236 = vsel %vm787, %v5231, %v5235
      %5237 = vrot.lane.b32.xlu0 %v5236, 8
      %v5238 = vpop.permute.xlu0 %5237
      %v5239 = vrot.slane %v5221, 1
      %v5240 = vrot.slane %v5224, 1
      %v5241 = vsel %vm802, %v5239, %v5240
      %5242 = vrot.lane.b32.xlu0 %v5241, 16
      %v5243 = vpop.permute.xlu0 %5242
      %v5246 = vunpack.c.l.b16 %v5211
      %v5247 = vunpack.c.l.b16 %v5212
      %v5248 = vpack.c.b16 %v5247, %v5246
      %5249 = vrot.lane.b32.xlu0 %v5248, 24
      %v5250 = vpop.permute.xlu0 %5249
      %v5252 = vunpack.c.l.b16 %v5213
      %v5253 = vpack.c.b16 %v5252, %v5252
      %v5255 = vshrl.u32 %v5248, 16
      %v5257 = vshll.u32 %v5248, 16
      %v5259 = vrot.slane %v5257, 1
      %v5260 = vor.u32 %v5255, %v5259
      %v5262 = vshll.u32 %v5253, 16
      %v5264 = vrot.slane %v5262, 1
      %v5265 = vsel %vm787, %v5260, %v5264
      %5266 = vrot.lane.b32.xlu0 %v5265, 32
      %v5267 = vpop.permute.xlu0 %5266
      %v5268 = vrot.slane %v5248, 1
      %v5269 = vrot.slane %v5253, 1
      %v5270 = vsel %vm802, %v5268, %v5269
      %5271 = vrot.lane.b32.xlu0 %v5270, 40
      %v5272 = vpop.permute.xlu0 %5271
      %v5275 = vunpack.c.l.b16 %v5214
      %v5276 = vunpack.c.l.b16 %v5215
      %v5277 = vpack.c.b16 %v5276, %v5275
      %5278 = vrot.lane.b32.xlu0 %v5277, 48
      %v5279 = vpop.permute.xlu0 %5278
      %v5281 = vunpack.c.l.b16 %v5216
      %v5282 = vpack.c.b16 %v5281, %v5281
      %v5284 = vshrl.u32 %v5277, 16
      %v5286 = vshll.u32 %v5277, 16
      %v5288 = vrot.slane %v5286, 1
      %v5289 = vor.u32 %v5284, %v5288
      %v5291 = vshll.u32 %v5282, 16
      %v5293 = vrot.slane %v5291, 1
      %v5294 = vsel %vm787, %v5289, %v5293
      %5295 = vrot.lane.b32.xlu0 %v5294, 56
      %v5296 = vpop.permute.xlu0 %5295
      %v5297 = vrot.slane %v5277, 1
      %v5298 = vrot.slane %v5282, 1
      %v5299 = vsel %vm802, %v5297, %v5298
      %5300 = vrot.lane.b32.xlu0 %v5299, 64
      %v5301 = vpop.permute.xlu0 %5300
      %v5303 = vsel %vm3628, %v5221, %v5238
      %v5305 = vsel %vm3631, %v5303, %v5243
      %v5307 = vsel %vm887, %v5305, %v5250
      %v5309 = vsel %vm3636, %v5307, %v5267
      %v5311 = vsel %vm3639, %v5309, %v5272
      %v5313 = vsel %vm3642, %v5311, %v5279
      %v5315 = vsel %vm3645, %v5313, %v5296
      %v5317 = vsel %vm3648, %v5315, %v5301
      %v5319 = vunpack.c.l.b16 %v5317
      %v5320 = vunpack.c.h.b16 %v5317
      %v5321 = vpack.c.b16 %v5319, %v5319
      %v5322 = vpack.c.b16 %v5320, %v5320
      %5325 = vst.msk [vmem:[#allocation5 + $0x70] sm:$0xf] %vm3658, %v5321
      %5326 = vst.msk [vmem:[#allocation5 + $0x74] sm:$0xf] %vm3658, %v5322
      %v5327 = vld [vmem:[%s3496] sm:$0xf]
      %v5328 = vld [vmem:[%s3496 + $0x4] sm:$0xf]
      %v5329 = vld [vmem:[%s3496 + $0x8] sm:$0x1]
      %v5330 = vld [vmem:[%s3526] sm:$0xf]
      %v5331 = vld [vmem:[%s3526 + $0x4] sm:$0xf]
      %v5332 = vld [vmem:[%s3526 + $0x8] sm:$0x1]
      %s5333 = scalar_lea.vmem [#allocation4], 204
      %v5334 = vld [vmem:[%s5333] sm:$0xf]
      %v5335 = vld [vmem:[%s5333 + $0x4] sm:$0xf]
      %v5336 = vld [vmem:[%s5333 + $0x8] sm:$0x1]
      %v5339 = vunpack.c.l.b16 %v5327
      %v5340 = vunpack.c.l.b16 %v5328
      %v5341 = vpack.c.b16 %v5340, %v5339
      %v5343 = vunpack.c.l.b16 %v5329
      %v5344 = vpack.c.b16 %v5343, %v5343
      %v5346 = vshrl.u32 %v5341, 16
      %v5348 = vshll.u32 %v5341, 16
      %v5350 = vrot.slane %v5348, 1
      %v5351 = vor.u32 %v5346, %v5350
      %v5353 = vshll.u32 %v5344, 16
      %v5355 = vrot.slane %v5353, 1
      %v5356 = vsel %vm787, %v5351, %v5355
      %5357 = vrot.lane.b32.xlu0 %v5356, 8
      %v5358 = vpop.permute.xlu0 %5357
      %v5359 = vrot.slane %v5341, 1
      %v5360 = vrot.slane %v5344, 1
      %v5361 = vsel %vm802, %v5359, %v5360
      %5362 = vrot.lane.b32.xlu0 %v5361, 16
      %v5363 = vpop.permute.xlu0 %5362
      %v5366 = vunpack.c.l.b16 %v5330
      %v5367 = vunpack.c.l.b16 %v5331
      %v5368 = vpack.c.b16 %v5367, %v5366
      %5369 = vrot.lane.b32.xlu0 %v5368, 24
      %v5370 = vpop.permute.xlu0 %5369
      %v5372 = vunpack.c.l.b16 %v5332
      %v5373 = vpack.c.b16 %v5372, %v5372
      %v5375 = vshrl.u32 %v5368, 16
      %v5377 = vshll.u32 %v5368, 16
      %v5379 = vrot.slane %v5377, 1
      %v5380 = vor.u32 %v5375, %v5379
      %v5382 = vshll.u32 %v5373, 16
      %v5384 = vrot.slane %v5382, 1
      %v5385 = vsel %vm787, %v5380, %v5384
      %5386 = vrot.lane.b32.xlu0 %v5385, 32
      %v5387 = vpop.permute.xlu0 %5386
      %v5388 = vrot.slane %v5368, 1
      %v5389 = vrot.slane %v5373, 1
      %v5390 = vsel %vm802, %v5388, %v5389
      %5391 = vrot.lane.b32.xlu0 %v5390, 40
      %v5392 = vpop.permute.xlu0 %5391
      %v5395 = vunpack.c.l.b16 %v5334
      %v5396 = vunpack.c.l.b16 %v5335
      %v5397 = vpack.c.b16 %v5396, %v5395
      %5398 = vrot.lane.b32.xlu0 %v5397, 48
      %v5399 = vpop.permute.xlu0 %5398
      %v5401 = vunpack.c.l.b16 %v5336
      %v5402 = vpack.c.b16 %v5401, %v5401
      %v5404 = vshrl.u32 %v5397, 16
      %v5406 = vshll.u32 %v5397, 16
      %v5408 = vrot.slane %v5406, 1
      %v5409 = vor.u32 %v5404, %v5408
      %v5411 = vshll.u32 %v5402, 16
      %v5413 = vrot.slane %v5411, 1
      %v5414 = vsel %vm787, %v5409, %v5413
      %5415 = vrot.lane.b32.xlu0 %v5414, 56
      %v5416 = vpop.permute.xlu0 %5415
      %v5417 = vrot.slane %v5397, 1
      %v5418 = vrot.slane %v5402, 1
      %v5419 = vsel %vm802, %v5417, %v5418
      %5420 = vrot.lane.b32.xlu0 %v5419, 64
      %v5421 = vpop.permute.xlu0 %5420
      %v5423 = vsel %vm3628, %v5341, %v5358
      %v5425 = vsel %vm3631, %v5423, %v5363
      %v5427 = vsel %vm887, %v5425, %v5370
      %v5429 = vsel %vm3636, %v5427, %v5387
      %v5431 = vsel %vm3639, %v5429, %v5392
      %v5433 = vsel %vm3642, %v5431, %v5399
      %v5435 = vsel %vm3645, %v5433, %v5416
      %v5437 = vsel %vm3648, %v5435, %v5421
      %v5439 = vunpack.c.l.b16 %v5437
      %v5440 = vunpack.c.h.b16 %v5437
      %v5441 = vpack.c.b16 %v5439, %v5439
      %v5442 = vpack.c.b16 %v5440, %v5440
      %5445 = vst.msk [vmem:[#allocation5 + $0x78] sm:$0xf] %vm3658, %v5441
      %5446 = vst.msk [vmem:[#allocation5 + $0x7c] sm:$0xf] %vm3658, %v5442
      %v5447 = vld [vmem:[#allocation5] sm:$0xf]
      %v5448 = vld [vmem:[#allocation5 + $0x4] sm:$0xf]
      %v5449 = vld [vmem:[#allocation5 + $0x8] sm:$0xf]
      %v5450 = vld [vmem:[#allocation5 + $0xc] sm:$0xf]
      %v5451 = vld [vmem:[#allocation5 + $0x10] sm:$0xf]
      %v5452 = vld [vmem:[#allocation5 + $0x14] sm:$0xf]
      %v5453 = vld [vmem:[#allocation5 + $0x18] sm:$0xf]
      %v5454 = vld [vmem:[#allocation5 + $0x1c] sm:$0xf]
      %v5455 = vld [vmem:[#allocation5 + $0x20] sm:$0xf]
      %v5456 = vld [vmem:[#allocation5 + $0x24] sm:$0xf]
      %v5457 = vld [vmem:[#allocation5 + $0x28] sm:$0xf]
      %v5458 = vld [vmem:[#allocation5 + $0x2c] sm:$0xf]
      %v5459 = vld [vmem:[#allocation5 + $0x30] sm:$0xf]
      %v5460 = vld [vmem:[#allocation5 + $0x34] sm:$0xf]
      %v5461 = vld [vmem:[#allocation5 + $0x38] sm:$0xf]
      %v5462 = vld [vmem:[#allocation5 + $0x3c] sm:$0xf]
      %v5463 = vld [vmem:[#allocation5 + $0x40] sm:$0xf]
      %v5464 = vld [vmem:[#allocation5 + $0x44] sm:$0xf]
      %v5465 = vld [vmem:[#allocation5 + $0x48] sm:$0xf]
      %v5466 = vld [vmem:[#allocation5 + $0x4c] sm:$0xf]
      %v5467 = vld [vmem:[#allocation5 + $0x50] sm:$0xf]
      %v5468 = vld [vmem:[#allocation5 + $0x54] sm:$0xf]
      %v5469 = vld [vmem:[#allocation5 + $0x58] sm:$0xf]
      %v5470 = vld [vmem:[#allocation5 + $0x5c] sm:$0xf]
      %v5471 = vld [vmem:[#allocation5 + $0x60] sm:$0xf]
      %v5472 = vld [vmem:[#allocation5 + $0x64] sm:$0xf]
      %v5473 = vld [vmem:[#allocation5 + $0x68] sm:$0xf]
      %v5474 = vld [vmem:[#allocation5 + $0x6c] sm:$0xf]
      %v5475 = vld [vmem:[#allocation5 + $0x70] sm:$0xf]
      %v5476 = vld [vmem:[#allocation5 + $0x74] sm:$0xf]
      %v5477 = vld [vmem:[#allocation5 + $0x78] sm:$0xf]
      %v5478 = vld [vmem:[#allocation5 + $0x7c] sm:$0xf]
      %v5479 = vld [vmem:[%s3] sm:$0xf]
      %v5480 = vld [vmem:[%s3 + $0x4] sm:$0xf]
      %v5481 = vld [vmem:[%s3 + $0x8] sm:$0xf]
      %v5482 = vld [vmem:[%s3 + $0xc] sm:$0xf]
      %v5483 = vld [vmem:[%s3 + $0x10] sm:$0xf]
      %v5484 = vld [vmem:[%s3 + $0x14] sm:$0xf]
      %v5485 = vld [vmem:[%s3 + $0x18] sm:$0xf]
      %v5486 = vld [vmem:[%s3 + $0x1c] sm:$0xf]
      %v5487 = vld [vmem:[%s3 + $0x20] sm:$0xf]
      %v5488 = vld [vmem:[%s4] sm:$0x1]
      %v5490 = vperm.slane %v5488, 0
      %v5524 = vunpack.c.l.b16 %v5447
      %v5525 = vunpack.c.l.b16 %v5448
      %v5526 = vunpack.c.l.b16 %v5449
      %v5527 = vunpack.c.l.b16 %v5450
      %v5528 = vunpack.c.l.b16 %v5451
      %v5529 = vunpack.c.l.b16 %v5452
      %v5530 = vunpack.c.l.b16 %v5453
      %v5531 = vunpack.c.l.b16 %v5454
      %v5532 = vunpack.c.l.b16 %v5455
      %v5533 = vunpack.c.l.b16 %v5456
      %v5534 = vunpack.c.l.b16 %v5457
      %v5535 = vunpack.c.l.b16 %v5458
      %v5536 = vunpack.c.l.b16 %v5459
      %v5537 = vunpack.c.l.b16 %v5460
      %v5538 = vunpack.c.l.b16 %v5461
      %v5539 = vunpack.c.l.b16 %v5462
      %v5540 = vunpack.c.l.b16 %v5463
      %v5541 = vunpack.c.l.b16 %v5464
      %v5542 = vunpack.c.l.b16 %v5465
      %v5543 = vunpack.c.l.b16 %v5466
      %v5544 = vunpack.c.l.b16 %v5467
      %v5545 = vunpack.c.l.b16 %v5468
      %v5546 = vunpack.c.l.b16 %v5469
      %v5547 = vunpack.c.l.b16 %v5470
      %v5548 = vunpack.c.l.b16 %v5471
      %v5549 = vunpack.c.l.b16 %v5472
      %v5550 = vunpack.c.l.b16 %v5473
      %v5551 = vunpack.c.l.b16 %v5474
      %v5552 = vunpack.c.l.b16 %v5475
      %v5553 = vunpack.c.l.b16 %v5476
      %v5554 = vunpack.c.l.b16 %v5477
      %v5555 = vunpack.c.l.b16 %v5478
      %v5556 = vpack.c.b16 %v5525, %v5524
      %v5557 = vpack.c.b16 %v5527, %v5526
      %v5558 = vpack.c.b16 %v5529, %v5528
      %v5559 = vpack.c.b16 %v5531, %v5530
      %v5560 = vpack.c.b16 %v5533, %v5532
      %v5561 = vpack.c.b16 %v5535, %v5534
      %v5562 = vpack.c.b16 %v5537, %v5536
      %v5563 = vpack.c.b16 %v5539, %v5538
      %v5564 = vpack.c.b16 %v5541, %v5540
      %v5565 = vpack.c.b16 %v5543, %v5542
      %v5566 = vpack.c.b16 %v5545, %v5544
      %v5567 = vpack.c.b16 %v5547, %v5546
      %v5568 = vpack.c.b16 %v5549, %v5548
      %v5569 = vpack.c.b16 %v5551, %v5550
      %v5570 = vpack.c.b16 %v5553, %v5552
      %v5571 = vpack.c.b16 %v5555, %v5554
      %v5581 = vunpack.c.l.b16 %v5479
      %v5582 = vunpack.c.l.b16 %v5480
      %v5583 = vunpack.c.l.b16 %v5481
      %v5584 = vunpack.c.l.b16 %v5482
      %v5585 = vunpack.c.l.b16 %v5483
      %v5586 = vunpack.c.l.b16 %v5484
      %v5587 = vunpack.c.l.b16 %v5485
      %v5588 = vunpack.c.l.b16 %v5486
      %v5589 = vunpack.c.l.b16 %v5487
      %v5590 = vpack.c.b16 %v5582, %v5581
      %v5591 = vpack.c.b16 %v5584, %v5583
      %v5592 = vpack.c.b16 %v5586, %v5585
      %v5593 = vpack.c.b16 %v5588, %v5587
      %v5594 = vpack.c.b16 %v5589, %v5589
      %vm5599 = vcmask 588800
      %v5601 = vsel %vm5599, %v5556, 0
      %v5604 = vsel %vm5599, %v5557, 0
      %v5607 = vsel %vm5599, %v5558, 0
      %v5610 = vsel %vm5599, %v5559, 0
      %v5613 = vsel %vm5599, %v5560, 0
      %v5616 = vsel %vm5599, %v5561, 0
      %v5619 = vsel %vm5599, %v5562, 0
      %v5622 = vsel %vm5599, %v5563, 0
      %v5625 = vsel %vm5599, %v5564, 0
      %v5628 = vsel %vm5599, %v5565, 0
      %v5631 = vsel %vm5599, %v5566, 0
      %v5634 = vsel %vm5599, %v5567, 0
      %v5637 = vsel %vm5599, %v5568, 0
      %v5640 = vsel %vm5599, %v5569, 0
      %v5643 = vsel %vm5599, %v5570, 0
      %v5646 = vsel %vm5599, %v5571, 0
      %vm5648 = vcmask 1043456
      %v5650 = vsel %vm5648, %v5594, 0
      %5652 = vmatpush.bf16.msra.mxu0 0
      %5653 = vmatpush.bf16.msra.mxu0 0
      %5654 = vmatpush.bf16.msra.mxu0 0
      %5655 = vmatpush.bf16.msra.mxu0 %v5650
      %5656 = vmatpush.bf16.msra.mxu0 %v5593
      %5657 = vmatpush.bf16.msra.mxu0 %v5592
      %5658 = vmatpush.bf16.msra.mxu0 %v5591
      %5659 = vmatpush.bf16.msra.mxu0 %v5590
      %5660 = vmatmul.bf16.gmra.mxu0 %v5601
      %v5661 = vpop.f32.mrf.mxu0
      %v5662 = vadd.f32 %v5490, %v5661
      %v5663 = vpop.f32.mrf.mxu0
      %v5664 = vadd.f32 %v5490, %v5663
      %5665 = vmatmul.bf16.gmra.mxu0 %v5604
      %v5666 = vpop.f32.mrf.mxu0
      %v5667 = vadd.f32 %v5490, %v5666
      %v5668 = vpop.f32.mrf.mxu0
      %v5669 = vadd.f32 %v5490, %v5668
      %5670 = vmatmul.bf16.gmra.mxu0 %v5607
      %v5671 = vpop.f32.mrf.mxu0
      %v5672 = vadd.f32 %v5490, %v5671
      %v5673 = vpop.f32.mrf.mxu0
      %v5674 = vadd.f32 %v5490, %v5673
      %5675 = vmatmul.bf16.gmra.mxu0 %v5610
      %v5676 = vpop.f32.mrf.mxu0
      %v5677 = vadd.f32 %v5490, %v5676
      %v5678 = vpop.f32.mrf.mxu0
      %v5679 = vadd.f32 %v5490, %v5678
      %5680 = vmatmul.bf16.gmra.mxu0 %v5613
      %v5681 = vpop.f32.mrf.mxu0
      %v5682 = vadd.f32 %v5490, %v5681
      %v5683 = vpop.f32.mrf.mxu0
      %v5684 = vadd.f32 %v5490, %v5683
      %5685 = vmatmul.bf16.gmra.mxu0 %v5616
      %v5686 = vpop.f32.mrf.mxu0
      %v5687 = vadd.f32 %v5490, %v5686
      %v5688 = vpop.f32.mrf.mxu0
      %v5689 = vadd.f32 %v5490, %v5688
      %5690 = vmatmul.bf16.gmra.mxu0 %v5619
      %v5691 = vpop.f32.mrf.mxu0
      %v5692 = vadd.f32 %v5490, %v5691
      %v5693 = vpop.f32.mrf.mxu0
      %v5694 = vadd.f32 %v5490, %v5693
      %5695 = vmatmul.bf16.gmra.mxu0 %v5622
      %v5696 = vpop.f32.mrf.mxu0
      %v5697 = vadd.f32 %v5490, %v5696
      %v5698 = vpop.f32.mrf.mxu0
      %v5699 = vadd.f32 %v5490, %v5698
      %5700 = vmatmul.bf16.gmra.mxu0 %v5625
      %v5701 = vpop.f32.mrf.mxu0
      %v5702 = vadd.f32 %v5490, %v5701
      %v5703 = vpop.f32.mrf.mxu0
      %v5704 = vadd.f32 %v5490, %v5703
      %5705 = vmatmul.bf16.gmra.mxu0 %v5628
      %v5706 = vpop.f32.mrf.mxu0
      %v5707 = vadd.f32 %v5490, %v5706
      %v5708 = vpop.f32.mrf.mxu0
      %v5709 = vadd.f32 %v5490, %v5708
      %5710 = vmatmul.bf16.gmra.mxu0 %v5631
      %v5711 = vpop.f32.mrf.mxu0
      %v5712 = vadd.f32 %v5490, %v5711
      %v5713 = vpop.f32.mrf.mxu0
      %v5714 = vadd.f32 %v5490, %v5713
      %5715 = vmatmul.bf16.gmra.mxu0 %v5634
      %v5716 = vpop.f32.mrf.mxu0
      %v5717 = vadd.f32 %v5490, %v5716
      %v5718 = vpop.f32.mrf.mxu0
      %v5719 = vadd.f32 %v5490, %v5718
      %5720 = vmatmul.bf16.gmra.mxu0 %v5637
      %v5721 = vpop.f32.mrf.mxu0
      %v5722 = vadd.f32 %v5490, %v5721
      %v5723 = vpop.f32.mrf.mxu0
      %v5724 = vadd.f32 %v5490, %v5723
      %5725 = vmatmul.bf16.gmra.mxu0 %v5640
      %v5726 = vpop.f32.mrf.mxu0
      %v5727 = vadd.f32 %v5490, %v5726
      %v5728 = vpop.f32.mrf.mxu0
      %v5729 = vadd.f32 %v5490, %v5728
      %5730 = vmatmul.bf16.gmra.mxu0 %v5643
      %v5731 = vpop.f32.mrf.mxu0
      %v5732 = vadd.f32 %v5490, %v5731
      %v5733 = vpop.f32.mrf.mxu0
      %v5734 = vadd.f32 %v5490, %v5733
      %5735 = vmatmul.bf16.gmra.mxu0 %v5646
      %v5736 = vpop.f32.mrf.mxu0
      %v5737 = vadd.f32 %v5490, %v5736
      %v5738 = vpop.f32.mrf.mxu0
      %v5739 = vadd.f32 %v5490, %v5738
      %5740 = vdwg.mxu0
      %v5741 = vmax.f32 %v5662, 0.0
      %v5742 = vmax.f32 %v5664, 0.0
      %v5743 = vmax.f32 %v5667, 0.0
      %v5744 = vmax.f32 %v5669, 0.0
      %v5745 = vmax.f32 %v5672, 0.0
      %v5746 = vmax.f32 %v5674, 0.0
      %v5747 = vmax.f32 %v5677, 0.0
      %v5748 = vmax.f32 %v5679, 0.0
      %v5749 = vmax.f32 %v5682, 0.0
      %v5750 = vmax.f32 %v5684, 0.0
      %v5751 = vmax.f32 %v5687, 0.0
      %v5752 = vmax.f32 %v5689, 0.0
      %v5753 = vmax.f32 %v5692, 0.0
      %v5754 = vmax.f32 %v5694, 0.0
      %v5755 = vmax.f32 %v5697, 0.0
      %v5756 = vmax.f32 %v5699, 0.0
      %v5757 = vmax.f32 %v5702, 0.0
      %v5758 = vmax.f32 %v5704, 0.0
      %v5759 = vmax.f32 %v5707, 0.0
      %v5760 = vmax.f32 %v5709, 0.0
      %v5761 = vmax.f32 %v5712, 0.0
      %v5762 = vmax.f32 %v5714, 0.0
      %v5763 = vmax.f32 %v5717, 0.0
      %v5764 = vmax.f32 %v5719, 0.0
      %v5765 = vmax.f32 %v5722, 0.0
      %v5766 = vmax.f32 %v5724, 0.0
      %v5767 = vmax.f32 %v5727, 0.0
      %v5768 = vmax.f32 %v5729, 0.0
      %v5769 = vmax.f32 %v5732, 0.0
      %v5770 = vmax.f32 %v5734, 0.0
      %v5771 = vmax.f32 %v5737, 0.0
      %v5772 = vmax.f32 %v5739, 0.0
      %v5773 = vpack.c.bf16 %v5741, %v5741
      %v5774 = vpack.c.bf16 %v5742, %v5742
      %v5775 = vpack.c.bf16 %v5743, %v5743
      %v5776 = vpack.c.bf16 %v5744, %v5744
      %v5777 = vpack.c.bf16 %v5745, %v5745
      %v5778 = vpack.c.bf16 %v5746, %v5746
      %v5779 = vpack.c.bf16 %v5747, %v5747
      %v5780 = vpack.c.bf16 %v5748, %v5748
      %v5781 = vpack.c.bf16 %v5749, %v5749
      %v5782 = vpack.c.bf16 %v5750, %v5750
      %v5783 = vpack.c.bf16 %v5751, %v5751
      %v5784 = vpack.c.bf16 %v5752, %v5752
      %v5785 = vpack.c.bf16 %v5753, %v5753
      %v5786 = vpack.c.bf16 %v5754, %v5754
      %v5787 = vpack.c.bf16 %v5755, %v5755
      %v5788 = vpack.c.bf16 %v5756, %v5756
      %v5789 = vpack.c.bf16 %v5757, %v5757
      %v5790 = vpack.c.bf16 %v5758, %v5758
      %v5791 = vpack.c.bf16 %v5759, %v5759
      %v5792 = vpack.c.bf16 %v5760, %v5760
      %v5793 = vpack.c.bf16 %v5761, %v5761
      %v5794 = vpack.c.bf16 %v5762, %v5762
      %v5795 = vpack.c.bf16 %v5763, %v5763
      %v5796 = vpack.c.bf16 %v5764, %v5764
      %v5797 = vpack.c.bf16 %v5765, %v5765
      %v5798 = vpack.c.bf16 %v5766, %v5766
      %v5799 = vpack.c.bf16 %v5767, %v5767
      %v5800 = vpack.c.bf16 %v5768, %v5768
      %v5801 = vpack.c.bf16 %v5769, %v5769
      %v5802 = vpack.c.bf16 %v5770, %v5770
      %v5803 = vpack.c.bf16 %v5771, %v5771
      %v5804 = vpack.c.bf16 %v5772, %v5772
      %5805 = vst.msk [vmem:[%s224] sm:$0xf] %vm2994, %v5773
      %5806 = vst.msk [vmem:[%s224 + $0x4] sm:$0xf] %vm2994, %v5774
      %5807 = vst.msk [vmem:[%s224 + $0x8] sm:$0xf] %vm2994, %v5775
      %5808 = vst.msk [vmem:[%s224 + $0xc] sm:$0xf] %vm2994, %v5776
      %5809 = vst.msk [vmem:[%s224 + $0x10] sm:$0xf] %vm2994, %v5777
      %5810 = vst.msk [vmem:[%s224 + $0x14] sm:$0xf] %vm2994, %v5778
      %5811 = vst.msk [vmem:[%s224 + $0x18] sm:$0xf] %vm2994, %v5779
      %5812 = vst.msk [vmem:[%s224 + $0x1c] sm:$0xf] %vm2994, %v5780
      %5813 = vst.msk [vmem:[%s224 + $0x20] sm:$0xf] %vm2994, %v5781
      %5814 = vst.msk [vmem:[%s224 + $0x24] sm:$0xf] %vm2994, %v5782
      %5815 = vst.msk [vmem:[%s224 + $0x28] sm:$0xf] %vm2994, %v5783
      %5816 = vst.msk [vmem:[%s224 + $0x2c] sm:$0xf] %vm2994, %v5784
      %5817 = vst.msk [vmem:[%s224 + $0x30] sm:$0xf] %vm2994, %v5785
      %5818 = vst.msk [vmem:[%s224 + $0x34] sm:$0xf] %vm2994, %v5786
      %5819 = vst.msk [vmem:[%s224 + $0x38] sm:$0xf] %vm2994, %v5787
      %5820 = vst.msk [vmem:[%s224 + $0x3c] sm:$0xf] %vm2994, %v5788
      %5821 = vst.msk [vmem:[%s224 + $0x40] sm:$0xf] %vm2994, %v5789
      %5822 = vst.msk [vmem:[%s224 + $0x44] sm:$0xf] %vm2994, %v5790
      %5823 = vst.msk [vmem:[%s224 + $0x48] sm:$0xf] %vm2994, %v5791
      %5824 = vst.msk [vmem:[%s224 + $0x4c] sm:$0xf] %vm2994, %v5792
      %5825 = vst.msk [vmem:[%s224 + $0x50] sm:$0xf] %vm2994, %v5793
      %5826 = vst.msk [vmem:[%s224 + $0x54] sm:$0xf] %vm2994, %v5794
      %5827 = vst.msk [vmem:[%s224 + $0x58] sm:$0xf] %vm2994, %v5795
      %5828 = vst.msk [vmem:[%s224 + $0x5c] sm:$0xf] %vm2994, %v5796
      %5829 = vst.msk [vmem:[%s224 + $0x60] sm:$0xf] %vm2994, %v5797
      %5830 = vst.msk [vmem:[%s224 + $0x64] sm:$0xf] %vm2994, %v5798
      %5831 = vst.msk [vmem:[%s224 + $0x68] sm:$0xf] %vm2994, %v5799
      %5832 = vst.msk [vmem:[%s224 + $0x6c] sm:$0xf] %vm2994, %v5800
      %5833 = vst.msk [vmem:[%s224 + $0x70] sm:$0xf] %vm2994, %v5801
      %5834 = vst.msk [vmem:[%s224 + $0x74] sm:$0xf] %vm2994, %v5802
      %5835 = vst.msk [vmem:[%s224 + $0x78] sm:$0xf] %vm2994, %v5803
      %5836 = vst.msk [vmem:[%s224 + $0x7c] sm:$0xf] %vm2994, %v5804
      %p5837 = scmp.lt.s32.totalorder %s16, 1
      %s5838 = scalar_select %p5837, %s16, 1
      %s5839 = smul.addr %s5838, 32
      %s5840 = smul.addr %s5839, 4
      %s5841 = scalar_lea.vmem %s5, %s5840
      // Predicated region
      $region41: #{tpu_custom_call.1} parent=39 // pred_check
        %p5842 = pneg %p144
      $region42: #{tpu_custom_call.1} parent=39 // pred_check_branch
        %5844 = sbr.rel (%p5842) target = $region44
      $region43: #{tpu_custom_call.1} parent=39 // pred_region
        _
      $region44: #{tpu_custom_call.1} parent=39 // pred_fallthru
        _
    $region40: #{tpu_custom_call.1} parent=5 // pred_fallthru
      _
    %p5845 = scmp.le.s32.totalorder 2, %s11
    // Predicated region
    $region45: #{tpu_custom_call.1} parent=5 // pred_check
      %p5846 = pneg %p5845
    $region46: #{tpu_custom_call.1} parent=5 // pred_check_branch
      %5848 = sbr.rel (%p5846) target = $region48
    $region47: #{tpu_custom_call.1} parent=5 // pred_region
      %s5849 = ssub.s32 %s11, 2
      // Predicated region
      $region49: #{tpu_custom_call.1} parent=47 // pred_check
        %p5850 = pneg %p150
      $region50: #{tpu_custom_call.1} parent=47 // pred_check_branch
        %5852 = sbr.rel (%p5850) target = $region52
      $region51: #{tpu_custom_call.1} parent=47 // pred_region
        %p5853 = scmp.lt.s32.totalorder %s17, 1
        %s5854 = scalar_select %p5853, %s17, 1
        %s5855 = smul.addr %s5854, 32
        %s5856 = smul.addr %s5855, 4
        %s5857 = scalar_lea.vmem %s5, %s5856
      $region52: #{tpu_custom_call.1} parent=47 // pred_fallthru
        _
    $region48: #{tpu_custom_call.1} parent=5 // pred_fallthru
      _
  $region6: #{tpu_custom_call.1} parent=0 // loop_footer
    %s15 = sadd.s32 1, %s11
  $region7: #{tpu_custom_call.1} parent=0 // loop_footer_branch
    %10 = sbr.rel target = $region3
  $region8: #{tpu_custom_call.1} parent=0 // loop_exit
    _

</llo_original>
